<compile_context>
chip_gen: v7x
topology: tpu7x:2x2x1
jax: 0.10.0
libtpu: 0.0.40
codegen_flags: <defaults>
</compile_context>

<pallas_src>
import functools

import jax
import jax.numpy as jnp
from jax.experimental import pallas as pl
from jax.experimental.pallas import tpu as pltpu


# ----------------------------------------------------------------------------
# Fused residual-block kernel (one batch element per grid step)
# ----------------------------------------------------------------------------

def _residual_block_kernel(x_ref, w1_ref, b1_ref, w2_ref, b2_ref, o_ref,
                           xpad_ref, acc_ref, *, eps):
    """Fused residual block for one batch element.

    x_ref   : (1, H, W, Cp)   f32   input activation (channels padded to Cp)
    w*_ref  : (3, 3, Cp, Cp)  bf16  conv weights laid out (kh, kw, Cin, Cout)
    b*_ref  : (1, Cp)         f32   conv biases
    o_ref   : (1, H, W, Cp)   f32   x + IN(conv2(relu(IN(conv1(x)))))
    xpad_ref: (H+2, W+2, Cp)  f32   VMEM scratch: reflect-padded activation
    acc_ref : (H*W, Cp)       f32   VMEM scratch: MXU accumulator
    """
    _, H, W, Cp = x_ref.shape

    def conv3x3(inp, w_ref, b_ref):
        # ---- reflect pad (pad=1) into the VMEM scratch (fully overwritten) --
        xpad_ref[1:H + 1, 1:W + 1, :] = inp
        xpad_ref[0:1, 1:W + 1, :] = inp[1:2, :, :]
        xpad_ref[H + 1:H + 2, 1:W + 1, :] = inp[H - 2:H - 1, :, :]
        xpad_ref[1:H + 1, 0:1, :] = inp[:, 1:2, :]
        xpad_ref[1:H + 1, W + 1:W + 2, :] = inp[:, W - 2:W - 1, :]
        xpad_ref[0:1, 0:1, :] = inp[1:2, 1:2, :]
        xpad_ref[0:1, W + 1:W + 2, :] = inp[1:2, W - 2:W - 1, :]
        xpad_ref[H + 1:H + 2, 0:1, :] = inp[H - 2:H - 1, 1:2, :]
        xpad_ref[H + 1:H + 2, W + 1:W + 2, :] = inp[H - 2:H - 1, W - 2:W - 1, :]

        # ---- 9 shifted-window bf16 MXU matmuls, f32 accumulation ------------
        acc_ref[...] = jnp.zeros_like(acc_ref)
        for di in range(3):
            for dj in range(3):
                a = xpad_ref[di:di + H, dj:dj + W, :].astype(jnp.bfloat16)
                a = a.reshape(H * W, Cp)
                acc_ref[...] += jnp.dot(a, w_ref[di, dj],
                                        preferred_element_type=jnp.float32)
        return acc_ref[...] + b_ref[...]                       # (H*W, Cp) f32

    def instance_norm(h):
        # per-channel stats over the spatial axis; channels sit on the lanes
        mean = jnp.mean(h, axis=0, keepdims=True)
        var = jnp.mean(jnp.square(h - mean), axis=0, keepdims=True)
        return (h - mean) * jax.lax.rsqrt(var + eps)

    # conv1 -> IN -> ReLU
    h1 = conv3x3(x_ref[0], w1_ref, b1_ref)
    y1 = jnp.maximum(instance_norm(h1), 0.0).reshape(H, W, Cp)
    # conv2 -> IN (no activation)
    h2 = conv3x3(y1, w2_ref, b2_ref)
    y2 = instance_norm(h2).reshape(H, W, Cp)
    # fused residual skip-add
    o_ref[0] = x_ref[0] + y2


# ----------------------------------------------------------------------------
# Python wrapper: NCHW public API, NHWC + channel padding internally
# ----------------------------------------------------------------------------

def _round_up(v, m):
    return (v + m - 1) // m * m


def residual_block_forward(params, x_nchw, *, eps=1e-5):
    w1, b1 = params["w1"], params["b1"]
    w2, b2 = params["w2"], params["b2"]
    B, C, H, W = x_nchw.shape
    Cp = max(128, _round_up(C, 128))                 # lane-dense channel count

    # NCHW -> NHWC, zero-pad channels up to Cp (padded channels stay exactly 0
    # through conv / IN / residual, so slicing them off afterwards is exact).
    x = jnp.transpose(x_nchw, (0, 2, 3, 1)).astype(jnp.float32)
    x = jnp.pad(x, ((0, 0), (0, 0), (0, 0), (0, Cp - C)))

    def prep_w(w):   # torch (Cout, Cin, 3, 3) -> (3, 3, Cin_p, Cout_p) bf16
        wt = jnp.transpose(w, (2, 3, 1, 0))
        wt = jnp.pad(wt, ((0, 0), (0, 0), (0, Cp - C), (0, Cp - C)))
        return wt.astype(jnp.bfloat16)

    def prep_b(b):
        return jnp.pad(b, (0, Cp - C)).reshape(1, Cp).astype(jnp.float32)

    flops = B * 2 * (2 * H * W * 9 * Cp * Cp)                 # two 3x3 convs
    bytes_accessed = (2 * B * H * W * Cp * 4                  # x in + out (f32)
                      + 2 * 9 * Cp * Cp * 2                   # bf16 weights
                      + 2 * Cp * 4)                           # biases

    out = pl.pallas_call(
        functools.partial(_residual_block_kernel, eps=eps),
        out_shape=jax.ShapeDtypeStruct((B, H, W, Cp), jnp.float32),
        grid=(B,),
        in_specs=[
            pl.BlockSpec((1, H, W, Cp), lambda b: (b, 0, 0, 0)),
            pl.BlockSpec((3, 3, Cp, Cp), lambda b: (0, 0, 0, 0)),
            pl.BlockSpec((1, Cp), lambda b: (0, 0)),
            pl.BlockSpec((3, 3, Cp, Cp), lambda b: (0, 0, 0, 0)),
            pl.BlockSpec((1, Cp), lambda b: (0, 0)),
        ],
        out_specs=pl.BlockSpec((1, H, W, Cp), lambda b: (b, 0, 0, 0)),
        scratch_shapes=[
            pltpu.VMEM((H + 2, W + 2, Cp), jnp.float32),   # reflect-pad buffer
            pltpu.VMEM((H * W, Cp), jnp.float32),          # MXU accumulator
        ],
        compiler_params=pltpu.CompilerParams(
            dimension_semantics=("parallel",),
            vmem_limit_bytes=64 * 1024 * 1024),
        cost_estimate=pl.CostEstimate(
            flops=flops, transcendentals=4 * B * Cp,
            bytes_accessed=bytes_accessed),
    )(x, prep_w(w1), prep_b(b1), prep_w(w2), prep_b(b2))

    out = out[..., :C]                                   # drop channel padding
    return jnp.transpose(out, (0, 3, 1, 2))              # back to NCHW


# ----------------------------------------------------------------------------
# Pure-JAX reference (for correctness checking) + parameter init
# ----------------------------------------------------------------------------

def _reference_residual_block(params, x, eps=1e-5):
    def conv_in(h, w, b, relu):
        hp = jnp.pad(h, ((0, 0), (0, 0), (1, 1), (1, 1)), mode="reflect")
        y = jax.lax.conv_general_dilated(
            hp, w, window_strides=(1, 1), padding="VALID",
            dimension_numbers=("NCHW", "OIHW", "NCHW"))
        y = y + b[None, :, None, None]
        mean = jnp.mean(y, axis=(2, 3), keepdims=True)
        var = jnp.mean(jnp.square(y - mean), axis=(2, 3), keepdims=True)
        y = (y - mean) * jax.lax.rsqrt(var + eps)
        return jnp.maximum(y, 0.0) if relu else y

    h = conv_in(x, params["w1"], params["b1"], True)
    h = conv_in(h, params["w2"], params["b2"], False)
    return x + h


def init_residual_block_params(key, channels):
    ks = jax.random.split(key, 4)
    bound = 1.0 / jnp.sqrt(jnp.float32(channels * 9))
    w_shape = (channels, channels, 3, 3)
    return {
        "w1": jax.random.uniform(ks[0], w_shape, jnp.float32, -bound, bound),
        "b1": jax.random.uniform(ks[1], (channels,), jnp.float32, -bound, bound),
        "w2": jax.random.uniform(ks[2], w_shape, jnp.float32, -bound, bound),
        "b2": jax.random.uniform(ks[3], (channels,), jnp.float32, -bound, bound),
    }


if __name__ == "__main__":
    key = jax.random.PRNGKey(0)
    k_params, k_x = jax.random.split(key)

    BATCH, CHANNELS, H, W = 2, 64, 16, 16
    params = init_residual_block_params(k_params, CHANNELS)
    x = jax.random.normal(k_x, (BATCH, CHANNELS, H, W), jnp.float32)

    fwd = jax.jit(residual_block_forward)
    out = fwd(params, x)
    jax.block_until_ready(out)

    assert out.shape == (BATCH, CHANNELS, H, W), out.shape
    assert bool(jnp.all(jnp.isfinite(out)))

    ref = _reference_residual_block(params, x)
    max_err = float(jnp.max(jnp.abs(out - ref)))
    assert max_err < 1e-1, f"max abs err vs reference: {max_err}"

    print("KERNEL_OK")
</pallas_src>

<mosaic_0001>
module attributes {stable_mosaic.version = 11 : i64} {
  func.func @_residual_block_kernel(%arg0: i32, %arg1: memref<1x16x16x128xf32, #tpu.memory_space<vmem>>, %arg2: memref<3x3x128x128xbf16, #tpu.memory_space<vmem>>, %arg3: memref<1x128xf32, #tpu.memory_space<vmem>>, %arg4: memref<3x3x128x128xbf16, #tpu.memory_space<vmem>>, %arg5: memref<1x128xf32, #tpu.memory_space<vmem>>, %arg6: memref<1x16x16x128xf32, #tpu.memory_space<vmem>>, %arg7: memref<18x18x128xf32, #tpu.memory_space<vmem>>, %arg8: memref<256x128xf32, #tpu.memory_space<vmem>>) attributes {dimension_semantics = [#tpu.dimension_semantics<parallel>], iteration_bounds = array<i64: 2>, scalar_prefetch = 0 : i64, scratch_operands = 2 : i64, tpu.core_type = #tpu.core_type<tc>, window_params = [{transform_indices = @transform_0, window_bounds = array<i64: 1, 16, 16, 128>}, {pipeline_mode = #tpu.pipeline_mode<synchronous>, transform_indices = @transform_1, window_bounds = array<i64: 3, 3, 128, 128>}, {pipeline_mode = #tpu.pipeline_mode<synchronous>, transform_indices = @transform_2, window_bounds = array<i64: 1, 128>}, {pipeline_mode = #tpu.pipeline_mode<synchronous>, transform_indices = @transform_3, window_bounds = array<i64: 3, 3, 128, 128>}, {pipeline_mode = #tpu.pipeline_mode<synchronous>, transform_indices = @transform_4, window_bounds = array<i64: 1, 128>}, {transform_indices = @transform_5, window_bounds = array<i64: 1, 16, 16, 128>}]} {
    %c0 = arith.constant 0 : index
    %c0_0 = arith.constant 0 : index
    %c0_1 = arith.constant 0 : index
    %c0_2 = arith.constant 0 : index
    %0 = vector.load %arg1[%c0, %c0_0, %c0_1, %c0_2] : memref<1x16x16x128xf32, #tpu.memory_space<vmem>>, vector<1x16x16x128xf32>
    %1 = vector.shape_cast %0 : vector<1x16x16x128xf32> to vector<16x16x128xf32>
    %c1 = arith.constant 1 : index
    %c1_3 = arith.constant 1 : index
    %c0_4 = arith.constant 0 : index
    %2 = vector.load %arg7[%c1, %c1_3, %c0_4] : memref<18x18x128xf32, #tpu.memory_space<vmem>>, vector<16x16x128xf32>
    tpu.vector_store %arg7[%c1, %c1_3, %c0_4], %1 {strides = array<i32>} : memref<18x18x128xf32, #tpu.memory_space<vmem>>, vector<16x16x128xf32>,
    %3 = vector.extract_strided_slice %1 {offsets = [1, 0, 0], sizes = [1, 16, 128], strides = [1, 1, 1]} : vector<16x16x128xf32> to vector<1x16x128xf32>
    %c0_5 = arith.constant 0 : index
    %c1_6 = arith.constant 1 : index
    %c0_7 = arith.constant 0 : index
    %4 = vector.load %arg7[%c0_5, %c1_6, %c0_7] : memref<18x18x128xf32, #tpu.memory_space<vmem>>, vector<1x16x128xf32>
    tpu.vector_store %arg7[%c0_5, %c1_6, %c0_7], %3 {strides = array<i32>} : memref<18x18x128xf32, #tpu.memory_space<vmem>>, vector<1x16x128xf32>,
    %5 = vector.extract_strided_slice %1 {offsets = [14, 0, 0], sizes = [1, 16, 128], strides = [1, 1, 1]} : vector<16x16x128xf32> to vector<1x16x128xf32>
    %c17 = arith.constant 17 : index
    %c1_8 = arith.constant 1 : index
    %c0_9 = arith.constant 0 : index
    %6 = vector.load %arg7[%c17, %c1_8, %c0_9] : memref<18x18x128xf32, #tpu.memory_space<vmem>>, vector<1x16x128xf32>
    tpu.vector_store %arg7[%c17, %c1_8, %c0_9], %5 {strides = array<i32>} : memref<18x18x128xf32, #tpu.memory_space<vmem>>, vector<1x16x128xf32>,
    %7 = vector.extract_strided_slice %1 {offsets = [0, 1, 0], sizes = [16, 1, 128], strides = [1, 1, 1]} : vector<16x16x128xf32> to vector<16x1x128xf32>
    %c1_10 = arith.constant 1 : index
    %c0_11 = arith.constant 0 : index
    %c0_12 = arith.constant 0 : index
    %8 = vector.load %arg7[%c1_10, %c0_11, %c0_12] : memref<18x18x128xf32, #tpu.memory_space<vmem>>, vector<16x1x128xf32>
    tpu.vector_store %arg7[%c1_10, %c0_11, %c0_12], %7 {strides = array<i32>} : memref<18x18x128xf32, #tpu.memory_space<vmem>>, vector<16x1x128xf32>,
    %9 = vector.extract_strided_slice %1 {offsets = [0, 14, 0], sizes = [16, 1, 128], strides = [1, 1, 1]} : vector<16x16x128xf32> to vector<16x1x128xf32>
    %c1_13 = arith.constant 1 : index
    %c17_14 = arith.constant 17 : index
    %c0_15 = arith.constant 0 : index
    %10 = vector.load %arg7[%c1_13, %c17_14, %c0_15] : memref<18x18x128xf32, #tpu.memory_space<vmem>>, vector<16x1x128xf32>
    tpu.vector_store %arg7[%c1_13, %c17_14, %c0_15], %9 {strides = array<i32>} : memref<18x18x128xf32, #tpu.memory_space<vmem>>, vector<16x1x128xf32>,
    %11 = vector.extract_strided_slice %1 {offsets = [1, 1, 0], sizes = [1, 1, 128], strides = [1, 1, 1]} : vector<16x16x128xf32> to vector<1x1x128xf32>
    %c0_16 = arith.constant 0 : index
    %c0_17 = arith.constant 0 : index
    %c0_18 = arith.constant 0 : index
    %12 = vector.load %arg7[%c0_16, %c0_17, %c0_18] : memref<18x18x128xf32, #tpu.memory_space<vmem>>, vector<1x1x128xf32>
    tpu.vector_store %arg7[%c0_16, %c0_17, %c0_18], %11 {strides = array<i32>} : memref<18x18x128xf32, #tpu.memory_space<vmem>>, vector<1x1x128xf32>,
    %13 = vector.extract_strided_slice %1 {offsets = [1, 14, 0], sizes = [1, 1, 128], strides = [1, 1, 1]} : vector<16x16x128xf32> to vector<1x1x128xf32>
    %c0_19 = arith.constant 0 : index
    %c17_20 = arith.constant 17 : index
    %c0_21 = arith.constant 0 : index
    %14 = vector.load %arg7[%c0_19, %c17_20, %c0_21] : memref<18x18x128xf32, #tpu.memory_space<vmem>>, vector<1x1x128xf32>
    tpu.vector_store %arg7[%c0_19, %c17_20, %c0_21], %13 {strides = array<i32>} : memref<18x18x128xf32, #tpu.memory_space<vmem>>, vector<1x1x128xf32>,
    %15 = vector.extract_strided_slice %1 {offsets = [14, 1, 0], sizes = [1, 1, 128], strides = [1, 1, 1]} : vector<16x16x128xf32> to vector<1x1x128xf32>
    %c17_22 = arith.constant 17 : index
    %c0_23 = arith.constant 0 : index
    %c0_24 = arith.constant 0 : index
    %16 = vector.load %arg7[%c17_22, %c0_23, %c0_24] : memref<18x18x128xf32, #tpu.memory_space<vmem>>, vector<1x1x128xf32>
    tpu.vector_store %arg7[%c17_22, %c0_23, %c0_24], %15 {strides = array<i32>} : memref<18x18x128xf32, #tpu.memory_space<vmem>>, vector<1x1x128xf32>,
    %17 = vector.extract_strided_slice %1 {offsets = [14, 14, 0], sizes = [1, 1, 128], strides = [1, 1, 1]} : vector<16x16x128xf32> to vector<1x1x128xf32>
    %c17_25 = arith.constant 17 : index
    %c17_26 = arith.constant 17 : index
    %c0_27 = arith.constant 0 : index
    %18 = vector.load %arg7[%c17_25, %c17_26, %c0_27] : memref<18x18x128xf32, #tpu.memory_space<vmem>>, vector<1x1x128xf32>
    tpu.vector_store %arg7[%c17_25, %c17_26, %c0_27], %17 {strides = array<i32>} : memref<18x18x128xf32, #tpu.memory_space<vmem>>, vector<1x1x128xf32>,
    %cst = arith.constant 0.000000e+00 : f32
    %19 = vector.broadcast %cst : f32 to vector<256x128xf32>
    %c0_28 = arith.constant 0 : index
    %c0_29 = arith.constant 0 : index
    %20 = vector.load %arg8[%c0_28, %c0_29] : memref<256x128xf32, #tpu.memory_space<vmem>>, vector<256x128xf32>
    tpu.vector_store %arg8[%c0_28, %c0_29], %19 {strides = array<i32>} : memref<256x128xf32, #tpu.memory_space<vmem>>, vector<256x128xf32>,
    %c0_30 = arith.constant 0 : index
    %c0_31 = arith.constant 0 : index
    %c0_32 = arith.constant 0 : index
    %21 = vector.load %arg7[%c0_30, %c0_31, %c0_32] : memref<18x18x128xf32, #tpu.memory_space<vmem>>, vector<16x16x128xf32>
    %22 = arith.truncf %21 : vector<16x16x128xf32> to vector<16x16x128xbf16>
    %23 = vector.shape_cast %22 : vector<16x16x128xbf16> to vector<256x128xbf16>
    %c0_33 = arith.constant 0 : index
    %c0_34 = arith.constant 0 : index
    %24 = vector.load %arg8[%c0_33, %c0_34] : memref<256x128xf32, #tpu.memory_space<vmem>>, vector<256x128xf32>
    %c0_35 = arith.constant 0 : index
    %c0_36 = arith.constant 0 : index
    %c0_37 = arith.constant 0 : index
    %c0_38 = arith.constant 0 : index
    %25 = vector.load %arg2[%c0_35, %c0_36, %c0_37, %c0_38] : memref<3x3x128x128xbf16, #tpu.memory_space<vmem>>, vector<1x1x128x128xbf16>
    %26 = vector.shape_cast %25 : vector<1x1x128x128xbf16> to vector<128x128xbf16>
    %cst_39 = arith.constant dense<0.000000e+00> : vector<256x128xf32>
    %27 = tpu.matmul %23, %26, %cst_39 {dimension_numbers = #tpu.dot_dimension_numbers<[1], [0], [0], [1], [0, 0, 1, 1], [], []>} : vector<256x128xbf16>, vector<128x128xbf16>, vector<256x128xf32> -> vector<256x128xf32>
    %28 = arith.addf %24, %27 : vector<256x128xf32>
    %c0_40 = arith.constant 0 : index
    %c0_41 = arith.constant 0 : index
    %29 = vector.load %arg8[%c0_40, %c0_41] : memref<256x128xf32, #tpu.memory_space<vmem>>, vector<256x128xf32>
    tpu.vector_store %arg8[%c0_40, %c0_41], %28 {strides = array<i32>} : memref<256x128xf32, #tpu.memory_space<vmem>>, vector<256x128xf32>,
    %c0_42 = arith.constant 0 : index
    %c1_43 = arith.constant 1 : index
    %c0_44 = arith.constant 0 : index
    %30 = vector.load %arg7[%c0_42, %c1_43, %c0_44] : memref<18x18x128xf32, #tpu.memory_space<vmem>>, vector<16x16x128xf32>
    %31 = arith.truncf %30 : vector<16x16x128xf32> to vector<16x16x128xbf16>
    %32 = vector.shape_cast %31 : vector<16x16x128xbf16> to vector<256x128xbf16>
    %c0_45 = arith.constant 0 : index
    %c0_46 = arith.constant 0 : index
    %33 = vector.load %arg8[%c0_45, %c0_46] : memref<256x128xf32, #tpu.memory_space<vmem>>, vector<256x128xf32>
    %c0_47 = arith.constant 0 : index
    %c1_48 = arith.constant 1 : index
    %c0_49 = arith.constant 0 : index
    %c0_50 = arith.constant 0 : index
    %34 = vector.load %arg2[%c0_47, %c1_48, %c0_49, %c0_50] : memref<3x3x128x128xbf16, #tpu.memory_space<vmem>>, vector<1x1x128x128xbf16>
    %35 = vector.shape_cast %34 : vector<1x1x128x128xbf16> to vector<128x128xbf16>
    %cst_51 = arith.constant dense<0.000000e+00> : vector<256x128xf32>
    %36 = tpu.matmul %32, %35, %cst_51 {dimension_numbers = #tpu.dot_dimension_numbers<[1], [0], [0], [1], [0, 0, 1, 1], [], []>} : vector<256x128xbf16>, vector<128x128xbf16>, vector<256x128xf32> -> vector<256x128xf32>
    %37 = arith.addf %33, %36 : vector<256x128xf32>
    %c0_52 = arith.constant 0 : index
    %c0_53 = arith.constant 0 : index
    %38 = vector.load %arg8[%c0_52, %c0_53] : memref<256x128xf32, #tpu.memory_space<vmem>>, vector<256x128xf32>
    tpu.vector_store %arg8[%c0_52, %c0_53], %37 {strides = array<i32>} : memref<256x128xf32, #tpu.memory_space<vmem>>, vector<256x128xf32>,
    %c0_54 = arith.constant 0 : index
    %c2 = arith.constant 2 : index
    %c0_55 = arith.constant 0 : index
    %39 = vector.load %arg7[%c0_54, %c2, %c0_55] : memref<18x18x128xf32, #tpu.memory_space<vmem>>, vector<16x16x128xf32>
    %40 = arith.truncf %39 : vector<16x16x128xf32> to vector<16x16x128xbf16>
    %41 = vector.shape_cast %40 : vector<16x16x128xbf16> to vector<256x128xbf16>
    %c0_56 = arith.constant 0 : index
    %c0_57 = arith.constant 0 : index
    %42 = vector.load %arg8[%c0_56, %c0_57] : memref<256x128xf32, #tpu.memory_space<vmem>>, vector<256x128xf32>
    %c0_58 = arith.constant 0 : index
    %c2_59 = arith.constant 2 : index
    %c0_60 = arith.constant 0 : index
    %c0_61 = arith.constant 0 : index
    %43 = vector.load %arg2[%c0_58, %c2_59, %c0_60, %c0_61] : memref<3x3x128x128xbf16, #tpu.memory_space<vmem>>, vector<1x1x128x128xbf16>
    %44 = vector.shape_cast %43 : vector<1x1x128x128xbf16> to vector<128x128xbf16>
    %cst_62 = arith.constant dense<0.000000e+00> : vector<256x128xf32>
    %45 = tpu.matmul %41, %44, %cst_62 {dimension_numbers = #tpu.dot_dimension_numbers<[1], [0], [0], [1], [0, 0, 1, 1], [], []>} : vector<256x128xbf16>, vector<128x128xbf16>, vector<256x128xf32> -> vector<256x128xf32>
    %46 = arith.addf %42, %45 : vector<256x128xf32>
    %c0_63 = arith.constant 0 : index
    %c0_64 = arith.constant 0 : index
    %47 = vector.load %arg8[%c0_63, %c0_64] : memref<256x128xf32, #tpu.memory_space<vmem>>, vector<256x128xf32>
    tpu.vector_store %arg8[%c0_63, %c0_64], %46 {strides = array<i32>} : memref<256x128xf32, #tpu.memory_space<vmem>>, vector<256x128xf32>,
    %c1_65 = arith.constant 1 : index
    %c0_66 = arith.constant 0 : index
    %c0_67 = arith.constant 0 : index
    %48 = vector.load %arg7[%c1_65, %c0_66, %c0_67] : memref<18x18x128xf32, #tpu.memory_space<vmem>>, vector<16x16x128xf32>
    %49 = arith.truncf %48 : vector<16x16x128xf32> to vector<16x16x128xbf16>
    %50 = vector.shape_cast %49 : vector<16x16x128xbf16> to vector<256x128xbf16>
    %c0_68 = arith.constant 0 : index
    %c0_69 = arith.constant 0 : index
    %51 = vector.load %arg8[%c0_68, %c0_69] : memref<256x128xf32, #tpu.memory_space<vmem>>, vector<256x128xf32>
    %c1_70 = arith.constant 1 : index
    %c0_71 = arith.constant 0 : index
    %c0_72 = arith.constant 0 : index
    %c0_73 = arith.constant 0 : index
    %52 = vector.load %arg2[%c1_70, %c0_71, %c0_72, %c0_73] : memref<3x3x128x128xbf16, #tpu.memory_space<vmem>>, vector<1x1x128x128xbf16>
    %53 = vector.shape_cast %52 : vector<1x1x128x128xbf16> to vector<128x128xbf16>
    %cst_74 = arith.constant dense<0.000000e+00> : vector<256x128xf32>
    %54 = tpu.matmul %50, %53, %cst_74 {dimension_numbers = #tpu.dot_dimension_numbers<[1], [0], [0], [1], [0, 0, 1, 1], [], []>} : vector<256x128xbf16>, vector<128x128xbf16>, vector<256x128xf32> -> vector<256x128xf32>
    %55 = arith.addf %51, %54 : vector<256x128xf32>
    %c0_75 = arith.constant 0 : index
    %c0_76 = arith.constant 0 : index
    %56 = vector.load %arg8[%c0_75, %c0_76] : memref<256x128xf32, #tpu.memory_space<vmem>>, vector<256x128xf32>
    tpu.vector_store %arg8[%c0_75, %c0_76], %55 {strides = array<i32>} : memref<256x128xf32, #tpu.memory_space<vmem>>, vector<256x128xf32>,
    %c1_77 = arith.constant 1 : index
    %c1_78 = arith.constant 1 : index
    %c0_79 = arith.constant 0 : index
    %57 = vector.load %arg7[%c1_77, %c1_78, %c0_79] : memref<18x18x128xf32, #tpu.memory_space<vmem>>, vector<16x16x128xf32>
    %58 = arith.truncf %57 : vector<16x16x128xf32> to vector<16x16x128xbf16>
    %59 = vector.shape_cast %58 : vector<16x16x128xbf16> to vector<256x128xbf16>
    %c0_80 = arith.constant 0 : index
    %c0_81 = arith.constant 0 : index
    %60 = vector.load %arg8[%c0_80, %c0_81] : memref<256x128xf32, #tpu.memory_space<vmem>>, vector<256x128xf32>
    %c1_82 = arith.constant 1 : index
    %c1_83 = arith.constant 1 : index
    %c0_84 = arith.constant 0 : index
    %c0_85 = arith.constant 0 : index
    %61 = vector.load %arg2[%c1_82, %c1_83, %c0_84, %c0_85] : memref<3x3x128x128xbf16, #tpu.memory_space<vmem>>, vector<1x1x128x128xbf16>
    %62 = vector.shape_cast %61 : vector<1x1x128x128xbf16> to vector<128x128xbf16>
    %cst_86 = arith.constant dense<0.000000e+00> : vector<256x128xf32>
    %63 = tpu.matmul %59, %62, %cst_86 {dimension_numbers = #tpu.dot_dimension_numbers<[1], [0], [0], [1], [0, 0, 1, 1], [], []>} : vector<256x128xbf16>, vector<128x128xbf16>, vector<256x128xf32> -> vector<256x128xf32>
    %64 = arith.addf %60, %63 : vector<256x128xf32>
    %c0_87 = arith.constant 0 : index
    %c0_88 = arith.constant 0 : index
    %65 = vector.load %arg8[%c0_87, %c0_88] : memref<256x128xf32, #tpu.memory_space<vmem>>, vector<256x128xf32>
    tpu.vector_store %arg8[%c0_87, %c0_88], %64 {strides = array<i32>} : memref<256x128xf32, #tpu.memory_space<vmem>>, vector<256x128xf32>,
    %c1_89 = arith.constant 1 : index
    %c2_90 = arith.constant 2 : index
    %c0_91 = arith.constant 0 : index
    %66 = vector.load %arg7[%c1_89, %c2_90, %c0_91] : memref<18x18x128xf32, #tpu.memory_space<vmem>>, vector<16x16x128xf32>
    %67 = arith.truncf %66 : vector<16x16x128xf32> to vector<16x16x128xbf16>
    %68 = vector.shape_cast %67 : vector<16x16x128xbf16> to vector<256x128xbf16>
    %c0_92 = arith.constant 0 : index
    %c0_93 = arith.constant 0 : index
    %69 = vector.load %arg8[%c0_92, %c0_93] : memref<256x128xf32, #tpu.memory_space<vmem>>, vector<256x128xf32>
    %c1_94 = arith.constant 1 : index
    %c2_95 = arith.constant 2 : index
    %c0_96 = arith.constant 0 : index
    %c0_97 = arith.constant 0 : index
    %70 = vector.load %arg2[%c1_94, %c2_95, %c0_96, %c0_97] : memref<3x3x128x128xbf16, #tpu.memory_space<vmem>>, vector<1x1x128x128xbf16>
    %71 = vector.shape_cast %70 : vector<1x1x128x128xbf16> to vector<128x128xbf16>
    %cst_98 = arith.constant dense<0.000000e+00> : vector<256x128xf32>
    %72 = tpu.matmul %68, %71, %cst_98 {dimension_numbers = #tpu.dot_dimension_numbers<[1], [0], [0], [1], [0, 0, 1, 1], [], []>} : vector<256x128xbf16>, vector<128x128xbf16>, vector<256x128xf32> -> vector<256x128xf32>
    %73 = arith.addf %69, %72 : vector<256x128xf32>
    %c0_99 = arith.constant 0 : index
    %c0_100 = arith.constant 0 : index
    %74 = vector.load %arg8[%c0_99, %c0_100] : memref<256x128xf32, #tpu.memory_space<vmem>>, vector<256x128xf32>
    tpu.vector_store %arg8[%c0_99, %c0_100], %73 {strides = array<i32>} : memref<256x128xf32, #tpu.memory_space<vmem>>, vector<256x128xf32>,
    %c2_101 = arith.constant 2 : index
    %c0_102 = arith.constant 0 : index
    %c0_103 = arith.constant 0 : index
    %75 = vector.load %arg7[%c2_101, %c0_102, %c0_103] : memref<18x18x128xf32, #tpu.memory_space<vmem>>, vector<16x16x128xf32>
    %76 = arith.truncf %75 : vector<16x16x128xf32> to vector<16x16x128xbf16>
    %77 = vector.shape_cast %76 : vector<16x16x128xbf16> to vector<256x128xbf16>
    %c0_104 = arith.constant 0 : index
    %c0_105 = arith.constant 0 : index
    %78 = vector.load %arg8[%c0_104, %c0_105] : memref<256x128xf32, #tpu.memory_space<vmem>>, vector<256x128xf32>
    %c2_106 = arith.constant 2 : index
    %c0_107 = arith.constant 0 : index
    %c0_108 = arith.constant 0 : index
    %c0_109 = arith.constant 0 : index
    %79 = vector.load %arg2[%c2_106, %c0_107, %c0_108, %c0_109] : memref<3x3x128x128xbf16, #tpu.memory_space<vmem>>, vector<1x1x128x128xbf16>
    %80 = vector.shape_cast %79 : vector<1x1x128x128xbf16> to vector<128x128xbf16>
    %cst_110 = arith.constant dense<0.000000e+00> : vector<256x128xf32>
    %81 = tpu.matmul %77, %80, %cst_110 {dimension_numbers = #tpu.dot_dimension_numbers<[1], [0], [0], [1], [0, 0, 1, 1], [], []>} : vector<256x128xbf16>, vector<128x128xbf16>, vector<256x128xf32> -> vector<256x128xf32>
    %82 = arith.addf %78, %81 : vector<256x128xf32>
    %c0_111 = arith.constant 0 : index
    %c0_112 = arith.constant 0 : index
    %83 = vector.load %arg8[%c0_111, %c0_112] : memref<256x128xf32, #tpu.memory_space<vmem>>, vector<256x128xf32>
    tpu.vector_store %arg8[%c0_111, %c0_112], %82 {strides = array<i32>} : memref<256x128xf32, #tpu.memory_space<vmem>>, vector<256x128xf32>,
    %c2_113 = arith.constant 2 : index
    %c1_114 = arith.constant 1 : index
    %c0_115 = arith.constant 0 : index
    %84 = vector.load %arg7[%c2_113, %c1_114, %c0_115] : memref<18x18x128xf32, #tpu.memory_space<vmem>>, vector<16x16x128xf32>
    %85 = arith.truncf %84 : vector<16x16x128xf32> to vector<16x16x128xbf16>
    %86 = vector.shape_cast %85 : vector<16x16x128xbf16> to vector<256x128xbf16>
    %c0_116 = arith.constant 0 : index
    %c0_117 = arith.constant 0 : index
    %87 = vector.load %arg8[%c0_116, %c0_117] : memref<256x128xf32, #tpu.memory_space<vmem>>, vector<256x128xf32>
    %c2_118 = arith.constant 2 : index
    %c1_119 = arith.constant 1 : index
    %c0_120 = arith.constant 0 : index
    %c0_121 = arith.constant 0 : index
    %88 = vector.load %arg2[%c2_118, %c1_119, %c0_120, %c0_121] : memref<3x3x128x128xbf16, #tpu.memory_space<vmem>>, vector<1x1x128x128xbf16>
    %89 = vector.shape_cast %88 : vector<1x1x128x128xbf16> to vector<128x128xbf16>
    %cst_122 = arith.constant dense<0.000000e+00> : vector<256x128xf32>
    %90 = tpu.matmul %86, %89, %cst_122 {dimension_numbers = #tpu.dot_dimension_numbers<[1], [0], [0], [1], [0, 0, 1, 1], [], []>} : vector<256x128xbf16>, vector<128x128xbf16>, vector<256x128xf32> -> vector<256x128xf32>
    %91 = arith.addf %87, %90 : vector<256x128xf32>
    %c0_123 = arith.constant 0 : index
    %c0_124 = arith.constant 0 : index
    %92 = vector.load %arg8[%c0_123, %c0_124] : memref<256x128xf32, #tpu.memory_space<vmem>>, vector<256x128xf32>
    tpu.vector_store %arg8[%c0_123, %c0_124], %91 {strides = array<i32>} : memref<256x128xf32, #tpu.memory_space<vmem>>, vector<256x128xf32>,
    %c2_125 = arith.constant 2 : index
    %c2_126 = arith.constant 2 : index
    %c0_127 = arith.constant 0 : index
    %93 = vector.load %arg7[%c2_125, %c2_126, %c0_127] : memref<18x18x128xf32, #tpu.memory_space<vmem>>, vector<16x16x128xf32>
    %94 = arith.truncf %93 : vector<16x16x128xf32> to vector<16x16x128xbf16>
    %95 = vector.shape_cast %94 : vector<16x16x128xbf16> to vector<256x128xbf16>
    %c0_128 = arith.constant 0 : index
    %c0_129 = arith.constant 0 : index
    %96 = vector.load %arg8[%c0_128, %c0_129] : memref<256x128xf32, #tpu.memory_space<vmem>>, vector<256x128xf32>
    %c2_130 = arith.constant 2 : index
    %c2_131 = arith.constant 2 : index
    %c0_132 = arith.constant 0 : index
    %c0_133 = arith.constant 0 : index
    %97 = vector.load %arg2[%c2_130, %c2_131, %c0_132, %c0_133] : memref<3x3x128x128xbf16, #tpu.memory_space<vmem>>, vector<1x1x128x128xbf16>
    %98 = vector.shape_cast %97 : vector<1x1x128x128xbf16> to vector<128x128xbf16>
    %cst_134 = arith.constant dense<0.000000e+00> : vector<256x128xf32>
    %99 = tpu.matmul %95, %98, %cst_134 {dimension_numbers = #tpu.dot_dimension_numbers<[1], [0], [0], [1], [0, 0, 1, 1], [], []>} : vector<256x128xbf16>, vector<128x128xbf16>, vector<256x128xf32> -> vector<256x128xf32>
    %100 = arith.addf %96, %99 : vector<256x128xf32>
    %c0_135 = arith.constant 0 : index
    %c0_136 = arith.constant 0 : index
    %101 = vector.load %arg8[%c0_135, %c0_136] : memref<256x128xf32, #tpu.memory_space<vmem>>, vector<256x128xf32>
    tpu.vector_store %arg8[%c0_135, %c0_136], %100 {strides = array<i32>} : memref<256x128xf32, #tpu.memory_space<vmem>>, vector<256x128xf32>,
    %c0_137 = arith.constant 0 : index
    %c0_138 = arith.constant 0 : index
    %102 = vector.load %arg8[%c0_137, %c0_138] : memref<256x128xf32, #tpu.memory_space<vmem>>, vector<256x128xf32>
    %c0_139 = arith.constant 0 : index
    %c0_140 = arith.constant 0 : index
    %103 = vector.load %arg3[%c0_139, %c0_140] : memref<1x128xf32, #tpu.memory_space<vmem>>, vector<1x128xf32>
    %104 = vector.broadcast %103 : vector<1x128xf32> to vector<256x128xf32>
    %105 = arith.addf %102, %104 : vector<256x128xf32>
    %cst_141 = arith.constant dense<0.000000e+00> : vector<128xf32>
    %106 = vector.multi_reduction <add>, %105, %cst_141 [0] : vector<256x128xf32> to vector<128xf32>
    %107 = vector.shape_cast %106 : vector<128xf32> to vector<1x128xf32>
    %cst_142 = arith.constant 2.560000e+02 : f32
    %108 = vector.broadcast %cst_142 : f32 to vector<1x128xf32>
    %109 = arith.divf %107, %108 : vector<1x128xf32>
    %110 = vector.broadcast %109 : vector<1x128xf32> to vector<256x128xf32>
    %111 = arith.subf %105, %110 : vector<256x128xf32>
    %112 = arith.mulf %111, %111 : vector<256x128xf32>
    %cst_143 = arith.constant dense<0.000000e+00> : vector<128xf32>
    %113 = vector.multi_reduction <add>, %112, %cst_143 [0] : vector<256x128xf32> to vector<128xf32>
    %114 = vector.shape_cast %113 : vector<128xf32> to vector<1x128xf32>
    %cst_144 = arith.constant 2.560000e+02 : f32
    %115 = vector.broadcast %cst_144 : f32 to vector<1x128xf32>
    %116 = arith.divf %114, %115 : vector<1x128xf32>
    %117 = vector.broadcast %109 : vector<1x128xf32> to vector<256x128xf32>
    %118 = arith.subf %105, %117 : vector<256x128xf32>
    %cst_145 = arith.constant 9.99999974E-6 : f32
    %119 = vector.broadcast %cst_145 : f32 to vector<1x128xf32>
    %120 = arith.addf %116, %119 : vector<1x128xf32>
    %121 = math.rsqrt %120 : vector<1x128xf32>
    %122 = vector.broadcast %121 : vector<1x128xf32> to vector<256x128xf32>
    %123 = arith.mulf %118, %122 : vector<256x128xf32>
    %cst_146 = arith.constant 0.000000e+00 : f32
    %124 = vector.broadcast %cst_146 : f32 to vector<256x128xf32>
    %125 = arith.maximumf %123, %124 : vector<256x128xf32>
    %126 = vector.shape_cast %125 : vector<256x128xf32> to vector<16x16x128xf32>
    %c1_147 = arith.constant 1 : index
    %c1_148 = arith.constant 1 : index
    %c0_149 = arith.constant 0 : index
    %127 = vector.load %arg7[%c1_147, %c1_148, %c0_149] : memref<18x18x128xf32, #tpu.memory_space<vmem>>, vector<16x16x128xf32>
    tpu.vector_store %arg7[%c1_147, %c1_148, %c0_149], %126 {strides = array<i32>} : memref<18x18x128xf32, #tpu.memory_space<vmem>>, vector<16x16x128xf32>,
    %128 = vector.extract_strided_slice %126 {offsets = [1, 0, 0], sizes = [1, 16, 128], strides = [1, 1, 1]} : vector<16x16x128xf32> to vector<1x16x128xf32>
    %c0_150 = arith.constant 0 : index
    %c1_151 = arith.constant 1 : index
    %c0_152 = arith.constant 0 : index
    %129 = vector.load %arg7[%c0_150, %c1_151, %c0_152] : memref<18x18x128xf32, #tpu.memory_space<vmem>>, vector<1x16x128xf32>
    tpu.vector_store %arg7[%c0_150, %c1_151, %c0_152], %128 {strides = array<i32>} : memref<18x18x128xf32, #tpu.memory_space<vmem>>, vector<1x16x128xf32>,
    %130 = vector.extract_strided_slice %126 {offsets = [14, 0, 0], sizes = [1, 16, 128], strides = [1, 1, 1]} : vector<16x16x128xf32> to vector<1x16x128xf32>
    %c17_153 = arith.constant 17 : index
    %c1_154 = arith.constant 1 : index
    %c0_155 = arith.constant 0 : index
    %131 = vector.load %arg7[%c17_153, %c1_154, %c0_155] : memref<18x18x128xf32, #tpu.memory_space<vmem>>, vector<1x16x128xf32>
    tpu.vector_store %arg7[%c17_153, %c1_154, %c0_155], %130 {strides = array<i32>} : memref<18x18x128xf32, #tpu.memory_space<vmem>>, vector<1x16x128xf32>,
    %132 = vector.extract_strided_slice %126 {offsets = [0, 1, 0], sizes = [16, 1, 128], strides = [1, 1, 1]} : vector<16x16x128xf32> to vector<16x1x128xf32>
    %c1_156 = arith.constant 1 : index
    %c0_157 = arith.constant 0 : index
    %c0_158 = arith.constant 0 : index
    %133 = vector.load %arg7[%c1_156, %c0_157, %c0_158] : memref<18x18x128xf32, #tpu.memory_space<vmem>>, vector<16x1x128xf32>
    tpu.vector_store %arg7[%c1_156, %c0_157, %c0_158], %132 {strides = array<i32>} : memref<18x18x128xf32, #tpu.memory_space<vmem>>, vector<16x1x128xf32>,
    %134 = vector.extract_strided_slice %126 {offsets = [0, 14, 0], sizes = [16, 1, 128], strides = [1, 1, 1]} : vector<16x16x128xf32> to vector<16x1x128xf32>
    %c1_159 = arith.constant 1 : index
    %c17_160 = arith.constant 17 : index
    %c0_161 = arith.constant 0 : index
    %135 = vector.load %arg7[%c1_159, %c17_160, %c0_161] : memref<18x18x128xf32, #tpu.memory_space<vmem>>, vector<16x1x128xf32>
    tpu.vector_store %arg7[%c1_159, %c17_160, %c0_161], %134 {strides = array<i32>} : memref<18x18x128xf32, #tpu.memory_space<vmem>>, vector<16x1x128xf32>,
    %136 = vector.extract_strided_slice %126 {offsets = [1, 1, 0], sizes = [1, 1, 128], strides = [1, 1, 1]} : vector<16x16x128xf32> to vector<1x1x128xf32>
    %c0_162 = arith.constant 0 : index
    %c0_163 = arith.constant 0 : index
    %c0_164 = arith.constant 0 : index
    %137 = vector.load %arg7[%c0_162, %c0_163, %c0_164] : memref<18x18x128xf32, #tpu.memory_space<vmem>>, vector<1x1x128xf32>
    tpu.vector_store %arg7[%c0_162, %c0_163, %c0_164], %136 {strides = array<i32>} : memref<18x18x128xf32, #tpu.memory_space<vmem>>, vector<1x1x128xf32>,
    %138 = vector.extract_strided_slice %126 {offsets = [1, 14, 0], sizes = [1, 1, 128], strides = [1, 1, 1]} : vector<16x16x128xf32> to vector<1x1x128xf32>
    %c0_165 = arith.constant 0 : index
    %c17_166 = arith.constant 17 : index
    %c0_167 = arith.constant 0 : index
    %139 = vector.load %arg7[%c0_165, %c17_166, %c0_167] : memref<18x18x128xf32, #tpu.memory_space<vmem>>, vector<1x1x128xf32>
    tpu.vector_store %arg7[%c0_165, %c17_166, %c0_167], %138 {strides = array<i32>} : memref<18x18x128xf32, #tpu.memory_space<vmem>>, vector<1x1x128xf32>,
    %140 = vector.extract_strided_slice %126 {offsets = [14, 1, 0], sizes = [1, 1, 128], strides = [1, 1, 1]} : vector<16x16x128xf32> to vector<1x1x128xf32>
    %c17_168 = arith.constant 17 : index
    %c0_169 = arith.constant 0 : index
    %c0_170 = arith.constant 0 : index
    %141 = vector.load %arg7[%c17_168, %c0_169, %c0_170] : memref<18x18x128xf32, #tpu.memory_space<vmem>>, vector<1x1x128xf32>
    tpu.vector_store %arg7[%c17_168, %c0_169, %c0_170], %140 {strides = array<i32>} : memref<18x18x128xf32, #tpu.memory_space<vmem>>, vector<1x1x128xf32>,
    %142 = vector.extract_strided_slice %126 {offsets = [14, 14, 0], sizes = [1, 1, 128], strides = [1, 1, 1]} : vector<16x16x128xf32> to vector<1x1x128xf32>
    %c17_171 = arith.constant 17 : index
    %c17_172 = arith.constant 17 : index
    %c0_173 = arith.constant 0 : index
    %143 = vector.load %arg7[%c17_171, %c17_172, %c0_173] : memref<18x18x128xf32, #tpu.memory_space<vmem>>, vector<1x1x128xf32>
    tpu.vector_store %arg7[%c17_171, %c17_172, %c0_173], %142 {strides = array<i32>} : memref<18x18x128xf32, #tpu.memory_space<vmem>>, vector<1x1x128xf32>,
    %cst_174 = arith.constant 0.000000e+00 : f32
    %144 = vector.broadcast %cst_174 : f32 to vector<256x128xf32>
    %c0_175 = arith.constant 0 : index
    %c0_176 = arith.constant 0 : index
    %145 = vector.load %arg8[%c0_175, %c0_176] : memref<256x128xf32, #tpu.memory_space<vmem>>, vector<256x128xf32>
    tpu.vector_store %arg8[%c0_175, %c0_176], %144 {strides = array<i32>} : memref<256x128xf32, #tpu.memory_space<vmem>>, vector<256x128xf32>,
    %c0_177 = arith.constant 0 : index
    %c0_178 = arith.constant 0 : index
    %c0_179 = arith.constant 0 : index
    %146 = vector.load %arg7[%c0_177, %c0_178, %c0_179] : memref<18x18x128xf32, #tpu.memory_space<vmem>>, vector<16x16x128xf32>
    %147 = arith.truncf %146 : vector<16x16x128xf32> to vector<16x16x128xbf16>
    %148 = vector.shape_cast %147 : vector<16x16x128xbf16> to vector<256x128xbf16>
    %c0_180 = arith.constant 0 : index
    %c0_181 = arith.constant 0 : index
    %149 = vector.load %arg8[%c0_180, %c0_181] : memref<256x128xf32, #tpu.memory_space<vmem>>, vector<256x128xf32>
    %c0_182 = arith.constant 0 : index
    %c0_183 = arith.constant 0 : index
    %c0_184 = arith.constant 0 : index
    %c0_185 = arith.constant 0 : index
    %150 = vector.load %arg4[%c0_182, %c0_183, %c0_184, %c0_185] : memref<3x3x128x128xbf16, #tpu.memory_space<vmem>>, vector<1x1x128x128xbf16>
    %151 = vector.shape_cast %150 : vector<1x1x128x128xbf16> to vector<128x128xbf16>
    %cst_186 = arith.constant dense<0.000000e+00> : vector<256x128xf32>
    %152 = tpu.matmul %148, %151, %cst_186 {dimension_numbers = #tpu.dot_dimension_numbers<[1], [0], [0], [1], [0, 0, 1, 1], [], []>} : vector<256x128xbf16>, vector<128x128xbf16>, vector<256x128xf32> -> vector<256x128xf32>
    %153 = arith.addf %149, %152 : vector<256x128xf32>
    %c0_187 = arith.constant 0 : index
    %c0_188 = arith.constant 0 : index
    %154 = vector.load %arg8[%c0_187, %c0_188] : memref<256x128xf32, #tpu.memory_space<vmem>>, vector<256x128xf32>
    tpu.vector_store %arg8[%c0_187, %c0_188], %153 {strides = array<i32>} : memref<256x128xf32, #tpu.memory_space<vmem>>, vector<256x128xf32>,
    %c0_189 = arith.constant 0 : index
    %c1_190 = arith.constant 1 : index
    %c0_191 = arith.constant 0 : index
    %155 = vector.load %arg7[%c0_189, %c1_190, %c0_191] : memref<18x18x128xf32, #tpu.memory_space<vmem>>, vector<16x16x128xf32>
    %156 = arith.truncf %155 : vector<16x16x128xf32> to vector<16x16x128xbf16>
    %157 = vector.shape_cast %156 : vector<16x16x128xbf16> to vector<256x128xbf16>
    %c0_192 = arith.constant 0 : index
    %c0_193 = arith.constant 0 : index
    %158 = vector.load %arg8[%c0_192, %c0_193] : memref<256x128xf32, #tpu.memory_space<vmem>>, vector<256x128xf32>
    %c0_194 = arith.constant 0 : index
    %c1_195 = arith.constant 1 : index
    %c0_196 = arith.constant 0 : index
    %c0_197 = arith.constant 0 : index
    %159 = vector.load %arg4[%c0_194, %c1_195, %c0_196, %c0_197] : memref<3x3x128x128xbf16, #tpu.memory_space<vmem>>, vector<1x1x128x128xbf16>
    %160 = vector.shape_cast %159 : vector<1x1x128x128xbf16> to vector<128x128xbf16>
    %cst_198 = arith.constant dense<0.000000e+00> : vector<256x128xf32>
    %161 = tpu.matmul %157, %160, %cst_198 {dimension_numbers = #tpu.dot_dimension_numbers<[1], [0], [0], [1], [0, 0, 1, 1], [], []>} : vector<256x128xbf16>, vector<128x128xbf16>, vector<256x128xf32> -> vector<256x128xf32>
    %162 = arith.addf %158, %161 : vector<256x128xf32>
    %c0_199 = arith.constant 0 : index
    %c0_200 = arith.constant 0 : index
    %163 = vector.load %arg8[%c0_199, %c0_200] : memref<256x128xf32, #tpu.memory_space<vmem>>, vector<256x128xf32>
    tpu.vector_store %arg8[%c0_199, %c0_200], %162 {strides = array<i32>} : memref<256x128xf32, #tpu.memory_space<vmem>>, vector<256x128xf32>,
    %c0_201 = arith.constant 0 : index
    %c2_202 = arith.constant 2 : index
    %c0_203 = arith.constant 0 : index
    %164 = vector.load %arg7[%c0_201, %c2_202, %c0_203] : memref<18x18x128xf32, #tpu.memory_space<vmem>>, vector<16x16x128xf32>
    %165 = arith.truncf %164 : vector<16x16x128xf32> to vector<16x16x128xbf16>
    %166 = vector.shape_cast %165 : vector<16x16x128xbf16> to vector<256x128xbf16>
    %c0_204 = arith.constant 0 : index
    %c0_205 = arith.constant 0 : index
    %167 = vector.load %arg8[%c0_204, %c0_205] : memref<256x128xf32, #tpu.memory_space<vmem>>, vector<256x128xf32>
    %c0_206 = arith.constant 0 : index
    %c2_207 = arith.constant 2 : index
    %c0_208 = arith.constant 0 : index
    %c0_209 = arith.constant 0 : index
    %168 = vector.load %arg4[%c0_206, %c2_207, %c0_208, %c0_209] : memref<3x3x128x128xbf16, #tpu.memory_space<vmem>>, vector<1x1x128x128xbf16>
    %169 = vector.shape_cast %168 : vector<1x1x128x128xbf16> to vector<128x128xbf16>
    %cst_210 = arith.constant dense<0.000000e+00> : vector<256x128xf32>
    %170 = tpu.matmul %166, %169, %cst_210 {dimension_numbers = #tpu.dot_dimension_numbers<[1], [0], [0], [1], [0, 0, 1, 1], [], []>} : vector<256x128xbf16>, vector<128x128xbf16>, vector<256x128xf32> -> vector<256x128xf32>
    %171 = arith.addf %167, %170 : vector<256x128xf32>
    %c0_211 = arith.constant 0 : index
    %c0_212 = arith.constant 0 : index
    %172 = vector.load %arg8[%c0_211, %c0_212] : memref<256x128xf32, #tpu.memory_space<vmem>>, vector<256x128xf32>
    tpu.vector_store %arg8[%c0_211, %c0_212], %171 {strides = array<i32>} : memref<256x128xf32, #tpu.memory_space<vmem>>, vector<256x128xf32>,
    %c1_213 = arith.constant 1 : index
    %c0_214 = arith.constant 0 : index
    %c0_215 = arith.constant 0 : index
    %173 = vector.load %arg7[%c1_213, %c0_214, %c0_215] : memref<18x18x128xf32, #tpu.memory_space<vmem>>, vector<16x16x128xf32>
    %174 = arith.truncf %173 : vector<16x16x128xf32> to vector<16x16x128xbf16>
    %175 = vector.shape_cast %174 : vector<16x16x128xbf16> to vector<256x128xbf16>
    %c0_216 = arith.constant 0 : index
    %c0_217 = arith.constant 0 : index
    %176 = vector.load %arg8[%c0_216, %c0_217] : memref<256x128xf32, #tpu.memory_space<vmem>>, vector<256x128xf32>
    %c1_218 = arith.constant 1 : index
    %c0_219 = arith.constant 0 : index
    %c0_220 = arith.constant 0 : index
    %c0_221 = arith.constant 0 : index
    %177 = vector.load %arg4[%c1_218, %c0_219, %c0_220, %c0_221] : memref<3x3x128x128xbf16, #tpu.memory_space<vmem>>, vector<1x1x128x128xbf16>
    %178 = vector.shape_cast %177 : vector<1x1x128x128xbf16> to vector<128x128xbf16>
    %cst_222 = arith.constant dense<0.000000e+00> : vector<256x128xf32>
    %179 = tpu.matmul %175, %178, %cst_222 {dimension_numbers = #tpu.dot_dimension_numbers<[1], [0], [0], [1], [0, 0, 1, 1], [], []>} : vector<256x128xbf16>, vector<128x128xbf16>, vector<256x128xf32> -> vector<256x128xf32>
    %180 = arith.addf %176, %179 : vector<256x128xf32>
    %c0_223 = arith.constant 0 : index
    %c0_224 = arith.constant 0 : index
    %181 = vector.load %arg8[%c0_223, %c0_224] : memref<256x128xf32, #tpu.memory_space<vmem>>, vector<256x128xf32>
    tpu.vector_store %arg8[%c0_223, %c0_224], %180 {strides = array<i32>} : memref<256x128xf32, #tpu.memory_space<vmem>>, vector<256x128xf32>,
    %c1_225 = arith.constant 1 : index
    %c1_226 = arith.constant 1 : index
    %c0_227 = arith.constant 0 : index
    %182 = vector.load %arg7[%c1_225, %c1_226, %c0_227] : memref<18x18x128xf32, #tpu.memory_space<vmem>>, vector<16x16x128xf32>
    %183 = arith.truncf %182 : vector<16x16x128xf32> to vector<16x16x128xbf16>
    %184 = vector.shape_cast %183 : vector<16x16x128xbf16> to vector<256x128xbf16>
    %c0_228 = arith.constant 0 : index
    %c0_229 = arith.constant 0 : index
    %185 = vector.load %arg8[%c0_228, %c0_229] : memref<256x128xf32, #tpu.memory_space<vmem>>, vector<256x128xf32>
    %c1_230 = arith.constant 1 : index
    %c1_231 = arith.constant 1 : index
    %c0_232 = arith.constant 0 : index
    %c0_233 = arith.constant 0 : index
    %186 = vector.load %arg4[%c1_230, %c1_231, %c0_232, %c0_233] : memref<3x3x128x128xbf16, #tpu.memory_space<vmem>>, vector<1x1x128x128xbf16>
    %187 = vector.shape_cast %186 : vector<1x1x128x128xbf16> to vector<128x128xbf16>
    %cst_234 = arith.constant dense<0.000000e+00> : vector<256x128xf32>
    %188 = tpu.matmul %184, %187, %cst_234 {dimension_numbers = #tpu.dot_dimension_numbers<[1], [0], [0], [1], [0, 0, 1, 1], [], []>} : vector<256x128xbf16>, vector<128x128xbf16>, vector<256x128xf32> -> vector<256x128xf32>
    %189 = arith.addf %185, %188 : vector<256x128xf32>
    %c0_235 = arith.constant 0 : index
    %c0_236 = arith.constant 0 : index
    %190 = vector.load %arg8[%c0_235, %c0_236] : memref<256x128xf32, #tpu.memory_space<vmem>>, vector<256x128xf32>
    tpu.vector_store %arg8[%c0_235, %c0_236], %189 {strides = array<i32>} : memref<256x128xf32, #tpu.memory_space<vmem>>, vector<256x128xf32>,
    %c1_237 = arith.constant 1 : index
    %c2_238 = arith.constant 2 : index
    %c0_239 = arith.constant 0 : index
    %191 = vector.load %arg7[%c1_237, %c2_238, %c0_239] : memref<18x18x128xf32, #tpu.memory_space<vmem>>, vector<16x16x128xf32>
    %192 = arith.truncf %191 : vector<16x16x128xf32> to vector<16x16x128xbf16>
    %193 = vector.shape_cast %192 : vector<16x16x128xbf16> to vector<256x128xbf16>
    %c0_240 = arith.constant 0 : index
    %c0_241 = arith.constant 0 : index
    %194 = vector.load %arg8[%c0_240, %c0_241] : memref<256x128xf32, #tpu.memory_space<vmem>>, vector<256x128xf32>
    %c1_242 = arith.constant 1 : index
    %c2_243 = arith.constant 2 : index
    %c0_244 = arith.constant 0 : index
    %c0_245 = arith.constant 0 : index
    %195 = vector.load %arg4[%c1_242, %c2_243, %c0_244, %c0_245] : memref<3x3x128x128xbf16, #tpu.memory_space<vmem>>, vector<1x1x128x128xbf16>
    %196 = vector.shape_cast %195 : vector<1x1x128x128xbf16> to vector<128x128xbf16>
    %cst_246 = arith.constant dense<0.000000e+00> : vector<256x128xf32>
    %197 = tpu.matmul %193, %196, %cst_246 {dimension_numbers = #tpu.dot_dimension_numbers<[1], [0], [0], [1], [0, 0, 1, 1], [], []>} : vector<256x128xbf16>, vector<128x128xbf16>, vector<256x128xf32> -> vector<256x128xf32>
    %198 = arith.addf %194, %197 : vector<256x128xf32>
    %c0_247 = arith.constant 0 : index
    %c0_248 = arith.constant 0 : index
    %199 = vector.load %arg8[%c0_247, %c0_248] : memref<256x128xf32, #tpu.memory_space<vmem>>, vector<256x128xf32>
    tpu.vector_store %arg8[%c0_247, %c0_248], %198 {strides = array<i32>} : memref<256x128xf32, #tpu.memory_space<vmem>>, vector<256x128xf32>,
    %c2_249 = arith.constant 2 : index
    %c0_250 = arith.constant 0 : index
    %c0_251 = arith.constant 0 : index
    %200 = vector.load %arg7[%c2_249, %c0_250, %c0_251] : memref<18x18x128xf32, #tpu.memory_space<vmem>>, vector<16x16x128xf32>
    %201 = arith.truncf %200 : vector<16x16x128xf32> to vector<16x16x128xbf16>
    %202 = vector.shape_cast %201 : vector<16x16x128xbf16> to vector<256x128xbf16>
    %c0_252 = arith.constant 0 : index
    %c0_253 = arith.constant 0 : index
    %203 = vector.load %arg8[%c0_252, %c0_253] : memref<256x128xf32, #tpu.memory_space<vmem>>, vector<256x128xf32>
    %c2_254 = arith.constant 2 : index
    %c0_255 = arith.constant 0 : index
    %c0_256 = arith.constant 0 : index
    %c0_257 = arith.constant 0 : index
    %204 = vector.load %arg4[%c2_254, %c0_255, %c0_256, %c0_257] : memref<3x3x128x128xbf16, #tpu.memory_space<vmem>>, vector<1x1x128x128xbf16>
    %205 = vector.shape_cast %204 : vector<1x1x128x128xbf16> to vector<128x128xbf16>
    %cst_258 = arith.constant dense<0.000000e+00> : vector<256x128xf32>
    %206 = tpu.matmul %202, %205, %cst_258 {dimension_numbers = #tpu.dot_dimension_numbers<[1], [0], [0], [1], [0, 0, 1, 1], [], []>} : vector<256x128xbf16>, vector<128x128xbf16>, vector<256x128xf32> -> vector<256x128xf32>
    %207 = arith.addf %203, %206 : vector<256x128xf32>
    %c0_259 = arith.constant 0 : index
    %c0_260 = arith.constant 0 : index
    %208 = vector.load %arg8[%c0_259, %c0_260] : memref<256x128xf32, #tpu.memory_space<vmem>>, vector<256x128xf32>
    tpu.vector_store %arg8[%c0_259, %c0_260], %207 {strides = array<i32>} : memref<256x128xf32, #tpu.memory_space<vmem>>, vector<256x128xf32>,
    %c2_261 = arith.constant 2 : index
    %c1_262 = arith.constant 1 : index
    %c0_263 = arith.constant 0 : index
    %209 = vector.load %arg7[%c2_261, %c1_262, %c0_263] : memref<18x18x128xf32, #tpu.memory_space<vmem>>, vector<16x16x128xf32>
    %210 = arith.truncf %209 : vector<16x16x128xf32> to vector<16x16x128xbf16>
    %211 = vector.shape_cast %210 : vector<16x16x128xbf16> to vector<256x128xbf16>
    %c0_264 = arith.constant 0 : index
    %c0_265 = arith.constant 0 : index
    %212 = vector.load %arg8[%c0_264, %c0_265] : memref<256x128xf32, #tpu.memory_space<vmem>>, vector<256x128xf32>
    %c2_266 = arith.constant 2 : index
    %c1_267 = arith.constant 1 : index
    %c0_268 = arith.constant 0 : index
    %c0_269 = arith.constant 0 : index
    %213 = vector.load %arg4[%c2_266, %c1_267, %c0_268, %c0_269] : memref<3x3x128x128xbf16, #tpu.memory_space<vmem>>, vector<1x1x128x128xbf16>
    %214 = vector.shape_cast %213 : vector<1x1x128x128xbf16> to vector<128x128xbf16>
    %cst_270 = arith.constant dense<0.000000e+00> : vector<256x128xf32>
    %215 = tpu.matmul %211, %214, %cst_270 {dimension_numbers = #tpu.dot_dimension_numbers<[1], [0], [0], [1], [0, 0, 1, 1], [], []>} : vector<256x128xbf16>, vector<128x128xbf16>, vector<256x128xf32> -> vector<256x128xf32>
    %216 = arith.addf %212, %215 : vector<256x128xf32>
    %c0_271 = arith.constant 0 : index
    %c0_272 = arith.constant 0 : index
    %217 = vector.load %arg8[%c0_271, %c0_272] : memref<256x128xf32, #tpu.memory_space<vmem>>, vector<256x128xf32>
    tpu.vector_store %arg8[%c0_271, %c0_272], %216 {strides = array<i32>} : memref<256x128xf32, #tpu.memory_space<vmem>>, vector<256x128xf32>,
    %c2_273 = arith.constant 2 : index
    %c2_274 = arith.constant 2 : index
    %c0_275 = arith.constant 0 : index
    %218 = vector.load %arg7[%c2_273, %c2_274, %c0_275] : memref<18x18x128xf32, #tpu.memory_space<vmem>>, vector<16x16x128xf32>
    %219 = arith.truncf %218 : vector<16x16x128xf32> to vector<16x16x128xbf16>
    %220 = vector.shape_cast %219 : vector<16x16x128xbf16> to vector<256x128xbf16>
    %c0_276 = arith.constant 0 : index
    %c0_277 = arith.constant 0 : index
    %221 = vector.load %arg8[%c0_276, %c0_277] : memref<256x128xf32, #tpu.memory_space<vmem>>, vector<256x128xf32>
    %c2_278 = arith.constant 2 : index
    %c2_279 = arith.constant 2 : index
    %c0_280 = arith.constant 0 : index
    %c0_281 = arith.constant 0 : index
    %222 = vector.load %arg4[%c2_278, %c2_279, %c0_280, %c0_281] : memref<3x3x128x128xbf16, #tpu.memory_space<vmem>>, vector<1x1x128x128xbf16>
    %223 = vector.shape_cast %222 : vector<1x1x128x128xbf16> to vector<128x128xbf16>
    %cst_282 = arith.constant dense<0.000000e+00> : vector<256x128xf32>
    %224 = tpu.matmul %220, %223, %cst_282 {dimension_numbers = #tpu.dot_dimension_numbers<[1], [0], [0], [1], [0, 0, 1, 1], [], []>} : vector<256x128xbf16>, vector<128x128xbf16>, vector<256x128xf32> -> vector<256x128xf32>
    %225 = arith.addf %221, %224 : vector<256x128xf32>
    %c0_283 = arith.constant 0 : index
    %c0_284 = arith.constant 0 : index
    %226 = vector.load %arg8[%c0_283, %c0_284] : memref<256x128xf32, #tpu.memory_space<vmem>>, vector<256x128xf32>
    tpu.vector_store %arg8[%c0_283, %c0_284], %225 {strides = array<i32>} : memref<256x128xf32, #tpu.memory_space<vmem>>, vector<256x128xf32>,
    %c0_285 = arith.constant 0 : index
    %c0_286 = arith.constant 0 : index
    %227 = vector.load %arg8[%c0_285, %c0_286] : memref<256x128xf32, #tpu.memory_space<vmem>>, vector<256x128xf32>
    %c0_287 = arith.constant 0 : index
    %c0_288 = arith.constant 0 : index
    %228 = vector.load %arg5[%c0_287, %c0_288] : memref<1x128xf32, #tpu.memory_space<vmem>>, vector<1x128xf32>
    %229 = vector.broadcast %228 : vector<1x128xf32> to vector<256x128xf32>
    %230 = arith.addf %227, %229 : vector<256x128xf32>
    %cst_289 = arith.constant dense<0.000000e+00> : vector<128xf32>
    %231 = vector.multi_reduction <add>, %230, %cst_289 [0] : vector<256x128xf32> to vector<128xf32>
    %232 = vector.shape_cast %231 : vector<128xf32> to vector<1x128xf32>
    %cst_290 = arith.constant 2.560000e+02 : f32
    %233 = vector.broadcast %cst_290 : f32 to vector<1x128xf32>
    %234 = arith.divf %232, %233 : vector<1x128xf32>
    %235 = vector.broadcast %234 : vector<1x128xf32> to vector<256x128xf32>
    %236 = arith.subf %230, %235 : vector<256x128xf32>
    %237 = arith.mulf %236, %236 : vector<256x128xf32>
    %cst_291 = arith.constant dense<0.000000e+00> : vector<128xf32>
    %238 = vector.multi_reduction <add>, %237, %cst_291 [0] : vector<256x128xf32> to vector<128xf32>
    %239 = vector.shape_cast %238 : vector<128xf32> to vector<1x128xf32>
    %cst_292 = arith.constant 2.560000e+02 : f32
    %240 = vector.broadcast %cst_292 : f32 to vector<1x128xf32>
    %241 = arith.divf %239, %240 : vector<1x128xf32>
    %242 = vector.broadcast %234 : vector<1x128xf32> to vector<256x128xf32>
    %243 = arith.subf %230, %242 : vector<256x128xf32>
    %cst_293 = arith.constant 9.99999974E-6 : f32
    %244 = vector.broadcast %cst_293 : f32 to vector<1x128xf32>
    %245 = arith.addf %241, %244 : vector<1x128xf32>
    %246 = math.rsqrt %245 : vector<1x128xf32>
    %247 = vector.broadcast %246 : vector<1x128xf32> to vector<256x128xf32>
    %248 = arith.mulf %243, %247 : vector<256x128xf32>
    %249 = vector.shape_cast %248 : vector<256x128xf32> to vector<16x16x128xf32>
    %c0_294 = arith.constant 0 : index
    %c0_295 = arith.constant 0 : index
    %c0_296 = arith.constant 0 : index
    %c0_297 = arith.constant 0 : index
    %250 = vector.load %arg1[%c0_294, %c0_295, %c0_296, %c0_297] : memref<1x16x16x128xf32, #tpu.memory_space<vmem>>, vector<1x16x16x128xf32>
    %251 = vector.shape_cast %250 : vector<1x16x16x128xf32> to vector<16x16x128xf32>
    %252 = arith.addf %251, %249 : vector<16x16x128xf32>
    %c0_298 = arith.constant 0 : index
    %c0_299 = arith.constant 0 : index
    %c0_300 = arith.constant 0 : index
    %c0_301 = arith.constant 0 : index
    %253 = vector.load %arg6[%c0_298, %c0_299, %c0_300, %c0_301] : memref<1x16x16x128xf32, #tpu.memory_space<vmem>>, vector<1x16x16x128xf32>
    %254 = vector.shape_cast %253 : vector<1x16x16x128xf32> to vector<16x16x128xf32>
    %255 = vector.shape_cast %252 : vector<16x16x128xf32> to vector<1x16x16x128xf32>
    tpu.vector_store %arg6[%c0_298, %c0_299, %c0_300, %c0_301], %255 {strides = array<i32>} : memref<1x16x16x128xf32, #tpu.memory_space<vmem>>, vector<1x16x16x128xf32>,
    return
  }
  func.func @transform_0(%arg0: i32) -> (i32, i32, i32, i32) {
    %c0_i32 = arith.constant 0 : i32
    %c0_i32_0 = arith.constant 0 : i32
    %c0_i32_1 = arith.constant 0 : i32
    %c0_i32_2 = arith.constant 0 : i32
    return %arg0, %c0_i32, %c0_i32_0, %c0_i32_1 : i32, i32, i32, i32
  }
  func.func @transform_1(%arg0: i32) -> (i32, i32, i32, i32) {
    %c0_i32 = arith.constant 0 : i32
    %c0_i32_0 = arith.constant 0 : i32
    %c0_i32_1 = arith.constant 0 : i32
    %c0_i32_2 = arith.constant 0 : i32
    %c0_i32_3 = arith.constant 0 : i32
    return %c0_i32, %c0_i32_0, %c0_i32_1, %c0_i32_2 : i32, i32, i32, i32
  }
  func.func @transform_2(%arg0: i32) -> (i32, i32) {
    %c0_i32 = arith.constant 0 : i32
    %c0_i32_0 = arith.constant 0 : i32
    %c0_i32_1 = arith.constant 0 : i32
    return %c0_i32, %c0_i32_0 : i32, i32
  }
  func.func @transform_3(%arg0: i32) -> (i32, i32, i32, i32) {
    %c0_i32 = arith.constant 0 : i32
    %c0_i32_0 = arith.constant 0 : i32
    %c0_i32_1 = arith.constant 0 : i32
    %c0_i32_2 = arith.constant 0 : i32
    %c0_i32_3 = arith.constant 0 : i32
    return %c0_i32, %c0_i32_0, %c0_i32_1, %c0_i32_2 : i32, i32, i32, i32
  }
  func.func @transform_4(%arg0: i32) -> (i32, i32) {
    %c0_i32 = arith.constant 0 : i32
    %c0_i32_0 = arith.constant 0 : i32
    %c0_i32_1 = arith.constant 0 : i32
    return %c0_i32, %c0_i32_0 : i32, i32
  }
  func.func @transform_5(%arg0: i32) -> (i32, i32, i32, i32) {
    %c0_i32 = arith.constant 0 : i32
    %c0_i32_0 = arith.constant 0 : i32
    %c0_i32_1 = arith.constant 0 : i32
    %c0_i32_2 = arith.constant 0 : i32
    return %arg0, %c0_i32, %c0_i32_0, %c0_i32_1 : i32, i32, i32, i32
  }
}

</mosaic_0001>

<llo_original>
// kernel: residual_block_forward.1
$region0: #{residual_block_forward.1}
  #allocation0 [shape = 'u32[]', space=smem, size = 0x4, offset = 0x4, fixed_abs, tag = 'smem constant byte address 0x4 - core index']
  #allocation1 [shape = 'u32[144,128]{1,0:T(1,128)}', space=vmem, size = 0x12000, scoped, tag = 'internal scratch']
  #allocation2 [shape = 'f32[18,18,128]{2,1,0:T(8,128)}', space=vmem, size = 0x36000, scoped, tag = 'scratch operand']
  #allocation3 [shape = 'f32[256,128]{1,0:T(8,128)}', space=vmem, size = 0x20000, scoped, tag = 'scratch operand']
  %s0 = inlined_call_operand.hbm [shape: f32[2,16,16,128], index: 0, kind: input, shape index: {}]
  %s1 = inlined_call_operand.hbm [shape: bf16[3,3,128,128], index: 1, kind: input, shape index: {}]
  %s2 = inlined_call_operand.hbm [shape: f32[1,128], index: 2, kind: input, shape index: {}]
  %s3 = inlined_call_operand.hbm [shape: bf16[3,3,128,128], index: 3, kind: input, shape index: {}]
  %s4 = inlined_call_operand.hbm [shape: f32[1,128], index: 4, kind: input, shape index: {}]
  %s5 = inlined_call_operand.hbm [shape: f32[2,16,16,128], index: 5, kind: output, shape index: {}]
  %s6 = sld [smem:[#allocation0]]
  $region73: #{residual_block_forward.1} parent=0
    _
  %s8 = ssub.s32 1, %s6
  %s9 = scalar_select 0, %s8, %s6
  $region1: #{residual_block_forward.1} parent=0
    #allocation4 [shape = 'u8[262144]{0}', space=vmem, size = 0x40000, scoped, tag = 'input window, operand 0']
    #allocation5 [shape = 's32[2]{0}', space=sflag, size = 0x8, scoped, tag = 'scoped memory for residual_block_forward.1']
    #allocation6 [shape = 's32[2]{0}', space=sflag, size = 0x8, scoped, tag = 'scoped memory for residual_block_forward.1']
    #allocation7 [shape = 'u8[294912]{0}', space=vmem, size = 0x48000, scoped, tag = 'input window, operand 1, single buffered']
    #allocation8 [shape = 's32[1]{0}', space=sflag, size = 0x4, scoped, tag = 'scoped memory for residual_block_forward.1']
    #allocation9 [shape = 'u8[512]{0}', space=vmem, size = 0x400, scoped, tag = 'input window, operand 2, single buffered']
    #allocation10 [shape = 'u8[294912]{0}', space=vmem, size = 0x48000, scoped, tag = 'input window, operand 3, single buffered']
    #allocation11 [shape = 's32[1]{0}', space=sflag, size = 0x4, scoped, tag = 'scoped memory for residual_block_forward.1']
    #allocation12 [shape = 'u8[512]{0}', space=vmem, size = 0x400, scoped, tag = 'input window, operand 4, single buffered']
    #allocation13 [shape = 'u8[262144]{0}', space=vmem, size = 0x40000, scoped, tag = 'output window, operand 0']
    %10 = vsyncpa [#allocation5], 0
    %s11 = scalar_lea.sflag [#allocation5], 1
    %12 = vsyncpa %s11, 0
    %13 = vsyncpa [#allocation8], 0
    %14 = vsyncpa [#allocation11], 0
    %15 = vsyncpa [#allocation6], 0
    %s16 = scalar_lea.sflag [#allocation6], 1
    %17 = vsyncpa %s16, 0
    loop: start=0, step=1, limit=4
    $region2: #{residual_block_forward.1} parent=1 // loop_pre_header
      _
    $region3: #{residual_block_forward.1} parent=1 // loop_header
      %s19 = sphi 0, %s23
      %p20 = scmp.ge.s32.totalorder %s19, 4
      %s29 = sphi 0, %s31
      %s32 = sphi 0, %s29
      %s33 = sphi 0, %s32
      %s49 = sphi 0, %s33
      %s53 = sphi 0, %s53
      %s55 = sphi 0, %s53
      %s56 = sphi 0, %s55
      %s70 = sphi 0, %s56
      %s74 = sphi 0, %s74
      %s76 = sphi 0, %s74
      %s77 = sphi 0, %s76
      %s91 = sphi 0, %s77
      %s95 = sphi 0, %s95
      %s97 = sphi 0, %s95
      %s98 = sphi 0, %s97
      %s112 = sphi 0, %s98
      %s116 = sphi 0, %s116
      %s118 = sphi 0, %s116
      %s119 = sphi 0, %s118
      %s133 = sphi 0, %s119
      %s139 = sphi 0, %s141
      %s142 = sphi 0, %s139
      %s143 = sphi 0, %s142
      %s159 = sphi 0, %s143
    $region4: #{residual_block_forward.1} parent=1 // loop_header_branch
      %22 = sbr.rel (%p20) target = $region8
    $region5: #{residual_block_forward.1} parent=1 // loop_body
      %s24 = ssub.s32 %s19, 1
      %s25 = ssub.s32 %s19, 2
      %s26 = sadd.s32 %s19, 1
      %s27 = ssub.s32 %s19, %s26
      %p28 = scmp.eq.s32.totalorder %s27, 0
      %s30 = sadd.s32 %s29, 1
      %s31 = scalar_select %p28, %s29, %s30
      %p34 = pneg %p28
      %p35 = scmp.eq.s32.totalorder %s19, 1
      %p36 = por %p34, %p35
      %p37 = scmp.ne.s32.totalorder %s29, %s32
      %p38 = scmp.eq.s32.totalorder %s19, 0
      %p39 = por %p37, %p38
      %p40 = scmp.ne.s32.totalorder %s29, %s32
      %p41 = scmp.eq.s32.totalorder %s24, 1
      %p42 = por %p40, %p41
      %p43 = scmp.ne.s32.totalorder %s32, %s33
      %p44 = scmp.eq.s32.totalorder %s24, 0
      %p45 = por %p43, %p44
      %p46 = scmp.ne.s32.totalorder %s32, %s33
      %p47 = scmp.eq.s32.totalorder %s25, 1
      %p48 = por %p46, %p47
      %p50 = scmp.ne.s32.totalorder %s33, %s49
      %p51 = scmp.eq.s32.totalorder %s25, 0
      %p52 = por %p50, %p51
      %s54 = sadd.s32 %s53, 1
      %p57 = scmp.eq.s32.totalorder %s19, 1
      %p58 = scmp.ne.s32.totalorder %s53, %s55
      %p59 = scmp.eq.s32.totalorder %s19, 0
      %p60 = por %p58, %p59
      %p61 = scmp.ne.s32.totalorder %s53, %s55
      %p62 = scmp.eq.s32.totalorder %s24, 1
      %p63 = por %p61, %p62
      %p64 = scmp.ne.s32.totalorder %s55, %s56
      %p65 = scmp.eq.s32.totalorder %s24, 0
      %p66 = por %p64, %p65
      %p67 = scmp.ne.s32.totalorder %s55, %s56
      %p68 = scmp.eq.s32.totalorder %s25, 1
      %p69 = por %p67, %p68
      %p71 = scmp.ne.s32.totalorder %s56, %s70
      %p72 = scmp.eq.s32.totalorder %s25, 0
      %p73 = por %p71, %p72
      %s75 = sadd.s32 %s74, 1
      %p78 = scmp.eq.s32.totalorder %s19, 1
      %p79 = scmp.ne.s32.totalorder %s74, %s76
      %p80 = scmp.eq.s32.totalorder %s19, 0
      %p81 = por %p79, %p80
      %p82 = scmp.ne.s32.totalorder %s74, %s76
      %p83 = scmp.eq.s32.totalorder %s24, 1
      %p84 = por %p82, %p83
      %p85 = scmp.ne.s32.totalorder %s76, %s77
      %p86 = scmp.eq.s32.totalorder %s24, 0
      %p87 = por %p85, %p86
      %p88 = scmp.ne.s32.totalorder %s76, %s77
      %p89 = scmp.eq.s32.totalorder %s25, 1
      %p90 = por %p88, %p89
      %p92 = scmp.ne.s32.totalorder %s77, %s91
      %p93 = scmp.eq.s32.totalorder %s25, 0
      %p94 = por %p92, %p93
      %s96 = sadd.s32 %s95, 1
      %p99 = scmp.eq.s32.totalorder %s19, 1
      %p100 = scmp.ne.s32.totalorder %s95, %s97
      %p101 = scmp.eq.s32.totalorder %s19, 0
      %p102 = por %p100, %p101
      %p103 = scmp.ne.s32.totalorder %s95, %s97
      %p104 = scmp.eq.s32.totalorder %s24, 1
      %p105 = por %p103, %p104
      %p106 = scmp.ne.s32.totalorder %s97, %s98
      %p107 = scmp.eq.s32.totalorder %s24, 0
      %p108 = por %p106, %p107
      %p109 = scmp.ne.s32.totalorder %s97, %s98
      %p110 = scmp.eq.s32.totalorder %s25, 1
      %p111 = por %p109, %p110
      %p113 = scmp.ne.s32.totalorder %s98, %s112
      %p114 = scmp.eq.s32.totalorder %s25, 0
      %p115 = por %p113, %p114
      %s117 = sadd.s32 %s116, 1
      %p120 = scmp.eq.s32.totalorder %s19, 1
      %p121 = scmp.ne.s32.totalorder %s116, %s118
      %p122 = scmp.eq.s32.totalorder %s19, 0
      %p123 = por %p121, %p122
      %p124 = scmp.ne.s32.totalorder %s116, %s118
      %p125 = scmp.eq.s32.totalorder %s24, 1
      %p126 = por %p124, %p125
      %p127 = scmp.ne.s32.totalorder %s118, %s119
      %p128 = scmp.eq.s32.totalorder %s24, 0
      %p129 = por %p127, %p128
      %p130 = scmp.ne.s32.totalorder %s118, %s119
      %p131 = scmp.eq.s32.totalorder %s25, 1
      %p132 = por %p130, %p131
      %p134 = scmp.ne.s32.totalorder %s119, %s133
      %p135 = scmp.eq.s32.totalorder %s25, 0
      %p136 = por %p134, %p135
      %s137 = ssub.s32 %s19, %s26
      %p138 = scmp.eq.s32.totalorder %s137, 0
      %s140 = sadd.s32 %s139, 1
      %s141 = scalar_select %p138, %s139, %s140
      %p144 = pneg %p138
      %p145 = scmp.eq.s32.totalorder %s19, 1
      %p146 = por %p144, %p145
      %p147 = scmp.ne.s32.totalorder %s139, %s142
      %p148 = scmp.eq.s32.totalorder %s19, 0
      %p149 = por %p147, %p148
      %p150 = scmp.ne.s32.totalorder %s139, %s142
      %p151 = scmp.eq.s32.totalorder %s24, 1
      %p152 = por %p150, %p151
      %p153 = scmp.ne.s32.totalorder %s142, %s143
      %p154 = scmp.eq.s32.totalorder %s24, 0
      %p155 = por %p153, %p154
      %p156 = scmp.ne.s32.totalorder %s142, %s143
      %p157 = scmp.eq.s32.totalorder %s25, 1
      %p158 = por %p156, %p157
      %p160 = scmp.ne.s32.totalorder %s143, %s159
      %p161 = scmp.eq.s32.totalorder %s25, 0
      %p162 = por %p160, %p161
      %p163 = scmp.le.s32.totalorder 1, %s19
      %p164 = scmp.lt.s32.totalorder %s19, 3
      %p165 = pnand %p163, %p164
      %p166 = pneg %p165
      // Predicated region
      $region9: #{residual_block_forward.1} parent=5 // pred_check
        _
      $region10: #{residual_block_forward.1} parent=5 // pred_check_branch
        %168 = sbr.rel (%p165) target = $region12
      $region11: #{residual_block_forward.1} parent=5 // pred_region
        %s169 = ssub.s32 %s19, 1
        // Predicated region
        $region13: #{residual_block_forward.1} parent=11 // pred_check
          %p170 = pneg %p66
        $region14: #{residual_block_forward.1} parent=11 // pred_check_branch
          %172 = sbr.rel (%p170) target = $region16
        $region15: #{residual_block_forward.1} parent=11 // pred_region
          %s174 = ssub.s32 9216, 9216
          %175 = vsyncadd [#allocation8], %s174
          %s176 = sshll.u32 [#allocation7], 4
          %s177 = int_to_ptr.vmem [resolvable:$true] %s176
          %182 = dma.hbm_to_vmem [thread:$0]  %s1, 9216, %s177, [#allocation8], 64, 64, 4
        $region16: #{residual_block_forward.1} parent=11 // pred_fallthru
          _
        // Predicated region
        $region17: #{residual_block_forward.1} parent=11 // pred_check
          %p183 = pneg %p87
        $region18: #{residual_block_forward.1} parent=11 // pred_check_branch
          %185 = sbr.rel (%p183) target = $region20
        $region19: #{residual_block_forward.1} parent=11 // pred_region
          %s187 = ssub.s32 16, 16
          %188 = vsyncadd [#allocation8], %s187
          %s190 = sshll.u32 [#allocation9], 4
          %s191 = int_to_ptr.vmem [resolvable:$true] %s190
          %193 = dma.hbm_to_vmem [thread:$0]  %s2, 16, %s191, [#allocation8]
        $region20: #{residual_block_forward.1} parent=11 // pred_fallthru
          _
        // Predicated region
        $region21: #{residual_block_forward.1} parent=11 // pred_check
          %p194 = pneg %p108
        $region22: #{residual_block_forward.1} parent=11 // pred_check_branch
          %196 = sbr.rel (%p194) target = $region24
        $region23: #{residual_block_forward.1} parent=11 // pred_region
          %s198 = ssub.s32 9216, 9216
          %199 = vsyncadd [#allocation11], %s198
          %s200 = sshll.u32 [#allocation10], 4
          %s201 = int_to_ptr.vmem [resolvable:$true] %s200
          %206 = dma.hbm_to_vmem [thread:$0]  %s3, 9216, %s201, [#allocation11], 64, 64, 4
        $region24: #{residual_block_forward.1} parent=11 // pred_fallthru
          _
        // Predicated region
        $region25: #{residual_block_forward.1} parent=11 // pred_check
          %p207 = pneg %p129
        $region26: #{residual_block_forward.1} parent=11 // pred_check_branch
          %209 = sbr.rel (%p207) target = $region28
        $region27: #{residual_block_forward.1} parent=11 // pred_region
          %s211 = ssub.s32 16, 16
          %212 = vsyncadd [#allocation11], %s211
          %s214 = sshll.u32 [#allocation12], 4
          %s215 = int_to_ptr.vmem [resolvable:$true] %s214
          %217 = dma.hbm_to_vmem [thread:$0]  %s4, 16, %s215, [#allocation11]
        $region28: #{residual_block_forward.1} parent=11 // pred_fallthru
          _
      $region12: #{residual_block_forward.1} parent=5 // pred_fallthru
        _
      %p218 = scmp.lt.s32.totalorder %s19, 2
      // Predicated region
      $region29: #{residual_block_forward.1} parent=5 // pred_check
        %p219 = pneg %p218
      $region30: #{residual_block_forward.1} parent=5 // pred_check_branch
        %221 = sbr.rel (%p219) target = $region32
      $region31: #{residual_block_forward.1} parent=5 // pred_region
        // Predicated region
        $region33: #{residual_block_forward.1} parent=31 // pred_check
          %p222 = pneg %p39
        $region34: #{residual_block_forward.1} parent=31 // pred_check_branch
          %224 = sbr.rel (%p222) target = $region36
        $region35: #{residual_block_forward.1} parent=31 // pred_region
          %s225 = sand.u32 %s29, 1
          %s226 = scalar_lea.sflag [#allocation5], %s225
          %s227 = sand.u32 %s29, 1
          %s228 = smul.addr %s227, 256
          %s229 = scalar_lea.vmem [#allocation4], %s228
          %s231 = ssub.s32 4096, 4096
          %232 = vsyncadd %s226, %s231
          %s233 = smul.addr %s19, 32
          %s234 = smul.addr %s233, 128
          %s235 = scalar_lea.hbm %s0, %s234
          %s236 = sshll.u32 %s229, 4
          %s237 = int_to_ptr.vmem [resolvable:$true] %s236
          %242 = dma.hbm_to_vmem [thread:$0]  %s235, 4096, %s237, %s226, 128, 128, 8
        $region36: #{residual_block_forward.1} parent=31 // pred_fallthru
          _
      $region32: #{residual_block_forward.1} parent=5 // pred_fallthru
        _
      %p243 = scmp.le.s32.totalorder 1, %s19
      %p244 = scmp.lt.s32.totalorder %s19, 3
      %p245 = pnand %p243, %p244
      %p246 = pneg %p245
      // Predicated region
      $region37: #{residual_block_forward.1} parent=5 // pred_check
        _
      $region38: #{residual_block_forward.1} parent=5 // pred_check_branch
        %248 = sbr.rel (%p245) target = $region40
      $region39: #{residual_block_forward.1} parent=5 // pred_region
        %s249 = ssub.s32 %s19, 1
        %s250 = sand.u32 %s32, 1
        %s251 = scalar_lea.sflag [#allocation5], %s250
        %s252 = sand.u32 %s32, 1
        %s253 = smul.addr %s252, 256
        %s254 = scalar_lea.vmem [#allocation4], %s253
        // Predicated region
        $region41: #{residual_block_forward.1} parent=39 // pred_check
          %p255 = pneg %p45
        $region42: #{residual_block_forward.1} parent=39 // pred_check_branch
          %257 = sbr.rel (%p255) target = $region44
        $region43: #{residual_block_forward.1} parent=39 // pred_region
          %258 = dma.done %s251, 4096
        $region44: #{residual_block_forward.1} parent=39 // pred_fallthru
          _
        // Predicated region
        $region45: #{residual_block_forward.1} parent=39 // pred_check
          %p259 = pneg %p66
        $region46: #{residual_block_forward.1} parent=39 // pred_check_branch
          %261 = sbr.rel (%p259) target = $region48
        $region47: #{residual_block_forward.1} parent=39 // pred_region
          %262 = dma.done [#allocation8], 9216
        $region48: #{residual_block_forward.1} parent=39 // pred_fallthru
          _
        // Predicated region
        $region49: #{residual_block_forward.1} parent=39 // pred_check
          %p263 = pneg %p87
        $region50: #{residual_block_forward.1} parent=39 // pred_check_branch
          %265 = sbr.rel (%p263) target = $region52
        $region51: #{residual_block_forward.1} parent=39 // pred_region
          %266 = dma.done [#allocation8], 16
        $region52: #{residual_block_forward.1} parent=39 // pred_fallthru
          _
        // Predicated region
        $region53: #{residual_block_forward.1} parent=39 // pred_check
          %p267 = pneg %p108
        $region54: #{residual_block_forward.1} parent=39 // pred_check_branch
          %269 = sbr.rel (%p267) target = $region56
        $region55: #{residual_block_forward.1} parent=39 // pred_region
          %270 = dma.done [#allocation11], 9216
        $region56: #{residual_block_forward.1} parent=39 // pred_fallthru
          _
        // Predicated region
        $region57: #{residual_block_forward.1} parent=39 // pred_check
          %p271 = pneg %p129
        $region58: #{residual_block_forward.1} parent=39 // pred_check_branch
          %273 = sbr.rel (%p271) target = $region60
        $region59: #{residual_block_forward.1} parent=39 // pred_region
          %274 = dma.done [#allocation11], 16
        $region60: #{residual_block_forward.1} parent=39 // pred_fallthru
          _
        %s275 = sand.u32 %s32, 1
        %s276 = scalar_lea.sflag [#allocation5], %s275
        %s277 = sand.u32 %s32, 1
        %s278 = smul.addr %s277, 256
        %s279 = scalar_lea.vmem [#allocation4], %s278
        %p280 = pneg %p45
        %p281 = pneg %p42
        %p282 = pneg %p66
        %p283 = pneg %p63
        %p284 = pneg %p87
        %p285 = pneg %p84
        %p286 = pneg %p108
        %p287 = pneg %p105
        %p288 = pneg %p129
        %p289 = pneg %p126
        %p290 = pneg %p155
        %p291 = pneg %p152
        %s292 = sand.u32 %s142, 1
        %s293 = scalar_lea.sflag [#allocation6], %s292
        %s294 = sand.u32 %s142, 1
        %s295 = smul.addr %s294, 256
        %s296 = scalar_lea.vmem [#allocation13], %s295
        %v298 = vld [vmem:[%s254] sm:$0xff]
        %v299 = vld [vmem:[%s254 + $0x8] sm:$0xff]
        %v300 = vld [vmem:[%s254 + $0x10] sm:$0xff]
        %v301 = vld [vmem:[%s254 + $0x18] sm:$0xff]
        %v302 = vld [vmem:[%s254 + $0x20] sm:$0xff]
        %v303 = vld [vmem:[%s254 + $0x28] sm:$0xff]
        %v304 = vld [vmem:[%s254 + $0x30] sm:$0xff]
        %v305 = vld [vmem:[%s254 + $0x38] sm:$0xff]
        %v306 = vld [vmem:[%s254 + $0x40] sm:$0xff]
        %v307 = vld [vmem:[%s254 + $0x48] sm:$0xff]
        %v308 = vld [vmem:[%s254 + $0x50] sm:$0xff]
        %v309 = vld [vmem:[%s254 + $0x58] sm:$0xff]
        %v310 = vld [vmem:[%s254 + $0x60] sm:$0xff]
        %v311 = vld [vmem:[%s254 + $0x68] sm:$0xff]
        %v312 = vld [vmem:[%s254 + $0x70] sm:$0xff]
        %v313 = vld [vmem:[%s254 + $0x78] sm:$0xff]
        %v314 = vld [vmem:[%s254 + $0x80] sm:$0xff]
        %v315 = vld [vmem:[%s254 + $0x88] sm:$0xff]
        %v316 = vld [vmem:[%s254 + $0x90] sm:$0xff]
        %v317 = vld [vmem:[%s254 + $0x98] sm:$0xff]
        %v318 = vld [vmem:[%s254 + $0xa0] sm:$0xff]
        %v319 = vld [vmem:[%s254 + $0xa8] sm:$0xff]
        %v320 = vld [vmem:[%s254 + $0xb0] sm:$0xff]
        %v321 = vld [vmem:[%s254 + $0xb8] sm:$0xff]
        %v322 = vld [vmem:[%s254 + $0xc0] sm:$0xff]
        %v323 = vld [vmem:[%s254 + $0xc8] sm:$0xff]
        %v324 = vld [vmem:[%s254 + $0xd0] sm:$0xff]
        %v325 = vld [vmem:[%s254 + $0xd8] sm:$0xff]
        %v326 = vld [vmem:[%s254 + $0xe0] sm:$0xff]
        %v327 = vld [vmem:[%s254 + $0xe8] sm:$0xff]
        %v328 = vld [vmem:[%s254 + $0xf0] sm:$0xff]
        %v329 = vld [vmem:[%s254 + $0xf8] sm:$0xff]
        %s330 = scalar_lea.vmem [#allocation2], 24
        %331 = vst [vmem:[%s330 + $0x1] sm:$0xff] %v298
        %332 = vst [vmem:[%s330 + $0x9] sm:$0xff] %v299
        %333 = vst [vmem:[%s330 + $0x19] sm:$0xff] %v300
        %334 = vst [vmem:[%s330 + $0x21] sm:$0xff] %v301
        %335 = vst [vmem:[%s330 + $0x31] sm:$0xff] %v302
        %336 = vst [vmem:[%s330 + $0x39] sm:$0xff] %v303
        %337 = vst [vmem:[%s330 + $0x49] sm:$0xff] %v304
        %338 = vst [vmem:[%s330 + $0x51] sm:$0xff] %v305
        %339 = vst [vmem:[%s330 + $0x61] sm:$0xff] %v306
        %340 = vst [vmem:[%s330 + $0x69] sm:$0xff] %v307
        %341 = vst [vmem:[%s330 + $0x79] sm:$0xff] %v308
        %342 = vst [vmem:[%s330 + $0x81] sm:$0xff] %v309
        %343 = vst [vmem:[%s330 + $0x91] sm:$0xff] %v310
        %344 = vst [vmem:[%s330 + $0x99] sm:$0xff] %v311
        %345 = vst [vmem:[%s330 + $0xa9] sm:$0xff] %v312
        %346 = vst [vmem:[%s330 + $0xb1] sm:$0xff] %v313
        %347 = vst [vmem:[%s330 + $0xc1] sm:$0xff] %v314
        %348 = vst [vmem:[%s330 + $0xc9] sm:$0xff] %v315
        %349 = vst [vmem:[%s330 + $0xd9] sm:$0xff] %v316
        %350 = vst [vmem:[%s330 + $0xe1] sm:$0xff] %v317
        %351 = vst [vmem:[%s330 + $0xf1] sm:$0xff] %v318
        %352 = vst [vmem:[%s330 + $0xf9] sm:$0xff] %v319
        %353 = vst [vmem:[%s330 + $0x109] sm:$0xff] %v320
        %354 = vst [vmem:[%s330 + $0x111] sm:$0xff] %v321
        %355 = vst [vmem:[%s330 + $0x121] sm:$0xff] %v322
        %356 = vst [vmem:[%s330 + $0x129] sm:$0xff] %v323
        %357 = vst [vmem:[%s330 + $0x139] sm:$0xff] %v324
        %358 = vst [vmem:[%s330 + $0x141] sm:$0xff] %v325
        %359 = vst [vmem:[%s330 + $0x151] sm:$0xff] %v326
        %360 = vst [vmem:[%s330 + $0x159] sm:$0xff] %v327
        %361 = vst [vmem:[%s330 + $0x169] sm:$0xff] %v328
        %362 = vst [vmem:[%s330 + $0x171] sm:$0xff] %v329
        %363 = vst [vmem:[#allocation2 + $0x1] sm:$0xff] %v300
        %364 = vst [vmem:[#allocation2 + $0x9] sm:$0xff] %v301
        %s365 = scalar_lea.vmem [#allocation2], 408
        %366 = vst [vmem:[%s365 + $0x1] sm:$0xff] %v326
        %367 = vst [vmem:[%s365 + $0x9] sm:$0xff] %v327
        %368 = vst [vmem:[%s330 - $0x1] sm:$0x2] %v298
        %369 = vst [vmem:[%s330 + $0x17] sm:$0x2] %v300
        %370 = vst [vmem:[%s330 + $0x2f] sm:$0x2] %v302
        %371 = vst [vmem:[%s330 + $0x47] sm:$0x2] %v304
        %372 = vst [vmem:[%s330 + $0x5f] sm:$0x2] %v306
        %373 = vst [vmem:[%s330 + $0x77] sm:$0x2] %v308
        %374 = vst [vmem:[%s330 + $0x8f] sm:$0x2] %v310
        %375 = vst [vmem:[%s330 + $0xa7] sm:$0x2] %v312
        %376 = vst [vmem:[%s330 + $0xbf] sm:$0x2] %v314
        %377 = vst [vmem:[%s330 + $0xd7] sm:$0x2] %v316
        %378 = vst [vmem:[%s330 + $0xef] sm:$0x2] %v318
        %379 = vst [vmem:[%s330 + $0x107] sm:$0x2] %v320
        %380 = vst [vmem:[%s330 + $0x11f] sm:$0x2] %v322
        %381 = vst [vmem:[%s330 + $0x137] sm:$0x2] %v324
        %382 = vst [vmem:[%s330 + $0x14f] sm:$0x2] %v326
        %383 = vst [vmem:[%s330 + $0x167] sm:$0x2] %v328
        %384 = vst [vmem:[%s330 + $0xb] sm:$0x40] %v299
        %385 = vst [vmem:[%s330 + $0x23] sm:$0x40] %v301
        %386 = vst [vmem:[%s330 + $0x3b] sm:$0x40] %v303
        %387 = vst [vmem:[%s330 + $0x53] sm:$0x40] %v305
        %388 = vst [vmem:[%s330 + $0x6b] sm:$0x40] %v307
        %389 = vst [vmem:[%s330 + $0x83] sm:$0x40] %v309
        %390 = vst [vmem:[%s330 + $0x9b] sm:$0x40] %v311
        %391 = vst [vmem:[%s330 + $0xb3] sm:$0x40] %v313
        %392 = vst [vmem:[%s330 + $0xcb] sm:$0x40] %v315
        %393 = vst [vmem:[%s330 + $0xe3] sm:$0x40] %v317
        %394 = vst [vmem:[%s330 + $0xfb] sm:$0x40] %v319
        %395 = vst [vmem:[%s330 + $0x113] sm:$0x40] %v321
        %396 = vst [vmem:[%s330 + $0x12b] sm:$0x40] %v323
        %397 = vst [vmem:[%s330 + $0x143] sm:$0x40] %v325
        %398 = vst [vmem:[%s330 + $0x15b] sm:$0x40] %v327
        %399 = vst [vmem:[%s330 + $0x173] sm:$0x40] %v329
        %400 = vst [vmem:[#allocation2 - $0x1] sm:$0x2] %v300
        %401 = vst [vmem:[#allocation2 + $0xb] sm:$0x40] %v301
        %402 = vst [vmem:[%s365 - $0x1] sm:$0x2] %v326
        %403 = vst [vmem:[%s365 + $0xb] sm:$0x40] %v327
        %404 = vst [vmem:[#allocation3] sm:$0xff] 0.0
        %405 = vst [vmem:[#allocation3 + $0x8] sm:$0xff] 0.0
        %406 = vst [vmem:[#allocation3 + $0x10] sm:$0xff] 0.0
        %407 = vst [vmem:[#allocation3 + $0x18] sm:$0xff] 0.0
        %408 = vst [vmem:[#allocation3 + $0x20] sm:$0xff] 0.0
        %409 = vst [vmem:[#allocation3 + $0x28] sm:$0xff] 0.0
        %410 = vst [vmem:[#allocation3 + $0x30] sm:$0xff] 0.0
        %411 = vst [vmem:[#allocation3 + $0x38] sm:$0xff] 0.0
        %412 = vst [vmem:[#allocation3 + $0x40] sm:$0xff] 0.0
        %413 = vst [vmem:[#allocation3 + $0x48] sm:$0xff] 0.0
        %414 = vst [vmem:[#allocation3 + $0x50] sm:$0xff] 0.0
        %415 = vst [vmem:[#allocation3 + $0x58] sm:$0xff] 0.0
        %416 = vst [vmem:[#allocation3 + $0x60] sm:$0xff] 0.0
        %417 = vst [vmem:[#allocation3 + $0x68] sm:$0xff] 0.0
        %418 = vst [vmem:[#allocation3 + $0x70] sm:$0xff] 0.0
        %419 = vst [vmem:[#allocation3 + $0x78] sm:$0xff] 0.0
        %420 = vst [vmem:[#allocation3 + $0x80] sm:$0xff] 0.0
        %421 = vst [vmem:[#allocation3 + $0x88] sm:$0xff] 0.0
        %422 = vst [vmem:[#allocation3 + $0x90] sm:$0xff] 0.0
        %423 = vst [vmem:[#allocation3 + $0x98] sm:$0xff] 0.0
        %424 = vst [vmem:[#allocation3 + $0xa0] sm:$0xff] 0.0
        %425 = vst [vmem:[#allocation3 + $0xa8] sm:$0xff] 0.0
        %426 = vst [vmem:[#allocation3 + $0xb0] sm:$0xff] 0.0
        %427 = vst [vmem:[#allocation3 + $0xb8] sm:$0xff] 0.0
        %428 = vst [vmem:[#allocation3 + $0xc0] sm:$0xff] 0.0
        %429 = vst [vmem:[#allocation3 + $0xc8] sm:$0xff] 0.0
        %430 = vst [vmem:[#allocation3 + $0xd0] sm:$0xff] 0.0
        %431 = vst [vmem:[#allocation3 + $0xd8] sm:$0xff] 0.0
        %432 = vst [vmem:[#allocation3 + $0xe0] sm:$0xff] 0.0
        %433 = vst [vmem:[#allocation3 + $0xe8] sm:$0xff] 0.0
        %434 = vst [vmem:[#allocation3 + $0xf0] sm:$0xff] 0.0
        %435 = vst [vmem:[#allocation3 + $0xf8] sm:$0xff] 0.0
        %v436 = vld [vmem:[#allocation2] sm:$0xff]
        %v437 = vld [vmem:[#allocation2 + $0x8] sm:$0xff]
        %v438 = vld [vmem:[#allocation2 + $0x18] sm:$0xff]
        %v439 = vld [vmem:[#allocation2 + $0x20] sm:$0xff]
        %v440 = vld [vmem:[#allocation2 + $0x30] sm:$0xff]
        %v441 = vld [vmem:[#allocation2 + $0x38] sm:$0xff]
        %v442 = vld [vmem:[#allocation2 + $0x48] sm:$0xff]
        %v443 = vld [vmem:[#allocation2 + $0x50] sm:$0xff]
        %v444 = vld [vmem:[#allocation2 + $0x60] sm:$0xff]
        %v445 = vld [vmem:[#allocation2 + $0x68] sm:$0xff]
        %v446 = vld [vmem:[#allocation2 + $0x78] sm:$0xff]
        %v447 = vld [vmem:[#allocation2 + $0x80] sm:$0xff]
        %v448 = vld [vmem:[#allocation2 + $0x90] sm:$0xff]
        %v449 = vld [vmem:[#allocation2 + $0x98] sm:$0xff]
        %v450 = vld [vmem:[#allocation2 + $0xa8] sm:$0xff]
        %v451 = vld [vmem:[#allocation2 + $0xb0] sm:$0xff]
        %v452 = vld [vmem:[#allocation2 + $0xc0] sm:$0xff]
        %v453 = vld [vmem:[#allocation2 + $0xc8] sm:$0xff]
        %v454 = vld [vmem:[#allocation2 + $0xd8] sm:$0xff]
        %v455 = vld [vmem:[#allocation2 + $0xe0] sm:$0xff]
        %v456 = vld [vmem:[#allocation2 + $0xf0] sm:$0xff]
        %v457 = vld [vmem:[#allocation2 + $0xf8] sm:$0xff]
        %v458 = vld [vmem:[#allocation2 + $0x108] sm:$0xff]
        %v459 = vld [vmem:[#allocation2 + $0x110] sm:$0xff]
        %v460 = vld [vmem:[#allocation2 + $0x120] sm:$0xff]
        %v461 = vld [vmem:[#allocation2 + $0x128] sm:$0xff]
        %v462 = vld [vmem:[#allocation2 + $0x138] sm:$0xff]
        %v463 = vld [vmem:[#allocation2 + $0x140] sm:$0xff]
        %v464 = vld [vmem:[#allocation2 + $0x150] sm:$0xff]
        %v465 = vld [vmem:[#allocation2 + $0x158] sm:$0xff]
        %v466 = vld [vmem:[#allocation2 + $0x168] sm:$0xff]
        %v467 = vld [vmem:[#allocation2 + $0x170] sm:$0xff]
        %v468 = vpack.c.bf16 %v437, %v436
        %v469 = vpack.c.bf16 %v439, %v438
        %v470 = vpack.c.bf16 %v441, %v440
        %v471 = vpack.c.bf16 %v443, %v442
        %v472 = vpack.c.bf16 %v445, %v444
        %v473 = vpack.c.bf16 %v447, %v446
        %v474 = vpack.c.bf16 %v449, %v448
        %v475 = vpack.c.bf16 %v451, %v450
        %v476 = vpack.c.bf16 %v453, %v452
        %v477 = vpack.c.bf16 %v455, %v454
        %v478 = vpack.c.bf16 %v457, %v456
        %v479 = vpack.c.bf16 %v459, %v458
        %v480 = vpack.c.bf16 %v461, %v460
        %v481 = vpack.c.bf16 %v463, %v462
        %v482 = vpack.c.bf16 %v465, %v464
        %v483 = vpack.c.bf16 %v467, %v466
        %v484 = vld [vmem:[#allocation3] sm:$0xff]
        %v485 = vld [vmem:[#allocation3 + $0x8] sm:$0xff]
        %v486 = vld [vmem:[#allocation3 + $0x10] sm:$0xff]
        %v487 = vld [vmem:[#allocation3 + $0x18] sm:$0xff]
        %v488 = vld [vmem:[#allocation3 + $0x20] sm:$0xff]
        %v489 = vld [vmem:[#allocation3 + $0x28] sm:$0xff]
        %v490 = vld [vmem:[#allocation3 + $0x30] sm:$0xff]
        %v491 = vld [vmem:[#allocation3 + $0x38] sm:$0xff]
        %v492 = vld [vmem:[#allocation3 + $0x40] sm:$0xff]
        %v493 = vld [vmem:[#allocation3 + $0x48] sm:$0xff]
        %v494 = vld [vmem:[#allocation3 + $0x50] sm:$0xff]
        %v495 = vld [vmem:[#allocation3 + $0x58] sm:$0xff]
        %v496 = vld [vmem:[#allocation3 + $0x60] sm:$0xff]
        %v497 = vld [vmem:[#allocation3 + $0x68] sm:$0xff]
        %v498 = vld [vmem:[#allocation3 + $0x70] sm:$0xff]
        %v499 = vld [vmem:[#allocation3 + $0x78] sm:$0xff]
        %v500 = vld [vmem:[#allocation3 + $0x80] sm:$0xff]
        %v501 = vld [vmem:[#allocation3 + $0x88] sm:$0xff]
        %v502 = vld [vmem:[#allocation3 + $0x90] sm:$0xff]
        %v503 = vld [vmem:[#allocation3 + $0x98] sm:$0xff]
        %v504 = vld [vmem:[#allocation3 + $0xa0] sm:$0xff]
        %v505 = vld [vmem:[#allocation3 + $0xa8] sm:$0xff]
        %v506 = vld [vmem:[#allocation3 + $0xb0] sm:$0xff]
        %v507 = vld [vmem:[#allocation3 + $0xb8] sm:$0xff]
        %v508 = vld [vmem:[#allocation3 + $0xc0] sm:$0xff]
        %v509 = vld [vmem:[#allocation3 + $0xc8] sm:$0xff]
        %v510 = vld [vmem:[#allocation3 + $0xd0] sm:$0xff]
        %v511 = vld [vmem:[#allocation3 + $0xd8] sm:$0xff]
        %v512 = vld [vmem:[#allocation3 + $0xe0] sm:$0xff]
        %v513 = vld [vmem:[#allocation3 + $0xe8] sm:$0xff]
        %v514 = vld [vmem:[#allocation3 + $0xf0] sm:$0xff]
        %v515 = vld [vmem:[#allocation3 + $0xf8] sm:$0xff]
        %v516 = vld [vmem:[#allocation7] sm:$0xf]
        %v517 = vld [vmem:[#allocation7 + $0x4] sm:$0xf]
        %v518 = vld [vmem:[#allocation7 + $0x8] sm:$0xf]
        %v519 = vld [vmem:[#allocation7 + $0xc] sm:$0xf]
        %v520 = vld [vmem:[#allocation7 + $0x10] sm:$0xf]
        %v521 = vld [vmem:[#allocation7 + $0x14] sm:$0xf]
        %v522 = vld [vmem:[#allocation7 + $0x18] sm:$0xf]
        %v523 = vld [vmem:[#allocation7 + $0x1c] sm:$0xf]
        %v524 = vld [vmem:[#allocation7 + $0x20] sm:$0xf]
        %v525 = vld [vmem:[#allocation7 + $0x24] sm:$0xf]
        %v526 = vld [vmem:[#allocation7 + $0x28] sm:$0xf]
        %v527 = vld [vmem:[#allocation7 + $0x2c] sm:$0xf]
        %v528 = vld [vmem:[#allocation7 + $0x30] sm:$0xf]
        %v529 = vld [vmem:[#allocation7 + $0x34] sm:$0xf]
        %v530 = vld [vmem:[#allocation7 + $0x38] sm:$0xf]
        %v531 = vld [vmem:[#allocation7 + $0x3c] sm:$0xf]
        %v548 = vunpack.c.l.b16 %v516
        %v549 = vunpack.c.l.b16 %v517
        %v550 = vunpack.c.l.b16 %v518
        %v551 = vunpack.c.l.b16 %v519
        %v552 = vunpack.c.l.b16 %v520
        %v553 = vunpack.c.l.b16 %v521
        %v554 = vunpack.c.l.b16 %v522
        %v555 = vunpack.c.l.b16 %v523
        %v556 = vunpack.c.l.b16 %v524
        %v557 = vunpack.c.l.b16 %v525
        %v558 = vunpack.c.l.b16 %v526
        %v559 = vunpack.c.l.b16 %v527
        %v560 = vunpack.c.l.b16 %v528
        %v561 = vunpack.c.l.b16 %v529
        %v562 = vunpack.c.l.b16 %v530
        %v563 = vunpack.c.l.b16 %v531
        %v564 = vpack.c.b16 %v549, %v548
        %v565 = vpack.c.b16 %v551, %v550
        %v566 = vpack.c.b16 %v553, %v552
        %v567 = vpack.c.b16 %v555, %v554
        %v568 = vpack.c.b16 %v557, %v556
        %v569 = vpack.c.b16 %v559, %v558
        %v570 = vpack.c.b16 %v561, %v560
        %v571 = vpack.c.b16 %v563, %v562
        %580 = vmatprep.subr.bf16.mxu0 0
        %581 = vmatpush1.bf16.msra.mxu0 %v564
        %582 = vmatprep.subr.bf16.mxu0 0
        %583 = vmatpush1.bf16.msra.mxu0 %v565
        %584 = vmatprep.subr.bf16.mxu0 0
        %585 = vmatpush1.bf16.msra.mxu0 %v566
        %586 = vmatprep.subr.bf16.mxu0 0
        %587 = vmatpush1.bf16.msra.mxu0 %v567
        %588 = vmatprep.subr.bf16.mxu0 0
        %589 = vmatpush1.bf16.msra.mxu0 %v568
        %590 = vmatprep.subr.bf16.mxu0 0
        %591 = vmatpush1.bf16.msra.mxu0 %v569
        %592 = vmatprep.subr.bf16.mxu0 0
        %593 = vmatpush1.bf16.msra.mxu0 %v570
        %594 = vmatprep.subr.bf16.mxu0 0
        %595 = vmatpush1.bf16.msra.mxu0 %v571
        %596 = vmatprep.subr.bf16.mxu0 0
        %597 = vmatpush1.bf16.msra.mxu0 0
        %598 = vmatprep.subr.bf16.mxu0 0
        %599 = vmatpush1.bf16.msra.mxu0 0
        %600 = vmatprep.subr.bf16.mxu0 0
        %601 = vmatpush1.bf16.msra.mxu0 0
        %602 = vmatprep.subr.bf16.mxu0 0
        %603 = vmatpush1.bf16.msra.mxu0 0
        %604 = vmatprep.subr.bf16.mxu0 0
        %605 = vmatpush1.bf16.msra.mxu0 0
        %606 = vmatprep.subr.bf16.mxu0 0
        %607 = vmatpush1.bf16.msra.mxu0 0
        %608 = vmatprep.subr.bf16.mxu0 0
        %609 = vmatpush1.bf16.msra.mxu0 0
        %610 = vmatprep.subr.bf16.mxu0 0
        %611 = vmatpush1.bf16.msra.mxu0 0
        %612 = vmatprep.mubr.bf16.mxu0 0
        %613 = vmatmul.mubr.bf16.gmra.mrb[0].mxu0 %v468
        %v614 = vpop.f32.mrb[0].mxu0
        %v615 = vadd.f32 0.0, %v614
        %v616 = vpop.f32.mrb[0].mxu0
        %v617 = vpop.f32.mrb[0].mxu0
        %v618 = vadd.f32 0.0, %v617
        %v619 = vpop.f32.mrb[0].mxu0
        %620 = vmatprep.mubr.bf16.mxu0 0
        %621 = vmatmul.mubr.bf16.gmra.mrb[0].mxu0 %v469
        %v622 = vpop.f32.mrb[0].mxu0
        %v623 = vadd.f32 0.0, %v622
        %v624 = vpop.f32.mrb[0].mxu0
        %v625 = vpop.f32.mrb[0].mxu0
        %v626 = vadd.f32 0.0, %v625
        %v627 = vpop.f32.mrb[0].mxu0
        %628 = vmatprep.mubr.bf16.mxu0 0
        %629 = vmatmul.mubr.bf16.gmra.mrb[0].mxu0 %v470
        %v630 = vpop.f32.mrb[0].mxu0
        %v631 = vadd.f32 0.0, %v630
        %v632 = vpop.f32.mrb[0].mxu0
        %v633 = vpop.f32.mrb[0].mxu0
        %v634 = vadd.f32 0.0, %v633
        %v635 = vpop.f32.mrb[0].mxu0
        %636 = vmatprep.mubr.bf16.mxu0 0
        %637 = vmatmul.mubr.bf16.gmra.mrb[0].mxu0 %v471
        %v638 = vpop.f32.mrb[0].mxu0
        %v639 = vadd.f32 0.0, %v638
        %v640 = vpop.f32.mrb[0].mxu0
        %v641 = vpop.f32.mrb[0].mxu0
        %v642 = vadd.f32 0.0, %v641
        %v643 = vpop.f32.mrb[0].mxu0
        %644 = vmatprep.mubr.bf16.mxu0 0
        %645 = vmatmul.mubr.bf16.gmra.mrb[0].mxu0 %v472
        %v646 = vpop.f32.mrb[0].mxu0
        %v647 = vadd.f32 0.0, %v646
        %v648 = vpop.f32.mrb[0].mxu0
        %v649 = vpop.f32.mrb[0].mxu0
        %v650 = vadd.f32 0.0, %v649
        %v651 = vpop.f32.mrb[0].mxu0
        %652 = vmatprep.mubr.bf16.mxu0 0
        %653 = vmatmul.mubr.bf16.gmra.mrb[0].mxu0 %v473
        %v654 = vpop.f32.mrb[0].mxu0
        %v655 = vadd.f32 0.0, %v654
        %v656 = vpop.f32.mrb[0].mxu0
        %v657 = vpop.f32.mrb[0].mxu0
        %v658 = vadd.f32 0.0, %v657
        %v659 = vpop.f32.mrb[0].mxu0
        %660 = vmatprep.mubr.bf16.mxu0 0
        %661 = vmatmul.mubr.bf16.gmra.mrb[0].mxu0 %v474
        %v662 = vpop.f32.mrb[0].mxu0
        %v663 = vadd.f32 0.0, %v662
        %v664 = vpop.f32.mrb[0].mxu0
        %v665 = vpop.f32.mrb[0].mxu0
        %v666 = vadd.f32 0.0, %v665
        %v667 = vpop.f32.mrb[0].mxu0
        %668 = vmatprep.mubr.bf16.mxu0 0
        %669 = vmatmul.mubr.bf16.gmra.mrb[0].mxu0 %v475
        %v670 = vpop.f32.mrb[0].mxu0
        %v671 = vadd.f32 0.0, %v670
        %v672 = vpop.f32.mrb[0].mxu0
        %v673 = vpop.f32.mrb[0].mxu0
        %v674 = vadd.f32 0.0, %v673
        %v675 = vpop.f32.mrb[0].mxu0
        %676 = vmatprep.mubr.bf16.mxu0 0
        %677 = vmatmul.mubr.bf16.gmra.mrb[0].mxu0 %v476
        %v678 = vpop.f32.mrb[0].mxu0
        %v679 = vadd.f32 0.0, %v678
        %v680 = vpop.f32.mrb[0].mxu0
        %v681 = vpop.f32.mrb[0].mxu0
        %v682 = vadd.f32 0.0, %v681
        %v683 = vpop.f32.mrb[0].mxu0
        %684 = vmatprep.mubr.bf16.mxu0 0
        %685 = vmatmul.mubr.bf16.gmra.mrb[0].mxu0 %v477
        %v686 = vpop.f32.mrb[0].mxu0
        %v687 = vadd.f32 0.0, %v686
        %v688 = vpop.f32.mrb[0].mxu0
        %v689 = vpop.f32.mrb[0].mxu0
        %v690 = vadd.f32 0.0, %v689
        %v691 = vpop.f32.mrb[0].mxu0
        %692 = vmatprep.mubr.bf16.mxu0 0
        %693 = vmatmul.mubr.bf16.gmra.mrb[0].mxu0 %v478
        %v694 = vpop.f32.mrb[0].mxu0
        %v695 = vadd.f32 0.0, %v694
        %v696 = vpop.f32.mrb[0].mxu0
        %v697 = vpop.f32.mrb[0].mxu0
        %v698 = vadd.f32 0.0, %v697
        %v699 = vpop.f32.mrb[0].mxu0
        %700 = vmatprep.mubr.bf16.mxu0 0
        %701 = vmatmul.mubr.bf16.gmra.mrb[0].mxu0 %v479
        %v702 = vpop.f32.mrb[0].mxu0
        %v703 = vadd.f32 0.0, %v702
        %v704 = vpop.f32.mrb[0].mxu0
        %v705 = vpop.f32.mrb[0].mxu0
        %v706 = vadd.f32 0.0, %v705
        %v707 = vpop.f32.mrb[0].mxu0
        %708 = vmatprep.mubr.bf16.mxu0 0
        %709 = vmatmul.mubr.bf16.gmra.mrb[0].mxu0 %v480
        %v710 = vpop.f32.mrb[0].mxu0
        %v711 = vadd.f32 0.0, %v710
        %v712 = vpop.f32.mrb[0].mxu0
        %v713 = vpop.f32.mrb[0].mxu0
        %v714 = vadd.f32 0.0, %v713
        %v715 = vpop.f32.mrb[0].mxu0
        %716 = vmatprep.mubr.bf16.mxu0 0
        %717 = vmatmul.mubr.bf16.gmra.mrb[0].mxu0 %v481
        %v718 = vpop.f32.mrb[0].mxu0
        %v719 = vadd.f32 0.0, %v718
        %v720 = vpop.f32.mrb[0].mxu0
        %v721 = vpop.f32.mrb[0].mxu0
        %v722 = vadd.f32 0.0, %v721
        %v723 = vpop.f32.mrb[0].mxu0
        %724 = vmatprep.mubr.bf16.mxu0 0
        %725 = vmatmul.mubr.bf16.gmra.mrb[0].mxu0 %v482
        %v726 = vpop.f32.mrb[0].mxu0
        %v727 = vadd.f32 0.0, %v726
        %v728 = vpop.f32.mrb[0].mxu0
        %v729 = vpop.f32.mrb[0].mxu0
        %v730 = vadd.f32 0.0, %v729
        %v731 = vpop.f32.mrb[0].mxu0
        %732 = vmatprep.mubr.bf16.mxu0 0
        %733 = vmatmul.mubr.bf16.gmra.mrb[0].mxu0 %v483
        %v734 = vpop.f32.mrb[0].mxu0
        %v735 = vadd.f32 0.0, %v734
        %v736 = vpop.f32.mrb[0].mxu0
        %v737 = vpop.f32.mrb[0].mxu0
        %v738 = vadd.f32 0.0, %v737
        %v739 = vpop.f32.mrb[0].mxu0
        %740 = vdwg.mxu0
        %v741 = vadd.f32 %v484, %v615
        %v742 = vadd.f32 %v485, %v618
        %v743 = vadd.f32 %v486, %v623
        %v744 = vadd.f32 %v487, %v626
        %v745 = vadd.f32 %v488, %v631
        %v746 = vadd.f32 %v489, %v634
        %v747 = vadd.f32 %v490, %v639
        %v748 = vadd.f32 %v491, %v642
        %v749 = vadd.f32 %v492, %v647
        %v750 = vadd.f32 %v493, %v650
        %v751 = vadd.f32 %v494, %v655
        %v752 = vadd.f32 %v495, %v658
        %v753 = vadd.f32 %v496, %v663
        %v754 = vadd.f32 %v497, %v666
        %v755 = vadd.f32 %v498, %v671
        %v756 = vadd.f32 %v499, %v674
        %v757 = vadd.f32 %v500, %v679
        %v758 = vadd.f32 %v501, %v682
        %v759 = vadd.f32 %v502, %v687
        %v760 = vadd.f32 %v503, %v690
        %v761 = vadd.f32 %v504, %v695
        %v762 = vadd.f32 %v505, %v698
        %v763 = vadd.f32 %v506, %v703
        %v764 = vadd.f32 %v507, %v706
        %v765 = vadd.f32 %v508, %v711
        %v766 = vadd.f32 %v509, %v714
        %v767 = vadd.f32 %v510, %v719
        %v768 = vadd.f32 %v511, %v722
        %v769 = vadd.f32 %v512, %v727
        %v770 = vadd.f32 %v513, %v730
        %v771 = vadd.f32 %v514, %v735
        %v772 = vadd.f32 %v515, %v738
        %773 = vst [vmem:[#allocation3] sm:$0xff] %v741
        %774 = vst [vmem:[#allocation3 + $0x8] sm:$0xff] %v742
        %775 = vst [vmem:[#allocation3 + $0x10] sm:$0xff] %v743
        %776 = vst [vmem:[#allocation3 + $0x18] sm:$0xff] %v744
        %777 = vst [vmem:[#allocation3 + $0x20] sm:$0xff] %v745
        %778 = vst [vmem:[#allocation3 + $0x28] sm:$0xff] %v746
        %779 = vst [vmem:[#allocation3 + $0x30] sm:$0xff] %v747
        %780 = vst [vmem:[#allocation3 + $0x38] sm:$0xff] %v748
        %781 = vst [vmem:[#allocation3 + $0x40] sm:$0xff] %v749
        %782 = vst [vmem:[#allocation3 + $0x48] sm:$0xff] %v750
        %783 = vst [vmem:[#allocation3 + $0x50] sm:$0xff] %v751
        %784 = vst [vmem:[#allocation3 + $0x58] sm:$0xff] %v752
        %785 = vst [vmem:[#allocation3 + $0x60] sm:$0xff] %v753
        %786 = vst [vmem:[#allocation3 + $0x68] sm:$0xff] %v754
        %787 = vst [vmem:[#allocation3 + $0x70] sm:$0xff] %v755
        %788 = vst [vmem:[#allocation3 + $0x78] sm:$0xff] %v756
        %789 = vst [vmem:[#allocation3 + $0x80] sm:$0xff] %v757
        %790 = vst [vmem:[#allocation3 + $0x88] sm:$0xff] %v758
        %791 = vst [vmem:[#allocation3 + $0x90] sm:$0xff] %v759
        %792 = vst [vmem:[#allocation3 + $0x98] sm:$0xff] %v760
        %793 = vst [vmem:[#allocation3 + $0xa0] sm:$0xff] %v761
        %794 = vst [vmem:[#allocation3 + $0xa8] sm:$0xff] %v762
        %795 = vst [vmem:[#allocation3 + $0xb0] sm:$0xff] %v763
        %796 = vst [vmem:[#allocation3 + $0xb8] sm:$0xff] %v764
        %797 = vst [vmem:[#allocation3 + $0xc0] sm:$0xff] %v765
        %798 = vst [vmem:[#allocation3 + $0xc8] sm:$0xff] %v766
        %799 = vst [vmem:[#allocation3 + $0xd0] sm:$0xff] %v767
        %800 = vst [vmem:[#allocation3 + $0xd8] sm:$0xff] %v768
        %801 = vst [vmem:[#allocation3 + $0xe0] sm:$0xff] %v769
        %802 = vst [vmem:[#allocation3 + $0xe8] sm:$0xff] %v770
        %803 = vst [vmem:[#allocation3 + $0xf0] sm:$0xff] %v771
        %804 = vst [vmem:[#allocation3 + $0xf8] sm:$0xff] %v772
        %v805 = vld [vmem:[#allocation2 + $0x1] sm:$0xff]
        %v806 = vld [vmem:[#allocation2 + $0x9] sm:$0xff]
        %v807 = vld [vmem:[#allocation2 + $0x19] sm:$0xff]
        %v808 = vld [vmem:[#allocation2 + $0x21] sm:$0xff]
        %v809 = vld [vmem:[#allocation2 + $0x31] sm:$0xff]
        %v810 = vld [vmem:[#allocation2 + $0x39] sm:$0xff]
        %v811 = vld [vmem:[#allocation2 + $0x49] sm:$0xff]
        %v812 = vld [vmem:[#allocation2 + $0x51] sm:$0xff]
        %v813 = vld [vmem:[#allocation2 + $0x61] sm:$0xff]
        %v814 = vld [vmem:[#allocation2 + $0x69] sm:$0xff]
        %v815 = vld [vmem:[#allocation2 + $0x79] sm:$0xff]
        %v816 = vld [vmem:[#allocation2 + $0x81] sm:$0xff]
        %v817 = vld [vmem:[#allocation2 + $0x91] sm:$0xff]
        %v818 = vld [vmem:[#allocation2 + $0x99] sm:$0xff]
        %v819 = vld [vmem:[#allocation2 + $0xa9] sm:$0xff]
        %v820 = vld [vmem:[#allocation2 + $0xb1] sm:$0xff]
        %v821 = vld [vmem:[#allocation2 + $0xc1] sm:$0xff]
        %v822 = vld [vmem:[#allocation2 + $0xc9] sm:$0xff]
        %v823 = vld [vmem:[#allocation2 + $0xd9] sm:$0xff]
        %v824 = vld [vmem:[#allocation2 + $0xe1] sm:$0xff]
        %v825 = vld [vmem:[#allocation2 + $0xf1] sm:$0xff]
        %v826 = vld [vmem:[#allocation2 + $0xf9] sm:$0xff]
        %v827 = vld [vmem:[#allocation2 + $0x109] sm:$0xff]
        %v828 = vld [vmem:[#allocation2 + $0x111] sm:$0xff]
        %v829 = vld [vmem:[#allocation2 + $0x121] sm:$0xff]
        %v830 = vld [vmem:[#allocation2 + $0x129] sm:$0xff]
        %v831 = vld [vmem:[#allocation2 + $0x139] sm:$0xff]
        %v832 = vld [vmem:[#allocation2 + $0x141] sm:$0xff]
        %v833 = vld [vmem:[#allocation2 + $0x151] sm:$0xff]
        %v834 = vld [vmem:[#allocation2 + $0x159] sm:$0xff]
        %v835 = vld [vmem:[#allocation2 + $0x169] sm:$0xff]
        %v836 = vld [vmem:[#allocation2 + $0x171] sm:$0xff]
        %v837 = vpack.c.bf16 %v806, %v805
        %v838 = vpack.c.bf16 %v808, %v807
        %v839 = vpack.c.bf16 %v810, %v809
        %v840 = vpack.c.bf16 %v812, %v811
        %v841 = vpack.c.bf16 %v814, %v813
        %v842 = vpack.c.bf16 %v816, %v815
        %v843 = vpack.c.bf16 %v818, %v817
        %v844 = vpack.c.bf16 %v820, %v819
        %v845 = vpack.c.bf16 %v822, %v821
        %v846 = vpack.c.bf16 %v824, %v823
        %v847 = vpack.c.bf16 %v826, %v825
        %v848 = vpack.c.bf16 %v828, %v827
        %v849 = vpack.c.bf16 %v830, %v829
        %v850 = vpack.c.bf16 %v832, %v831
        %v851 = vpack.c.bf16 %v834, %v833
        %v852 = vpack.c.bf16 %v836, %v835
        %v853 = vld [vmem:[#allocation3] sm:$0xff]
        %v854 = vld [vmem:[#allocation3 + $0x8] sm:$0xff]
        %v855 = vld [vmem:[#allocation3 + $0x10] sm:$0xff]
        %v856 = vld [vmem:[#allocation3 + $0x18] sm:$0xff]
        %v857 = vld [vmem:[#allocation3 + $0x20] sm:$0xff]
        %v858 = vld [vmem:[#allocation3 + $0x28] sm:$0xff]
        %v859 = vld [vmem:[#allocation3 + $0x30] sm:$0xff]
        %v860 = vld [vmem:[#allocation3 + $0x38] sm:$0xff]
        %v861 = vld [vmem:[#allocation3 + $0x40] sm:$0xff]
        %v862 = vld [vmem:[#allocation3 + $0x48] sm:$0xff]
        %v863 = vld [vmem:[#allocation3 + $0x50] sm:$0xff]
        %v864 = vld [vmem:[#allocation3 + $0x58] sm:$0xff]
        %v865 = vld [vmem:[#allocation3 + $0x60] sm:$0xff]
        %v866 = vld [vmem:[#allocation3 + $0x68] sm:$0xff]
        %v867 = vld [vmem:[#allocation3 + $0x70] sm:$0xff]
        %v868 = vld [vmem:[#allocation3 + $0x78] sm:$0xff]
        %v869 = vld [vmem:[#allocation3 + $0x80] sm:$0xff]
        %v870 = vld [vmem:[#allocation3 + $0x88] sm:$0xff]
        %v871 = vld [vmem:[#allocation3 + $0x90] sm:$0xff]
        %v872 = vld [vmem:[#allocation3 + $0x98] sm:$0xff]
        %v873 = vld [vmem:[#allocation3 + $0xa0] sm:$0xff]
        %v874 = vld [vmem:[#allocation3 + $0xa8] sm:$0xff]
        %v875 = vld [vmem:[#allocation3 + $0xb0] sm:$0xff]
        %v876 = vld [vmem:[#allocation3 + $0xb8] sm:$0xff]
        %v877 = vld [vmem:[#allocation3 + $0xc0] sm:$0xff]
        %v878 = vld [vmem:[#allocation3 + $0xc8] sm:$0xff]
        %v879 = vld [vmem:[#allocation3 + $0xd0] sm:$0xff]
        %v880 = vld [vmem:[#allocation3 + $0xd8] sm:$0xff]
        %v881 = vld [vmem:[#allocation3 + $0xe0] sm:$0xff]
        %v882 = vld [vmem:[#allocation3 + $0xe8] sm:$0xff]
        %v883 = vld [vmem:[#allocation3 + $0xf0] sm:$0xff]
        %v884 = vld [vmem:[#allocation3 + $0xf8] sm:$0xff]
        %s885 = scalar_lea.vmem [#allocation7], 64
        %v886 = vld [vmem:[%s885] sm:$0xf]
        %v887 = vld [vmem:[%s885 + $0x4] sm:$0xf]
        %v888 = vld [vmem:[%s885 + $0x8] sm:$0xf]
        %v889 = vld [vmem:[%s885 + $0xc] sm:$0xf]
        %v890 = vld [vmem:[%s885 + $0x10] sm:$0xf]
        %v891 = vld [vmem:[%s885 + $0x14] sm:$0xf]
        %v892 = vld [vmem:[%s885 + $0x18] sm:$0xf]
        %v893 = vld [vmem:[%s885 + $0x1c] sm:$0xf]
        %v894 = vld [vmem:[%s885 + $0x20] sm:$0xf]
        %v895 = vld [vmem:[%s885 + $0x24] sm:$0xf]
        %v896 = vld [vmem:[%s885 + $0x28] sm:$0xf]
        %v897 = vld [vmem:[%s885 + $0x2c] sm:$0xf]
        %v898 = vld [vmem:[%s885 + $0x30] sm:$0xf]
        %v899 = vld [vmem:[%s885 + $0x34] sm:$0xf]
        %v900 = vld [vmem:[%s885 + $0x38] sm:$0xf]
        %v901 = vld [vmem:[%s885 + $0x3c] sm:$0xf]
        %v918 = vunpack.c.l.b16 %v886
        %v919 = vunpack.c.l.b16 %v887
        %v920 = vunpack.c.l.b16 %v888
        %v921 = vunpack.c.l.b16 %v889
        %v922 = vunpack.c.l.b16 %v890
        %v923 = vunpack.c.l.b16 %v891
        %v924 = vunpack.c.l.b16 %v892
        %v925 = vunpack.c.l.b16 %v893
        %v926 = vunpack.c.l.b16 %v894
        %v927 = vunpack.c.l.b16 %v895
        %v928 = vunpack.c.l.b16 %v896
        %v929 = vunpack.c.l.b16 %v897
        %v930 = vunpack.c.l.b16 %v898
        %v931 = vunpack.c.l.b16 %v899
        %v932 = vunpack.c.l.b16 %v900
        %v933 = vunpack.c.l.b16 %v901
        %v934 = vpack.c.b16 %v919, %v918
        %v935 = vpack.c.b16 %v921, %v920
        %v936 = vpack.c.b16 %v923, %v922
        %v937 = vpack.c.b16 %v925, %v924
        %v938 = vpack.c.b16 %v927, %v926
        %v939 = vpack.c.b16 %v929, %v928
        %v940 = vpack.c.b16 %v931, %v930
        %v941 = vpack.c.b16 %v933, %v932
        %950 = vmatprep.subr.bf16.mxu0 0
        %951 = vmatpush1.bf16.msra.mxu0 %v934
        %952 = vmatprep.subr.bf16.mxu0 0
        %953 = vmatpush1.bf16.msra.mxu0 %v935
        %954 = vmatprep.subr.bf16.mxu0 0
        %955 = vmatpush1.bf16.msra.mxu0 %v936
        %956 = vmatprep.subr.bf16.mxu0 0
        %957 = vmatpush1.bf16.msra.mxu0 %v937
        %958 = vmatprep.subr.bf16.mxu0 0
        %959 = vmatpush1.bf16.msra.mxu0 %v938
        %960 = vmatprep.subr.bf16.mxu0 0
        %961 = vmatpush1.bf16.msra.mxu0 %v939
        %962 = vmatprep.subr.bf16.mxu0 0
        %963 = vmatpush1.bf16.msra.mxu0 %v940
        %964 = vmatprep.subr.bf16.mxu0 0
        %965 = vmatpush1.bf16.msra.mxu0 %v941
        %966 = vmatprep.subr.bf16.mxu0 0
        %967 = vmatpush1.bf16.msra.mxu0 0
        %968 = vmatprep.subr.bf16.mxu0 0
        %969 = vmatpush1.bf16.msra.mxu0 0
        %970 = vmatprep.subr.bf16.mxu0 0
        %971 = vmatpush1.bf16.msra.mxu0 0
        %972 = vmatprep.subr.bf16.mxu0 0
        %973 = vmatpush1.bf16.msra.mxu0 0
        %974 = vmatprep.subr.bf16.mxu0 0
        %975 = vmatpush1.bf16.msra.mxu0 0
        %976 = vmatprep.subr.bf16.mxu0 0
        %977 = vmatpush1.bf16.msra.mxu0 0
        %978 = vmatprep.subr.bf16.mxu0 0
        %979 = vmatpush1.bf16.msra.mxu0 0
        %980 = vmatprep.subr.bf16.mxu0 0
        %981 = vmatpush1.bf16.msra.mxu0 0
        %982 = vmatprep.mubr.bf16.mxu0 0
        %983 = vmatmul.mubr.bf16.gmra.mrb[0].mxu0 %v837
        %v984 = vpop.f32.mrb[0].mxu0
        %v985 = vadd.f32 0.0, %v984
        %v986 = vpop.f32.mrb[0].mxu0
        %v987 = vpop.f32.mrb[0].mxu0
        %v988 = vadd.f32 0.0, %v987
        %v989 = vpop.f32.mrb[0].mxu0
        %990 = vmatprep.mubr.bf16.mxu0 0
        %991 = vmatmul.mubr.bf16.gmra.mrb[0].mxu0 %v838
        %v992 = vpop.f32.mrb[0].mxu0
        %v993 = vadd.f32 0.0, %v992
        %v994 = vpop.f32.mrb[0].mxu0
        %v995 = vpop.f32.mrb[0].mxu0
        %v996 = vadd.f32 0.0, %v995
        %v997 = vpop.f32.mrb[0].mxu0
        %998 = vmatprep.mubr.bf16.mxu0 0
        %999 = vmatmul.mubr.bf16.gmra.mrb[0].mxu0 %v839
        %v1000 = vpop.f32.mrb[0].mxu0
        %v1001 = vadd.f32 0.0, %v1000
        %v1002 = vpop.f32.mrb[0].mxu0
        %v1003 = vpop.f32.mrb[0].mxu0
        %v1004 = vadd.f32 0.0, %v1003
        %v1005 = vpop.f32.mrb[0].mxu0
        %1006 = vmatprep.mubr.bf16.mxu0 0
        %1007 = vmatmul.mubr.bf16.gmra.mrb[0].mxu0 %v840
        %v1008 = vpop.f32.mrb[0].mxu0
        %v1009 = vadd.f32 0.0, %v1008
        %v1010 = vpop.f32.mrb[0].mxu0
        %v1011 = vpop.f32.mrb[0].mxu0
        %v1012 = vadd.f32 0.0, %v1011
        %v1013 = vpop.f32.mrb[0].mxu0
        %1014 = vmatprep.mubr.bf16.mxu0 0
        %1015 = vmatmul.mubr.bf16.gmra.mrb[0].mxu0 %v841
        %v1016 = vpop.f32.mrb[0].mxu0
        %v1017 = vadd.f32 0.0, %v1016
        %v1018 = vpop.f32.mrb[0].mxu0
        %v1019 = vpop.f32.mrb[0].mxu0
        %v1020 = vadd.f32 0.0, %v1019
        %v1021 = vpop.f32.mrb[0].mxu0
        %1022 = vmatprep.mubr.bf16.mxu0 0
        %1023 = vmatmul.mubr.bf16.gmra.mrb[0].mxu0 %v842
        %v1024 = vpop.f32.mrb[0].mxu0
        %v1025 = vadd.f32 0.0, %v1024
        %v1026 = vpop.f32.mrb[0].mxu0
        %v1027 = vpop.f32.mrb[0].mxu0
        %v1028 = vadd.f32 0.0, %v1027
        %v1029 = vpop.f32.mrb[0].mxu0
        %1030 = vmatprep.mubr.bf16.mxu0 0
        %1031 = vmatmul.mubr.bf16.gmra.mrb[0].mxu0 %v843
        %v1032 = vpop.f32.mrb[0].mxu0
        %v1033 = vadd.f32 0.0, %v1032
        %v1034 = vpop.f32.mrb[0].mxu0
        %v1035 = vpop.f32.mrb[0].mxu0
        %v1036 = vadd.f32 0.0, %v1035
        %v1037 = vpop.f32.mrb[0].mxu0
        %1038 = vmatprep.mubr.bf16.mxu0 0
        %1039 = vmatmul.mubr.bf16.gmra.mrb[0].mxu0 %v844
        %v1040 = vpop.f32.mrb[0].mxu0
        %v1041 = vadd.f32 0.0, %v1040
        %v1042 = vpop.f32.mrb[0].mxu0
        %v1043 = vpop.f32.mrb[0].mxu0
        %v1044 = vadd.f32 0.0, %v1043
        %v1045 = vpop.f32.mrb[0].mxu0
        %1046 = vmatprep.mubr.bf16.mxu0 0
        %1047 = vmatmul.mubr.bf16.gmra.mrb[0].mxu0 %v845
        %v1048 = vpop.f32.mrb[0].mxu0
        %v1049 = vadd.f32 0.0, %v1048
        %v1050 = vpop.f32.mrb[0].mxu0
        %v1051 = vpop.f32.mrb[0].mxu0
        %v1052 = vadd.f32 0.0, %v1051
        %v1053 = vpop.f32.mrb[0].mxu0
        %1054 = vmatprep.mubr.bf16.mxu0 0
        %1055 = vmatmul.mubr.bf16.gmra.mrb[0].mxu0 %v846
        %v1056 = vpop.f32.mrb[0].mxu0
        %v1057 = vadd.f32 0.0, %v1056
        %v1058 = vpop.f32.mrb[0].mxu0
        %v1059 = vpop.f32.mrb[0].mxu0
        %v1060 = vadd.f32 0.0, %v1059
        %v1061 = vpop.f32.mrb[0].mxu0
        %1062 = vmatprep.mubr.bf16.mxu0 0
        %1063 = vmatmul.mubr.bf16.gmra.mrb[0].mxu0 %v847
        %v1064 = vpop.f32.mrb[0].mxu0
        %v1065 = vadd.f32 0.0, %v1064
        %v1066 = vpop.f32.mrb[0].mxu0
        %v1067 = vpop.f32.mrb[0].mxu0
        %v1068 = vadd.f32 0.0, %v1067
        %v1069 = vpop.f32.mrb[0].mxu0
        %1070 = vmatprep.mubr.bf16.mxu0 0
        %1071 = vmatmul.mubr.bf16.gmra.mrb[0].mxu0 %v848
        %v1072 = vpop.f32.mrb[0].mxu0
        %v1073 = vadd.f32 0.0, %v1072
        %v1074 = vpop.f32.mrb[0].mxu0
        %v1075 = vpop.f32.mrb[0].mxu0
        %v1076 = vadd.f32 0.0, %v1075
        %v1077 = vpop.f32.mrb[0].mxu0
        %1078 = vmatprep.mubr.bf16.mxu0 0
        %1079 = vmatmul.mubr.bf16.gmra.mrb[0].mxu0 %v849
        %v1080 = vpop.f32.mrb[0].mxu0
        %v1081 = vadd.f32 0.0, %v1080
        %v1082 = vpop.f32.mrb[0].mxu0
        %v1083 = vpop.f32.mrb[0].mxu0
        %v1084 = vadd.f32 0.0, %v1083
        %v1085 = vpop.f32.mrb[0].mxu0
        %1086 = vmatprep.mubr.bf16.mxu0 0
        %1087 = vmatmul.mubr.bf16.gmra.mrb[0].mxu0 %v850
        %v1088 = vpop.f32.mrb[0].mxu0
        %v1089 = vadd.f32 0.0, %v1088
        %v1090 = vpop.f32.mrb[0].mxu0
        %v1091 = vpop.f32.mrb[0].mxu0
        %v1092 = vadd.f32 0.0, %v1091
        %v1093 = vpop.f32.mrb[0].mxu0
        %1094 = vmatprep.mubr.bf16.mxu0 0
        %1095 = vmatmul.mubr.bf16.gmra.mrb[0].mxu0 %v851
        %v1096 = vpop.f32.mrb[0].mxu0
        %v1097 = vadd.f32 0.0, %v1096
        %v1098 = vpop.f32.mrb[0].mxu0
        %v1099 = vpop.f32.mrb[0].mxu0
        %v1100 = vadd.f32 0.0, %v1099
        %v1101 = vpop.f32.mrb[0].mxu0
        %1102 = vmatprep.mubr.bf16.mxu0 0
        %1103 = vmatmul.mubr.bf16.gmra.mrb[0].mxu0 %v852
        %v1104 = vpop.f32.mrb[0].mxu0
        %v1105 = vadd.f32 0.0, %v1104
        %v1106 = vpop.f32.mrb[0].mxu0
        %v1107 = vpop.f32.mrb[0].mxu0
        %v1108 = vadd.f32 0.0, %v1107
        %v1109 = vpop.f32.mrb[0].mxu0
        %1110 = vdwg.mxu0
        %v1111 = vadd.f32 %v853, %v985
        %v1112 = vadd.f32 %v854, %v988
        %v1113 = vadd.f32 %v855, %v993
        %v1114 = vadd.f32 %v856, %v996
        %v1115 = vadd.f32 %v857, %v1001
        %v1116 = vadd.f32 %v858, %v1004
        %v1117 = vadd.f32 %v859, %v1009
        %v1118 = vadd.f32 %v860, %v1012
        %v1119 = vadd.f32 %v861, %v1017
        %v1120 = vadd.f32 %v862, %v1020
        %v1121 = vadd.f32 %v863, %v1025
        %v1122 = vadd.f32 %v864, %v1028
        %v1123 = vadd.f32 %v865, %v1033
        %v1124 = vadd.f32 %v866, %v1036
        %v1125 = vadd.f32 %v867, %v1041
        %v1126 = vadd.f32 %v868, %v1044
        %v1127 = vadd.f32 %v869, %v1049
        %v1128 = vadd.f32 %v870, %v1052
        %v1129 = vadd.f32 %v871, %v1057
        %v1130 = vadd.f32 %v872, %v1060
        %v1131 = vadd.f32 %v873, %v1065
        %v1132 = vadd.f32 %v874, %v1068
        %v1133 = vadd.f32 %v875, %v1073
        %v1134 = vadd.f32 %v876, %v1076
        %v1135 = vadd.f32 %v877, %v1081
        %v1136 = vadd.f32 %v878, %v1084
        %v1137 = vadd.f32 %v879, %v1089
        %v1138 = vadd.f32 %v880, %v1092
        %v1139 = vadd.f32 %v881, %v1097
        %v1140 = vadd.f32 %v882, %v1100
        %v1141 = vadd.f32 %v883, %v1105
        %v1142 = vadd.f32 %v884, %v1108
        %1143 = vst [vmem:[#allocation3] sm:$0xff] %v1111
        %1144 = vst [vmem:[#allocation3 + $0x8] sm:$0xff] %v1112
        %1145 = vst [vmem:[#allocation3 + $0x10] sm:$0xff] %v1113
        %1146 = vst [vmem:[#allocation3 + $0x18] sm:$0xff] %v1114
        %1147 = vst [vmem:[#allocation3 + $0x20] sm:$0xff] %v1115
        %1148 = vst [vmem:[#allocation3 + $0x28] sm:$0xff] %v1116
        %1149 = vst [vmem:[#allocation3 + $0x30] sm:$0xff] %v1117
        %1150 = vst [vmem:[#allocation3 + $0x38] sm:$0xff] %v1118
        %1151 = vst [vmem:[#allocation3 + $0x40] sm:$0xff] %v1119
        %1152 = vst [vmem:[#allocation3 + $0x48] sm:$0xff] %v1120
        %1153 = vst [vmem:[#allocation3 + $0x50] sm:$0xff] %v1121
        %1154 = vst [vmem:[#allocation3 + $0x58] sm:$0xff] %v1122
        %1155 = vst [vmem:[#allocation3 + $0x60] sm:$0xff] %v1123
        %1156 = vst [vmem:[#allocation3 + $0x68] sm:$0xff] %v1124
        %1157 = vst [vmem:[#allocation3 + $0x70] sm:$0xff] %v1125
        %1158 = vst [vmem:[#allocation3 + $0x78] sm:$0xff] %v1126
        %1159 = vst [vmem:[#allocation3 + $0x80] sm:$0xff] %v1127
        %1160 = vst [vmem:[#allocation3 + $0x88] sm:$0xff] %v1128
        %1161 = vst [vmem:[#allocation3 + $0x90] sm:$0xff] %v1129
        %1162 = vst [vmem:[#allocation3 + $0x98] sm:$0xff] %v1130
        %1163 = vst [vmem:[#allocation3 + $0xa0] sm:$0xff] %v1131
        %1164 = vst [vmem:[#allocation3 + $0xa8] sm:$0xff] %v1132
        %1165 = vst [vmem:[#allocation3 + $0xb0] sm:$0xff] %v1133
        %1166 = vst [vmem:[#allocation3 + $0xb8] sm:$0xff] %v1134
        %1167 = vst [vmem:[#allocation3 + $0xc0] sm:$0xff] %v1135
        %1168 = vst [vmem:[#allocation3 + $0xc8] sm:$0xff] %v1136
        %1169 = vst [vmem:[#allocation3 + $0xd0] sm:$0xff] %v1137
        %1170 = vst [vmem:[#allocation3 + $0xd8] sm:$0xff] %v1138
        %1171 = vst [vmem:[#allocation3 + $0xe0] sm:$0xff] %v1139
        %1172 = vst [vmem:[#allocation3 + $0xe8] sm:$0xff] %v1140
        %1173 = vst [vmem:[#allocation3 + $0xf0] sm:$0xff] %v1141
        %1174 = vst [vmem:[#allocation3 + $0xf8] sm:$0xff] %v1142
        %v1175 = vld [vmem:[#allocation2 + $0x2] sm:$0xff]
        %v1176 = vld [vmem:[#allocation2 + $0xa] sm:$0xff]
        %v1177 = vld [vmem:[#allocation2 + $0x1a] sm:$0xff]
        %v1178 = vld [vmem:[#allocation2 + $0x22] sm:$0xff]
        %v1179 = vld [vmem:[#allocation2 + $0x32] sm:$0xff]
        %v1180 = vld [vmem:[#allocation2 + $0x3a] sm:$0xff]
        %v1181 = vld [vmem:[#allocation2 + $0x4a] sm:$0xff]
        %v1182 = vld [vmem:[#allocation2 + $0x52] sm:$0xff]
        %v1183 = vld [vmem:[#allocation2 + $0x62] sm:$0xff]
        %v1184 = vld [vmem:[#allocation2 + $0x6a] sm:$0xff]
        %v1185 = vld [vmem:[#allocation2 + $0x7a] sm:$0xff]
        %v1186 = vld [vmem:[#allocation2 + $0x82] sm:$0xff]
        %v1187 = vld [vmem:[#allocation2 + $0x92] sm:$0xff]
        %v1188 = vld [vmem:[#allocation2 + $0x9a] sm:$0xff]
        %v1189 = vld [vmem:[#allocation2 + $0xaa] sm:$0xff]
        %v1190 = vld [vmem:[#allocation2 + $0xb2] sm:$0xff]
        %v1191 = vld [vmem:[#allocation2 + $0xc2] sm:$0xff]
        %v1192 = vld [vmem:[#allocation2 + $0xca] sm:$0xff]
        %v1193 = vld [vmem:[#allocation2 + $0xda] sm:$0xff]
        %v1194 = vld [vmem:[#allocation2 + $0xe2] sm:$0xff]
        %v1195 = vld [vmem:[#allocation2 + $0xf2] sm:$0xff]
        %v1196 = vld [vmem:[#allocation2 + $0xfa] sm:$0xff]
        %v1197 = vld [vmem:[#allocation2 + $0x10a] sm:$0xff]
        %v1198 = vld [vmem:[#allocation2 + $0x112] sm:$0xff]
        %v1199 = vld [vmem:[#allocation2 + $0x122] sm:$0xff]
        %v1200 = vld [vmem:[#allocation2 + $0x12a] sm:$0xff]
        %v1201 = vld [vmem:[#allocation2 + $0x13a] sm:$0xff]
        %v1202 = vld [vmem:[#allocation2 + $0x142] sm:$0xff]
        %v1203 = vld [vmem:[#allocation2 + $0x152] sm:$0xff]
        %v1204 = vld [vmem:[#allocation2 + $0x15a] sm:$0xff]
        %v1205 = vld [vmem:[#allocation2 + $0x16a] sm:$0xff]
        %v1206 = vld [vmem:[#allocation2 + $0x172] sm:$0xff]
        %v1207 = vpack.c.bf16 %v1176, %v1175
        %v1208 = vpack.c.bf16 %v1178, %v1177
        %v1209 = vpack.c.bf16 %v1180, %v1179
        %v1210 = vpack.c.bf16 %v1182, %v1181
        %v1211 = vpack.c.bf16 %v1184, %v1183
        %v1212 = vpack.c.bf16 %v1186, %v1185
        %v1213 = vpack.c.bf16 %v1188, %v1187
        %v1214 = vpack.c.bf16 %v1190, %v1189
        %v1215 = vpack.c.bf16 %v1192, %v1191
        %v1216 = vpack.c.bf16 %v1194, %v1193
        %v1217 = vpack.c.bf16 %v1196, %v1195
        %v1218 = vpack.c.bf16 %v1198, %v1197
        %v1219 = vpack.c.bf16 %v1200, %v1199
        %v1220 = vpack.c.bf16 %v1202, %v1201
        %v1221 = vpack.c.bf16 %v1204, %v1203
        %v1222 = vpack.c.bf16 %v1206, %v1205
        %v1223 = vld [vmem:[#allocation3] sm:$0xff]
        %v1224 = vld [vmem:[#allocation3 + $0x8] sm:$0xff]
        %v1225 = vld [vmem:[#allocation3 + $0x10] sm:$0xff]
        %v1226 = vld [vmem:[#allocation3 + $0x18] sm:$0xff]
        %v1227 = vld [vmem:[#allocation3 + $0x20] sm:$0xff]
        %v1228 = vld [vmem:[#allocation3 + $0x28] sm:$0xff]
        %v1229 = vld [vmem:[#allocation3 + $0x30] sm:$0xff]
        %v1230 = vld [vmem:[#allocation3 + $0x38] sm:$0xff]
        %v1231 = vld [vmem:[#allocation3 + $0x40] sm:$0xff]
        %v1232 = vld [vmem:[#allocation3 + $0x48] sm:$0xff]
        %v1233 = vld [vmem:[#allocation3 + $0x50] sm:$0xff]
        %v1234 = vld [vmem:[#allocation3 + $0x58] sm:$0xff]
        %v1235 = vld [vmem:[#allocation3 + $0x60] sm:$0xff]
        %v1236 = vld [vmem:[#allocation3 + $0x68] sm:$0xff]
        %v1237 = vld [vmem:[#allocation3 + $0x70] sm:$0xff]
        %v1238 = vld [vmem:[#allocation3 + $0x78] sm:$0xff]
        %v1239 = vld [vmem:[#allocation3 + $0x80] sm:$0xff]
        %v1240 = vld [vmem:[#allocation3 + $0x88] sm:$0xff]
        %v1241 = vld [vmem:[#allocation3 + $0x90] sm:$0xff]
        %v1242 = vld [vmem:[#allocation3 + $0x98] sm:$0xff]
        %v1243 = vld [vmem:[#allocation3 + $0xa0] sm:$0xff]
        %v1244 = vld [vmem:[#allocation3 + $0xa8] sm:$0xff]
        %v1245 = vld [vmem:[#allocation3 + $0xb0] sm:$0xff]
        %v1246 = vld [vmem:[#allocation3 + $0xb8] sm:$0xff]
        %v1247 = vld [vmem:[#allocation3 + $0xc0] sm:$0xff]
        %v1248 = vld [vmem:[#allocation3 + $0xc8] sm:$0xff]
        %v1249 = vld [vmem:[#allocation3 + $0xd0] sm:$0xff]
        %v1250 = vld [vmem:[#allocation3 + $0xd8] sm:$0xff]
        %v1251 = vld [vmem:[#allocation3 + $0xe0] sm:$0xff]
        %v1252 = vld [vmem:[#allocation3 + $0xe8] sm:$0xff]
        %v1253 = vld [vmem:[#allocation3 + $0xf0] sm:$0xff]
        %v1254 = vld [vmem:[#allocation3 + $0xf8] sm:$0xff]
        %s1255 = scalar_lea.vmem [#allocation7], 128
        %v1256 = vld [vmem:[%s1255] sm:$0xf]
        %v1257 = vld [vmem:[%s1255 + $0x4] sm:$0xf]
        %v1258 = vld [vmem:[%s1255 + $0x8] sm:$0xf]
        %v1259 = vld [vmem:[%s1255 + $0xc] sm:$0xf]
        %v1260 = vld [vmem:[%s1255 + $0x10] sm:$0xf]
        %v1261 = vld [vmem:[%s1255 + $0x14] sm:$0xf]
        %v1262 = vld [vmem:[%s1255 + $0x18] sm:$0xf]
        %v1263 = vld [vmem:[%s1255 + $0x1c] sm:$0xf]
        %v1264 = vld [vmem:[%s1255 + $0x20] sm:$0xf]
        %v1265 = vld [vmem:[%s1255 + $0x24] sm:$0xf]
        %v1266 = vld [vmem:[%s1255 + $0x28] sm:$0xf]
        %v1267 = vld [vmem:[%s1255 + $0x2c] sm:$0xf]
        %v1268 = vld [vmem:[%s1255 + $0x30] sm:$0xf]
        %v1269 = vld [vmem:[%s1255 + $0x34] sm:$0xf]
        %v1270 = vld [vmem:[%s1255 + $0x38] sm:$0xf]
        %v1271 = vld [vmem:[%s1255 + $0x3c] sm:$0xf]
        %v1288 = vunpack.c.l.b16 %v1256
        %v1289 = vunpack.c.l.b16 %v1257
        %v1290 = vunpack.c.l.b16 %v1258
        %v1291 = vunpack.c.l.b16 %v1259
        %v1292 = vunpack.c.l.b16 %v1260
        %v1293 = vunpack.c.l.b16 %v1261
        %v1294 = vunpack.c.l.b16 %v1262
        %v1295 = vunpack.c.l.b16 %v1263
        %v1296 = vunpack.c.l.b16 %v1264
        %v1297 = vunpack.c.l.b16 %v1265
        %v1298 = vunpack.c.l.b16 %v1266
        %v1299 = vunpack.c.l.b16 %v1267
        %v1300 = vunpack.c.l.b16 %v1268
        %v1301 = vunpack.c.l.b16 %v1269
        %v1302 = vunpack.c.l.b16 %v1270
        %v1303 = vunpack.c.l.b16 %v1271
        %v1304 = vpack.c.b16 %v1289, %v1288
        %v1305 = vpack.c.b16 %v1291, %v1290
        %v1306 = vpack.c.b16 %v1293, %v1292
        %v1307 = vpack.c.b16 %v1295, %v1294
        %v1308 = vpack.c.b16 %v1297, %v1296
        %v1309 = vpack.c.b16 %v1299, %v1298
        %v1310 = vpack.c.b16 %v1301, %v1300
        %v1311 = vpack.c.b16 %v1303, %v1302
        %1320 = vmatprep.subr.bf16.mxu0 0
        %1321 = vmatpush1.bf16.msra.mxu0 %v1304
        %1322 = vmatprep.subr.bf16.mxu0 0
        %1323 = vmatpush1.bf16.msra.mxu0 %v1305
        %1324 = vmatprep.subr.bf16.mxu0 0
        %1325 = vmatpush1.bf16.msra.mxu0 %v1306
        %1326 = vmatprep.subr.bf16.mxu0 0
        %1327 = vmatpush1.bf16.msra.mxu0 %v1307
        %1328 = vmatprep.subr.bf16.mxu0 0
        %1329 = vmatpush1.bf16.msra.mxu0 %v1308
        %1330 = vmatprep.subr.bf16.mxu0 0
        %1331 = vmatpush1.bf16.msra.mxu0 %v1309
        %1332 = vmatprep.subr.bf16.mxu0 0
        %1333 = vmatpush1.bf16.msra.mxu0 %v1310
        %1334 = vmatprep.subr.bf16.mxu0 0
        %1335 = vmatpush1.bf16.msra.mxu0 %v1311
        %1336 = vmatprep.subr.bf16.mxu0 0
        %1337 = vmatpush1.bf16.msra.mxu0 0
        %1338 = vmatprep.subr.bf16.mxu0 0
        %1339 = vmatpush1.bf16.msra.mxu0 0
        %1340 = vmatprep.subr.bf16.mxu0 0
        %1341 = vmatpush1.bf16.msra.mxu0 0
        %1342 = vmatprep.subr.bf16.mxu0 0
        %1343 = vmatpush1.bf16.msra.mxu0 0
        %1344 = vmatprep.subr.bf16.mxu0 0
        %1345 = vmatpush1.bf16.msra.mxu0 0
        %1346 = vmatprep.subr.bf16.mxu0 0
        %1347 = vmatpush1.bf16.msra.mxu0 0
        %1348 = vmatprep.subr.bf16.mxu0 0
        %1349 = vmatpush1.bf16.msra.mxu0 0
        %1350 = vmatprep.subr.bf16.mxu0 0
        %1351 = vmatpush1.bf16.msra.mxu0 0
        %1352 = vmatprep.mubr.bf16.mxu0 0
        %1353 = vmatmul.mubr.bf16.gmra.mrb[0].mxu0 %v1207
        %v1354 = vpop.f32.mrb[0].mxu0
        %v1355 = vadd.f32 0.0, %v1354
        %v1356 = vpop.f32.mrb[0].mxu0
        %v1357 = vpop.f32.mrb[0].mxu0
        %v1358 = vadd.f32 0.0, %v1357
        %v1359 = vpop.f32.mrb[0].mxu0
        %1360 = vmatprep.mubr.bf16.mxu0 0
        %1361 = vmatmul.mubr.bf16.gmra.mrb[0].mxu0 %v1208
        %v1362 = vpop.f32.mrb[0].mxu0
        %v1363 = vadd.f32 0.0, %v1362
        %v1364 = vpop.f32.mrb[0].mxu0
        %v1365 = vpop.f32.mrb[0].mxu0
        %v1366 = vadd.f32 0.0, %v1365
        %v1367 = vpop.f32.mrb[0].mxu0
        %1368 = vmatprep.mubr.bf16.mxu0 0
        %1369 = vmatmul.mubr.bf16.gmra.mrb[0].mxu0 %v1209
        %v1370 = vpop.f32.mrb[0].mxu0
        %v1371 = vadd.f32 0.0, %v1370
        %v1372 = vpop.f32.mrb[0].mxu0
        %v1373 = vpop.f32.mrb[0].mxu0
        %v1374 = vadd.f32 0.0, %v1373
        %v1375 = vpop.f32.mrb[0].mxu0
        %1376 = vmatprep.mubr.bf16.mxu0 0
        %1377 = vmatmul.mubr.bf16.gmra.mrb[0].mxu0 %v1210
        %v1378 = vpop.f32.mrb[0].mxu0
        %v1379 = vadd.f32 0.0, %v1378
        %v1380 = vpop.f32.mrb[0].mxu0
        %v1381 = vpop.f32.mrb[0].mxu0
        %v1382 = vadd.f32 0.0, %v1381
        %v1383 = vpop.f32.mrb[0].mxu0
        %1384 = vmatprep.mubr.bf16.mxu0 0
        %1385 = vmatmul.mubr.bf16.gmra.mrb[0].mxu0 %v1211
        %v1386 = vpop.f32.mrb[0].mxu0
        %v1387 = vadd.f32 0.0, %v1386
        %v1388 = vpop.f32.mrb[0].mxu0
        %v1389 = vpop.f32.mrb[0].mxu0
        %v1390 = vadd.f32 0.0, %v1389
        %v1391 = vpop.f32.mrb[0].mxu0
        %1392 = vmatprep.mubr.bf16.mxu0 0
        %1393 = vmatmul.mubr.bf16.gmra.mrb[0].mxu0 %v1212
        %v1394 = vpop.f32.mrb[0].mxu0
        %v1395 = vadd.f32 0.0, %v1394
        %v1396 = vpop.f32.mrb[0].mxu0
        %v1397 = vpop.f32.mrb[0].mxu0
        %v1398 = vadd.f32 0.0, %v1397
        %v1399 = vpop.f32.mrb[0].mxu0
        %1400 = vmatprep.mubr.bf16.mxu0 0
        %1401 = vmatmul.mubr.bf16.gmra.mrb[0].mxu0 %v1213
        %v1402 = vpop.f32.mrb[0].mxu0
        %v1403 = vadd.f32 0.0, %v1402
        %v1404 = vpop.f32.mrb[0].mxu0
        %v1405 = vpop.f32.mrb[0].mxu0
        %v1406 = vadd.f32 0.0, %v1405
        %v1407 = vpop.f32.mrb[0].mxu0
        %1408 = vmatprep.mubr.bf16.mxu0 0
        %1409 = vmatmul.mubr.bf16.gmra.mrb[0].mxu0 %v1214
        %v1410 = vpop.f32.mrb[0].mxu0
        %v1411 = vadd.f32 0.0, %v1410
        %v1412 = vpop.f32.mrb[0].mxu0
        %v1413 = vpop.f32.mrb[0].mxu0
        %v1414 = vadd.f32 0.0, %v1413
        %v1415 = vpop.f32.mrb[0].mxu0
        %1416 = vmatprep.mubr.bf16.mxu0 0
        %1417 = vmatmul.mubr.bf16.gmra.mrb[0].mxu0 %v1215
        %v1418 = vpop.f32.mrb[0].mxu0
        %v1419 = vadd.f32 0.0, %v1418
        %v1420 = vpop.f32.mrb[0].mxu0
        %v1421 = vpop.f32.mrb[0].mxu0
        %v1422 = vadd.f32 0.0, %v1421
        %v1423 = vpop.f32.mrb[0].mxu0
        %1424 = vmatprep.mubr.bf16.mxu0 0
        %1425 = vmatmul.mubr.bf16.gmra.mrb[0].mxu0 %v1216
        %v1426 = vpop.f32.mrb[0].mxu0
        %v1427 = vadd.f32 0.0, %v1426
        %v1428 = vpop.f32.mrb[0].mxu0
        %v1429 = vpop.f32.mrb[0].mxu0
        %v1430 = vadd.f32 0.0, %v1429
        %v1431 = vpop.f32.mrb[0].mxu0
        %1432 = vmatprep.mubr.bf16.mxu0 0
        %1433 = vmatmul.mubr.bf16.gmra.mrb[0].mxu0 %v1217
        %v1434 = vpop.f32.mrb[0].mxu0
        %v1435 = vadd.f32 0.0, %v1434
        %v1436 = vpop.f32.mrb[0].mxu0
        %v1437 = vpop.f32.mrb[0].mxu0
        %v1438 = vadd.f32 0.0, %v1437
        %v1439 = vpop.f32.mrb[0].mxu0
        %1440 = vmatprep.mubr.bf16.mxu0 0
        %1441 = vmatmul.mubr.bf16.gmra.mrb[0].mxu0 %v1218
        %v1442 = vpop.f32.mrb[0].mxu0
        %v1443 = vadd.f32 0.0, %v1442
        %v1444 = vpop.f32.mrb[0].mxu0
        %v1445 = vpop.f32.mrb[0].mxu0
        %v1446 = vadd.f32 0.0, %v1445
        %v1447 = vpop.f32.mrb[0].mxu0
        %1448 = vmatprep.mubr.bf16.mxu0 0
        %1449 = vmatmul.mubr.bf16.gmra.mrb[0].mxu0 %v1219
        %v1450 = vpop.f32.mrb[0].mxu0
        %v1451 = vadd.f32 0.0, %v1450
        %v1452 = vpop.f32.mrb[0].mxu0
        %v1453 = vpop.f32.mrb[0].mxu0
        %v1454 = vadd.f32 0.0, %v1453
        %v1455 = vpop.f32.mrb[0].mxu0
        %1456 = vmatprep.mubr.bf16.mxu0 0
        %1457 = vmatmul.mubr.bf16.gmra.mrb[0].mxu0 %v1220
        %v1458 = vpop.f32.mrb[0].mxu0
        %v1459 = vadd.f32 0.0, %v1458
        %v1460 = vpop.f32.mrb[0].mxu0
        %v1461 = vpop.f32.mrb[0].mxu0
        %v1462 = vadd.f32 0.0, %v1461
        %v1463 = vpop.f32.mrb[0].mxu0
        %1464 = vmatprep.mubr.bf16.mxu0 0
        %1465 = vmatmul.mubr.bf16.gmra.mrb[0].mxu0 %v1221
        %v1466 = vpop.f32.mrb[0].mxu0
        %v1467 = vadd.f32 0.0, %v1466
        %v1468 = vpop.f32.mrb[0].mxu0
        %v1469 = vpop.f32.mrb[0].mxu0
        %v1470 = vadd.f32 0.0, %v1469
        %v1471 = vpop.f32.mrb[0].mxu0
        %1472 = vmatprep.mubr.bf16.mxu0 0
        %1473 = vmatmul.mubr.bf16.gmra.mrb[0].mxu0 %v1222
        %v1474 = vpop.f32.mrb[0].mxu0
        %v1475 = vadd.f32 0.0, %v1474
        %v1476 = vpop.f32.mrb[0].mxu0
        %v1477 = vpop.f32.mrb[0].mxu0
        %v1478 = vadd.f32 0.0, %v1477
        %v1479 = vpop.f32.mrb[0].mxu0
        %1480 = vdwg.mxu0
        %v1481 = vadd.f32 %v1223, %v1355
        %v1482 = vadd.f32 %v1224, %v1358
        %v1483 = vadd.f32 %v1225, %v1363
        %v1484 = vadd.f32 %v1226, %v1366
        %v1485 = vadd.f32 %v1227, %v1371
        %v1486 = vadd.f32 %v1228, %v1374
        %v1487 = vadd.f32 %v1229, %v1379
        %v1488 = vadd.f32 %v1230, %v1382
        %v1489 = vadd.f32 %v1231, %v1387
        %v1490 = vadd.f32 %v1232, %v1390
        %v1491 = vadd.f32 %v1233, %v1395
        %v1492 = vadd.f32 %v1234, %v1398
        %v1493 = vadd.f32 %v1235, %v1403
        %v1494 = vadd.f32 %v1236, %v1406
        %v1495 = vadd.f32 %v1237, %v1411
        %v1496 = vadd.f32 %v1238, %v1414
        %v1497 = vadd.f32 %v1239, %v1419
        %v1498 = vadd.f32 %v1240, %v1422
        %v1499 = vadd.f32 %v1241, %v1427
        %v1500 = vadd.f32 %v1242, %v1430
        %v1501 = vadd.f32 %v1243, %v1435
        %v1502 = vadd.f32 %v1244, %v1438
        %v1503 = vadd.f32 %v1245, %v1443
        %v1504 = vadd.f32 %v1246, %v1446
        %v1505 = vadd.f32 %v1247, %v1451
        %v1506 = vadd.f32 %v1248, %v1454
        %v1507 = vadd.f32 %v1249, %v1459
        %v1508 = vadd.f32 %v1250, %v1462
        %v1509 = vadd.f32 %v1251, %v1467
        %v1510 = vadd.f32 %v1252, %v1470
        %v1511 = vadd.f32 %v1253, %v1475
        %v1512 = vadd.f32 %v1254, %v1478
        %1513 = vst [vmem:[#allocation3] sm:$0xff] %v1481
        %1514 = vst [vmem:[#allocation3 + $0x8] sm:$0xff] %v1482
        %1515 = vst [vmem:[#allocation3 + $0x10] sm:$0xff] %v1483
        %1516 = vst [vmem:[#allocation3 + $0x18] sm:$0xff] %v1484
        %1517 = vst [vmem:[#allocation3 + $0x20] sm:$0xff] %v1485
        %1518 = vst [vmem:[#allocation3 + $0x28] sm:$0xff] %v1486
        %1519 = vst [vmem:[#allocation3 + $0x30] sm:$0xff] %v1487
        %1520 = vst [vmem:[#allocation3 + $0x38] sm:$0xff] %v1488
        %1521 = vst [vmem:[#allocation3 + $0x40] sm:$0xff] %v1489
        %1522 = vst [vmem:[#allocation3 + $0x48] sm:$0xff] %v1490
        %1523 = vst [vmem:[#allocation3 + $0x50] sm:$0xff] %v1491
        %1524 = vst [vmem:[#allocation3 + $0x58] sm:$0xff] %v1492
        %1525 = vst [vmem:[#allocation3 + $0x60] sm:$0xff] %v1493
        %1526 = vst [vmem:[#allocation3 + $0x68] sm:$0xff] %v1494
        %1527 = vst [vmem:[#allocation3 + $0x70] sm:$0xff] %v1495
        %1528 = vst [vmem:[#allocation3 + $0x78] sm:$0xff] %v1496
        %1529 = vst [vmem:[#allocation3 + $0x80] sm:$0xff] %v1497
        %1530 = vst [vmem:[#allocation3 + $0x88] sm:$0xff] %v1498
        %1531 = vst [vmem:[#allocation3 + $0x90] sm:$0xff] %v1499
        %1532 = vst [vmem:[#allocation3 + $0x98] sm:$0xff] %v1500
        %1533 = vst [vmem:[#allocation3 + $0xa0] sm:$0xff] %v1501
        %1534 = vst [vmem:[#allocation3 + $0xa8] sm:$0xff] %v1502
        %1535 = vst [vmem:[#allocation3 + $0xb0] sm:$0xff] %v1503
        %1536 = vst [vmem:[#allocation3 + $0xb8] sm:$0xff] %v1504
        %1537 = vst [vmem:[#allocation3 + $0xc0] sm:$0xff] %v1505
        %1538 = vst [vmem:[#allocation3 + $0xc8] sm:$0xff] %v1506
        %1539 = vst [vmem:[#allocation3 + $0xd0] sm:$0xff] %v1507
        %1540 = vst [vmem:[#allocation3 + $0xd8] sm:$0xff] %v1508
        %1541 = vst [vmem:[#allocation3 + $0xe0] sm:$0xff] %v1509
        %1542 = vst [vmem:[#allocation3 + $0xe8] sm:$0xff] %v1510
        %1543 = vst [vmem:[#allocation3 + $0xf0] sm:$0xff] %v1511
        %1544 = vst [vmem:[#allocation3 + $0xf8] sm:$0xff] %v1512
        %v1545 = vld [vmem:[%s330] sm:$0xff]
        %v1546 = vld [vmem:[%s330 + $0x8] sm:$0xff]
        %v1547 = vld [vmem:[%s330 + $0x18] sm:$0xff]
        %v1548 = vld [vmem:[%s330 + $0x20] sm:$0xff]
        %v1549 = vld [vmem:[%s330 + $0x30] sm:$0xff]
        %v1550 = vld [vmem:[%s330 + $0x38] sm:$0xff]
        %v1551 = vld [vmem:[%s330 + $0x48] sm:$0xff]
        %v1552 = vld [vmem:[%s330 + $0x50] sm:$0xff]
        %v1553 = vld [vmem:[%s330 + $0x60] sm:$0xff]
        %v1554 = vld [vmem:[%s330 + $0x68] sm:$0xff]
        %v1555 = vld [vmem:[%s330 + $0x78] sm:$0xff]
        %v1556 = vld [vmem:[%s330 + $0x80] sm:$0xff]
        %v1557 = vld [vmem:[%s330 + $0x90] sm:$0xff]
        %v1558 = vld [vmem:[%s330 + $0x98] sm:$0xff]
        %v1559 = vld [vmem:[%s330 + $0xa8] sm:$0xff]
        %v1560 = vld [vmem:[%s330 + $0xb0] sm:$0xff]
        %v1561 = vld [vmem:[%s330 + $0xc0] sm:$0xff]
        %v1562 = vld [vmem:[%s330 + $0xc8] sm:$0xff]
        %v1563 = vld [vmem:[%s330 + $0xd8] sm:$0xff]
        %v1564 = vld [vmem:[%s330 + $0xe0] sm:$0xff]
        %v1565 = vld [vmem:[%s330 + $0xf0] sm:$0xff]
        %v1566 = vld [vmem:[%s330 + $0xf8] sm:$0xff]
        %v1567 = vld [vmem:[%s330 + $0x108] sm:$0xff]
        %v1568 = vld [vmem:[%s330 + $0x110] sm:$0xff]
        %v1569 = vld [vmem:[%s330 + $0x120] sm:$0xff]
        %v1570 = vld [vmem:[%s330 + $0x128] sm:$0xff]
        %v1571 = vld [vmem:[%s330 + $0x138] sm:$0xff]
        %v1572 = vld [vmem:[%s330 + $0x140] sm:$0xff]
        %v1573 = vld [vmem:[%s330 + $0x150] sm:$0xff]
        %v1574 = vld [vmem:[%s330 + $0x158] sm:$0xff]
        %v1575 = vld [vmem:[%s330 + $0x168] sm:$0xff]
        %v1576 = vld [vmem:[%s330 + $0x170] sm:$0xff]
        %v1577 = vpack.c.bf16 %v1546, %v1545
        %v1578 = vpack.c.bf16 %v1548, %v1547
        %v1579 = vpack.c.bf16 %v1550, %v1549
        %v1580 = vpack.c.bf16 %v1552, %v1551
        %v1581 = vpack.c.bf16 %v1554, %v1553
        %v1582 = vpack.c.bf16 %v1556, %v1555
        %v1583 = vpack.c.bf16 %v1558, %v1557
        %v1584 = vpack.c.bf16 %v1560, %v1559
        %v1585 = vpack.c.bf16 %v1562, %v1561
        %v1586 = vpack.c.bf16 %v1564, %v1563
        %v1587 = vpack.c.bf16 %v1566, %v1565
        %v1588 = vpack.c.bf16 %v1568, %v1567
        %v1589 = vpack.c.bf16 %v1570, %v1569
        %v1590 = vpack.c.bf16 %v1572, %v1571
        %v1591 = vpack.c.bf16 %v1574, %v1573
        %v1592 = vpack.c.bf16 %v1576, %v1575
        %v1593 = vld [vmem:[#allocation3] sm:$0xff]
        %v1594 = vld [vmem:[#allocation3 + $0x8] sm:$0xff]
        %v1595 = vld [vmem:[#allocation3 + $0x10] sm:$0xff]
        %v1596 = vld [vmem:[#allocation3 + $0x18] sm:$0xff]
        %v1597 = vld [vmem:[#allocation3 + $0x20] sm:$0xff]
        %v1598 = vld [vmem:[#allocation3 + $0x28] sm:$0xff]
        %v1599 = vld [vmem:[#allocation3 + $0x30] sm:$0xff]
        %v1600 = vld [vmem:[#allocation3 + $0x38] sm:$0xff]
        %v1601 = vld [vmem:[#allocation3 + $0x40] sm:$0xff]
        %v1602 = vld [vmem:[#allocation3 + $0x48] sm:$0xff]
        %v1603 = vld [vmem:[#allocation3 + $0x50] sm:$0xff]
        %v1604 = vld [vmem:[#allocation3 + $0x58] sm:$0xff]
        %v1605 = vld [vmem:[#allocation3 + $0x60] sm:$0xff]
        %v1606 = vld [vmem:[#allocation3 + $0x68] sm:$0xff]
        %v1607 = vld [vmem:[#allocation3 + $0x70] sm:$0xff]
        %v1608 = vld [vmem:[#allocation3 + $0x78] sm:$0xff]
        %v1609 = vld [vmem:[#allocation3 + $0x80] sm:$0xff]
        %v1610 = vld [vmem:[#allocation3 + $0x88] sm:$0xff]
        %v1611 = vld [vmem:[#allocation3 + $0x90] sm:$0xff]
        %v1612 = vld [vmem:[#allocation3 + $0x98] sm:$0xff]
        %v1613 = vld [vmem:[#allocation3 + $0xa0] sm:$0xff]
        %v1614 = vld [vmem:[#allocation3 + $0xa8] sm:$0xff]
        %v1615 = vld [vmem:[#allocation3 + $0xb0] sm:$0xff]
        %v1616 = vld [vmem:[#allocation3 + $0xb8] sm:$0xff]
        %v1617 = vld [vmem:[#allocation3 + $0xc0] sm:$0xff]
        %v1618 = vld [vmem:[#allocation3 + $0xc8] sm:$0xff]
        %v1619 = vld [vmem:[#allocation3 + $0xd0] sm:$0xff]
        %v1620 = vld [vmem:[#allocation3 + $0xd8] sm:$0xff]
        %v1621 = vld [vmem:[#allocation3 + $0xe0] sm:$0xff]
        %v1622 = vld [vmem:[#allocation3 + $0xe8] sm:$0xff]
        %v1623 = vld [vmem:[#allocation3 + $0xf0] sm:$0xff]
        %v1624 = vld [vmem:[#allocation3 + $0xf8] sm:$0xff]
        %s1625 = scalar_lea.vmem [#allocation7], 192
        %v1626 = vld [vmem:[%s1625] sm:$0xf]
        %v1627 = vld [vmem:[%s1625 + $0x4] sm:$0xf]
        %v1628 = vld [vmem:[%s1625 + $0x8] sm:$0xf]
        %v1629 = vld [vmem:[%s1625 + $0xc] sm:$0xf]
        %v1630 = vld [vmem:[%s1625 + $0x10] sm:$0xf]
        %v1631 = vld [vmem:[%s1625 + $0x14] sm:$0xf]
        %v1632 = vld [vmem:[%s1625 + $0x18] sm:$0xf]
        %v1633 = vld [vmem:[%s1625 + $0x1c] sm:$0xf]
        %v1634 = vld [vmem:[%s1625 + $0x20] sm:$0xf]
        %v1635 = vld [vmem:[%s1625 + $0x24] sm:$0xf]
        %v1636 = vld [vmem:[%s1625 + $0x28] sm:$0xf]
        %v1637 = vld [vmem:[%s1625 + $0x2c] sm:$0xf]
        %v1638 = vld [vmem:[%s1625 + $0x30] sm:$0xf]
        %v1639 = vld [vmem:[%s1625 + $0x34] sm:$0xf]
        %v1640 = vld [vmem:[%s1625 + $0x38] sm:$0xf]
        %v1641 = vld [vmem:[%s1625 + $0x3c] sm:$0xf]
        %v1658 = vunpack.c.l.b16 %v1626
        %v1659 = vunpack.c.l.b16 %v1627
        %v1660 = vunpack.c.l.b16 %v1628
        %v1661 = vunpack.c.l.b16 %v1629
        %v1662 = vunpack.c.l.b16 %v1630
        %v1663 = vunpack.c.l.b16 %v1631
        %v1664 = vunpack.c.l.b16 %v1632
        %v1665 = vunpack.c.l.b16 %v1633
        %v1666 = vunpack.c.l.b16 %v1634
        %v1667 = vunpack.c.l.b16 %v1635
        %v1668 = vunpack.c.l.b16 %v1636
        %v1669 = vunpack.c.l.b16 %v1637
        %v1670 = vunpack.c.l.b16 %v1638
        %v1671 = vunpack.c.l.b16 %v1639
        %v1672 = vunpack.c.l.b16 %v1640
        %v1673 = vunpack.c.l.b16 %v1641
        %v1674 = vpack.c.b16 %v1659, %v1658
        %v1675 = vpack.c.b16 %v1661, %v1660
        %v1676 = vpack.c.b16 %v1663, %v1662
        %v1677 = vpack.c.b16 %v1665, %v1664
        %v1678 = vpack.c.b16 %v1667, %v1666
        %v1679 = vpack.c.b16 %v1669, %v1668
        %v1680 = vpack.c.b16 %v1671, %v1670
        %v1681 = vpack.c.b16 %v1673, %v1672
        %1690 = vmatprep.subr.bf16.mxu0 0
        %1691 = vmatpush1.bf16.msra.mxu0 %v1674
        %1692 = vmatprep.subr.bf16.mxu0 0
        %1693 = vmatpush1.bf16.msra.mxu0 %v1675
        %1694 = vmatprep.subr.bf16.mxu0 0
        %1695 = vmatpush1.bf16.msra.mxu0 %v1676
        %1696 = vmatprep.subr.bf16.mxu0 0
        %1697 = vmatpush1.bf16.msra.mxu0 %v1677
        %1698 = vmatprep.subr.bf16.mxu0 0
        %1699 = vmatpush1.bf16.msra.mxu0 %v1678
        %1700 = vmatprep.subr.bf16.mxu0 0
        %1701 = vmatpush1.bf16.msra.mxu0 %v1679
        %1702 = vmatprep.subr.bf16.mxu0 0
        %1703 = vmatpush1.bf16.msra.mxu0 %v1680
        %1704 = vmatprep.subr.bf16.mxu0 0
        %1705 = vmatpush1.bf16.msra.mxu0 %v1681
        %1706 = vmatprep.subr.bf16.mxu0 0
        %1707 = vmatpush1.bf16.msra.mxu0 0
        %1708 = vmatprep.subr.bf16.mxu0 0
        %1709 = vmatpush1.bf16.msra.mxu0 0
        %1710 = vmatprep.subr.bf16.mxu0 0
        %1711 = vmatpush1.bf16.msra.mxu0 0
        %1712 = vmatprep.subr.bf16.mxu0 0
        %1713 = vmatpush1.bf16.msra.mxu0 0
        %1714 = vmatprep.subr.bf16.mxu0 0
        %1715 = vmatpush1.bf16.msra.mxu0 0
        %1716 = vmatprep.subr.bf16.mxu0 0
        %1717 = vmatpush1.bf16.msra.mxu0 0
        %1718 = vmatprep.subr.bf16.mxu0 0
        %1719 = vmatpush1.bf16.msra.mxu0 0
        %1720 = vmatprep.subr.bf16.mxu0 0
        %1721 = vmatpush1.bf16.msra.mxu0 0
        %1722 = vmatprep.mubr.bf16.mxu0 0
        %1723 = vmatmul.mubr.bf16.gmra.mrb[0].mxu0 %v1577
        %v1724 = vpop.f32.mrb[0].mxu0
        %v1725 = vadd.f32 0.0, %v1724
        %v1726 = vpop.f32.mrb[0].mxu0
        %v1727 = vpop.f32.mrb[0].mxu0
        %v1728 = vadd.f32 0.0, %v1727
        %v1729 = vpop.f32.mrb[0].mxu0
        %1730 = vmatprep.mubr.bf16.mxu0 0
        %1731 = vmatmul.mubr.bf16.gmra.mrb[0].mxu0 %v1578
        %v1732 = vpop.f32.mrb[0].mxu0
        %v1733 = vadd.f32 0.0, %v1732
        %v1734 = vpop.f32.mrb[0].mxu0
        %v1735 = vpop.f32.mrb[0].mxu0
        %v1736 = vadd.f32 0.0, %v1735
        %v1737 = vpop.f32.mrb[0].mxu0
        %1738 = vmatprep.mubr.bf16.mxu0 0
        %1739 = vmatmul.mubr.bf16.gmra.mrb[0].mxu0 %v1579
        %v1740 = vpop.f32.mrb[0].mxu0
        %v1741 = vadd.f32 0.0, %v1740
        %v1742 = vpop.f32.mrb[0].mxu0
        %v1743 = vpop.f32.mrb[0].mxu0
        %v1744 = vadd.f32 0.0, %v1743
        %v1745 = vpop.f32.mrb[0].mxu0
        %1746 = vmatprep.mubr.bf16.mxu0 0
        %1747 = vmatmul.mubr.bf16.gmra.mrb[0].mxu0 %v1580
        %v1748 = vpop.f32.mrb[0].mxu0
        %v1749 = vadd.f32 0.0, %v1748
        %v1750 = vpop.f32.mrb[0].mxu0
        %v1751 = vpop.f32.mrb[0].mxu0
        %v1752 = vadd.f32 0.0, %v1751
        %v1753 = vpop.f32.mrb[0].mxu0
        %1754 = vmatprep.mubr.bf16.mxu0 0
        %1755 = vmatmul.mubr.bf16.gmra.mrb[0].mxu0 %v1581
        %v1756 = vpop.f32.mrb[0].mxu0
        %v1757 = vadd.f32 0.0, %v1756
        %v1758 = vpop.f32.mrb[0].mxu0
        %v1759 = vpop.f32.mrb[0].mxu0
        %v1760 = vadd.f32 0.0, %v1759
        %v1761 = vpop.f32.mrb[0].mxu0
        %1762 = vmatprep.mubr.bf16.mxu0 0
        %1763 = vmatmul.mubr.bf16.gmra.mrb[0].mxu0 %v1582
        %v1764 = vpop.f32.mrb[0].mxu0
        %v1765 = vadd.f32 0.0, %v1764
        %v1766 = vpop.f32.mrb[0].mxu0
        %v1767 = vpop.f32.mrb[0].mxu0
        %v1768 = vadd.f32 0.0, %v1767
        %v1769 = vpop.f32.mrb[0].mxu0
        %1770 = vmatprep.mubr.bf16.mxu0 0
        %1771 = vmatmul.mubr.bf16.gmra.mrb[0].mxu0 %v1583
        %v1772 = vpop.f32.mrb[0].mxu0
        %v1773 = vadd.f32 0.0, %v1772
        %v1774 = vpop.f32.mrb[0].mxu0
        %v1775 = vpop.f32.mrb[0].mxu0
        %v1776 = vadd.f32 0.0, %v1775
        %v1777 = vpop.f32.mrb[0].mxu0
        %1778 = vmatprep.mubr.bf16.mxu0 0
        %1779 = vmatmul.mubr.bf16.gmra.mrb[0].mxu0 %v1584
        %v1780 = vpop.f32.mrb[0].mxu0
        %v1781 = vadd.f32 0.0, %v1780
        %v1782 = vpop.f32.mrb[0].mxu0
        %v1783 = vpop.f32.mrb[0].mxu0
        %v1784 = vadd.f32 0.0, %v1783
        %v1785 = vpop.f32.mrb[0].mxu0
        %1786 = vmatprep.mubr.bf16.mxu0 0
        %1787 = vmatmul.mubr.bf16.gmra.mrb[0].mxu0 %v1585
        %v1788 = vpop.f32.mrb[0].mxu0
        %v1789 = vadd.f32 0.0, %v1788
        %v1790 = vpop.f32.mrb[0].mxu0
        %v1791 = vpop.f32.mrb[0].mxu0
        %v1792 = vadd.f32 0.0, %v1791
        %v1793 = vpop.f32.mrb[0].mxu0
        %1794 = vmatprep.mubr.bf16.mxu0 0
        %1795 = vmatmul.mubr.bf16.gmra.mrb[0].mxu0 %v1586
        %v1796 = vpop.f32.mrb[0].mxu0
        %v1797 = vadd.f32 0.0, %v1796
        %v1798 = vpop.f32.mrb[0].mxu0
        %v1799 = vpop.f32.mrb[0].mxu0
        %v1800 = vadd.f32 0.0, %v1799
        %v1801 = vpop.f32.mrb[0].mxu0
        %1802 = vmatprep.mubr.bf16.mxu0 0
        %1803 = vmatmul.mubr.bf16.gmra.mrb[0].mxu0 %v1587
        %v1804 = vpop.f32.mrb[0].mxu0
        %v1805 = vadd.f32 0.0, %v1804
        %v1806 = vpop.f32.mrb[0].mxu0
        %v1807 = vpop.f32.mrb[0].mxu0
        %v1808 = vadd.f32 0.0, %v1807
        %v1809 = vpop.f32.mrb[0].mxu0
        %1810 = vmatprep.mubr.bf16.mxu0 0
        %1811 = vmatmul.mubr.bf16.gmra.mrb[0].mxu0 %v1588
        %v1812 = vpop.f32.mrb[0].mxu0
        %v1813 = vadd.f32 0.0, %v1812
        %v1814 = vpop.f32.mrb[0].mxu0
        %v1815 = vpop.f32.mrb[0].mxu0
        %v1816 = vadd.f32 0.0, %v1815
        %v1817 = vpop.f32.mrb[0].mxu0
        %1818 = vmatprep.mubr.bf16.mxu0 0
        %1819 = vmatmul.mubr.bf16.gmra.mrb[0].mxu0 %v1589
        %v1820 = vpop.f32.mrb[0].mxu0
        %v1821 = vadd.f32 0.0, %v1820
        %v1822 = vpop.f32.mrb[0].mxu0
        %v1823 = vpop.f32.mrb[0].mxu0
        %v1824 = vadd.f32 0.0, %v1823
        %v1825 = vpop.f32.mrb[0].mxu0
        %1826 = vmatprep.mubr.bf16.mxu0 0
        %1827 = vmatmul.mubr.bf16.gmra.mrb[0].mxu0 %v1590
        %v1828 = vpop.f32.mrb[0].mxu0
        %v1829 = vadd.f32 0.0, %v1828
        %v1830 = vpop.f32.mrb[0].mxu0
        %v1831 = vpop.f32.mrb[0].mxu0
        %v1832 = vadd.f32 0.0, %v1831
        %v1833 = vpop.f32.mrb[0].mxu0
        %1834 = vmatprep.mubr.bf16.mxu0 0
        %1835 = vmatmul.mubr.bf16.gmra.mrb[0].mxu0 %v1591
        %v1836 = vpop.f32.mrb[0].mxu0
        %v1837 = vadd.f32 0.0, %v1836
        %v1838 = vpop.f32.mrb[0].mxu0
        %v1839 = vpop.f32.mrb[0].mxu0
        %v1840 = vadd.f32 0.0, %v1839
        %v1841 = vpop.f32.mrb[0].mxu0
        %1842 = vmatprep.mubr.bf16.mxu0 0
        %1843 = vmatmul.mubr.bf16.gmra.mrb[0].mxu0 %v1592
        %v1844 = vpop.f32.mrb[0].mxu0
        %v1845 = vadd.f32 0.0, %v1844
        %v1846 = vpop.f32.mrb[0].mxu0
        %v1847 = vpop.f32.mrb[0].mxu0
        %v1848 = vadd.f32 0.0, %v1847
        %v1849 = vpop.f32.mrb[0].mxu0
        %1850 = vdwg.mxu0
        %v1851 = vadd.f32 %v1593, %v1725
        %v1852 = vadd.f32 %v1594, %v1728
        %v1853 = vadd.f32 %v1595, %v1733
        %v1854 = vadd.f32 %v1596, %v1736
        %v1855 = vadd.f32 %v1597, %v1741
        %v1856 = vadd.f32 %v1598, %v1744
        %v1857 = vadd.f32 %v1599, %v1749
        %v1858 = vadd.f32 %v1600, %v1752
        %v1859 = vadd.f32 %v1601, %v1757
        %v1860 = vadd.f32 %v1602, %v1760
        %v1861 = vadd.f32 %v1603, %v1765
        %v1862 = vadd.f32 %v1604, %v1768
        %v1863 = vadd.f32 %v1605, %v1773
        %v1864 = vadd.f32 %v1606, %v1776
        %v1865 = vadd.f32 %v1607, %v1781
        %v1866 = vadd.f32 %v1608, %v1784
        %v1867 = vadd.f32 %v1609, %v1789
        %v1868 = vadd.f32 %v1610, %v1792
        %v1869 = vadd.f32 %v1611, %v1797
        %v1870 = vadd.f32 %v1612, %v1800
        %v1871 = vadd.f32 %v1613, %v1805
        %v1872 = vadd.f32 %v1614, %v1808
        %v1873 = vadd.f32 %v1615, %v1813
        %v1874 = vadd.f32 %v1616, %v1816
        %v1875 = vadd.f32 %v1617, %v1821
        %v1876 = vadd.f32 %v1618, %v1824
        %v1877 = vadd.f32 %v1619, %v1829
        %v1878 = vadd.f32 %v1620, %v1832
        %v1879 = vadd.f32 %v1621, %v1837
        %v1880 = vadd.f32 %v1622, %v1840
        %v1881 = vadd.f32 %v1623, %v1845
        %v1882 = vadd.f32 %v1624, %v1848
        %1883 = vst [vmem:[#allocation3] sm:$0xff] %v1851
        %1884 = vst [vmem:[#allocation3 + $0x8] sm:$0xff] %v1852
        %1885 = vst [vmem:[#allocation3 + $0x10] sm:$0xff] %v1853
        %1886 = vst [vmem:[#allocation3 + $0x18] sm:$0xff] %v1854
        %1887 = vst [vmem:[#allocation3 + $0x20] sm:$0xff] %v1855
        %1888 = vst [vmem:[#allocation3 + $0x28] sm:$0xff] %v1856
        %1889 = vst [vmem:[#allocation3 + $0x30] sm:$0xff] %v1857
        %1890 = vst [vmem:[#allocation3 + $0x38] sm:$0xff] %v1858
        %1891 = vst [vmem:[#allocation3 + $0x40] sm:$0xff] %v1859
        %1892 = vst [vmem:[#allocation3 + $0x48] sm:$0xff] %v1860
        %1893 = vst [vmem:[#allocation3 + $0x50] sm:$0xff] %v1861
        %1894 = vst [vmem:[#allocation3 + $0x58] sm:$0xff] %v1862
        %1895 = vst [vmem:[#allocation3 + $0x60] sm:$0xff] %v1863
        %1896 = vst [vmem:[#allocation3 + $0x68] sm:$0xff] %v1864
        %1897 = vst [vmem:[#allocation3 + $0x70] sm:$0xff] %v1865
        %1898 = vst [vmem:[#allocation3 + $0x78] sm:$0xff] %v1866
        %1899 = vst [vmem:[#allocation3 + $0x80] sm:$0xff] %v1867
        %1900 = vst [vmem:[#allocation3 + $0x88] sm:$0xff] %v1868
        %1901 = vst [vmem:[#allocation3 + $0x90] sm:$0xff] %v1869
        %1902 = vst [vmem:[#allocation3 + $0x98] sm:$0xff] %v1870
        %1903 = vst [vmem:[#allocation3 + $0xa0] sm:$0xff] %v1871
        %1904 = vst [vmem:[#allocation3 + $0xa8] sm:$0xff] %v1872
        %1905 = vst [vmem:[#allocation3 + $0xb0] sm:$0xff] %v1873
        %1906 = vst [vmem:[#allocation3 + $0xb8] sm:$0xff] %v1874
        %1907 = vst [vmem:[#allocation3 + $0xc0] sm:$0xff] %v1875
        %1908 = vst [vmem:[#allocation3 + $0xc8] sm:$0xff] %v1876
        %1909 = vst [vmem:[#allocation3 + $0xd0] sm:$0xff] %v1877
        %1910 = vst [vmem:[#allocation3 + $0xd8] sm:$0xff] %v1878
        %1911 = vst [vmem:[#allocation3 + $0xe0] sm:$0xff] %v1879
        %1912 = vst [vmem:[#allocation3 + $0xe8] sm:$0xff] %v1880
        %1913 = vst [vmem:[#allocation3 + $0xf0] sm:$0xff] %v1881
        %1914 = vst [vmem:[#allocation3 + $0xf8] sm:$0xff] %v1882
        %v1915 = vld [vmem:[%s330 + $0x1] sm:$0xff]
        %v1916 = vld [vmem:[%s330 + $0x9] sm:$0xff]
        %v1917 = vld [vmem:[%s330 + $0x19] sm:$0xff]
        %v1918 = vld [vmem:[%s330 + $0x21] sm:$0xff]
        %v1919 = vld [vmem:[%s330 + $0x31] sm:$0xff]
        %v1920 = vld [vmem:[%s330 + $0x39] sm:$0xff]
        %v1921 = vld [vmem:[%s330 + $0x49] sm:$0xff]
        %v1922 = vld [vmem:[%s330 + $0x51] sm:$0xff]
        %v1923 = vld [vmem:[%s330 + $0x61] sm:$0xff]
        %v1924 = vld [vmem:[%s330 + $0x69] sm:$0xff]
        %v1925 = vld [vmem:[%s330 + $0x79] sm:$0xff]
        %v1926 = vld [vmem:[%s330 + $0x81] sm:$0xff]
        %v1927 = vld [vmem:[%s330 + $0x91] sm:$0xff]
        %v1928 = vld [vmem:[%s330 + $0x99] sm:$0xff]
        %v1929 = vld [vmem:[%s330 + $0xa9] sm:$0xff]
        %v1930 = vld [vmem:[%s330 + $0xb1] sm:$0xff]
        %v1931 = vld [vmem:[%s330 + $0xc1] sm:$0xff]
        %v1932 = vld [vmem:[%s330 + $0xc9] sm:$0xff]
        %v1933 = vld [vmem:[%s330 + $0xd9] sm:$0xff]
        %v1934 = vld [vmem:[%s330 + $0xe1] sm:$0xff]
        %v1935 = vld [vmem:[%s330 + $0xf1] sm:$0xff]
        %v1936 = vld [vmem:[%s330 + $0xf9] sm:$0xff]
        %v1937 = vld [vmem:[%s330 + $0x109] sm:$0xff]
        %v1938 = vld [vmem:[%s330 + $0x111] sm:$0xff]
        %v1939 = vld [vmem:[%s330 + $0x121] sm:$0xff]
        %v1940 = vld [vmem:[%s330 + $0x129] sm:$0xff]
        %v1941 = vld [vmem:[%s330 + $0x139] sm:$0xff]
        %v1942 = vld [vmem:[%s330 + $0x141] sm:$0xff]
        %v1943 = vld [vmem:[%s330 + $0x151] sm:$0xff]
        %v1944 = vld [vmem:[%s330 + $0x159] sm:$0xff]
        %v1945 = vld [vmem:[%s330 + $0x169] sm:$0xff]
        %v1946 = vld [vmem:[%s330 + $0x171] sm:$0xff]
        %v1947 = vpack.c.bf16 %v1916, %v1915
        %v1948 = vpack.c.bf16 %v1918, %v1917
        %v1949 = vpack.c.bf16 %v1920, %v1919
        %v1950 = vpack.c.bf16 %v1922, %v1921
        %v1951 = vpack.c.bf16 %v1924, %v1923
        %v1952 = vpack.c.bf16 %v1926, %v1925
        %v1953 = vpack.c.bf16 %v1928, %v1927
        %v1954 = vpack.c.bf16 %v1930, %v1929
        %v1955 = vpack.c.bf16 %v1932, %v1931
        %v1956 = vpack.c.bf16 %v1934, %v1933
        %v1957 = vpack.c.bf16 %v1936, %v1935
        %v1958 = vpack.c.bf16 %v1938, %v1937
        %v1959 = vpack.c.bf16 %v1940, %v1939
        %v1960 = vpack.c.bf16 %v1942, %v1941
        %v1961 = vpack.c.bf16 %v1944, %v1943
        %v1962 = vpack.c.bf16 %v1946, %v1945
        %v1963 = vld [vmem:[#allocation3] sm:$0xff]
        %v1964 = vld [vmem:[#allocation3 + $0x8] sm:$0xff]
        %v1965 = vld [vmem:[#allocation3 + $0x10] sm:$0xff]
        %v1966 = vld [vmem:[#allocation3 + $0x18] sm:$0xff]
        %v1967 = vld [vmem:[#allocation3 + $0x20] sm:$0xff]
        %v1968 = vld [vmem:[#allocation3 + $0x28] sm:$0xff]
        %v1969 = vld [vmem:[#allocation3 + $0x30] sm:$0xff]
        %v1970 = vld [vmem:[#allocation3 + $0x38] sm:$0xff]
        %v1971 = vld [vmem:[#allocation3 + $0x40] sm:$0xff]
        %v1972 = vld [vmem:[#allocation3 + $0x48] sm:$0xff]
        %v1973 = vld [vmem:[#allocation3 + $0x50] sm:$0xff]
        %v1974 = vld [vmem:[#allocation3 + $0x58] sm:$0xff]
        %v1975 = vld [vmem:[#allocation3 + $0x60] sm:$0xff]
        %v1976 = vld [vmem:[#allocation3 + $0x68] sm:$0xff]
        %v1977 = vld [vmem:[#allocation3 + $0x70] sm:$0xff]
        %v1978 = vld [vmem:[#allocation3 + $0x78] sm:$0xff]
        %v1979 = vld [vmem:[#allocation3 + $0x80] sm:$0xff]
        %v1980 = vld [vmem:[#allocation3 + $0x88] sm:$0xff]
        %v1981 = vld [vmem:[#allocation3 + $0x90] sm:$0xff]
        %v1982 = vld [vmem:[#allocation3 + $0x98] sm:$0xff]
        %v1983 = vld [vmem:[#allocation3 + $0xa0] sm:$0xff]
        %v1984 = vld [vmem:[#allocation3 + $0xa8] sm:$0xff]
        %v1985 = vld [vmem:[#allocation3 + $0xb0] sm:$0xff]
        %v1986 = vld [vmem:[#allocation3 + $0xb8] sm:$0xff]
        %v1987 = vld [vmem:[#allocation3 + $0xc0] sm:$0xff]
        %v1988 = vld [vmem:[#allocation3 + $0xc8] sm:$0xff]
        %v1989 = vld [vmem:[#allocation3 + $0xd0] sm:$0xff]
        %v1990 = vld [vmem:[#allocation3 + $0xd8] sm:$0xff]
        %v1991 = vld [vmem:[#allocation3 + $0xe0] sm:$0xff]
        %v1992 = vld [vmem:[#allocation3 + $0xe8] sm:$0xff]
        %v1993 = vld [vmem:[#allocation3 + $0xf0] sm:$0xff]
        %v1994 = vld [vmem:[#allocation3 + $0xf8] sm:$0xff]
        %s1995 = scalar_lea.vmem [#allocation7], 256
        %v1996 = vld [vmem:[%s1995] sm:$0xf]
        %v1997 = vld [vmem:[%s1995 + $0x4] sm:$0xf]
        %v1998 = vld [vmem:[%s1995 + $0x8] sm:$0xf]
        %v1999 = vld [vmem:[%s1995 + $0xc] sm:$0xf]
        %v2000 = vld [vmem:[%s1995 + $0x10] sm:$0xf]
        %v2001 = vld [vmem:[%s1995 + $0x14] sm:$0xf]
        %v2002 = vld [vmem:[%s1995 + $0x18] sm:$0xf]
        %v2003 = vld [vmem:[%s1995 + $0x1c] sm:$0xf]
        %v2004 = vld [vmem:[%s1995 + $0x20] sm:$0xf]
        %v2005 = vld [vmem:[%s1995 + $0x24] sm:$0xf]
        %v2006 = vld [vmem:[%s1995 + $0x28] sm:$0xf]
        %v2007 = vld [vmem:[%s1995 + $0x2c] sm:$0xf]
        %v2008 = vld [vmem:[%s1995 + $0x30] sm:$0xf]
        %v2009 = vld [vmem:[%s1995 + $0x34] sm:$0xf]
        %v2010 = vld [vmem:[%s1995 + $0x38] sm:$0xf]
        %v2011 = vld [vmem:[%s1995 + $0x3c] sm:$0xf]
        %v2028 = vunpack.c.l.b16 %v1996
        %v2029 = vunpack.c.l.b16 %v1997
        %v2030 = vunpack.c.l.b16 %v1998
        %v2031 = vunpack.c.l.b16 %v1999
        %v2032 = vunpack.c.l.b16 %v2000
        %v2033 = vunpack.c.l.b16 %v2001
        %v2034 = vunpack.c.l.b16 %v2002
        %v2035 = vunpack.c.l.b16 %v2003
        %v2036 = vunpack.c.l.b16 %v2004
        %v2037 = vunpack.c.l.b16 %v2005
        %v2038 = vunpack.c.l.b16 %v2006
        %v2039 = vunpack.c.l.b16 %v2007
        %v2040 = vunpack.c.l.b16 %v2008
        %v2041 = vunpack.c.l.b16 %v2009
        %v2042 = vunpack.c.l.b16 %v2010
        %v2043 = vunpack.c.l.b16 %v2011
        %v2044 = vpack.c.b16 %v2029, %v2028
        %v2045 = vpack.c.b16 %v2031, %v2030
        %v2046 = vpack.c.b16 %v2033, %v2032
        %v2047 = vpack.c.b16 %v2035, %v2034
        %v2048 = vpack.c.b16 %v2037, %v2036
        %v2049 = vpack.c.b16 %v2039, %v2038
        %v2050 = vpack.c.b16 %v2041, %v2040
        %v2051 = vpack.c.b16 %v2043, %v2042
        %2060 = vmatprep.subr.bf16.mxu0 0
        %2061 = vmatpush1.bf16.msra.mxu0 %v2044
        %2062 = vmatprep.subr.bf16.mxu0 0
        %2063 = vmatpush1.bf16.msra.mxu0 %v2045
        %2064 = vmatprep.subr.bf16.mxu0 0
        %2065 = vmatpush1.bf16.msra.mxu0 %v2046
        %2066 = vmatprep.subr.bf16.mxu0 0
        %2067 = vmatpush1.bf16.msra.mxu0 %v2047
        %2068 = vmatprep.subr.bf16.mxu0 0
        %2069 = vmatpush1.bf16.msra.mxu0 %v2048
        %2070 = vmatprep.subr.bf16.mxu0 0
        %2071 = vmatpush1.bf16.msra.mxu0 %v2049
        %2072 = vmatprep.subr.bf16.mxu0 0
        %2073 = vmatpush1.bf16.msra.mxu0 %v2050
        %2074 = vmatprep.subr.bf16.mxu0 0
        %2075 = vmatpush1.bf16.msra.mxu0 %v2051
        %2076 = vmatprep.subr.bf16.mxu0 0
        %2077 = vmatpush1.bf16.msra.mxu0 0
        %2078 = vmatprep.subr.bf16.mxu0 0
        %2079 = vmatpush1.bf16.msra.mxu0 0
        %2080 = vmatprep.subr.bf16.mxu0 0
        %2081 = vmatpush1.bf16.msra.mxu0 0
        %2082 = vmatprep.subr.bf16.mxu0 0
        %2083 = vmatpush1.bf16.msra.mxu0 0
        %2084 = vmatprep.subr.bf16.mxu0 0
        %2085 = vmatpush1.bf16.msra.mxu0 0
        %2086 = vmatprep.subr.bf16.mxu0 0
        %2087 = vmatpush1.bf16.msra.mxu0 0
        %2088 = vmatprep.subr.bf16.mxu0 0
        %2089 = vmatpush1.bf16.msra.mxu0 0
        %2090 = vmatprep.subr.bf16.mxu0 0
        %2091 = vmatpush1.bf16.msra.mxu0 0
        %2092 = vmatprep.mubr.bf16.mxu0 0
        %2093 = vmatmul.mubr.bf16.gmra.mrb[0].mxu0 %v1947
        %v2094 = vpop.f32.mrb[0].mxu0
        %v2095 = vadd.f32 0.0, %v2094
        %v2096 = vpop.f32.mrb[0].mxu0
        %v2097 = vpop.f32.mrb[0].mxu0
        %v2098 = vadd.f32 0.0, %v2097
        %v2099 = vpop.f32.mrb[0].mxu0
        %2100 = vmatprep.mubr.bf16.mxu0 0
        %2101 = vmatmul.mubr.bf16.gmra.mrb[0].mxu0 %v1948
        %v2102 = vpop.f32.mrb[0].mxu0
        %v2103 = vadd.f32 0.0, %v2102
        %v2104 = vpop.f32.mrb[0].mxu0
        %v2105 = vpop.f32.mrb[0].mxu0
        %v2106 = vadd.f32 0.0, %v2105
        %v2107 = vpop.f32.mrb[0].mxu0
        %2108 = vmatprep.mubr.bf16.mxu0 0
        %2109 = vmatmul.mubr.bf16.gmra.mrb[0].mxu0 %v1949
        %v2110 = vpop.f32.mrb[0].mxu0
        %v2111 = vadd.f32 0.0, %v2110
        %v2112 = vpop.f32.mrb[0].mxu0
        %v2113 = vpop.f32.mrb[0].mxu0
        %v2114 = vadd.f32 0.0, %v2113
        %v2115 = vpop.f32.mrb[0].mxu0
        %2116 = vmatprep.mubr.bf16.mxu0 0
        %2117 = vmatmul.mubr.bf16.gmra.mrb[0].mxu0 %v1950
        %v2118 = vpop.f32.mrb[0].mxu0
        %v2119 = vadd.f32 0.0, %v2118
        %v2120 = vpop.f32.mrb[0].mxu0
        %v2121 = vpop.f32.mrb[0].mxu0
        %v2122 = vadd.f32 0.0, %v2121
        %v2123 = vpop.f32.mrb[0].mxu0
        %2124 = vmatprep.mubr.bf16.mxu0 0
        %2125 = vmatmul.mubr.bf16.gmra.mrb[0].mxu0 %v1951
        %v2126 = vpop.f32.mrb[0].mxu0
        %v2127 = vadd.f32 0.0, %v2126
        %v2128 = vpop.f32.mrb[0].mxu0
        %v2129 = vpop.f32.mrb[0].mxu0
        %v2130 = vadd.f32 0.0, %v2129
        %v2131 = vpop.f32.mrb[0].mxu0
        %2132 = vmatprep.mubr.bf16.mxu0 0
        %2133 = vmatmul.mubr.bf16.gmra.mrb[0].mxu0 %v1952
        %v2134 = vpop.f32.mrb[0].mxu0
        %v2135 = vadd.f32 0.0, %v2134
        %v2136 = vpop.f32.mrb[0].mxu0
        %v2137 = vpop.f32.mrb[0].mxu0
        %v2138 = vadd.f32 0.0, %v2137
        %v2139 = vpop.f32.mrb[0].mxu0
        %2140 = vmatprep.mubr.bf16.mxu0 0
        %2141 = vmatmul.mubr.bf16.gmra.mrb[0].mxu0 %v1953
        %v2142 = vpop.f32.mrb[0].mxu0
        %v2143 = vadd.f32 0.0, %v2142
        %v2144 = vpop.f32.mrb[0].mxu0
        %v2145 = vpop.f32.mrb[0].mxu0
        %v2146 = vadd.f32 0.0, %v2145
        %v2147 = vpop.f32.mrb[0].mxu0
        %2148 = vmatprep.mubr.bf16.mxu0 0
        %2149 = vmatmul.mubr.bf16.gmra.mrb[0].mxu0 %v1954
        %v2150 = vpop.f32.mrb[0].mxu0
        %v2151 = vadd.f32 0.0, %v2150
        %v2152 = vpop.f32.mrb[0].mxu0
        %v2153 = vpop.f32.mrb[0].mxu0
        %v2154 = vadd.f32 0.0, %v2153
        %v2155 = vpop.f32.mrb[0].mxu0
        %2156 = vmatprep.mubr.bf16.mxu0 0
        %2157 = vmatmul.mubr.bf16.gmra.mrb[0].mxu0 %v1955
        %v2158 = vpop.f32.mrb[0].mxu0
        %v2159 = vadd.f32 0.0, %v2158
        %v2160 = vpop.f32.mrb[0].mxu0
        %v2161 = vpop.f32.mrb[0].mxu0
        %v2162 = vadd.f32 0.0, %v2161
        %v2163 = vpop.f32.mrb[0].mxu0
        %2164 = vmatprep.mubr.bf16.mxu0 0
        %2165 = vmatmul.mubr.bf16.gmra.mrb[0].mxu0 %v1956
        %v2166 = vpop.f32.mrb[0].mxu0
        %v2167 = vadd.f32 0.0, %v2166
        %v2168 = vpop.f32.mrb[0].mxu0
        %v2169 = vpop.f32.mrb[0].mxu0
        %v2170 = vadd.f32 0.0, %v2169
        %v2171 = vpop.f32.mrb[0].mxu0
        %2172 = vmatprep.mubr.bf16.mxu0 0
        %2173 = vmatmul.mubr.bf16.gmra.mrb[0].mxu0 %v1957
        %v2174 = vpop.f32.mrb[0].mxu0
        %v2175 = vadd.f32 0.0, %v2174
        %v2176 = vpop.f32.mrb[0].mxu0
        %v2177 = vpop.f32.mrb[0].mxu0
        %v2178 = vadd.f32 0.0, %v2177
        %v2179 = vpop.f32.mrb[0].mxu0
        %2180 = vmatprep.mubr.bf16.mxu0 0
        %2181 = vmatmul.mubr.bf16.gmra.mrb[0].mxu0 %v1958
        %v2182 = vpop.f32.mrb[0].mxu0
        %v2183 = vadd.f32 0.0, %v2182
        %v2184 = vpop.f32.mrb[0].mxu0
        %v2185 = vpop.f32.mrb[0].mxu0
        %v2186 = vadd.f32 0.0, %v2185
        %v2187 = vpop.f32.mrb[0].mxu0
        %2188 = vmatprep.mubr.bf16.mxu0 0
        %2189 = vmatmul.mubr.bf16.gmra.mrb[0].mxu0 %v1959
        %v2190 = vpop.f32.mrb[0].mxu0
        %v2191 = vadd.f32 0.0, %v2190
        %v2192 = vpop.f32.mrb[0].mxu0
        %v2193 = vpop.f32.mrb[0].mxu0
        %v2194 = vadd.f32 0.0, %v2193
        %v2195 = vpop.f32.mrb[0].mxu0
        %2196 = vmatprep.mubr.bf16.mxu0 0
        %2197 = vmatmul.mubr.bf16.gmra.mrb[0].mxu0 %v1960
        %v2198 = vpop.f32.mrb[0].mxu0
        %v2199 = vadd.f32 0.0, %v2198
        %v2200 = vpop.f32.mrb[0].mxu0
        %v2201 = vpop.f32.mrb[0].mxu0
        %v2202 = vadd.f32 0.0, %v2201
        %v2203 = vpop.f32.mrb[0].mxu0
        %2204 = vmatprep.mubr.bf16.mxu0 0
        %2205 = vmatmul.mubr.bf16.gmra.mrb[0].mxu0 %v1961
        %v2206 = vpop.f32.mrb[0].mxu0
        %v2207 = vadd.f32 0.0, %v2206
        %v2208 = vpop.f32.mrb[0].mxu0
        %v2209 = vpop.f32.mrb[0].mxu0
        %v2210 = vadd.f32 0.0, %v2209
        %v2211 = vpop.f32.mrb[0].mxu0
        %2212 = vmatprep.mubr.bf16.mxu0 0
        %2213 = vmatmul.mubr.bf16.gmra.mrb[0].mxu0 %v1962
        %v2214 = vpop.f32.mrb[0].mxu0
        %v2215 = vadd.f32 0.0, %v2214
        %v2216 = vpop.f32.mrb[0].mxu0
        %v2217 = vpop.f32.mrb[0].mxu0
        %v2218 = vadd.f32 0.0, %v2217
        %v2219 = vpop.f32.mrb[0].mxu0
        %2220 = vdwg.mxu0
        %v2221 = vadd.f32 %v1963, %v2095
        %v2222 = vadd.f32 %v1964, %v2098
        %v2223 = vadd.f32 %v1965, %v2103
        %v2224 = vadd.f32 %v1966, %v2106
        %v2225 = vadd.f32 %v1967, %v2111
        %v2226 = vadd.f32 %v1968, %v2114
        %v2227 = vadd.f32 %v1969, %v2119
        %v2228 = vadd.f32 %v1970, %v2122
        %v2229 = vadd.f32 %v1971, %v2127
        %v2230 = vadd.f32 %v1972, %v2130
        %v2231 = vadd.f32 %v1973, %v2135
        %v2232 = vadd.f32 %v1974, %v2138
        %v2233 = vadd.f32 %v1975, %v2143
        %v2234 = vadd.f32 %v1976, %v2146
        %v2235 = vadd.f32 %v1977, %v2151
        %v2236 = vadd.f32 %v1978, %v2154
        %v2237 = vadd.f32 %v1979, %v2159
        %v2238 = vadd.f32 %v1980, %v2162
        %v2239 = vadd.f32 %v1981, %v2167
        %v2240 = vadd.f32 %v1982, %v2170
        %v2241 = vadd.f32 %v1983, %v2175
        %v2242 = vadd.f32 %v1984, %v2178
        %v2243 = vadd.f32 %v1985, %v2183
        %v2244 = vadd.f32 %v1986, %v2186
        %v2245 = vadd.f32 %v1987, %v2191
        %v2246 = vadd.f32 %v1988, %v2194
        %v2247 = vadd.f32 %v1989, %v2199
        %v2248 = vadd.f32 %v1990, %v2202
        %v2249 = vadd.f32 %v1991, %v2207
        %v2250 = vadd.f32 %v1992, %v2210
        %v2251 = vadd.f32 %v1993, %v2215
        %v2252 = vadd.f32 %v1994, %v2218
        %2253 = vst [vmem:[#allocation3] sm:$0xff] %v2221
        %2254 = vst [vmem:[#allocation3 + $0x8] sm:$0xff] %v2222
        %2255 = vst [vmem:[#allocation3 + $0x10] sm:$0xff] %v2223
        %2256 = vst [vmem:[#allocation3 + $0x18] sm:$0xff] %v2224
        %2257 = vst [vmem:[#allocation3 + $0x20] sm:$0xff] %v2225
        %2258 = vst [vmem:[#allocation3 + $0x28] sm:$0xff] %v2226
        %2259 = vst [vmem:[#allocation3 + $0x30] sm:$0xff] %v2227
        %2260 = vst [vmem:[#allocation3 + $0x38] sm:$0xff] %v2228
        %2261 = vst [vmem:[#allocation3 + $0x40] sm:$0xff] %v2229
        %2262 = vst [vmem:[#allocation3 + $0x48] sm:$0xff] %v2230
        %2263 = vst [vmem:[#allocation3 + $0x50] sm:$0xff] %v2231
        %2264 = vst [vmem:[#allocation3 + $0x58] sm:$0xff] %v2232
        %2265 = vst [vmem:[#allocation3 + $0x60] sm:$0xff] %v2233
        %2266 = vst [vmem:[#allocation3 + $0x68] sm:$0xff] %v2234
        %2267 = vst [vmem:[#allocation3 + $0x70] sm:$0xff] %v2235
        %2268 = vst [vmem:[#allocation3 + $0x78] sm:$0xff] %v2236
        %2269 = vst [vmem:[#allocation3 + $0x80] sm:$0xff] %v2237
        %2270 = vst [vmem:[#allocation3 + $0x88] sm:$0xff] %v2238
        %2271 = vst [vmem:[#allocation3 + $0x90] sm:$0xff] %v2239
        %2272 = vst [vmem:[#allocation3 + $0x98] sm:$0xff] %v2240
        %2273 = vst [vmem:[#allocation3 + $0xa0] sm:$0xff] %v2241
        %2274 = vst [vmem:[#allocation3 + $0xa8] sm:$0xff] %v2242
        %2275 = vst [vmem:[#allocation3 + $0xb0] sm:$0xff] %v2243
        %2276 = vst [vmem:[#allocation3 + $0xb8] sm:$0xff] %v2244
        %2277 = vst [vmem:[#allocation3 + $0xc0] sm:$0xff] %v2245
        %2278 = vst [vmem:[#allocation3 + $0xc8] sm:$0xff] %v2246
        %2279 = vst [vmem:[#allocation3 + $0xd0] sm:$0xff] %v2247
        %2280 = vst [vmem:[#allocation3 + $0xd8] sm:$0xff] %v2248
        %2281 = vst [vmem:[#allocation3 + $0xe0] sm:$0xff] %v2249
        %2282 = vst [vmem:[#allocation3 + $0xe8] sm:$0xff] %v2250
        %2283 = vst [vmem:[#allocation3 + $0xf0] sm:$0xff] %v2251
        %2284 = vst [vmem:[#allocation3 + $0xf8] sm:$0xff] %v2252
        %v2285 = vld [vmem:[%s330 + $0x2] sm:$0xff]
        %v2286 = vld [vmem:[%s330 + $0xa] sm:$0xff]
        %v2287 = vld [vmem:[%s330 + $0x1a] sm:$0xff]
        %v2288 = vld [vmem:[%s330 + $0x22] sm:$0xff]
        %v2289 = vld [vmem:[%s330 + $0x32] sm:$0xff]
        %v2290 = vld [vmem:[%s330 + $0x3a] sm:$0xff]
        %v2291 = vld [vmem:[%s330 + $0x4a] sm:$0xff]
        %v2292 = vld [vmem:[%s330 + $0x52] sm:$0xff]
        %v2293 = vld [vmem:[%s330 + $0x62] sm:$0xff]
        %v2294 = vld [vmem:[%s330 + $0x6a] sm:$0xff]
        %v2295 = vld [vmem:[%s330 + $0x7a] sm:$0xff]
        %v2296 = vld [vmem:[%s330 + $0x82] sm:$0xff]
        %v2297 = vld [vmem:[%s330 + $0x92] sm:$0xff]
        %v2298 = vld [vmem:[%s330 + $0x9a] sm:$0xff]
        %v2299 = vld [vmem:[%s330 + $0xaa] sm:$0xff]
        %v2300 = vld [vmem:[%s330 + $0xb2] sm:$0xff]
        %v2301 = vld [vmem:[%s330 + $0xc2] sm:$0xff]
        %v2302 = vld [vmem:[%s330 + $0xca] sm:$0xff]
        %v2303 = vld [vmem:[%s330 + $0xda] sm:$0xff]
        %v2304 = vld [vmem:[%s330 + $0xe2] sm:$0xff]
        %v2305 = vld [vmem:[%s330 + $0xf2] sm:$0xff]
        %v2306 = vld [vmem:[%s330 + $0xfa] sm:$0xff]
        %v2307 = vld [vmem:[%s330 + $0x10a] sm:$0xff]
        %v2308 = vld [vmem:[%s330 + $0x112] sm:$0xff]
        %v2309 = vld [vmem:[%s330 + $0x122] sm:$0xff]
        %v2310 = vld [vmem:[%s330 + $0x12a] sm:$0xff]
        %v2311 = vld [vmem:[%s330 + $0x13a] sm:$0xff]
        %v2312 = vld [vmem:[%s330 + $0x142] sm:$0xff]
        %v2313 = vld [vmem:[%s330 + $0x152] sm:$0xff]
        %v2314 = vld [vmem:[%s330 + $0x15a] sm:$0xff]
        %v2315 = vld [vmem:[%s330 + $0x16a] sm:$0xff]
        %v2316 = vld [vmem:[%s330 + $0x172] sm:$0xff]
        %v2317 = vpack.c.bf16 %v2286, %v2285
        %v2318 = vpack.c.bf16 %v2288, %v2287
        %v2319 = vpack.c.bf16 %v2290, %v2289
        %v2320 = vpack.c.bf16 %v2292, %v2291
        %v2321 = vpack.c.bf16 %v2294, %v2293
        %v2322 = vpack.c.bf16 %v2296, %v2295
        %v2323 = vpack.c.bf16 %v2298, %v2297
        %v2324 = vpack.c.bf16 %v2300, %v2299
        %v2325 = vpack.c.bf16 %v2302, %v2301
        %v2326 = vpack.c.bf16 %v2304, %v2303
        %v2327 = vpack.c.bf16 %v2306, %v2305
        %v2328 = vpack.c.bf16 %v2308, %v2307
        %v2329 = vpack.c.bf16 %v2310, %v2309
        %v2330 = vpack.c.bf16 %v2312, %v2311
        %v2331 = vpack.c.bf16 %v2314, %v2313
        %v2332 = vpack.c.bf16 %v2316, %v2315
        %v2333 = vld [vmem:[#allocation3] sm:$0xff]
        %v2334 = vld [vmem:[#allocation3 + $0x8] sm:$0xff]
        %v2335 = vld [vmem:[#allocation3 + $0x10] sm:$0xff]
        %v2336 = vld [vmem:[#allocation3 + $0x18] sm:$0xff]
        %v2337 = vld [vmem:[#allocation3 + $0x20] sm:$0xff]
        %v2338 = vld [vmem:[#allocation3 + $0x28] sm:$0xff]
        %v2339 = vld [vmem:[#allocation3 + $0x30] sm:$0xff]
        %v2340 = vld [vmem:[#allocation3 + $0x38] sm:$0xff]
        %v2341 = vld [vmem:[#allocation3 + $0x40] sm:$0xff]
        %v2342 = vld [vmem:[#allocation3 + $0x48] sm:$0xff]
        %v2343 = vld [vmem:[#allocation3 + $0x50] sm:$0xff]
        %v2344 = vld [vmem:[#allocation3 + $0x58] sm:$0xff]
        %v2345 = vld [vmem:[#allocation3 + $0x60] sm:$0xff]
        %v2346 = vld [vmem:[#allocation3 + $0x68] sm:$0xff]
        %v2347 = vld [vmem:[#allocation3 + $0x70] sm:$0xff]
        %v2348 = vld [vmem:[#allocation3 + $0x78] sm:$0xff]
        %v2349 = vld [vmem:[#allocation3 + $0x80] sm:$0xff]
        %v2350 = vld [vmem:[#allocation3 + $0x88] sm:$0xff]
        %v2351 = vld [vmem:[#allocation3 + $0x90] sm:$0xff]
        %v2352 = vld [vmem:[#allocation3 + $0x98] sm:$0xff]
        %v2353 = vld [vmem:[#allocation3 + $0xa0] sm:$0xff]
        %v2354 = vld [vmem:[#allocation3 + $0xa8] sm:$0xff]
        %v2355 = vld [vmem:[#allocation3 + $0xb0] sm:$0xff]
        %v2356 = vld [vmem:[#allocation3 + $0xb8] sm:$0xff]
        %v2357 = vld [vmem:[#allocation3 + $0xc0] sm:$0xff]
        %v2358 = vld [vmem:[#allocation3 + $0xc8] sm:$0xff]
        %v2359 = vld [vmem:[#allocation3 + $0xd0] sm:$0xff]
        %v2360 = vld [vmem:[#allocation3 + $0xd8] sm:$0xff]
        %v2361 = vld [vmem:[#allocation3 + $0xe0] sm:$0xff]
        %v2362 = vld [vmem:[#allocation3 + $0xe8] sm:$0xff]
        %v2363 = vld [vmem:[#allocation3 + $0xf0] sm:$0xff]
        %v2364 = vld [vmem:[#allocation3 + $0xf8] sm:$0xff]
        %s2365 = scalar_lea.vmem [#allocation7], 320
        %v2366 = vld [vmem:[%s2365] sm:$0xf]
        %v2367 = vld [vmem:[%s2365 + $0x4] sm:$0xf]
        %v2368 = vld [vmem:[%s2365 + $0x8] sm:$0xf]
        %v2369 = vld [vmem:[%s2365 + $0xc] sm:$0xf]
        %v2370 = vld [vmem:[%s2365 + $0x10] sm:$0xf]
        %v2371 = vld [vmem:[%s2365 + $0x14] sm:$0xf]
        %v2372 = vld [vmem:[%s2365 + $0x18] sm:$0xf]
        %v2373 = vld [vmem:[%s2365 + $0x1c] sm:$0xf]
        %v2374 = vld [vmem:[%s2365 + $0x20] sm:$0xf]
        %v2375 = vld [vmem:[%s2365 + $0x24] sm:$0xf]
        %v2376 = vld [vmem:[%s2365 + $0x28] sm:$0xf]
        %v2377 = vld [vmem:[%s2365 + $0x2c] sm:$0xf]
        %v2378 = vld [vmem:[%s2365 + $0x30] sm:$0xf]
        %v2379 = vld [vmem:[%s2365 + $0x34] sm:$0xf]
        %v2380 = vld [vmem:[%s2365 + $0x38] sm:$0xf]
        %v2381 = vld [vmem:[%s2365 + $0x3c] sm:$0xf]
        %v2398 = vunpack.c.l.b16 %v2366
        %v2399 = vunpack.c.l.b16 %v2367
        %v2400 = vunpack.c.l.b16 %v2368
        %v2401 = vunpack.c.l.b16 %v2369
        %v2402 = vunpack.c.l.b16 %v2370
        %v2403 = vunpack.c.l.b16 %v2371
        %v2404 = vunpack.c.l.b16 %v2372
        %v2405 = vunpack.c.l.b16 %v2373
        %v2406 = vunpack.c.l.b16 %v2374
        %v2407 = vunpack.c.l.b16 %v2375
        %v2408 = vunpack.c.l.b16 %v2376
        %v2409 = vunpack.c.l.b16 %v2377
        %v2410 = vunpack.c.l.b16 %v2378
        %v2411 = vunpack.c.l.b16 %v2379
        %v2412 = vunpack.c.l.b16 %v2380
        %v2413 = vunpack.c.l.b16 %v2381
        %v2414 = vpack.c.b16 %v2399, %v2398
        %v2415 = vpack.c.b16 %v2401, %v2400
        %v2416 = vpack.c.b16 %v2403, %v2402
        %v2417 = vpack.c.b16 %v2405, %v2404
        %v2418 = vpack.c.b16 %v2407, %v2406
        %v2419 = vpack.c.b16 %v2409, %v2408
        %v2420 = vpack.c.b16 %v2411, %v2410
        %v2421 = vpack.c.b16 %v2413, %v2412
        %2430 = vmatprep.subr.bf16.mxu0 0
        %2431 = vmatpush1.bf16.msra.mxu0 %v2414
        %2432 = vmatprep.subr.bf16.mxu0 0
        %2433 = vmatpush1.bf16.msra.mxu0 %v2415
        %2434 = vmatprep.subr.bf16.mxu0 0
        %2435 = vmatpush1.bf16.msra.mxu0 %v2416
        %2436 = vmatprep.subr.bf16.mxu0 0
        %2437 = vmatpush1.bf16.msra.mxu0 %v2417
        %2438 = vmatprep.subr.bf16.mxu0 0
        %2439 = vmatpush1.bf16.msra.mxu0 %v2418
        %2440 = vmatprep.subr.bf16.mxu0 0
        %2441 = vmatpush1.bf16.msra.mxu0 %v2419
        %2442 = vmatprep.subr.bf16.mxu0 0
        %2443 = vmatpush1.bf16.msra.mxu0 %v2420
        %2444 = vmatprep.subr.bf16.mxu0 0
        %2445 = vmatpush1.bf16.msra.mxu0 %v2421
        %2446 = vmatprep.subr.bf16.mxu0 0
        %2447 = vmatpush1.bf16.msra.mxu0 0
        %2448 = vmatprep.subr.bf16.mxu0 0
        %2449 = vmatpush1.bf16.msra.mxu0 0
        %2450 = vmatprep.subr.bf16.mxu0 0
        %2451 = vmatpush1.bf16.msra.mxu0 0
        %2452 = vmatprep.subr.bf16.mxu0 0
        %2453 = vmatpush1.bf16.msra.mxu0 0
        %2454 = vmatprep.subr.bf16.mxu0 0
        %2455 = vmatpush1.bf16.msra.mxu0 0
        %2456 = vmatprep.subr.bf16.mxu0 0
        %2457 = vmatpush1.bf16.msra.mxu0 0
        %2458 = vmatprep.subr.bf16.mxu0 0
        %2459 = vmatpush1.bf16.msra.mxu0 0
        %2460 = vmatprep.subr.bf16.mxu0 0
        %2461 = vmatpush1.bf16.msra.mxu0 0
        %2462 = vmatprep.mubr.bf16.mxu0 0
        %2463 = vmatmul.mubr.bf16.gmra.mrb[0].mxu0 %v2317
        %v2464 = vpop.f32.mrb[0].mxu0
        %v2465 = vadd.f32 0.0, %v2464
        %v2466 = vpop.f32.mrb[0].mxu0
        %v2467 = vpop.f32.mrb[0].mxu0
        %v2468 = vadd.f32 0.0, %v2467
        %v2469 = vpop.f32.mrb[0].mxu0
        %2470 = vmatprep.mubr.bf16.mxu0 0
        %2471 = vmatmul.mubr.bf16.gmra.mrb[0].mxu0 %v2318
        %v2472 = vpop.f32.mrb[0].mxu0
        %v2473 = vadd.f32 0.0, %v2472
        %v2474 = vpop.f32.mrb[0].mxu0
        %v2475 = vpop.f32.mrb[0].mxu0
        %v2476 = vadd.f32 0.0, %v2475
        %v2477 = vpop.f32.mrb[0].mxu0
        %2478 = vmatprep.mubr.bf16.mxu0 0
        %2479 = vmatmul.mubr.bf16.gmra.mrb[0].mxu0 %v2319
        %v2480 = vpop.f32.mrb[0].mxu0
        %v2481 = vadd.f32 0.0, %v2480
        %v2482 = vpop.f32.mrb[0].mxu0
        %v2483 = vpop.f32.mrb[0].mxu0
        %v2484 = vadd.f32 0.0, %v2483
        %v2485 = vpop.f32.mrb[0].mxu0
        %2486 = vmatprep.mubr.bf16.mxu0 0
        %2487 = vmatmul.mubr.bf16.gmra.mrb[0].mxu0 %v2320
        %v2488 = vpop.f32.mrb[0].mxu0
        %v2489 = vadd.f32 0.0, %v2488
        %v2490 = vpop.f32.mrb[0].mxu0
        %v2491 = vpop.f32.mrb[0].mxu0
        %v2492 = vadd.f32 0.0, %v2491
        %v2493 = vpop.f32.mrb[0].mxu0
        %2494 = vmatprep.mubr.bf16.mxu0 0
        %2495 = vmatmul.mubr.bf16.gmra.mrb[0].mxu0 %v2321
        %v2496 = vpop.f32.mrb[0].mxu0
        %v2497 = vadd.f32 0.0, %v2496
        %v2498 = vpop.f32.mrb[0].mxu0
        %v2499 = vpop.f32.mrb[0].mxu0
        %v2500 = vadd.f32 0.0, %v2499
        %v2501 = vpop.f32.mrb[0].mxu0
        %2502 = vmatprep.mubr.bf16.mxu0 0
        %2503 = vmatmul.mubr.bf16.gmra.mrb[0].mxu0 %v2322
        %v2504 = vpop.f32.mrb[0].mxu0
        %v2505 = vadd.f32 0.0, %v2504
        %v2506 = vpop.f32.mrb[0].mxu0
        %v2507 = vpop.f32.mrb[0].mxu0
        %v2508 = vadd.f32 0.0, %v2507
        %v2509 = vpop.f32.mrb[0].mxu0
        %2510 = vmatprep.mubr.bf16.mxu0 0
        %2511 = vmatmul.mubr.bf16.gmra.mrb[0].mxu0 %v2323
        %v2512 = vpop.f32.mrb[0].mxu0
        %v2513 = vadd.f32 0.0, %v2512
        %v2514 = vpop.f32.mrb[0].mxu0
        %v2515 = vpop.f32.mrb[0].mxu0
        %v2516 = vadd.f32 0.0, %v2515
        %v2517 = vpop.f32.mrb[0].mxu0
        %2518 = vmatprep.mubr.bf16.mxu0 0
        %2519 = vmatmul.mubr.bf16.gmra.mrb[0].mxu0 %v2324
        %v2520 = vpop.f32.mrb[0].mxu0
        %v2521 = vadd.f32 0.0, %v2520
        %v2522 = vpop.f32.mrb[0].mxu0
        %v2523 = vpop.f32.mrb[0].mxu0
        %v2524 = vadd.f32 0.0, %v2523
        %v2525 = vpop.f32.mrb[0].mxu0
        %2526 = vmatprep.mubr.bf16.mxu0 0
        %2527 = vmatmul.mubr.bf16.gmra.mrb[0].mxu0 %v2325
        %v2528 = vpop.f32.mrb[0].mxu0
        %v2529 = vadd.f32 0.0, %v2528
        %v2530 = vpop.f32.mrb[0].mxu0
        %v2531 = vpop.f32.mrb[0].mxu0
        %v2532 = vadd.f32 0.0, %v2531
        %v2533 = vpop.f32.mrb[0].mxu0
        %2534 = vmatprep.mubr.bf16.mxu0 0
        %2535 = vmatmul.mubr.bf16.gmra.mrb[0].mxu0 %v2326
        %v2536 = vpop.f32.mrb[0].mxu0
        %v2537 = vadd.f32 0.0, %v2536
        %v2538 = vpop.f32.mrb[0].mxu0
        %v2539 = vpop.f32.mrb[0].mxu0
        %v2540 = vadd.f32 0.0, %v2539
        %v2541 = vpop.f32.mrb[0].mxu0
        %2542 = vmatprep.mubr.bf16.mxu0 0
        %2543 = vmatmul.mubr.bf16.gmra.mrb[0].mxu0 %v2327
        %v2544 = vpop.f32.mrb[0].mxu0
        %v2545 = vadd.f32 0.0, %v2544
        %v2546 = vpop.f32.mrb[0].mxu0
        %v2547 = vpop.f32.mrb[0].mxu0
        %v2548 = vadd.f32 0.0, %v2547
        %v2549 = vpop.f32.mrb[0].mxu0
        %2550 = vmatprep.mubr.bf16.mxu0 0
        %2551 = vmatmul.mubr.bf16.gmra.mrb[0].mxu0 %v2328
        %v2552 = vpop.f32.mrb[0].mxu0
        %v2553 = vadd.f32 0.0, %v2552
        %v2554 = vpop.f32.mrb[0].mxu0
        %v2555 = vpop.f32.mrb[0].mxu0
        %v2556 = vadd.f32 0.0, %v2555
        %v2557 = vpop.f32.mrb[0].mxu0
        %2558 = vmatprep.mubr.bf16.mxu0 0
        %2559 = vmatmul.mubr.bf16.gmra.mrb[0].mxu0 %v2329
        %v2560 = vpop.f32.mrb[0].mxu0
        %v2561 = vadd.f32 0.0, %v2560
        %v2562 = vpop.f32.mrb[0].mxu0
        %v2563 = vpop.f32.mrb[0].mxu0
        %v2564 = vadd.f32 0.0, %v2563
        %v2565 = vpop.f32.mrb[0].mxu0
        %2566 = vmatprep.mubr.bf16.mxu0 0
        %2567 = vmatmul.mubr.bf16.gmra.mrb[0].mxu0 %v2330
        %v2568 = vpop.f32.mrb[0].mxu0
        %v2569 = vadd.f32 0.0, %v2568
        %v2570 = vpop.f32.mrb[0].mxu0
        %v2571 = vpop.f32.mrb[0].mxu0
        %v2572 = vadd.f32 0.0, %v2571
        %v2573 = vpop.f32.mrb[0].mxu0
        %2574 = vmatprep.mubr.bf16.mxu0 0
        %2575 = vmatmul.mubr.bf16.gmra.mrb[0].mxu0 %v2331
        %v2576 = vpop.f32.mrb[0].mxu0
        %v2577 = vadd.f32 0.0, %v2576
        %v2578 = vpop.f32.mrb[0].mxu0
        %v2579 = vpop.f32.mrb[0].mxu0
        %v2580 = vadd.f32 0.0, %v2579
        %v2581 = vpop.f32.mrb[0].mxu0
        %2582 = vmatprep.mubr.bf16.mxu0 0
        %2583 = vmatmul.mubr.bf16.gmra.mrb[0].mxu0 %v2332
        %v2584 = vpop.f32.mrb[0].mxu0
        %v2585 = vadd.f32 0.0, %v2584
        %v2586 = vpop.f32.mrb[0].mxu0
        %v2587 = vpop.f32.mrb[0].mxu0
        %v2588 = vadd.f32 0.0, %v2587
        %v2589 = vpop.f32.mrb[0].mxu0
        %2590 = vdwg.mxu0
        %v2591 = vadd.f32 %v2333, %v2465
        %v2592 = vadd.f32 %v2334, %v2468
        %v2593 = vadd.f32 %v2335, %v2473
        %v2594 = vadd.f32 %v2336, %v2476
        %v2595 = vadd.f32 %v2337, %v2481
        %v2596 = vadd.f32 %v2338, %v2484
        %v2597 = vadd.f32 %v2339, %v2489
        %v2598 = vadd.f32 %v2340, %v2492
        %v2599 = vadd.f32 %v2341, %v2497
        %v2600 = vadd.f32 %v2342, %v2500
        %v2601 = vadd.f32 %v2343, %v2505
        %v2602 = vadd.f32 %v2344, %v2508
        %v2603 = vadd.f32 %v2345, %v2513
        %v2604 = vadd.f32 %v2346, %v2516
        %v2605 = vadd.f32 %v2347, %v2521
        %v2606 = vadd.f32 %v2348, %v2524
        %v2607 = vadd.f32 %v2349, %v2529
        %v2608 = vadd.f32 %v2350, %v2532
        %v2609 = vadd.f32 %v2351, %v2537
        %v2610 = vadd.f32 %v2352, %v2540
        %v2611 = vadd.f32 %v2353, %v2545
        %v2612 = vadd.f32 %v2354, %v2548
        %v2613 = vadd.f32 %v2355, %v2553
        %v2614 = vadd.f32 %v2356, %v2556
        %v2615 = vadd.f32 %v2357, %v2561
        %v2616 = vadd.f32 %v2358, %v2564
        %v2617 = vadd.f32 %v2359, %v2569
        %v2618 = vadd.f32 %v2360, %v2572
        %v2619 = vadd.f32 %v2361, %v2577
        %v2620 = vadd.f32 %v2362, %v2580
        %v2621 = vadd.f32 %v2363, %v2585
        %v2622 = vadd.f32 %v2364, %v2588
        %2623 = vst [vmem:[#allocation3] sm:$0xff] %v2591
        %2624 = vst [vmem:[#allocation3 + $0x8] sm:$0xff] %v2592
        %2625 = vst [vmem:[#allocation3 + $0x10] sm:$0xff] %v2593
        %2626 = vst [vmem:[#allocation3 + $0x18] sm:$0xff] %v2594
        %2627 = vst [vmem:[#allocation3 + $0x20] sm:$0xff] %v2595
        %2628 = vst [vmem:[#allocation3 + $0x28] sm:$0xff] %v2596
        %2629 = vst [vmem:[#allocation3 + $0x30] sm:$0xff] %v2597
        %2630 = vst [vmem:[#allocation3 + $0x38] sm:$0xff] %v2598
        %2631 = vst [vmem:[#allocation3 + $0x40] sm:$0xff] %v2599
        %2632 = vst [vmem:[#allocation3 + $0x48] sm:$0xff] %v2600
        %2633 = vst [vmem:[#allocation3 + $0x50] sm:$0xff] %v2601
        %2634 = vst [vmem:[#allocation3 + $0x58] sm:$0xff] %v2602
        %2635 = vst [vmem:[#allocation3 + $0x60] sm:$0xff] %v2603
        %2636 = vst [vmem:[#allocation3 + $0x68] sm:$0xff] %v2604
        %2637 = vst [vmem:[#allocation3 + $0x70] sm:$0xff] %v2605
        %2638 = vst [vmem:[#allocation3 + $0x78] sm:$0xff] %v2606
        %2639 = vst [vmem:[#allocation3 + $0x80] sm:$0xff] %v2607
        %2640 = vst [vmem:[#allocation3 + $0x88] sm:$0xff] %v2608
        %2641 = vst [vmem:[#allocation3 + $0x90] sm:$0xff] %v2609
        %2642 = vst [vmem:[#allocation3 + $0x98] sm:$0xff] %v2610
        %2643 = vst [vmem:[#allocation3 + $0xa0] sm:$0xff] %v2611
        %2644 = vst [vmem:[#allocation3 + $0xa8] sm:$0xff] %v2612
        %2645 = vst [vmem:[#allocation3 + $0xb0] sm:$0xff] %v2613
        %2646 = vst [vmem:[#allocation3 + $0xb8] sm:$0xff] %v2614
        %2647 = vst [vmem:[#allocation3 + $0xc0] sm:$0xff] %v2615
        %2648 = vst [vmem:[#allocation3 + $0xc8] sm:$0xff] %v2616
        %2649 = vst [vmem:[#allocation3 + $0xd0] sm:$0xff] %v2617
        %2650 = vst [vmem:[#allocation3 + $0xd8] sm:$0xff] %v2618
        %2651 = vst [vmem:[#allocation3 + $0xe0] sm:$0xff] %v2619
        %2652 = vst [vmem:[#allocation3 + $0xe8] sm:$0xff] %v2620
        %2653 = vst [vmem:[#allocation3 + $0xf0] sm:$0xff] %v2621
        %2654 = vst [vmem:[#allocation3 + $0xf8] sm:$0xff] %v2622
        %s2655 = scalar_lea.vmem [#allocation2], 48
        %v2656 = vld [vmem:[%s2655] sm:$0xff]
        %v2657 = vld [vmem:[%s2655 + $0x8] sm:$0xff]
        %v2658 = vld [vmem:[%s2655 + $0x18] sm:$0xff]
        %v2659 = vld [vmem:[%s2655 + $0x20] sm:$0xff]
        %v2660 = vld [vmem:[%s2655 + $0x30] sm:$0xff]
        %v2661 = vld [vmem:[%s2655 + $0x38] sm:$0xff]
        %v2662 = vld [vmem:[%s2655 + $0x48] sm:$0xff]
        %v2663 = vld [vmem:[%s2655 + $0x50] sm:$0xff]
        %v2664 = vld [vmem:[%s2655 + $0x60] sm:$0xff]
        %v2665 = vld [vmem:[%s2655 + $0x68] sm:$0xff]
        %v2666 = vld [vmem:[%s2655 + $0x78] sm:$0xff]
        %v2667 = vld [vmem:[%s2655 + $0x80] sm:$0xff]
        %v2668 = vld [vmem:[%s2655 + $0x90] sm:$0xff]
        %v2669 = vld [vmem:[%s2655 + $0x98] sm:$0xff]
        %v2670 = vld [vmem:[%s2655 + $0xa8] sm:$0xff]
        %v2671 = vld [vmem:[%s2655 + $0xb0] sm:$0xff]
        %v2672 = vld [vmem:[%s2655 + $0xc0] sm:$0xff]
        %v2673 = vld [vmem:[%s2655 + $0xc8] sm:$0xff]
        %v2674 = vld [vmem:[%s2655 + $0xd8] sm:$0xff]
        %v2675 = vld [vmem:[%s2655 + $0xe0] sm:$0xff]
        %v2676 = vld [vmem:[%s2655 + $0xf0] sm:$0xff]
        %v2677 = vld [vmem:[%s2655 + $0xf8] sm:$0xff]
        %v2678 = vld [vmem:[%s2655 + $0x108] sm:$0xff]
        %v2679 = vld [vmem:[%s2655 + $0x110] sm:$0xff]
        %v2680 = vld [vmem:[%s2655 + $0x120] sm:$0xff]
        %v2681 = vld [vmem:[%s2655 + $0x128] sm:$0xff]
        %v2682 = vld [vmem:[%s2655 + $0x138] sm:$0xff]
        %v2683 = vld [vmem:[%s2655 + $0x140] sm:$0xff]
        %v2684 = vld [vmem:[%s2655 + $0x150] sm:$0xff]
        %v2685 = vld [vmem:[%s2655 + $0x158] sm:$0xff]
        %v2686 = vld [vmem:[%s2655 + $0x168] sm:$0xff]
        %v2687 = vld [vmem:[%s2655 + $0x170] sm:$0xff]
        %v2688 = vpack.c.bf16 %v2657, %v2656
        %v2689 = vpack.c.bf16 %v2659, %v2658
        %v2690 = vpack.c.bf16 %v2661, %v2660
        %v2691 = vpack.c.bf16 %v2663, %v2662
        %v2692 = vpack.c.bf16 %v2665, %v2664
        %v2693 = vpack.c.bf16 %v2667, %v2666
        %v2694 = vpack.c.bf16 %v2669, %v2668
        %v2695 = vpack.c.bf16 %v2671, %v2670
        %v2696 = vpack.c.bf16 %v2673, %v2672
        %v2697 = vpack.c.bf16 %v2675, %v2674
        %v2698 = vpack.c.bf16 %v2677, %v2676
        %v2699 = vpack.c.bf16 %v2679, %v2678
        %v2700 = vpack.c.bf16 %v2681, %v2680
        %v2701 = vpack.c.bf16 %v2683, %v2682
        %v2702 = vpack.c.bf16 %v2685, %v2684
        %v2703 = vpack.c.bf16 %v2687, %v2686
        %v2704 = vld [vmem:[#allocation3] sm:$0xff]
        %v2705 = vld [vmem:[#allocation3 + $0x8] sm:$0xff]
        %v2706 = vld [vmem:[#allocation3 + $0x10] sm:$0xff]
        %v2707 = vld [vmem:[#allocation3 + $0x18] sm:$0xff]
        %v2708 = vld [vmem:[#allocation3 + $0x20] sm:$0xff]
        %v2709 = vld [vmem:[#allocation3 + $0x28] sm:$0xff]
        %v2710 = vld [vmem:[#allocation3 + $0x30] sm:$0xff]
        %v2711 = vld [vmem:[#allocation3 + $0x38] sm:$0xff]
        %v2712 = vld [vmem:[#allocation3 + $0x40] sm:$0xff]
        %v2713 = vld [vmem:[#allocation3 + $0x48] sm:$0xff]
        %v2714 = vld [vmem:[#allocation3 + $0x50] sm:$0xff]
        %v2715 = vld [vmem:[#allocation3 + $0x58] sm:$0xff]
        %v2716 = vld [vmem:[#allocation3 + $0x60] sm:$0xff]
        %v2717 = vld [vmem:[#allocation3 + $0x68] sm:$0xff]
        %v2718 = vld [vmem:[#allocation3 + $0x70] sm:$0xff]
        %v2719 = vld [vmem:[#allocation3 + $0x78] sm:$0xff]
        %v2720 = vld [vmem:[#allocation3 + $0x80] sm:$0xff]
        %v2721 = vld [vmem:[#allocation3 + $0x88] sm:$0xff]
        %v2722 = vld [vmem:[#allocation3 + $0x90] sm:$0xff]
        %v2723 = vld [vmem:[#allocation3 + $0x98] sm:$0xff]
        %v2724 = vld [vmem:[#allocation3 + $0xa0] sm:$0xff]
        %v2725 = vld [vmem:[#allocation3 + $0xa8] sm:$0xff]
        %v2726 = vld [vmem:[#allocation3 + $0xb0] sm:$0xff]
        %v2727 = vld [vmem:[#allocation3 + $0xb8] sm:$0xff]
        %v2728 = vld [vmem:[#allocation3 + $0xc0] sm:$0xff]
        %v2729 = vld [vmem:[#allocation3 + $0xc8] sm:$0xff]
        %v2730 = vld [vmem:[#allocation3 + $0xd0] sm:$0xff]
        %v2731 = vld [vmem:[#allocation3 + $0xd8] sm:$0xff]
        %v2732 = vld [vmem:[#allocation3 + $0xe0] sm:$0xff]
        %v2733 = vld [vmem:[#allocation3 + $0xe8] sm:$0xff]
        %v2734 = vld [vmem:[#allocation3 + $0xf0] sm:$0xff]
        %v2735 = vld [vmem:[#allocation3 + $0xf8] sm:$0xff]
        %s2736 = scalar_lea.vmem [#allocation7], 384
        %v2737 = vld [vmem:[%s2736] sm:$0xf]
        %v2738 = vld [vmem:[%s2736 + $0x4] sm:$0xf]
        %v2739 = vld [vmem:[%s2736 + $0x8] sm:$0xf]
        %v2740 = vld [vmem:[%s2736 + $0xc] sm:$0xf]
        %v2741 = vld [vmem:[%s2736 + $0x10] sm:$0xf]
        %v2742 = vld [vmem:[%s2736 + $0x14] sm:$0xf]
        %v2743 = vld [vmem:[%s2736 + $0x18] sm:$0xf]
        %v2744 = vld [vmem:[%s2736 + $0x1c] sm:$0xf]
        %v2745 = vld [vmem:[%s2736 + $0x20] sm:$0xf]
        %v2746 = vld [vmem:[%s2736 + $0x24] sm:$0xf]
        %v2747 = vld [vmem:[%s2736 + $0x28] sm:$0xf]
        %v2748 = vld [vmem:[%s2736 + $0x2c] sm:$0xf]
        %v2749 = vld [vmem:[%s2736 + $0x30] sm:$0xf]
        %v2750 = vld [vmem:[%s2736 + $0x34] sm:$0xf]
        %v2751 = vld [vmem:[%s2736 + $0x38] sm:$0xf]
        %v2752 = vld [vmem:[%s2736 + $0x3c] sm:$0xf]
        %v2769 = vunpack.c.l.b16 %v2737
        %v2770 = vunpack.c.l.b16 %v2738
        %v2771 = vunpack.c.l.b16 %v2739
        %v2772 = vunpack.c.l.b16 %v2740
        %v2773 = vunpack.c.l.b16 %v2741
        %v2774 = vunpack.c.l.b16 %v2742
        %v2775 = vunpack.c.l.b16 %v2743
        %v2776 = vunpack.c.l.b16 %v2744
        %v2777 = vunpack.c.l.b16 %v2745
        %v2778 = vunpack.c.l.b16 %v2746
        %v2779 = vunpack.c.l.b16 %v2747
        %v2780 = vunpack.c.l.b16 %v2748
        %v2781 = vunpack.c.l.b16 %v2749
        %v2782 = vunpack.c.l.b16 %v2750
        %v2783 = vunpack.c.l.b16 %v2751
        %v2784 = vunpack.c.l.b16 %v2752
        %v2785 = vpack.c.b16 %v2770, %v2769
        %v2786 = vpack.c.b16 %v2772, %v2771
        %v2787 = vpack.c.b16 %v2774, %v2773
        %v2788 = vpack.c.b16 %v2776, %v2775
        %v2789 = vpack.c.b16 %v2778, %v2777
        %v2790 = vpack.c.b16 %v2780, %v2779
        %v2791 = vpack.c.b16 %v2782, %v2781
        %v2792 = vpack.c.b16 %v2784, %v2783
        %2801 = vmatprep.subr.bf16.mxu0 0
        %2802 = vmatpush1.bf16.msra.mxu0 %v2785
        %2803 = vmatprep.subr.bf16.mxu0 0
        %2804 = vmatpush1.bf16.msra.mxu0 %v2786
        %2805 = vmatprep.subr.bf16.mxu0 0
        %2806 = vmatpush1.bf16.msra.mxu0 %v2787
        %2807 = vmatprep.subr.bf16.mxu0 0
        %2808 = vmatpush1.bf16.msra.mxu0 %v2788
        %2809 = vmatprep.subr.bf16.mxu0 0
        %2810 = vmatpush1.bf16.msra.mxu0 %v2789
        %2811 = vmatprep.subr.bf16.mxu0 0
        %2812 = vmatpush1.bf16.msra.mxu0 %v2790
        %2813 = vmatprep.subr.bf16.mxu0 0
        %2814 = vmatpush1.bf16.msra.mxu0 %v2791
        %2815 = vmatprep.subr.bf16.mxu0 0
        %2816 = vmatpush1.bf16.msra.mxu0 %v2792
        %2817 = vmatprep.subr.bf16.mxu0 0
        %2818 = vmatpush1.bf16.msra.mxu0 0
        %2819 = vmatprep.subr.bf16.mxu0 0
        %2820 = vmatpush1.bf16.msra.mxu0 0
        %2821 = vmatprep.subr.bf16.mxu0 0
        %2822 = vmatpush1.bf16.msra.mxu0 0
        %2823 = vmatprep.subr.bf16.mxu0 0
        %2824 = vmatpush1.bf16.msra.mxu0 0
        %2825 = vmatprep.subr.bf16.mxu0 0
        %2826 = vmatpush1.bf16.msra.mxu0 0
        %2827 = vmatprep.subr.bf16.mxu0 0
        %2828 = vmatpush1.bf16.msra.mxu0 0
        %2829 = vmatprep.subr.bf16.mxu0 0
        %2830 = vmatpush1.bf16.msra.mxu0 0
        %2831 = vmatprep.subr.bf16.mxu0 0
        %2832 = vmatpush1.bf16.msra.mxu0 0
        %2833 = vmatprep.mubr.bf16.mxu0 0
        %2834 = vmatmul.mubr.bf16.gmra.mrb[0].mxu0 %v2688
        %v2835 = vpop.f32.mrb[0].mxu0
        %v2836 = vadd.f32 0.0, %v2835
        %v2837 = vpop.f32.mrb[0].mxu0
        %v2838 = vpop.f32.mrb[0].mxu0
        %v2839 = vadd.f32 0.0, %v2838
        %v2840 = vpop.f32.mrb[0].mxu0
        %2841 = vmatprep.mubr.bf16.mxu0 0
        %2842 = vmatmul.mubr.bf16.gmra.mrb[0].mxu0 %v2689
        %v2843 = vpop.f32.mrb[0].mxu0
        %v2844 = vadd.f32 0.0, %v2843
        %v2845 = vpop.f32.mrb[0].mxu0
        %v2846 = vpop.f32.mrb[0].mxu0
        %v2847 = vadd.f32 0.0, %v2846
        %v2848 = vpop.f32.mrb[0].mxu0
        %2849 = vmatprep.mubr.bf16.mxu0 0
        %2850 = vmatmul.mubr.bf16.gmra.mrb[0].mxu0 %v2690
        %v2851 = vpop.f32.mrb[0].mxu0
        %v2852 = vadd.f32 0.0, %v2851
        %v2853 = vpop.f32.mrb[0].mxu0
        %v2854 = vpop.f32.mrb[0].mxu0
        %v2855 = vadd.f32 0.0, %v2854
        %v2856 = vpop.f32.mrb[0].mxu0
        %2857 = vmatprep.mubr.bf16.mxu0 0
        %2858 = vmatmul.mubr.bf16.gmra.mrb[0].mxu0 %v2691
        %v2859 = vpop.f32.mrb[0].mxu0
        %v2860 = vadd.f32 0.0, %v2859
        %v2861 = vpop.f32.mrb[0].mxu0
        %v2862 = vpop.f32.mrb[0].mxu0
        %v2863 = vadd.f32 0.0, %v2862
        %v2864 = vpop.f32.mrb[0].mxu0
        %2865 = vmatprep.mubr.bf16.mxu0 0
        %2866 = vmatmul.mubr.bf16.gmra.mrb[0].mxu0 %v2692
        %v2867 = vpop.f32.mrb[0].mxu0
        %v2868 = vadd.f32 0.0, %v2867
        %v2869 = vpop.f32.mrb[0].mxu0
        %v2870 = vpop.f32.mrb[0].mxu0
        %v2871 = vadd.f32 0.0, %v2870
        %v2872 = vpop.f32.mrb[0].mxu0
        %2873 = vmatprep.mubr.bf16.mxu0 0
        %2874 = vmatmul.mubr.bf16.gmra.mrb[0].mxu0 %v2693
        %v2875 = vpop.f32.mrb[0].mxu0
        %v2876 = vadd.f32 0.0, %v2875
        %v2877 = vpop.f32.mrb[0].mxu0
        %v2878 = vpop.f32.mrb[0].mxu0
        %v2879 = vadd.f32 0.0, %v2878
        %v2880 = vpop.f32.mrb[0].mxu0
        %2881 = vmatprep.mubr.bf16.mxu0 0
        %2882 = vmatmul.mubr.bf16.gmra.mrb[0].mxu0 %v2694
        %v2883 = vpop.f32.mrb[0].mxu0
        %v2884 = vadd.f32 0.0, %v2883
        %v2885 = vpop.f32.mrb[0].mxu0
        %v2886 = vpop.f32.mrb[0].mxu0
        %v2887 = vadd.f32 0.0, %v2886
        %v2888 = vpop.f32.mrb[0].mxu0
        %2889 = vmatprep.mubr.bf16.mxu0 0
        %2890 = vmatmul.mubr.bf16.gmra.mrb[0].mxu0 %v2695
        %v2891 = vpop.f32.mrb[0].mxu0
        %v2892 = vadd.f32 0.0, %v2891
        %v2893 = vpop.f32.mrb[0].mxu0
        %v2894 = vpop.f32.mrb[0].mxu0
        %v2895 = vadd.f32 0.0, %v2894
        %v2896 = vpop.f32.mrb[0].mxu0
        %2897 = vmatprep.mubr.bf16.mxu0 0
        %2898 = vmatmul.mubr.bf16.gmra.mrb[0].mxu0 %v2696
        %v2899 = vpop.f32.mrb[0].mxu0
        %v2900 = vadd.f32 0.0, %v2899
        %v2901 = vpop.f32.mrb[0].mxu0
        %v2902 = vpop.f32.mrb[0].mxu0
        %v2903 = vadd.f32 0.0, %v2902
        %v2904 = vpop.f32.mrb[0].mxu0
        %2905 = vmatprep.mubr.bf16.mxu0 0
        %2906 = vmatmul.mubr.bf16.gmra.mrb[0].mxu0 %v2697
        %v2907 = vpop.f32.mrb[0].mxu0
        %v2908 = vadd.f32 0.0, %v2907
        %v2909 = vpop.f32.mrb[0].mxu0
        %v2910 = vpop.f32.mrb[0].mxu0
        %v2911 = vadd.f32 0.0, %v2910
        %v2912 = vpop.f32.mrb[0].mxu0
        %2913 = vmatprep.mubr.bf16.mxu0 0
        %2914 = vmatmul.mubr.bf16.gmra.mrb[0].mxu0 %v2698
        %v2915 = vpop.f32.mrb[0].mxu0
        %v2916 = vadd.f32 0.0, %v2915
        %v2917 = vpop.f32.mrb[0].mxu0
        %v2918 = vpop.f32.mrb[0].mxu0
        %v2919 = vadd.f32 0.0, %v2918
        %v2920 = vpop.f32.mrb[0].mxu0
        %2921 = vmatprep.mubr.bf16.mxu0 0
        %2922 = vmatmul.mubr.bf16.gmra.mrb[0].mxu0 %v2699
        %v2923 = vpop.f32.mrb[0].mxu0
        %v2924 = vadd.f32 0.0, %v2923
        %v2925 = vpop.f32.mrb[0].mxu0
        %v2926 = vpop.f32.mrb[0].mxu0
        %v2927 = vadd.f32 0.0, %v2926
        %v2928 = vpop.f32.mrb[0].mxu0
        %2929 = vmatprep.mubr.bf16.mxu0 0
        %2930 = vmatmul.mubr.bf16.gmra.mrb[0].mxu0 %v2700
        %v2931 = vpop.f32.mrb[0].mxu0
        %v2932 = vadd.f32 0.0, %v2931
        %v2933 = vpop.f32.mrb[0].mxu0
        %v2934 = vpop.f32.mrb[0].mxu0
        %v2935 = vadd.f32 0.0, %v2934
        %v2936 = vpop.f32.mrb[0].mxu0
        %2937 = vmatprep.mubr.bf16.mxu0 0
        %2938 = vmatmul.mubr.bf16.gmra.mrb[0].mxu0 %v2701
        %v2939 = vpop.f32.mrb[0].mxu0
        %v2940 = vadd.f32 0.0, %v2939
        %v2941 = vpop.f32.mrb[0].mxu0
        %v2942 = vpop.f32.mrb[0].mxu0
        %v2943 = vadd.f32 0.0, %v2942
        %v2944 = vpop.f32.mrb[0].mxu0
        %2945 = vmatprep.mubr.bf16.mxu0 0
        %2946 = vmatmul.mubr.bf16.gmra.mrb[0].mxu0 %v2702
        %v2947 = vpop.f32.mrb[0].mxu0
        %v2948 = vadd.f32 0.0, %v2947
        %v2949 = vpop.f32.mrb[0].mxu0
        %v2950 = vpop.f32.mrb[0].mxu0
        %v2951 = vadd.f32 0.0, %v2950
        %v2952 = vpop.f32.mrb[0].mxu0
        %2953 = vmatprep.mubr.bf16.mxu0 0
        %2954 = vmatmul.mubr.bf16.gmra.mrb[0].mxu0 %v2703
        %v2955 = vpop.f32.mrb[0].mxu0
        %v2956 = vadd.f32 0.0, %v2955
        %v2957 = vpop.f32.mrb[0].mxu0
        %v2958 = vpop.f32.mrb[0].mxu0
        %v2959 = vadd.f32 0.0, %v2958
        %v2960 = vpop.f32.mrb[0].mxu0
        %2961 = vdwg.mxu0
        %v2962 = vadd.f32 %v2704, %v2836
        %v2963 = vadd.f32 %v2705, %v2839
        %v2964 = vadd.f32 %v2706, %v2844
        %v2965 = vadd.f32 %v2707, %v2847
        %v2966 = vadd.f32 %v2708, %v2852
        %v2967 = vadd.f32 %v2709, %v2855
        %v2968 = vadd.f32 %v2710, %v2860
        %v2969 = vadd.f32 %v2711, %v2863
        %v2970 = vadd.f32 %v2712, %v2868
        %v2971 = vadd.f32 %v2713, %v2871
        %v2972 = vadd.f32 %v2714, %v2876
        %v2973 = vadd.f32 %v2715, %v2879
        %v2974 = vadd.f32 %v2716, %v2884
        %v2975 = vadd.f32 %v2717, %v2887
        %v2976 = vadd.f32 %v2718, %v2892
        %v2977 = vadd.f32 %v2719, %v2895
        %v2978 = vadd.f32 %v2720, %v2900
        %v2979 = vadd.f32 %v2721, %v2903
        %v2980 = vadd.f32 %v2722, %v2908
        %v2981 = vadd.f32 %v2723, %v2911
        %v2982 = vadd.f32 %v2724, %v2916
        %v2983 = vadd.f32 %v2725, %v2919
        %v2984 = vadd.f32 %v2726, %v2924
        %v2985 = vadd.f32 %v2727, %v2927
        %v2986 = vadd.f32 %v2728, %v2932
        %v2987 = vadd.f32 %v2729, %v2935
        %v2988 = vadd.f32 %v2730, %v2940
        %v2989 = vadd.f32 %v2731, %v2943
        %v2990 = vadd.f32 %v2732, %v2948
        %v2991 = vadd.f32 %v2733, %v2951
        %v2992 = vadd.f32 %v2734, %v2956
        %v2993 = vadd.f32 %v2735, %v2959
        %2994 = vst [vmem:[#allocation3] sm:$0xff] %v2962
        %2995 = vst [vmem:[#allocation3 + $0x8] sm:$0xff] %v2963
        %2996 = vst [vmem:[#allocation3 + $0x10] sm:$0xff] %v2964
        %2997 = vst [vmem:[#allocation3 + $0x18] sm:$0xff] %v2965
        %2998 = vst [vmem:[#allocation3 + $0x20] sm:$0xff] %v2966
        %2999 = vst [vmem:[#allocation3 + $0x28] sm:$0xff] %v2967
        %3000 = vst [vmem:[#allocation3 + $0x30] sm:$0xff] %v2968
        %3001 = vst [vmem:[#allocation3 + $0x38] sm:$0xff] %v2969
        %3002 = vst [vmem:[#allocation3 + $0x40] sm:$0xff] %v2970
        %3003 = vst [vmem:[#allocation3 + $0x48] sm:$0xff] %v2971
        %3004 = vst [vmem:[#allocation3 + $0x50] sm:$0xff] %v2972
        %3005 = vst [vmem:[#allocation3 + $0x58] sm:$0xff] %v2973
        %3006 = vst [vmem:[#allocation3 + $0x60] sm:$0xff] %v2974
        %3007 = vst [vmem:[#allocation3 + $0x68] sm:$0xff] %v2975
        %3008 = vst [vmem:[#allocation3 + $0x70] sm:$0xff] %v2976
        %3009 = vst [vmem:[#allocation3 + $0x78] sm:$0xff] %v2977
        %3010 = vst [vmem:[#allocation3 + $0x80] sm:$0xff] %v2978
        %3011 = vst [vmem:[#allocation3 + $0x88] sm:$0xff] %v2979
        %3012 = vst [vmem:[#allocation3 + $0x90] sm:$0xff] %v2980
        %3013 = vst [vmem:[#allocation3 + $0x98] sm:$0xff] %v2981
        %3014 = vst [vmem:[#allocation3 + $0xa0] sm:$0xff] %v2982
        %3015 = vst [vmem:[#allocation3 + $0xa8] sm:$0xff] %v2983
        %3016 = vst [vmem:[#allocation3 + $0xb0] sm:$0xff] %v2984
        %3017 = vst [vmem:[#allocation3 + $0xb8] sm:$0xff] %v2985
        %3018 = vst [vmem:[#allocation3 + $0xc0] sm:$0xff] %v2986
        %3019 = vst [vmem:[#allocation3 + $0xc8] sm:$0xff] %v2987
        %3020 = vst [vmem:[#allocation3 + $0xd0] sm:$0xff] %v2988
        %3021 = vst [vmem:[#allocation3 + $0xd8] sm:$0xff] %v2989
        %3022 = vst [vmem:[#allocation3 + $0xe0] sm:$0xff] %v2990
        %3023 = vst [vmem:[#allocation3 + $0xe8] sm:$0xff] %v2991
        %3024 = vst [vmem:[#allocation3 + $0xf0] sm:$0xff] %v2992
        %3025 = vst [vmem:[#allocation3 + $0xf8] sm:$0xff] %v2993
        %v3026 = vld [vmem:[%s2655 + $0x1] sm:$0xff]
        %v3027 = vld [vmem:[%s2655 + $0x9] sm:$0xff]
        %v3028 = vld [vmem:[%s2655 + $0x19] sm:$0xff]
        %v3029 = vld [vmem:[%s2655 + $0x21] sm:$0xff]
        %v3030 = vld [vmem:[%s2655 + $0x31] sm:$0xff]
        %v3031 = vld [vmem:[%s2655 + $0x39] sm:$0xff]
        %v3032 = vld [vmem:[%s2655 + $0x49] sm:$0xff]
        %v3033 = vld [vmem:[%s2655 + $0x51] sm:$0xff]
        %v3034 = vld [vmem:[%s2655 + $0x61] sm:$0xff]
        %v3035 = vld [vmem:[%s2655 + $0x69] sm:$0xff]
        %v3036 = vld [vmem:[%s2655 + $0x79] sm:$0xff]
        %v3037 = vld [vmem:[%s2655 + $0x81] sm:$0xff]
        %v3038 = vld [vmem:[%s2655 + $0x91] sm:$0xff]
        %v3039 = vld [vmem:[%s2655 + $0x99] sm:$0xff]
        %v3040 = vld [vmem:[%s2655 + $0xa9] sm:$0xff]
        %v3041 = vld [vmem:[%s2655 + $0xb1] sm:$0xff]
        %v3042 = vld [vmem:[%s2655 + $0xc1] sm:$0xff]
        %v3043 = vld [vmem:[%s2655 + $0xc9] sm:$0xff]
        %v3044 = vld [vmem:[%s2655 + $0xd9] sm:$0xff]
        %v3045 = vld [vmem:[%s2655 + $0xe1] sm:$0xff]
        %v3046 = vld [vmem:[%s2655 + $0xf1] sm:$0xff]
        %v3047 = vld [vmem:[%s2655 + $0xf9] sm:$0xff]
        %v3048 = vld [vmem:[%s2655 + $0x109] sm:$0xff]
        %v3049 = vld [vmem:[%s2655 + $0x111] sm:$0xff]
        %v3050 = vld [vmem:[%s2655 + $0x121] sm:$0xff]
        %v3051 = vld [vmem:[%s2655 + $0x129] sm:$0xff]
        %v3052 = vld [vmem:[%s2655 + $0x139] sm:$0xff]
        %v3053 = vld [vmem:[%s2655 + $0x141] sm:$0xff]
        %v3054 = vld [vmem:[%s2655 + $0x151] sm:$0xff]
        %v3055 = vld [vmem:[%s2655 + $0x159] sm:$0xff]
        %v3056 = vld [vmem:[%s2655 + $0x169] sm:$0xff]
        %v3057 = vld [vmem:[%s2655 + $0x171] sm:$0xff]
        %v3058 = vpack.c.bf16 %v3027, %v3026
        %v3059 = vpack.c.bf16 %v3029, %v3028
        %v3060 = vpack.c.bf16 %v3031, %v3030
        %v3061 = vpack.c.bf16 %v3033, %v3032
        %v3062 = vpack.c.bf16 %v3035, %v3034
        %v3063 = vpack.c.bf16 %v3037, %v3036
        %v3064 = vpack.c.bf16 %v3039, %v3038
        %v3065 = vpack.c.bf16 %v3041, %v3040
        %v3066 = vpack.c.bf16 %v3043, %v3042
        %v3067 = vpack.c.bf16 %v3045, %v3044
        %v3068 = vpack.c.bf16 %v3047, %v3046
        %v3069 = vpack.c.bf16 %v3049, %v3048
        %v3070 = vpack.c.bf16 %v3051, %v3050
        %v3071 = vpack.c.bf16 %v3053, %v3052
        %v3072 = vpack.c.bf16 %v3055, %v3054
        %v3073 = vpack.c.bf16 %v3057, %v3056
        %v3074 = vld [vmem:[#allocation3] sm:$0xff]
        %v3075 = vld [vmem:[#allocation3 + $0x8] sm:$0xff]
        %v3076 = vld [vmem:[#allocation3 + $0x10] sm:$0xff]
        %v3077 = vld [vmem:[#allocation3 + $0x18] sm:$0xff]
        %v3078 = vld [vmem:[#allocation3 + $0x20] sm:$0xff]
        %v3079 = vld [vmem:[#allocation3 + $0x28] sm:$0xff]
        %v3080 = vld [vmem:[#allocation3 + $0x30] sm:$0xff]
        %v3081 = vld [vmem:[#allocation3 + $0x38] sm:$0xff]
        %v3082 = vld [vmem:[#allocation3 + $0x40] sm:$0xff]
        %v3083 = vld [vmem:[#allocation3 + $0x48] sm:$0xff]
        %v3084 = vld [vmem:[#allocation3 + $0x50] sm:$0xff]
        %v3085 = vld [vmem:[#allocation3 + $0x58] sm:$0xff]
        %v3086 = vld [vmem:[#allocation3 + $0x60] sm:$0xff]
        %v3087 = vld [vmem:[#allocation3 + $0x68] sm:$0xff]
        %v3088 = vld [vmem:[#allocation3 + $0x70] sm:$0xff]
        %v3089 = vld [vmem:[#allocation3 + $0x78] sm:$0xff]
        %v3090 = vld [vmem:[#allocation3 + $0x80] sm:$0xff]
        %v3091 = vld [vmem:[#allocation3 + $0x88] sm:$0xff]
        %v3092 = vld [vmem:[#allocation3 + $0x90] sm:$0xff]
        %v3093 = vld [vmem:[#allocation3 + $0x98] sm:$0xff]
        %v3094 = vld [vmem:[#allocation3 + $0xa0] sm:$0xff]
        %v3095 = vld [vmem:[#allocation3 + $0xa8] sm:$0xff]
        %v3096 = vld [vmem:[#allocation3 + $0xb0] sm:$0xff]
        %v3097 = vld [vmem:[#allocation3 + $0xb8] sm:$0xff]
        %v3098 = vld [vmem:[#allocation3 + $0xc0] sm:$0xff]
        %v3099 = vld [vmem:[#allocation3 + $0xc8] sm:$0xff]
        %v3100 = vld [vmem:[#allocation3 + $0xd0] sm:$0xff]
        %v3101 = vld [vmem:[#allocation3 + $0xd8] sm:$0xff]
        %v3102 = vld [vmem:[#allocation3 + $0xe0] sm:$0xff]
        %v3103 = vld [vmem:[#allocation3 + $0xe8] sm:$0xff]
        %v3104 = vld [vmem:[#allocation3 + $0xf0] sm:$0xff]
        %v3105 = vld [vmem:[#allocation3 + $0xf8] sm:$0xff]
        %s3106 = scalar_lea.vmem [#allocation7], 448
        %v3107 = vld [vmem:[%s3106] sm:$0xf]
        %v3108 = vld [vmem:[%s3106 + $0x4] sm:$0xf]
        %v3109 = vld [vmem:[%s3106 + $0x8] sm:$0xf]
        %v3110 = vld [vmem:[%s3106 + $0xc] sm:$0xf]
        %v3111 = vld [vmem:[%s3106 + $0x10] sm:$0xf]
        %v3112 = vld [vmem:[%s3106 + $0x14] sm:$0xf]
        %v3113 = vld [vmem:[%s3106 + $0x18] sm:$0xf]
        %v3114 = vld [vmem:[%s3106 + $0x1c] sm:$0xf]
        %v3115 = vld [vmem:[%s3106 + $0x20] sm:$0xf]
        %v3116 = vld [vmem:[%s3106 + $0x24] sm:$0xf]
        %v3117 = vld [vmem:[%s3106 + $0x28] sm:$0xf]
        %v3118 = vld [vmem:[%s3106 + $0x2c] sm:$0xf]
        %v3119 = vld [vmem:[%s3106 + $0x30] sm:$0xf]
        %v3120 = vld [vmem:[%s3106 + $0x34] sm:$0xf]
        %v3121 = vld [vmem:[%s3106 + $0x38] sm:$0xf]
        %v3122 = vld [vmem:[%s3106 + $0x3c] sm:$0xf]
        %v3139 = vunpack.c.l.b16 %v3107
        %v3140 = vunpack.c.l.b16 %v3108
        %v3141 = vunpack.c.l.b16 %v3109
        %v3142 = vunpack.c.l.b16 %v3110
        %v3143 = vunpack.c.l.b16 %v3111
        %v3144 = vunpack.c.l.b16 %v3112
        %v3145 = vunpack.c.l.b16 %v3113
        %v3146 = vunpack.c.l.b16 %v3114
        %v3147 = vunpack.c.l.b16 %v3115
        %v3148 = vunpack.c.l.b16 %v3116
        %v3149 = vunpack.c.l.b16 %v3117
        %v3150 = vunpack.c.l.b16 %v3118
        %v3151 = vunpack.c.l.b16 %v3119
        %v3152 = vunpack.c.l.b16 %v3120
        %v3153 = vunpack.c.l.b16 %v3121
        %v3154 = vunpack.c.l.b16 %v3122
        %v3155 = vpack.c.b16 %v3140, %v3139
        %v3156 = vpack.c.b16 %v3142, %v3141
        %v3157 = vpack.c.b16 %v3144, %v3143
        %v3158 = vpack.c.b16 %v3146, %v3145
        %v3159 = vpack.c.b16 %v3148, %v3147
        %v3160 = vpack.c.b16 %v3150, %v3149
        %v3161 = vpack.c.b16 %v3152, %v3151
        %v3162 = vpack.c.b16 %v3154, %v3153
        %3171 = vmatprep.subr.bf16.mxu0 0
        %3172 = vmatpush1.bf16.msra.mxu0 %v3155
        %3173 = vmatprep.subr.bf16.mxu0 0
        %3174 = vmatpush1.bf16.msra.mxu0 %v3156
        %3175 = vmatprep.subr.bf16.mxu0 0
        %3176 = vmatpush1.bf16.msra.mxu0 %v3157
        %3177 = vmatprep.subr.bf16.mxu0 0
        %3178 = vmatpush1.bf16.msra.mxu0 %v3158
        %3179 = vmatprep.subr.bf16.mxu0 0
        %3180 = vmatpush1.bf16.msra.mxu0 %v3159
        %3181 = vmatprep.subr.bf16.mxu0 0
        %3182 = vmatpush1.bf16.msra.mxu0 %v3160
        %3183 = vmatprep.subr.bf16.mxu0 0
        %3184 = vmatpush1.bf16.msra.mxu0 %v3161
        %3185 = vmatprep.subr.bf16.mxu0 0
        %3186 = vmatpush1.bf16.msra.mxu0 %v3162
        %3187 = vmatprep.subr.bf16.mxu0 0
        %3188 = vmatpush1.bf16.msra.mxu0 0
        %3189 = vmatprep.subr.bf16.mxu0 0
        %3190 = vmatpush1.bf16.msra.mxu0 0
        %3191 = vmatprep.subr.bf16.mxu0 0
        %3192 = vmatpush1.bf16.msra.mxu0 0
        %3193 = vmatprep.subr.bf16.mxu0 0
        %3194 = vmatpush1.bf16.msra.mxu0 0
        %3195 = vmatprep.subr.bf16.mxu0 0
        %3196 = vmatpush1.bf16.msra.mxu0 0
        %3197 = vmatprep.subr.bf16.mxu0 0
        %3198 = vmatpush1.bf16.msra.mxu0 0
        %3199 = vmatprep.subr.bf16.mxu0 0
        %3200 = vmatpush1.bf16.msra.mxu0 0
        %3201 = vmatprep.subr.bf16.mxu0 0
        %3202 = vmatpush1.bf16.msra.mxu0 0
        %3203 = vmatprep.mubr.bf16.mxu0 0
        %3204 = vmatmul.mubr.bf16.gmra.mrb[0].mxu0 %v3058
        %v3205 = vpop.f32.mrb[0].mxu0
        %v3206 = vadd.f32 0.0, %v3205
        %v3207 = vpop.f32.mrb[0].mxu0
        %v3208 = vpop.f32.mrb[0].mxu0
        %v3209 = vadd.f32 0.0, %v3208
        %v3210 = vpop.f32.mrb[0].mxu0
        %3211 = vmatprep.mubr.bf16.mxu0 0
        %3212 = vmatmul.mubr.bf16.gmra.mrb[0].mxu0 %v3059
        %v3213 = vpop.f32.mrb[0].mxu0
        %v3214 = vadd.f32 0.0, %v3213
        %v3215 = vpop.f32.mrb[0].mxu0
        %v3216 = vpop.f32.mrb[0].mxu0
        %v3217 = vadd.f32 0.0, %v3216
        %v3218 = vpop.f32.mrb[0].mxu0
        %3219 = vmatprep.mubr.bf16.mxu0 0
        %3220 = vmatmul.mubr.bf16.gmra.mrb[0].mxu0 %v3060
        %v3221 = vpop.f32.mrb[0].mxu0
        %v3222 = vadd.f32 0.0, %v3221
        %v3223 = vpop.f32.mrb[0].mxu0
        %v3224 = vpop.f32.mrb[0].mxu0
        %v3225 = vadd.f32 0.0, %v3224
        %v3226 = vpop.f32.mrb[0].mxu0
        %3227 = vmatprep.mubr.bf16.mxu0 0
        %3228 = vmatmul.mubr.bf16.gmra.mrb[0].mxu0 %v3061
        %v3229 = vpop.f32.mrb[0].mxu0
        %v3230 = vadd.f32 0.0, %v3229
        %v3231 = vpop.f32.mrb[0].mxu0
        %v3232 = vpop.f32.mrb[0].mxu0
        %v3233 = vadd.f32 0.0, %v3232
        %v3234 = vpop.f32.mrb[0].mxu0
        %3235 = vmatprep.mubr.bf16.mxu0 0
        %3236 = vmatmul.mubr.bf16.gmra.mrb[0].mxu0 %v3062
        %v3237 = vpop.f32.mrb[0].mxu0
        %v3238 = vadd.f32 0.0, %v3237
        %v3239 = vpop.f32.mrb[0].mxu0
        %v3240 = vpop.f32.mrb[0].mxu0
        %v3241 = vadd.f32 0.0, %v3240
        %v3242 = vpop.f32.mrb[0].mxu0
        %3243 = vmatprep.mubr.bf16.mxu0 0
        %3244 = vmatmul.mubr.bf16.gmra.mrb[0].mxu0 %v3063
        %v3245 = vpop.f32.mrb[0].mxu0
        %v3246 = vadd.f32 0.0, %v3245
        %v3247 = vpop.f32.mrb[0].mxu0
        %v3248 = vpop.f32.mrb[0].mxu0
        %v3249 = vadd.f32 0.0, %v3248
        %v3250 = vpop.f32.mrb[0].mxu0
        %3251 = vmatprep.mubr.bf16.mxu0 0
        %3252 = vmatmul.mubr.bf16.gmra.mrb[0].mxu0 %v3064
        %v3253 = vpop.f32.mrb[0].mxu0
        %v3254 = vadd.f32 0.0, %v3253
        %v3255 = vpop.f32.mrb[0].mxu0
        %v3256 = vpop.f32.mrb[0].mxu0
        %v3257 = vadd.f32 0.0, %v3256
        %v3258 = vpop.f32.mrb[0].mxu0
        %3259 = vmatprep.mubr.bf16.mxu0 0
        %3260 = vmatmul.mubr.bf16.gmra.mrb[0].mxu0 %v3065
        %v3261 = vpop.f32.mrb[0].mxu0
        %v3262 = vadd.f32 0.0, %v3261
        %v3263 = vpop.f32.mrb[0].mxu0
        %v3264 = vpop.f32.mrb[0].mxu0
        %v3265 = vadd.f32 0.0, %v3264
        %v3266 = vpop.f32.mrb[0].mxu0
        %3267 = vmatprep.mubr.bf16.mxu0 0
        %3268 = vmatmul.mubr.bf16.gmra.mrb[0].mxu0 %v3066
        %v3269 = vpop.f32.mrb[0].mxu0
        %v3270 = vadd.f32 0.0, %v3269
        %v3271 = vpop.f32.mrb[0].mxu0
        %v3272 = vpop.f32.mrb[0].mxu0
        %v3273 = vadd.f32 0.0, %v3272
        %v3274 = vpop.f32.mrb[0].mxu0
        %3275 = vmatprep.mubr.bf16.mxu0 0
        %3276 = vmatmul.mubr.bf16.gmra.mrb[0].mxu0 %v3067
        %v3277 = vpop.f32.mrb[0].mxu0
        %v3278 = vadd.f32 0.0, %v3277
        %v3279 = vpop.f32.mrb[0].mxu0
        %v3280 = vpop.f32.mrb[0].mxu0
        %v3281 = vadd.f32 0.0, %v3280
        %v3282 = vpop.f32.mrb[0].mxu0
        %3283 = vmatprep.mubr.bf16.mxu0 0
        %3284 = vmatmul.mubr.bf16.gmra.mrb[0].mxu0 %v3068
        %v3285 = vpop.f32.mrb[0].mxu0
        %v3286 = vadd.f32 0.0, %v3285
        %v3287 = vpop.f32.mrb[0].mxu0
        %v3288 = vpop.f32.mrb[0].mxu0
        %v3289 = vadd.f32 0.0, %v3288
        %v3290 = vpop.f32.mrb[0].mxu0
        %3291 = vmatprep.mubr.bf16.mxu0 0
        %3292 = vmatmul.mubr.bf16.gmra.mrb[0].mxu0 %v3069
        %v3293 = vpop.f32.mrb[0].mxu0
        %v3294 = vadd.f32 0.0, %v3293
        %v3295 = vpop.f32.mrb[0].mxu0
        %v3296 = vpop.f32.mrb[0].mxu0
        %v3297 = vadd.f32 0.0, %v3296
        %v3298 = vpop.f32.mrb[0].mxu0
        %3299 = vmatprep.mubr.bf16.mxu0 0
        %3300 = vmatmul.mubr.bf16.gmra.mrb[0].mxu0 %v3070
        %v3301 = vpop.f32.mrb[0].mxu0
        %v3302 = vadd.f32 0.0, %v3301
        %v3303 = vpop.f32.mrb[0].mxu0
        %v3304 = vpop.f32.mrb[0].mxu0
        %v3305 = vadd.f32 0.0, %v3304
        %v3306 = vpop.f32.mrb[0].mxu0
        %3307 = vmatprep.mubr.bf16.mxu0 0
        %3308 = vmatmul.mubr.bf16.gmra.mrb[0].mxu0 %v3071
        %v3309 = vpop.f32.mrb[0].mxu0
        %v3310 = vadd.f32 0.0, %v3309
        %v3311 = vpop.f32.mrb[0].mxu0
        %v3312 = vpop.f32.mrb[0].mxu0
        %v3313 = vadd.f32 0.0, %v3312
        %v3314 = vpop.f32.mrb[0].mxu0
        %3315 = vmatprep.mubr.bf16.mxu0 0
        %3316 = vmatmul.mubr.bf16.gmra.mrb[0].mxu0 %v3072
        %v3317 = vpop.f32.mrb[0].mxu0
        %v3318 = vadd.f32 0.0, %v3317
        %v3319 = vpop.f32.mrb[0].mxu0
        %v3320 = vpop.f32.mrb[0].mxu0
        %v3321 = vadd.f32 0.0, %v3320
        %v3322 = vpop.f32.mrb[0].mxu0
        %3323 = vmatprep.mubr.bf16.mxu0 0
        %3324 = vmatmul.mubr.bf16.gmra.mrb[0].mxu0 %v3073
        %v3325 = vpop.f32.mrb[0].mxu0
        %v3326 = vadd.f32 0.0, %v3325
        %v3327 = vpop.f32.mrb[0].mxu0
        %v3328 = vpop.f32.mrb[0].mxu0
        %v3329 = vadd.f32 0.0, %v3328
        %v3330 = vpop.f32.mrb[0].mxu0
        %3331 = vdwg.mxu0
        %v3332 = vadd.f32 %v3074, %v3206
        %v3333 = vadd.f32 %v3075, %v3209
        %v3334 = vadd.f32 %v3076, %v3214
        %v3335 = vadd.f32 %v3077, %v3217
        %v3336 = vadd.f32 %v3078, %v3222
        %v3337 = vadd.f32 %v3079, %v3225
        %v3338 = vadd.f32 %v3080, %v3230
        %v3339 = vadd.f32 %v3081, %v3233
        %v3340 = vadd.f32 %v3082, %v3238
        %v3341 = vadd.f32 %v3083, %v3241
        %v3342 = vadd.f32 %v3084, %v3246
        %v3343 = vadd.f32 %v3085, %v3249
        %v3344 = vadd.f32 %v3086, %v3254
        %v3345 = vadd.f32 %v3087, %v3257
        %v3346 = vadd.f32 %v3088, %v3262
        %v3347 = vadd.f32 %v3089, %v3265
        %v3348 = vadd.f32 %v3090, %v3270
        %v3349 = vadd.f32 %v3091, %v3273
        %v3350 = vadd.f32 %v3092, %v3278
        %v3351 = vadd.f32 %v3093, %v3281
        %v3352 = vadd.f32 %v3094, %v3286
        %v3353 = vadd.f32 %v3095, %v3289
        %v3354 = vadd.f32 %v3096, %v3294
        %v3355 = vadd.f32 %v3097, %v3297
        %v3356 = vadd.f32 %v3098, %v3302
        %v3357 = vadd.f32 %v3099, %v3305
        %v3358 = vadd.f32 %v3100, %v3310
        %v3359 = vadd.f32 %v3101, %v3313
        %v3360 = vadd.f32 %v3102, %v3318
        %v3361 = vadd.f32 %v3103, %v3321
        %v3362 = vadd.f32 %v3104, %v3326
        %v3363 = vadd.f32 %v3105, %v3329
        %3364 = vst [vmem:[#allocation3] sm:$0xff] %v3332
        %3365 = vst [vmem:[#allocation3 + $0x8] sm:$0xff] %v3333
        %3366 = vst [vmem:[#allocation3 + $0x10] sm:$0xff] %v3334
        %3367 = vst [vmem:[#allocation3 + $0x18] sm:$0xff] %v3335
        %3368 = vst [vmem:[#allocation3 + $0x20] sm:$0xff] %v3336
        %3369 = vst [vmem:[#allocation3 + $0x28] sm:$0xff] %v3337
        %3370 = vst [vmem:[#allocation3 + $0x30] sm:$0xff] %v3338
        %3371 = vst [vmem:[#allocation3 + $0x38] sm:$0xff] %v3339
        %3372 = vst [vmem:[#allocation3 + $0x40] sm:$0xff] %v3340
        %3373 = vst [vmem:[#allocation3 + $0x48] sm:$0xff] %v3341
        %3374 = vst [vmem:[#allocation3 + $0x50] sm:$0xff] %v3342
        %3375 = vst [vmem:[#allocation3 + $0x58] sm:$0xff] %v3343
        %3376 = vst [vmem:[#allocation3 + $0x60] sm:$0xff] %v3344
        %3377 = vst [vmem:[#allocation3 + $0x68] sm:$0xff] %v3345
        %3378 = vst [vmem:[#allocation3 + $0x70] sm:$0xff] %v3346
        %3379 = vst [vmem:[#allocation3 + $0x78] sm:$0xff] %v3347
        %3380 = vst [vmem:[#allocation3 + $0x80] sm:$0xff] %v3348
        %3381 = vst [vmem:[#allocation3 + $0x88] sm:$0xff] %v3349
        %3382 = vst [vmem:[#allocation3 + $0x90] sm:$0xff] %v3350
        %3383 = vst [vmem:[#allocation3 + $0x98] sm:$0xff] %v3351
        %3384 = vst [vmem:[#allocation3 + $0xa0] sm:$0xff] %v3352
        %3385 = vst [vmem:[#allocation3 + $0xa8] sm:$0xff] %v3353
        %3386 = vst [vmem:[#allocation3 + $0xb0] sm:$0xff] %v3354
        %3387 = vst [vmem:[#allocation3 + $0xb8] sm:$0xff] %v3355
        %3388 = vst [vmem:[#allocation3 + $0xc0] sm:$0xff] %v3356
        %3389 = vst [vmem:[#allocation3 + $0xc8] sm:$0xff] %v3357
        %3390 = vst [vmem:[#allocation3 + $0xd0] sm:$0xff] %v3358
        %3391 = vst [vmem:[#allocation3 + $0xd8] sm:$0xff] %v3359
        %3392 = vst [vmem:[#allocation3 + $0xe0] sm:$0xff] %v3360
        %3393 = vst [vmem:[#allocation3 + $0xe8] sm:$0xff] %v3361
        %3394 = vst [vmem:[#allocation3 + $0xf0] sm:$0xff] %v3362
        %3395 = vst [vmem:[#allocation3 + $0xf8] sm:$0xff] %v3363
        %v3396 = vld [vmem:[%s2655 + $0x2] sm:$0xff]
        %v3397 = vld [vmem:[%s2655 + $0xa] sm:$0xff]
        %v3398 = vld [vmem:[%s2655 + $0x1a] sm:$0xff]
        %v3399 = vld [vmem:[%s2655 + $0x22] sm:$0xff]
        %v3400 = vld [vmem:[%s2655 + $0x32] sm:$0xff]
        %v3401 = vld [vmem:[%s2655 + $0x3a] sm:$0xff]
        %v3402 = vld [vmem:[%s2655 + $0x4a] sm:$0xff]
        %v3403 = vld [vmem:[%s2655 + $0x52] sm:$0xff]
        %v3404 = vld [vmem:[%s2655 + $0x62] sm:$0xff]
        %v3405 = vld [vmem:[%s2655 + $0x6a] sm:$0xff]
        %v3406 = vld [vmem:[%s2655 + $0x7a] sm:$0xff]
        %v3407 = vld [vmem:[%s2655 + $0x82] sm:$0xff]
        %v3408 = vld [vmem:[%s2655 + $0x92] sm:$0xff]
        %v3409 = vld [vmem:[%s2655 + $0x9a] sm:$0xff]
        %v3410 = vld [vmem:[%s2655 + $0xaa] sm:$0xff]
        %v3411 = vld [vmem:[%s2655 + $0xb2] sm:$0xff]
        %v3412 = vld [vmem:[%s2655 + $0xc2] sm:$0xff]
        %v3413 = vld [vmem:[%s2655 + $0xca] sm:$0xff]
        %v3414 = vld [vmem:[%s2655 + $0xda] sm:$0xff]
        %v3415 = vld [vmem:[%s2655 + $0xe2] sm:$0xff]
        %v3416 = vld [vmem:[%s2655 + $0xf2] sm:$0xff]
        %v3417 = vld [vmem:[%s2655 + $0xfa] sm:$0xff]
        %v3418 = vld [vmem:[%s2655 + $0x10a] sm:$0xff]
        %v3419 = vld [vmem:[%s2655 + $0x112] sm:$0xff]
        %v3420 = vld [vmem:[%s2655 + $0x122] sm:$0xff]
        %v3421 = vld [vmem:[%s2655 + $0x12a] sm:$0xff]
        %v3422 = vld [vmem:[%s2655 + $0x13a] sm:$0xff]
        %v3423 = vld [vmem:[%s2655 + $0x142] sm:$0xff]
        %v3424 = vld [vmem:[%s2655 + $0x152] sm:$0xff]
        %v3425 = vld [vmem:[%s2655 + $0x15a] sm:$0xff]
        %v3426 = vld [vmem:[%s2655 + $0x16a] sm:$0xff]
        %v3427 = vld [vmem:[%s2655 + $0x172] sm:$0xff]
        %v3428 = vpack.c.bf16 %v3397, %v3396
        %v3429 = vpack.c.bf16 %v3399, %v3398
        %v3430 = vpack.c.bf16 %v3401, %v3400
        %v3431 = vpack.c.bf16 %v3403, %v3402
        %v3432 = vpack.c.bf16 %v3405, %v3404
        %v3433 = vpack.c.bf16 %v3407, %v3406
        %v3434 = vpack.c.bf16 %v3409, %v3408
        %v3435 = vpack.c.bf16 %v3411, %v3410
        %v3436 = vpack.c.bf16 %v3413, %v3412
        %v3437 = vpack.c.bf16 %v3415, %v3414
        %v3438 = vpack.c.bf16 %v3417, %v3416
        %v3439 = vpack.c.bf16 %v3419, %v3418
        %v3440 = vpack.c.bf16 %v3421, %v3420
        %v3441 = vpack.c.bf16 %v3423, %v3422
        %v3442 = vpack.c.bf16 %v3425, %v3424
        %v3443 = vpack.c.bf16 %v3427, %v3426
        %v3444 = vld [vmem:[#allocation3] sm:$0xff]
        %v3445 = vld [vmem:[#allocation3 + $0x8] sm:$0xff]
        %v3446 = vld [vmem:[#allocation3 + $0x10] sm:$0xff]
        %v3447 = vld [vmem:[#allocation3 + $0x18] sm:$0xff]
        %v3448 = vld [vmem:[#allocation3 + $0x20] sm:$0xff]
        %v3449 = vld [vmem:[#allocation3 + $0x28] sm:$0xff]
        %v3450 = vld [vmem:[#allocation3 + $0x30] sm:$0xff]
        %v3451 = vld [vmem:[#allocation3 + $0x38] sm:$0xff]
        %v3452 = vld [vmem:[#allocation3 + $0x40] sm:$0xff]
        %v3453 = vld [vmem:[#allocation3 + $0x48] sm:$0xff]
        %v3454 = vld [vmem:[#allocation3 + $0x50] sm:$0xff]
        %v3455 = vld [vmem:[#allocation3 + $0x58] sm:$0xff]
        %v3456 = vld [vmem:[#allocation3 + $0x60] sm:$0xff]
        %v3457 = vld [vmem:[#allocation3 + $0x68] sm:$0xff]
        %v3458 = vld [vmem:[#allocation3 + $0x70] sm:$0xff]
        %v3459 = vld [vmem:[#allocation3 + $0x78] sm:$0xff]
        %v3460 = vld [vmem:[#allocation3 + $0x80] sm:$0xff]
        %v3461 = vld [vmem:[#allocation3 + $0x88] sm:$0xff]
        %v3462 = vld [vmem:[#allocation3 + $0x90] sm:$0xff]
        %v3463 = vld [vmem:[#allocation3 + $0x98] sm:$0xff]
        %v3464 = vld [vmem:[#allocation3 + $0xa0] sm:$0xff]
        %v3465 = vld [vmem:[#allocation3 + $0xa8] sm:$0xff]
        %v3466 = vld [vmem:[#allocation3 + $0xb0] sm:$0xff]
        %v3467 = vld [vmem:[#allocation3 + $0xb8] sm:$0xff]
        %v3468 = vld [vmem:[#allocation3 + $0xc0] sm:$0xff]
        %v3469 = vld [vmem:[#allocation3 + $0xc8] sm:$0xff]
        %v3470 = vld [vmem:[#allocation3 + $0xd0] sm:$0xff]
        %v3471 = vld [vmem:[#allocation3 + $0xd8] sm:$0xff]
        %v3472 = vld [vmem:[#allocation3 + $0xe0] sm:$0xff]
        %v3473 = vld [vmem:[#allocation3 + $0xe8] sm:$0xff]
        %v3474 = vld [vmem:[#allocation3 + $0xf0] sm:$0xff]
        %v3475 = vld [vmem:[#allocation3 + $0xf8] sm:$0xff]
        %s3476 = scalar_lea.vmem [#allocation7], 512
        %v3477 = vld [vmem:[%s3476] sm:$0xf]
        %v3478 = vld [vmem:[%s3476 + $0x4] sm:$0xf]
        %v3479 = vld [vmem:[%s3476 + $0x8] sm:$0xf]
        %v3480 = vld [vmem:[%s3476 + $0xc] sm:$0xf]
        %v3481 = vld [vmem:[%s3476 + $0x10] sm:$0xf]
        %v3482 = vld [vmem:[%s3476 + $0x14] sm:$0xf]
        %v3483 = vld [vmem:[%s3476 + $0x18] sm:$0xf]
        %v3484 = vld [vmem:[%s3476 + $0x1c] sm:$0xf]
        %v3485 = vld [vmem:[%s3476 + $0x20] sm:$0xf]
        %v3486 = vld [vmem:[%s3476 + $0x24] sm:$0xf]
        %v3487 = vld [vmem:[%s3476 + $0x28] sm:$0xf]
        %v3488 = vld [vmem:[%s3476 + $0x2c] sm:$0xf]
        %v3489 = vld [vmem:[%s3476 + $0x30] sm:$0xf]
        %v3490 = vld [vmem:[%s3476 + $0x34] sm:$0xf]
        %v3491 = vld [vmem:[%s3476 + $0x38] sm:$0xf]
        %v3492 = vld [vmem:[%s3476 + $0x3c] sm:$0xf]
        %v3509 = vunpack.c.l.b16 %v3477
        %v3510 = vunpack.c.l.b16 %v3478
        %v3511 = vunpack.c.l.b16 %v3479
        %v3512 = vunpack.c.l.b16 %v3480
        %v3513 = vunpack.c.l.b16 %v3481
        %v3514 = vunpack.c.l.b16 %v3482
        %v3515 = vunpack.c.l.b16 %v3483
        %v3516 = vunpack.c.l.b16 %v3484
        %v3517 = vunpack.c.l.b16 %v3485
        %v3518 = vunpack.c.l.b16 %v3486
        %v3519 = vunpack.c.l.b16 %v3487
        %v3520 = vunpack.c.l.b16 %v3488
        %v3521 = vunpack.c.l.b16 %v3489
        %v3522 = vunpack.c.l.b16 %v3490
        %v3523 = vunpack.c.l.b16 %v3491
        %v3524 = vunpack.c.l.b16 %v3492
        %v3525 = vpack.c.b16 %v3510, %v3509
        %v3526 = vpack.c.b16 %v3512, %v3511
        %v3527 = vpack.c.b16 %v3514, %v3513
        %v3528 = vpack.c.b16 %v3516, %v3515
        %v3529 = vpack.c.b16 %v3518, %v3517
        %v3530 = vpack.c.b16 %v3520, %v3519
        %v3531 = vpack.c.b16 %v3522, %v3521
        %v3532 = vpack.c.b16 %v3524, %v3523
        %3541 = vmatprep.subr.bf16.mxu0 0
        %3542 = vmatpush1.bf16.msra.mxu0 %v3525
        %3543 = vmatprep.subr.bf16.mxu0 0
        %3544 = vmatpush1.bf16.msra.mxu0 %v3526
        %3545 = vmatprep.subr.bf16.mxu0 0
        %3546 = vmatpush1.bf16.msra.mxu0 %v3527
        %3547 = vmatprep.subr.bf16.mxu0 0
        %3548 = vmatpush1.bf16.msra.mxu0 %v3528
        %3549 = vmatprep.subr.bf16.mxu0 0
        %3550 = vmatpush1.bf16.msra.mxu0 %v3529
        %3551 = vmatprep.subr.bf16.mxu0 0
        %3552 = vmatpush1.bf16.msra.mxu0 %v3530
        %3553 = vmatprep.subr.bf16.mxu0 0
        %3554 = vmatpush1.bf16.msra.mxu0 %v3531
        %3555 = vmatprep.subr.bf16.mxu0 0
        %3556 = vmatpush1.bf16.msra.mxu0 %v3532
        %3557 = vmatprep.subr.bf16.mxu0 0
        %3558 = vmatpush1.bf16.msra.mxu0 0
        %3559 = vmatprep.subr.bf16.mxu0 0
        %3560 = vmatpush1.bf16.msra.mxu0 0
        %3561 = vmatprep.subr.bf16.mxu0 0
        %3562 = vmatpush1.bf16.msra.mxu0 0
        %3563 = vmatprep.subr.bf16.mxu0 0
        %3564 = vmatpush1.bf16.msra.mxu0 0
        %3565 = vmatprep.subr.bf16.mxu0 0
        %3566 = vmatpush1.bf16.msra.mxu0 0
        %3567 = vmatprep.subr.bf16.mxu0 0
        %3568 = vmatpush1.bf16.msra.mxu0 0
        %3569 = vmatprep.subr.bf16.mxu0 0
        %3570 = vmatpush1.bf16.msra.mxu0 0
        %3571 = vmatprep.subr.bf16.mxu0 0
        %3572 = vmatpush1.bf16.msra.mxu0 0
        %3573 = vmatprep.mubr.bf16.mxu0 0
        %3574 = vmatmul.mubr.bf16.gmra.mrb[0].mxu0 %v3428
        %v3575 = vpop.f32.mrb[0].mxu0
        %v3576 = vadd.f32 0.0, %v3575
        %v3577 = vpop.f32.mrb[0].mxu0
        %v3578 = vpop.f32.mrb[0].mxu0
        %v3579 = vadd.f32 0.0, %v3578
        %v3580 = vpop.f32.mrb[0].mxu0
        %3581 = vmatprep.mubr.bf16.mxu0 0
        %3582 = vmatmul.mubr.bf16.gmra.mrb[0].mxu0 %v3429
        %v3583 = vpop.f32.mrb[0].mxu0
        %v3584 = vadd.f32 0.0, %v3583
        %v3585 = vpop.f32.mrb[0].mxu0
        %v3586 = vpop.f32.mrb[0].mxu0
        %v3587 = vadd.f32 0.0, %v3586
        %v3588 = vpop.f32.mrb[0].mxu0
        %3589 = vmatprep.mubr.bf16.mxu0 0
        %3590 = vmatmul.mubr.bf16.gmra.mrb[0].mxu0 %v3430
        %v3591 = vpop.f32.mrb[0].mxu0
        %v3592 = vadd.f32 0.0, %v3591
        %v3593 = vpop.f32.mrb[0].mxu0
        %v3594 = vpop.f32.mrb[0].mxu0
        %v3595 = vadd.f32 0.0, %v3594
        %v3596 = vpop.f32.mrb[0].mxu0
        %3597 = vmatprep.mubr.bf16.mxu0 0
        %3598 = vmatmul.mubr.bf16.gmra.mrb[0].mxu0 %v3431
        %v3599 = vpop.f32.mrb[0].mxu0
        %v3600 = vadd.f32 0.0, %v3599
        %v3601 = vpop.f32.mrb[0].mxu0
        %v3602 = vpop.f32.mrb[0].mxu0
        %v3603 = vadd.f32 0.0, %v3602
        %v3604 = vpop.f32.mrb[0].mxu0
        %3605 = vmatprep.mubr.bf16.mxu0 0
        %3606 = vmatmul.mubr.bf16.gmra.mrb[0].mxu0 %v3432
        %v3607 = vpop.f32.mrb[0].mxu0
        %v3608 = vadd.f32 0.0, %v3607
        %v3609 = vpop.f32.mrb[0].mxu0
        %v3610 = vpop.f32.mrb[0].mxu0
        %v3611 = vadd.f32 0.0, %v3610
        %v3612 = vpop.f32.mrb[0].mxu0
        %3613 = vmatprep.mubr.bf16.mxu0 0
        %3614 = vmatmul.mubr.bf16.gmra.mrb[0].mxu0 %v3433
        %v3615 = vpop.f32.mrb[0].mxu0
        %v3616 = vadd.f32 0.0, %v3615
        %v3617 = vpop.f32.mrb[0].mxu0
        %v3618 = vpop.f32.mrb[0].mxu0
        %v3619 = vadd.f32 0.0, %v3618
        %v3620 = vpop.f32.mrb[0].mxu0
        %3621 = vmatprep.mubr.bf16.mxu0 0
        %3622 = vmatmul.mubr.bf16.gmra.mrb[0].mxu0 %v3434
        %v3623 = vpop.f32.mrb[0].mxu0
        %v3624 = vadd.f32 0.0, %v3623
        %v3625 = vpop.f32.mrb[0].mxu0
        %v3626 = vpop.f32.mrb[0].mxu0
        %v3627 = vadd.f32 0.0, %v3626
        %v3628 = vpop.f32.mrb[0].mxu0
        %3629 = vmatprep.mubr.bf16.mxu0 0
        %3630 = vmatmul.mubr.bf16.gmra.mrb[0].mxu0 %v3435
        %v3631 = vpop.f32.mrb[0].mxu0
        %v3632 = vadd.f32 0.0, %v3631
        %v3633 = vpop.f32.mrb[0].mxu0
        %v3634 = vpop.f32.mrb[0].mxu0
        %v3635 = vadd.f32 0.0, %v3634
        %v3636 = vpop.f32.mrb[0].mxu0
        %3637 = vmatprep.mubr.bf16.mxu0 0
        %3638 = vmatmul.mubr.bf16.gmra.mrb[0].mxu0 %v3436
        %v3639 = vpop.f32.mrb[0].mxu0
        %v3640 = vadd.f32 0.0, %v3639
        %v3641 = vpop.f32.mrb[0].mxu0
        %v3642 = vpop.f32.mrb[0].mxu0
        %v3643 = vadd.f32 0.0, %v3642
        %v3644 = vpop.f32.mrb[0].mxu0
        %3645 = vmatprep.mubr.bf16.mxu0 0
        %3646 = vmatmul.mubr.bf16.gmra.mrb[0].mxu0 %v3437
        %v3647 = vpop.f32.mrb[0].mxu0
        %v3648 = vadd.f32 0.0, %v3647
        %v3649 = vpop.f32.mrb[0].mxu0
        %v3650 = vpop.f32.mrb[0].mxu0
        %v3651 = vadd.f32 0.0, %v3650
        %v3652 = vpop.f32.mrb[0].mxu0
        %3653 = vmatprep.mubr.bf16.mxu0 0
        %3654 = vmatmul.mubr.bf16.gmra.mrb[0].mxu0 %v3438
        %v3655 = vpop.f32.mrb[0].mxu0
        %v3656 = vadd.f32 0.0, %v3655
        %v3657 = vpop.f32.mrb[0].mxu0
        %v3658 = vpop.f32.mrb[0].mxu0
        %v3659 = vadd.f32 0.0, %v3658
        %v3660 = vpop.f32.mrb[0].mxu0
        %3661 = vmatprep.mubr.bf16.mxu0 0
        %3662 = vmatmul.mubr.bf16.gmra.mrb[0].mxu0 %v3439
        %v3663 = vpop.f32.mrb[0].mxu0
        %v3664 = vadd.f32 0.0, %v3663
        %v3665 = vpop.f32.mrb[0].mxu0
        %v3666 = vpop.f32.mrb[0].mxu0
        %v3667 = vadd.f32 0.0, %v3666
        %v3668 = vpop.f32.mrb[0].mxu0
        %3669 = vmatprep.mubr.bf16.mxu0 0
        %3670 = vmatmul.mubr.bf16.gmra.mrb[0].mxu0 %v3440
        %v3671 = vpop.f32.mrb[0].mxu0
        %v3672 = vadd.f32 0.0, %v3671
        %v3673 = vpop.f32.mrb[0].mxu0
        %v3674 = vpop.f32.mrb[0].mxu0
        %v3675 = vadd.f32 0.0, %v3674
        %v3676 = vpop.f32.mrb[0].mxu0
        %3677 = vmatprep.mubr.bf16.mxu0 0
        %3678 = vmatmul.mubr.bf16.gmra.mrb[0].mxu0 %v3441
        %v3679 = vpop.f32.mrb[0].mxu0
        %v3680 = vadd.f32 0.0, %v3679
        %v3681 = vpop.f32.mrb[0].mxu0
        %v3682 = vpop.f32.mrb[0].mxu0
        %v3683 = vadd.f32 0.0, %v3682
        %v3684 = vpop.f32.mrb[0].mxu0
        %3685 = vmatprep.mubr.bf16.mxu0 0
        %3686 = vmatmul.mubr.bf16.gmra.mrb[0].mxu0 %v3442
        %v3687 = vpop.f32.mrb[0].mxu0
        %v3688 = vadd.f32 0.0, %v3687
        %v3689 = vpop.f32.mrb[0].mxu0
        %v3690 = vpop.f32.mrb[0].mxu0
        %v3691 = vadd.f32 0.0, %v3690
        %v3692 = vpop.f32.mrb[0].mxu0
        %3693 = vmatprep.mubr.bf16.mxu0 0
        %3694 = vmatmul.mubr.bf16.gmra.mrb[0].mxu0 %v3443
        %v3695 = vpop.f32.mrb[0].mxu0
        %v3696 = vadd.f32 0.0, %v3695
        %v3697 = vpop.f32.mrb[0].mxu0
        %v3698 = vpop.f32.mrb[0].mxu0
        %v3699 = vadd.f32 0.0, %v3698
        %v3700 = vpop.f32.mrb[0].mxu0
        %3701 = vdwg.mxu0
        %v3702 = vadd.f32 %v3444, %v3576
        %v3703 = vadd.f32 %v3445, %v3579
        %v3704 = vadd.f32 %v3446, %v3584
        %v3705 = vadd.f32 %v3447, %v3587
        %v3706 = vadd.f32 %v3448, %v3592
        %v3707 = vadd.f32 %v3449, %v3595
        %v3708 = vadd.f32 %v3450, %v3600
        %v3709 = vadd.f32 %v3451, %v3603
        %v3710 = vadd.f32 %v3452, %v3608
        %v3711 = vadd.f32 %v3453, %v3611
        %v3712 = vadd.f32 %v3454, %v3616
        %v3713 = vadd.f32 %v3455, %v3619
        %v3714 = vadd.f32 %v3456, %v3624
        %v3715 = vadd.f32 %v3457, %v3627
        %v3716 = vadd.f32 %v3458, %v3632
        %v3717 = vadd.f32 %v3459, %v3635
        %v3718 = vadd.f32 %v3460, %v3640
        %v3719 = vadd.f32 %v3461, %v3643
        %v3720 = vadd.f32 %v3462, %v3648
        %v3721 = vadd.f32 %v3463, %v3651
        %v3722 = vadd.f32 %v3464, %v3656
        %v3723 = vadd.f32 %v3465, %v3659
        %v3724 = vadd.f32 %v3466, %v3664
        %v3725 = vadd.f32 %v3467, %v3667
        %v3726 = vadd.f32 %v3468, %v3672
        %v3727 = vadd.f32 %v3469, %v3675
        %v3728 = vadd.f32 %v3470, %v3680
        %v3729 = vadd.f32 %v3471, %v3683
        %v3730 = vadd.f32 %v3472, %v3688
        %v3731 = vadd.f32 %v3473, %v3691
        %v3732 = vadd.f32 %v3474, %v3696
        %v3733 = vadd.f32 %v3475, %v3699
        %3734 = vst [vmem:[#allocation3] sm:$0xff] %v3702
        %3735 = vst [vmem:[#allocation3 + $0x8] sm:$0xff] %v3703
        %3736 = vst [vmem:[#allocation3 + $0x10] sm:$0xff] %v3704
        %3737 = vst [vmem:[#allocation3 + $0x18] sm:$0xff] %v3705
        %3738 = vst [vmem:[#allocation3 + $0x20] sm:$0xff] %v3706
        %3739 = vst [vmem:[#allocation3 + $0x28] sm:$0xff] %v3707
        %3740 = vst [vmem:[#allocation3 + $0x30] sm:$0xff] %v3708
        %3741 = vst [vmem:[#allocation3 + $0x38] sm:$0xff] %v3709
        %3742 = vst [vmem:[#allocation3 + $0x40] sm:$0xff] %v3710
        %3743 = vst [vmem:[#allocation3 + $0x48] sm:$0xff] %v3711
        %3744 = vst [vmem:[#allocation3 + $0x50] sm:$0xff] %v3712
        %3745 = vst [vmem:[#allocation3 + $0x58] sm:$0xff] %v3713
        %3746 = vst [vmem:[#allocation3 + $0x60] sm:$0xff] %v3714
        %3747 = vst [vmem:[#allocation3 + $0x68] sm:$0xff] %v3715
        %3748 = vst [vmem:[#allocation3 + $0x70] sm:$0xff] %v3716
        %3749 = vst [vmem:[#allocation3 + $0x78] sm:$0xff] %v3717
        %3750 = vst [vmem:[#allocation3 + $0x80] sm:$0xff] %v3718
        %3751 = vst [vmem:[#allocation3 + $0x88] sm:$0xff] %v3719
        %3752 = vst [vmem:[#allocation3 + $0x90] sm:$0xff] %v3720
        %3753 = vst [vmem:[#allocation3 + $0x98] sm:$0xff] %v3721
        %3754 = vst [vmem:[#allocation3 + $0xa0] sm:$0xff] %v3722
        %3755 = vst [vmem:[#allocation3 + $0xa8] sm:$0xff] %v3723
        %3756 = vst [vmem:[#allocation3 + $0xb0] sm:$0xff] %v3724
        %3757 = vst [vmem:[#allocation3 + $0xb8] sm:$0xff] %v3725
        %3758 = vst [vmem:[#allocation3 + $0xc0] sm:$0xff] %v3726
        %3759 = vst [vmem:[#allocation3 + $0xc8] sm:$0xff] %v3727
        %3760 = vst [vmem:[#allocation3 + $0xd0] sm:$0xff] %v3728
        %3761 = vst [vmem:[#allocation3 + $0xd8] sm:$0xff] %v3729
        %3762 = vst [vmem:[#allocation3 + $0xe0] sm:$0xff] %v3730
        %3763 = vst [vmem:[#allocation3 + $0xe8] sm:$0xff] %v3731
        %3764 = vst [vmem:[#allocation3 + $0xf0] sm:$0xff] %v3732
        %3765 = vst [vmem:[#allocation3 + $0xf8] sm:$0xff] %v3733
        %v3766 = vld [vmem:[#allocation3] sm:$0xff]
        %v3767 = vld [vmem:[#allocation3 + $0x8] sm:$0xff]
        %v3768 = vld [vmem:[#allocation3 + $0x10] sm:$0xff]
        %v3769 = vld [vmem:[#allocation3 + $0x18] sm:$0xff]
        %v3770 = vld [vmem:[#allocation3 + $0x20] sm:$0xff]
        %v3771 = vld [vmem:[#allocation3 + $0x28] sm:$0xff]
        %v3772 = vld [vmem:[#allocation3 + $0x30] sm:$0xff]
        %v3773 = vld [vmem:[#allocation3 + $0x38] sm:$0xff]
        %v3774 = vld [vmem:[#allocation3 + $0x40] sm:$0xff]
        %v3775 = vld [vmem:[#allocation3 + $0x48] sm:$0xff]
        %v3776 = vld [vmem:[#allocation3 + $0x50] sm:$0xff]
        %v3777 = vld [vmem:[#allocation3 + $0x58] sm:$0xff]
        %v3778 = vld [vmem:[#allocation3 + $0x60] sm:$0xff]
        %v3779 = vld [vmem:[#allocation3 + $0x68] sm:$0xff]
        %v3780 = vld [vmem:[#allocation3 + $0x70] sm:$0xff]
        %v3781 = vld [vmem:[#allocation3 + $0x78] sm:$0xff]
        %v3782 = vld [vmem:[#allocation3 + $0x80] sm:$0xff]
        %v3783 = vld [vmem:[#allocation3 + $0x88] sm:$0xff]
        %v3784 = vld [vmem:[#allocation3 + $0x90] sm:$0xff]
        %v3785 = vld [vmem:[#allocation3 + $0x98] sm:$0xff]
        %v3786 = vld [vmem:[#allocation3 + $0xa0] sm:$0xff]
        %v3787 = vld [vmem:[#allocation3 + $0xa8] sm:$0xff]
        %v3788 = vld [vmem:[#allocation3 + $0xb0] sm:$0xff]
        %v3789 = vld [vmem:[#allocation3 + $0xb8] sm:$0xff]
        %v3790 = vld [vmem:[#allocation3 + $0xc0] sm:$0xff]
        %v3791 = vld [vmem:[#allocation3 + $0xc8] sm:$0xff]
        %v3792 = vld [vmem:[#allocation3 + $0xd0] sm:$0xff]
        %v3793 = vld [vmem:[#allocation3 + $0xd8] sm:$0xff]
        %v3794 = vld [vmem:[#allocation3 + $0xe0] sm:$0xff]
        %v3795 = vld [vmem:[#allocation3 + $0xe8] sm:$0xff]
        %v3796 = vld [vmem:[#allocation3 + $0xf0] sm:$0xff]
        %v3797 = vld [vmem:[#allocation3 + $0xf8] sm:$0xff]
        %v3798 = vld [vmem:[#allocation9] sm:$0x1]
        %v3800 = vlaneseq
        %v3801 = vshrl.u32 %v3800, 7
        %v3802 = vsub.s32 0, %v3801
        %v3803 = vrot.slane %v3798, %v3802
        %v3805 = vadd.f32 %v3766, %v3803
        %v3806 = vadd.f32 %v3767, %v3803
        %v3807 = vadd.f32 %v3768, %v3803
        %v3808 = vadd.f32 %v3769, %v3803
        %v3809 = vadd.f32 %v3770, %v3803
        %v3810 = vadd.f32 %v3771, %v3803
        %v3811 = vadd.f32 %v3772, %v3803
        %v3812 = vadd.f32 %v3773, %v3803
        %v3813 = vadd.f32 %v3774, %v3803
        %v3814 = vadd.f32 %v3775, %v3803
        %v3815 = vadd.f32 %v3776, %v3803
        %v3816 = vadd.f32 %v3777, %v3803
        %v3817 = vadd.f32 %v3778, %v3803
        %v3818 = vadd.f32 %v3779, %v3803
        %v3819 = vadd.f32 %v3780, %v3803
        %v3820 = vadd.f32 %v3781, %v3803
        %v3821 = vadd.f32 %v3782, %v3803
        %v3822 = vadd.f32 %v3783, %v3803
        %v3823 = vadd.f32 %v3784, %v3803
        %v3824 = vadd.f32 %v3785, %v3803
        %v3825 = vadd.f32 %v3786, %v3803
        %v3826 = vadd.f32 %v3787, %v3803
        %v3827 = vadd.f32 %v3788, %v3803
        %v3828 = vadd.f32 %v3789, %v3803
        %v3829 = vadd.f32 %v3790, %v3803
        %v3830 = vadd.f32 %v3791, %v3803
        %v3831 = vadd.f32 %v3792, %v3803
        %v3832 = vadd.f32 %v3793, %v3803
        %v3833 = vadd.f32 %v3794, %v3803
        %v3834 = vadd.f32 %v3795, %v3803
        %v3835 = vadd.f32 %v3796, %v3803
        %v3836 = vadd.f32 %v3797, %v3803
        %v3837 = vadd.f32 %v3805, %v3806
        %v3838 = vadd.f32 %v3837, %v3807
        %v3839 = vadd.f32 %v3838, %v3808
        %v3840 = vadd.f32 %v3839, %v3809
        %v3841 = vadd.f32 %v3840, %v3810
        %v3842 = vadd.f32 %v3841, %v3811
        %v3843 = vadd.f32 %v3842, %v3812
        %v3844 = vadd.f32 %v3843, %v3813
        %v3845 = vadd.f32 %v3844, %v3814
        %v3846 = vadd.f32 %v3845, %v3815
        %v3847 = vadd.f32 %v3846, %v3816
        %v3848 = vadd.f32 %v3847, %v3817
        %v3849 = vadd.f32 %v3848, %v3818
        %v3850 = vadd.f32 %v3849, %v3819
        %v3851 = vadd.f32 %v3850, %v3820
        %v3852 = vadd.f32 %v3851, %v3821
        %v3853 = vadd.f32 %v3852, %v3822
        %v3854 = vadd.f32 %v3853, %v3823
        %v3855 = vadd.f32 %v3854, %v3824
        %v3856 = vadd.f32 %v3855, %v3825
        %v3857 = vadd.f32 %v3856, %v3826
        %v3858 = vadd.f32 %v3857, %v3827
        %v3859 = vadd.f32 %v3858, %v3828
        %v3860 = vadd.f32 %v3859, %v3829
        %v3861 = vadd.f32 %v3860, %v3830
        %v3862 = vadd.f32 %v3861, %v3831
        %v3863 = vadd.f32 %v3862, %v3832
        %v3864 = vadd.f32 %v3863, %v3833
        %v3865 = vadd.f32 %v3864, %v3834
        %v3866 = vadd.f32 %v3865, %v3835
        %v3867 = vadd.f32 %v3866, %v3836
        %v3868 = vrot.slane %v3867, 4
        %v3869 = vadd.f32 %v3867, %v3868
        %v3870 = vrot.slane %v3869, 2
        %v3871 = vadd.f32 %v3869, %v3870
        %v3872 = vrot.slane %v3871, 1
        %v3873 = vadd.f32 %v3871, %v3872
        %v3874 = vrcp.pop 256.0
        %v3875 = vmul.f32 %v3873, %v3874
        %v3876 = vsub.f32 %v3805, %v3875
        %v3877 = vsub.f32 %v3806, %v3875
        %v3878 = vsub.f32 %v3807, %v3875
        %v3879 = vsub.f32 %v3808, %v3875
        %v3880 = vsub.f32 %v3809, %v3875
        %v3881 = vsub.f32 %v3810, %v3875
        %v3882 = vsub.f32 %v3811, %v3875
        %v3883 = vsub.f32 %v3812, %v3875
        %v3884 = vsub.f32 %v3813, %v3875
        %v3885 = vsub.f32 %v3814, %v3875
        %v3886 = vsub.f32 %v3815, %v3875
        %v3887 = vsub.f32 %v3816, %v3875
        %v3888 = vsub.f32 %v3817, %v3875
        %v3889 = vsub.f32 %v3818, %v3875
        %v3890 = vsub.f32 %v3819, %v3875
        %v3891 = vsub.f32 %v3820, %v3875
        %v3892 = vsub.f32 %v3821, %v3875
        %v3893 = vsub.f32 %v3822, %v3875
        %v3894 = vsub.f32 %v3823, %v3875
        %v3895 = vsub.f32 %v3824, %v3875
        %v3896 = vsub.f32 %v3825, %v3875
        %v3897 = vsub.f32 %v3826, %v3875
        %v3898 = vsub.f32 %v3827, %v3875
        %v3899 = vsub.f32 %v3828, %v3875
        %v3900 = vsub.f32 %v3829, %v3875
        %v3901 = vsub.f32 %v3830, %v3875
        %v3902 = vsub.f32 %v3831, %v3875
        %v3903 = vsub.f32 %v3832, %v3875
        %v3904 = vsub.f32 %v3833, %v3875
        %v3905 = vsub.f32 %v3834, %v3875
        %v3906 = vsub.f32 %v3835, %v3875
        %v3907 = vsub.f32 %v3836, %v3875
        %v3908 = vmul.f32 %v3876, %v3876
        %v3909 = vmul.f32 %v3877, %v3877
        %v3910 = vmul.f32 %v3878, %v3878
        %v3911 = vmul.f32 %v3879, %v3879
        %v3912 = vmul.f32 %v3880, %v3880
        %v3913 = vmul.f32 %v3881, %v3881
        %v3914 = vmul.f32 %v3882, %v3882
        %v3915 = vmul.f32 %v3883, %v3883
        %v3916 = vmul.f32 %v3884, %v3884
        %v3917 = vmul.f32 %v3885, %v3885
        %v3918 = vmul.f32 %v3886, %v3886
        %v3919 = vmul.f32 %v3887, %v3887
        %v3920 = vmul.f32 %v3888, %v3888
        %v3921 = vmul.f32 %v3889, %v3889
        %v3922 = vmul.f32 %v3890, %v3890
        %v3923 = vmul.f32 %v3891, %v3891
        %v3924 = vmul.f32 %v3892, %v3892
        %v3925 = vmul.f32 %v3893, %v3893
        %v3926 = vmul.f32 %v3894, %v3894
        %v3927 = vmul.f32 %v3895, %v3895
        %v3928 = vmul.f32 %v3896, %v3896
        %v3929 = vmul.f32 %v3897, %v3897
        %v3930 = vmul.f32 %v3898, %v3898
        %v3931 = vmul.f32 %v3899, %v3899
        %v3932 = vmul.f32 %v3900, %v3900
        %v3933 = vmul.f32 %v3901, %v3901
        %v3934 = vmul.f32 %v3902, %v3902
        %v3935 = vmul.f32 %v3903, %v3903
        %v3936 = vmul.f32 %v3904, %v3904
        %v3937 = vmul.f32 %v3905, %v3905
        %v3938 = vmul.f32 %v3906, %v3906
        %v3939 = vmul.f32 %v3907, %v3907
        %v3940 = vadd.f32 %v3908, %v3909
        %v3941 = vadd.f32 %v3940, %v3910
        %v3942 = vadd.f32 %v3941, %v3911
        %v3943 = vadd.f32 %v3942, %v3912
        %v3944 = vadd.f32 %v3943, %v3913
        %v3945 = vadd.f32 %v3944, %v3914
        %v3946 = vadd.f32 %v3945, %v3915
        %v3947 = vadd.f32 %v3946, %v3916
        %v3948 = vadd.f32 %v3947, %v3917
        %v3949 = vadd.f32 %v3948, %v3918
        %v3950 = vadd.f32 %v3949, %v3919
        %v3951 = vadd.f32 %v3950, %v3920
        %v3952 = vadd.f32 %v3951, %v3921
        %v3953 = vadd.f32 %v3952, %v3922
        %v3954 = vadd.f32 %v3953, %v3923
        %v3955 = vadd.f32 %v3954, %v3924
        %v3956 = vadd.f32 %v3955, %v3925
        %v3957 = vadd.f32 %v3956, %v3926
        %v3958 = vadd.f32 %v3957, %v3927
        %v3959 = vadd.f32 %v3958, %v3928
        %v3960 = vadd.f32 %v3959, %v3929
        %v3961 = vadd.f32 %v3960, %v3930
        %v3962 = vadd.f32 %v3961, %v3931
        %v3963 = vadd.f32 %v3962, %v3932
        %v3964 = vadd.f32 %v3963, %v3933
        %v3965 = vadd.f32 %v3964, %v3934
        %v3966 = vadd.f32 %v3965, %v3935
        %v3967 = vadd.f32 %v3966, %v3936
        %v3968 = vadd.f32 %v3967, %v3937
        %v3969 = vadd.f32 %v3968, %v3938
        %v3970 = vadd.f32 %v3969, %v3939
        %v3971 = vrot.slane %v3970, 4
        %v3972 = vadd.f32 %v3970, %v3971
        %v3973 = vrot.slane %v3972, 2
        %v3974 = vadd.f32 %v3972, %v3973
        %v3975 = vrot.slane %v3974, 1
        %v3976 = vadd.f32 %v3974, %v3975
        %v3977 = vmul.f32 %v3976, %v3874
        %v3978 = vadd.f32 %v3977, 1e-05
        %v3979 = vrsqrt.pop %v3978
        %v3980 = vmul.f32 %v3876, %v3979
        %v3981 = vmul.f32 %v3877, %v3979
        %v3982 = vmul.f32 %v3878, %v3979
        %v3983 = vmul.f32 %v3879, %v3979
        %v3984 = vmul.f32 %v3880, %v3979
        %v3985 = vmul.f32 %v3881, %v3979
        %v3986 = vmul.f32 %v3882, %v3979
        %v3987 = vmul.f32 %v3883, %v3979
        %v3988 = vmul.f32 %v3884, %v3979
        %v3989 = vmul.f32 %v3885, %v3979
        %v3990 = vmul.f32 %v3886, %v3979
        %v3991 = vmul.f32 %v3887, %v3979
        %v3992 = vmul.f32 %v3888, %v3979
        %v3993 = vmul.f32 %v3889, %v3979
        %v3994 = vmul.f32 %v3890, %v3979
        %v3995 = vmul.f32 %v3891, %v3979
        %v3996 = vmul.f32 %v3892, %v3979
        %v3997 = vmul.f32 %v3893, %v3979
        %v3998 = vmul.f32 %v3894, %v3979
        %v3999 = vmul.f32 %v3895, %v3979
        %v4000 = vmul.f32 %v3896, %v3979
        %v4001 = vmul.f32 %v3897, %v3979
        %v4002 = vmul.f32 %v3898, %v3979
        %v4003 = vmul.f32 %v3899, %v3979
        %v4004 = vmul.f32 %v3900, %v3979
        %v4005 = vmul.f32 %v3901, %v3979
        %v4006 = vmul.f32 %v3902, %v3979
        %v4007 = vmul.f32 %v3903, %v3979
        %v4008 = vmul.f32 %v3904, %v3979
        %v4009 = vmul.f32 %v3905, %v3979
        %v4010 = vmul.f32 %v3906, %v3979
        %v4011 = vmul.f32 %v3907, %v3979
        %v4012 = vmax.f32 %v3980, 0.0
        %v4013 = vmax.f32 %v3981, 0.0
        %v4014 = vmax.f32 %v3982, 0.0
        %v4015 = vmax.f32 %v3983, 0.0
        %v4016 = vmax.f32 %v3984, 0.0
        %v4017 = vmax.f32 %v3985, 0.0
        %v4018 = vmax.f32 %v3986, 0.0
        %v4019 = vmax.f32 %v3987, 0.0
        %v4020 = vmax.f32 %v3988, 0.0
        %v4021 = vmax.f32 %v3989, 0.0
        %v4022 = vmax.f32 %v3990, 0.0
        %v4023 = vmax.f32 %v3991, 0.0
        %v4024 = vmax.f32 %v3992, 0.0
        %v4025 = vmax.f32 %v3993, 0.0
        %v4026 = vmax.f32 %v3994, 0.0
        %v4027 = vmax.f32 %v3995, 0.0
        %v4028 = vmax.f32 %v3996, 0.0
        %v4029 = vmax.f32 %v3997, 0.0
        %v4030 = vmax.f32 %v3998, 0.0
        %v4031 = vmax.f32 %v3999, 0.0
        %v4032 = vmax.f32 %v4000, 0.0
        %v4033 = vmax.f32 %v4001, 0.0
        %v4034 = vmax.f32 %v4002, 0.0
        %v4035 = vmax.f32 %v4003, 0.0
        %v4036 = vmax.f32 %v4004, 0.0
        %v4037 = vmax.f32 %v4005, 0.0
        %v4038 = vmax.f32 %v4006, 0.0
        %v4039 = vmax.f32 %v4007, 0.0
        %v4040 = vmax.f32 %v4008, 0.0
        %v4041 = vmax.f32 %v4009, 0.0
        %v4042 = vmax.f32 %v4010, 0.0
        %v4043 = vmax.f32 %v4011, 0.0
        %4044 = vst [vmem:[%s330 + $0x1] sm:$0xff] %v4012
        %4045 = vst [vmem:[%s330 + $0x9] sm:$0xff] %v4013
        %4046 = vst [vmem:[%s330 + $0x19] sm:$0xff] %v4014
        %4047 = vst [vmem:[%s330 + $0x21] sm:$0xff] %v4015
        %4048 = vst [vmem:[%s330 + $0x31] sm:$0xff] %v4016
        %4049 = vst [vmem:[%s330 + $0x39] sm:$0xff] %v4017
        %4050 = vst [vmem:[%s330 + $0x49] sm:$0xff] %v4018
        %4051 = vst [vmem:[%s330 + $0x51] sm:$0xff] %v4019
        %4052 = vst [vmem:[%s330 + $0x61] sm:$0xff] %v4020
        %4053 = vst [vmem:[%s330 + $0x69] sm:$0xff] %v4021
        %4054 = vst [vmem:[%s330 + $0x79] sm:$0xff] %v4022
        %4055 = vst [vmem:[%s330 + $0x81] sm:$0xff] %v4023
        %4056 = vst [vmem:[%s330 + $0x91] sm:$0xff] %v4024
        %4057 = vst [vmem:[%s330 + $0x99] sm:$0xff] %v4025
        %4058 = vst [vmem:[%s330 + $0xa9] sm:$0xff] %v4026
        %4059 = vst [vmem:[%s330 + $0xb1] sm:$0xff] %v4027
        %4060 = vst [vmem:[%s330 + $0xc1] sm:$0xff] %v4028
        %4061 = vst [vmem:[%s330 + $0xc9] sm:$0xff] %v4029
        %4062 = vst [vmem:[%s330 + $0xd9] sm:$0xff] %v4030
        %4063 = vst [vmem:[%s330 + $0xe1] sm:$0xff] %v4031
        %4064 = vst [vmem:[%s330 + $0xf1] sm:$0xff] %v4032
        %4065 = vst [vmem:[%s330 + $0xf9] sm:$0xff] %v4033
        %4066 = vst [vmem:[%s330 + $0x109] sm:$0xff] %v4034
        %4067 = vst [vmem:[%s330 + $0x111] sm:$0xff] %v4035
        %4068 = vst [vmem:[%s330 + $0x121] sm:$0xff] %v4036
        %4069 = vst [vmem:[%s330 + $0x129] sm:$0xff] %v4037
        %4070 = vst [vmem:[%s330 + $0x139] sm:$0xff] %v4038
        %4071 = vst [vmem:[%s330 + $0x141] sm:$0xff] %v4039
        %4072 = vst [vmem:[%s330 + $0x151] sm:$0xff] %v4040
        %4073 = vst [vmem:[%s330 + $0x159] sm:$0xff] %v4041
        %4074 = vst [vmem:[%s330 + $0x169] sm:$0xff] %v4042
        %4075 = vst [vmem:[%s330 + $0x171] sm:$0xff] %v4043
        %4076 = vst [vmem:[#allocation2 + $0x1] sm:$0xff] %v4014
        %4077 = vst [vmem:[#allocation2 + $0x9] sm:$0xff] %v4015
        %4078 = vst [vmem:[%s365 + $0x1] sm:$0xff] %v4040
        %4079 = vst [vmem:[%s365 + $0x9] sm:$0xff] %v4041
        %4080 = vst [vmem:[%s330 - $0x1] sm:$0x2] %v4012
        %4081 = vst [vmem:[%s330 + $0x17] sm:$0x2] %v4014
        %4082 = vst [vmem:[%s330 + $0x2f] sm:$0x2] %v4016
        %4083 = vst [vmem:[%s330 + $0x47] sm:$0x2] %v4018
        %4084 = vst [vmem:[%s330 + $0x5f] sm:$0x2] %v4020
        %4085 = vst [vmem:[%s330 + $0x77] sm:$0x2] %v4022
        %4086 = vst [vmem:[%s330 + $0x8f] sm:$0x2] %v4024
        %4087 = vst [vmem:[%s330 + $0xa7] sm:$0x2] %v4026
        %4088 = vst [vmem:[%s330 + $0xbf] sm:$0x2] %v4028
        %4089 = vst [vmem:[%s330 + $0xd7] sm:$0x2] %v4030
        %4090 = vst [vmem:[%s330 + $0xef] sm:$0x2] %v4032
        %4091 = vst [vmem:[%s330 + $0x107] sm:$0x2] %v4034
        %4092 = vst [vmem:[%s330 + $0x11f] sm:$0x2] %v4036
        %4093 = vst [vmem:[%s330 + $0x137] sm:$0x2] %v4038
        %4094 = vst [vmem:[%s330 + $0x14f] sm:$0x2] %v4040
        %4095 = vst [vmem:[%s330 + $0x167] sm:$0x2] %v4042
        %4096 = vst [vmem:[%s330 + $0xb] sm:$0x40] %v4013
        %4097 = vst [vmem:[%s330 + $0x23] sm:$0x40] %v4015
        %4098 = vst [vmem:[%s330 + $0x3b] sm:$0x40] %v4017
        %4099 = vst [vmem:[%s330 + $0x53] sm:$0x40] %v4019
        %4100 = vst [vmem:[%s330 + $0x6b] sm:$0x40] %v4021
        %4101 = vst [vmem:[%s330 + $0x83] sm:$0x40] %v4023
        %4102 = vst [vmem:[%s330 + $0x9b] sm:$0x40] %v4025
        %4103 = vst [vmem:[%s330 + $0xb3] sm:$0x40] %v4027
        %4104 = vst [vmem:[%s330 + $0xcb] sm:$0x40] %v4029
        %4105 = vst [vmem:[%s330 + $0xe3] sm:$0x40] %v4031
        %4106 = vst [vmem:[%s330 + $0xfb] sm:$0x40] %v4033
        %4107 = vst [vmem:[%s330 + $0x113] sm:$0x40] %v4035
        %4108 = vst [vmem:[%s330 + $0x12b] sm:$0x40] %v4037
        %4109 = vst [vmem:[%s330 + $0x143] sm:$0x40] %v4039
        %4110 = vst [vmem:[%s330 + $0x15b] sm:$0x40] %v4041
        %4111 = vst [vmem:[%s330 + $0x173] sm:$0x40] %v4043
        %4112 = vst [vmem:[#allocation2 - $0x1] sm:$0x2] %v4014
        %4113 = vst [vmem:[#allocation2 + $0xb] sm:$0x40] %v4015
        %4114 = vst [vmem:[%s365 - $0x1] sm:$0x2] %v4040
        %4115 = vst [vmem:[%s365 + $0xb] sm:$0x40] %v4041
        %4116 = vst [vmem:[#allocation3] sm:$0xff] 0.0
        %4117 = vst [vmem:[#allocation3 + $0x8] sm:$0xff] 0.0
        %4118 = vst [vmem:[#allocation3 + $0x10] sm:$0xff] 0.0
        %4119 = vst [vmem:[#allocation3 + $0x18] sm:$0xff] 0.0
        %4120 = vst [vmem:[#allocation3 + $0x20] sm:$0xff] 0.0
        %4121 = vst [vmem:[#allocation3 + $0x28] sm:$0xff] 0.0
        %4122 = vst [vmem:[#allocation3 + $0x30] sm:$0xff] 0.0
        %4123 = vst [vmem:[#allocation3 + $0x38] sm:$0xff] 0.0
        %4124 = vst [vmem:[#allocation3 + $0x40] sm:$0xff] 0.0
        %4125 = vst [vmem:[#allocation3 + $0x48] sm:$0xff] 0.0
        %4126 = vst [vmem:[#allocation3 + $0x50] sm:$0xff] 0.0
        %4127 = vst [vmem:[#allocation3 + $0x58] sm:$0xff] 0.0
        %4128 = vst [vmem:[#allocation3 + $0x60] sm:$0xff] 0.0
        %4129 = vst [vmem:[#allocation3 + $0x68] sm:$0xff] 0.0
        %4130 = vst [vmem:[#allocation3 + $0x70] sm:$0xff] 0.0
        %4131 = vst [vmem:[#allocation3 + $0x78] sm:$0xff] 0.0
        %4132 = vst [vmem:[#allocation3 + $0x80] sm:$0xff] 0.0
        %4133 = vst [vmem:[#allocation3 + $0x88] sm:$0xff] 0.0
        %4134 = vst [vmem:[#allocation3 + $0x90] sm:$0xff] 0.0
        %4135 = vst [vmem:[#allocation3 + $0x98] sm:$0xff] 0.0
        %4136 = vst [vmem:[#allocation3 + $0xa0] sm:$0xff] 0.0
        %4137 = vst [vmem:[#allocation3 + $0xa8] sm:$0xff] 0.0
        %4138 = vst [vmem:[#allocation3 + $0xb0] sm:$0xff] 0.0
        %4139 = vst [vmem:[#allocation3 + $0xb8] sm:$0xff] 0.0
        %4140 = vst [vmem:[#allocation3 + $0xc0] sm:$0xff] 0.0
        %4141 = vst [vmem:[#allocation3 + $0xc8] sm:$0xff] 0.0
        %4142 = vst [vmem:[#allocation3 + $0xd0] sm:$0xff] 0.0
        %4143 = vst [vmem:[#allocation3 + $0xd8] sm:$0xff] 0.0
        %4144 = vst [vmem:[#allocation3 + $0xe0] sm:$0xff] 0.0
        %4145 = vst [vmem:[#allocation3 + $0xe8] sm:$0xff] 0.0
        %4146 = vst [vmem:[#allocation3 + $0xf0] sm:$0xff] 0.0
        %4147 = vst [vmem:[#allocation3 + $0xf8] sm:$0xff] 0.0
        %v4148 = vld [vmem:[#allocation2] sm:$0xff]
        %v4149 = vld [vmem:[#allocation2 + $0x8] sm:$0xff]
        %v4150 = vld [vmem:[#allocation2 + $0x18] sm:$0xff]
        %v4151 = vld [vmem:[#allocation2 + $0x20] sm:$0xff]
        %v4152 = vld [vmem:[#allocation2 + $0x30] sm:$0xff]
        %v4153 = vld [vmem:[#allocation2 + $0x38] sm:$0xff]
        %v4154 = vld [vmem:[#allocation2 + $0x48] sm:$0xff]
        %v4155 = vld [vmem:[#allocation2 + $0x50] sm:$0xff]
        %v4156 = vld [vmem:[#allocation2 + $0x60] sm:$0xff]
        %v4157 = vld [vmem:[#allocation2 + $0x68] sm:$0xff]
        %v4158 = vld [vmem:[#allocation2 + $0x78] sm:$0xff]
        %v4159 = vld [vmem:[#allocation2 + $0x80] sm:$0xff]
        %v4160 = vld [vmem:[#allocation2 + $0x90] sm:$0xff]
        %v4161 = vld [vmem:[#allocation2 + $0x98] sm:$0xff]
        %v4162 = vld [vmem:[#allocation2 + $0xa8] sm:$0xff]
        %v4163 = vld [vmem:[#allocation2 + $0xb0] sm:$0xff]
        %v4164 = vld [vmem:[#allocation2 + $0xc0] sm:$0xff]
        %v4165 = vld [vmem:[#allocation2 + $0xc8] sm:$0xff]
        %v4166 = vld [vmem:[#allocation2 + $0xd8] sm:$0xff]
        %v4167 = vld [vmem:[#allocation2 + $0xe0] sm:$0xff]
        %v4168 = vld [vmem:[#allocation2 + $0xf0] sm:$0xff]
        %v4169 = vld [vmem:[#allocation2 + $0xf8] sm:$0xff]
        %v4170 = vld [vmem:[#allocation2 + $0x108] sm:$0xff]
        %v4171 = vld [vmem:[#allocation2 + $0x110] sm:$0xff]
        %v4172 = vld [vmem:[#allocation2 + $0x120] sm:$0xff]
        %v4173 = vld [vmem:[#allocation2 + $0x128] sm:$0xff]
        %v4174 = vld [vmem:[#allocation2 + $0x138] sm:$0xff]
        %v4175 = vld [vmem:[#allocation2 + $0x140] sm:$0xff]
        %v4176 = vld [vmem:[#allocation2 + $0x150] sm:$0xff]
        %v4177 = vld [vmem:[#allocation2 + $0x158] sm:$0xff]
        %v4178 = vld [vmem:[#allocation2 + $0x168] sm:$0xff]
        %v4179 = vld [vmem:[#allocation2 + $0x170] sm:$0xff]
        %v4180 = vpack.c.bf16 %v4149, %v4148
        %v4181 = vpack.c.bf16 %v4151, %v4150
        %v4182 = vpack.c.bf16 %v4153, %v4152
        %v4183 = vpack.c.bf16 %v4155, %v4154
        %v4184 = vpack.c.bf16 %v4157, %v4156
        %v4185 = vpack.c.bf16 %v4159, %v4158
        %v4186 = vpack.c.bf16 %v4161, %v4160
        %v4187 = vpack.c.bf16 %v4163, %v4162
        %v4188 = vpack.c.bf16 %v4165, %v4164
        %v4189 = vpack.c.bf16 %v4167, %v4166
        %v4190 = vpack.c.bf16 %v4169, %v4168
        %v4191 = vpack.c.bf16 %v4171, %v4170
        %v4192 = vpack.c.bf16 %v4173, %v4172
        %v4193 = vpack.c.bf16 %v4175, %v4174
        %v4194 = vpack.c.bf16 %v4177, %v4176
        %v4195 = vpack.c.bf16 %v4179, %v4178
        %v4196 = vld [vmem:[#allocation3] sm:$0xff]
        %v4197 = vld [vmem:[#allocation3 + $0x8] sm:$0xff]
        %v4198 = vld [vmem:[#allocation3 + $0x10] sm:$0xff]
        %v4199 = vld [vmem:[#allocation3 + $0x18] sm:$0xff]
        %v4200 = vld [vmem:[#allocation3 + $0x20] sm:$0xff]
        %v4201 = vld [vmem:[#allocation3 + $0x28] sm:$0xff]
        %v4202 = vld [vmem:[#allocation3 + $0x30] sm:$0xff]
        %v4203 = vld [vmem:[#allocation3 + $0x38] sm:$0xff]
        %v4204 = vld [vmem:[#allocation3 + $0x40] sm:$0xff]
        %v4205 = vld [vmem:[#allocation3 + $0x48] sm:$0xff]
        %v4206 = vld [vmem:[#allocation3 + $0x50] sm:$0xff]
        %v4207 = vld [vmem:[#allocation3 + $0x58] sm:$0xff]
        %v4208 = vld [vmem:[#allocation3 + $0x60] sm:$0xff]
        %v4209 = vld [vmem:[#allocation3 + $0x68] sm:$0xff]
        %v4210 = vld [vmem:[#allocation3 + $0x70] sm:$0xff]
        %v4211 = vld [vmem:[#allocation3 + $0x78] sm:$0xff]
        %v4212 = vld [vmem:[#allocation3 + $0x80] sm:$0xff]
        %v4213 = vld [vmem:[#allocation3 + $0x88] sm:$0xff]
        %v4214 = vld [vmem:[#allocation3 + $0x90] sm:$0xff]
        %v4215 = vld [vmem:[#allocation3 + $0x98] sm:$0xff]
        %v4216 = vld [vmem:[#allocation3 + $0xa0] sm:$0xff]
        %v4217 = vld [vmem:[#allocation3 + $0xa8] sm:$0xff]
        %v4218 = vld [vmem:[#allocation3 + $0xb0] sm:$0xff]
        %v4219 = vld [vmem:[#allocation3 + $0xb8] sm:$0xff]
        %v4220 = vld [vmem:[#allocation3 + $0xc0] sm:$0xff]
        %v4221 = vld [vmem:[#allocation3 + $0xc8] sm:$0xff]
        %v4222 = vld [vmem:[#allocation3 + $0xd0] sm:$0xff]
        %v4223 = vld [vmem:[#allocation3 + $0xd8] sm:$0xff]
        %v4224 = vld [vmem:[#allocation3 + $0xe0] sm:$0xff]
        %v4225 = vld [vmem:[#allocation3 + $0xe8] sm:$0xff]
        %v4226 = vld [vmem:[#allocation3 + $0xf0] sm:$0xff]
        %v4227 = vld [vmem:[#allocation3 + $0xf8] sm:$0xff]
        %v4228 = vld [vmem:[#allocation10] sm:$0xf]
        %v4229 = vld [vmem:[#allocation10 + $0x4] sm:$0xf]
        %v4230 = vld [vmem:[#allocation10 + $0x8] sm:$0xf]
        %v4231 = vld [vmem:[#allocation10 + $0xc] sm:$0xf]
        %v4232 = vld [vmem:[#allocation10 + $0x10] sm:$0xf]
        %v4233 = vld [vmem:[#allocation10 + $0x14] sm:$0xf]
        %v4234 = vld [vmem:[#allocation10 + $0x18] sm:$0xf]
        %v4235 = vld [vmem:[#allocation10 + $0x1c] sm:$0xf]
        %v4236 = vld [vmem:[#allocation10 + $0x20] sm:$0xf]
        %v4237 = vld [vmem:[#allocation10 + $0x24] sm:$0xf]
        %v4238 = vld [vmem:[#allocation10 + $0x28] sm:$0xf]
        %v4239 = vld [vmem:[#allocation10 + $0x2c] sm:$0xf]
        %v4240 = vld [vmem:[#allocation10 + $0x30] sm:$0xf]
        %v4241 = vld [vmem:[#allocation10 + $0x34] sm:$0xf]
        %v4242 = vld [vmem:[#allocation10 + $0x38] sm:$0xf]
        %v4243 = vld [vmem:[#allocation10 + $0x3c] sm:$0xf]
        %v4260 = vunpack.c.l.b16 %v4228
        %v4261 = vunpack.c.l.b16 %v4229
        %v4262 = vunpack.c.l.b16 %v4230
        %v4263 = vunpack.c.l.b16 %v4231
        %v4264 = vunpack.c.l.b16 %v4232
        %v4265 = vunpack.c.l.b16 %v4233
        %v4266 = vunpack.c.l.b16 %v4234
        %v4267 = vunpack.c.l.b16 %v4235
        %v4268 = vunpack.c.l.b16 %v4236
        %v4269 = vunpack.c.l.b16 %v4237
        %v4270 = vunpack.c.l.b16 %v4238
        %v4271 = vunpack.c.l.b16 %v4239
        %v4272 = vunpack.c.l.b16 %v4240
        %v4273 = vunpack.c.l.b16 %v4241
        %v4274 = vunpack.c.l.b16 %v4242
        %v4275 = vunpack.c.l.b16 %v4243
        %v4276 = vpack.c.b16 %v4261, %v4260
        %v4277 = vpack.c.b16 %v4263, %v4262
        %v4278 = vpack.c.b16 %v4265, %v4264
        %v4279 = vpack.c.b16 %v4267, %v4266
        %v4280 = vpack.c.b16 %v4269, %v4268
        %v4281 = vpack.c.b16 %v4271, %v4270
        %v4282 = vpack.c.b16 %v4273, %v4272
        %v4283 = vpack.c.b16 %v4275, %v4274
        %4292 = vmatprep.subr.bf16.mxu0 0
        %4293 = vmatpush1.bf16.msra.mxu0 %v4276
        %4294 = vmatprep.subr.bf16.mxu0 0
        %4295 = vmatpush1.bf16.msra.mxu0 %v4277
        %4296 = vmatprep.subr.bf16.mxu0 0
        %4297 = vmatpush1.bf16.msra.mxu0 %v4278
        %4298 = vmatprep.subr.bf16.mxu0 0
        %4299 = vmatpush1.bf16.msra.mxu0 %v4279
        %4300 = vmatprep.subr.bf16.mxu0 0
        %4301 = vmatpush1.bf16.msra.mxu0 %v4280
        %4302 = vmatprep.subr.bf16.mxu0 0
        %4303 = vmatpush1.bf16.msra.mxu0 %v4281
        %4304 = vmatprep.subr.bf16.mxu0 0
        %4305 = vmatpush1.bf16.msra.mxu0 %v4282
        %4306 = vmatprep.subr.bf16.mxu0 0
        %4307 = vmatpush1.bf16.msra.mxu0 %v4283
        %4308 = vmatprep.subr.bf16.mxu0 0
        %4309 = vmatpush1.bf16.msra.mxu0 0
        %4310 = vmatprep.subr.bf16.mxu0 0
        %4311 = vmatpush1.bf16.msra.mxu0 0
        %4312 = vmatprep.subr.bf16.mxu0 0
        %4313 = vmatpush1.bf16.msra.mxu0 0
        %4314 = vmatprep.subr.bf16.mxu0 0
        %4315 = vmatpush1.bf16.msra.mxu0 0
        %4316 = vmatprep.subr.bf16.mxu0 0
        %4317 = vmatpush1.bf16.msra.mxu0 0
        %4318 = vmatprep.subr.bf16.mxu0 0
        %4319 = vmatpush1.bf16.msra.mxu0 0
        %4320 = vmatprep.subr.bf16.mxu0 0
        %4321 = vmatpush1.bf16.msra.mxu0 0
        %4322 = vmatprep.subr.bf16.mxu0 0
        %4323 = vmatpush1.bf16.msra.mxu0 0
        %4324 = vmatprep.mubr.bf16.mxu0 0
        %4325 = vmatmul.mubr.bf16.gmra.mrb[0].mxu0 %v4180
        %v4326 = vpop.f32.mrb[0].mxu0
        %v4327 = vadd.f32 0.0, %v4326
        %v4328 = vpop.f32.mrb[0].mxu0
        %v4329 = vpop.f32.mrb[0].mxu0
        %v4330 = vadd.f32 0.0, %v4329
        %v4331 = vpop.f32.mrb[0].mxu0
        %4332 = vmatprep.mubr.bf16.mxu0 0
        %4333 = vmatmul.mubr.bf16.gmra.mrb[0].mxu0 %v4181
        %v4334 = vpop.f32.mrb[0].mxu0
        %v4335 = vadd.f32 0.0, %v4334
        %v4336 = vpop.f32.mrb[0].mxu0
        %v4337 = vpop.f32.mrb[0].mxu0
        %v4338 = vadd.f32 0.0, %v4337
        %v4339 = vpop.f32.mrb[0].mxu0
        %4340 = vmatprep.mubr.bf16.mxu0 0
        %4341 = vmatmul.mubr.bf16.gmra.mrb[0].mxu0 %v4182
        %v4342 = vpop.f32.mrb[0].mxu0
        %v4343 = vadd.f32 0.0, %v4342
        %v4344 = vpop.f32.mrb[0].mxu0
        %v4345 = vpop.f32.mrb[0].mxu0
        %v4346 = vadd.f32 0.0, %v4345
        %v4347 = vpop.f32.mrb[0].mxu0
        %4348 = vmatprep.mubr.bf16.mxu0 0
        %4349 = vmatmul.mubr.bf16.gmra.mrb[0].mxu0 %v4183
        %v4350 = vpop.f32.mrb[0].mxu0
        %v4351 = vadd.f32 0.0, %v4350
        %v4352 = vpop.f32.mrb[0].mxu0
        %v4353 = vpop.f32.mrb[0].mxu0
        %v4354 = vadd.f32 0.0, %v4353
        %v4355 = vpop.f32.mrb[0].mxu0
        %4356 = vmatprep.mubr.bf16.mxu0 0
        %4357 = vmatmul.mubr.bf16.gmra.mrb[0].mxu0 %v4184
        %v4358 = vpop.f32.mrb[0].mxu0
        %v4359 = vadd.f32 0.0, %v4358
        %v4360 = vpop.f32.mrb[0].mxu0
        %v4361 = vpop.f32.mrb[0].mxu0
        %v4362 = vadd.f32 0.0, %v4361
        %v4363 = vpop.f32.mrb[0].mxu0
        %4364 = vmatprep.mubr.bf16.mxu0 0
        %4365 = vmatmul.mubr.bf16.gmra.mrb[0].mxu0 %v4185
        %v4366 = vpop.f32.mrb[0].mxu0
        %v4367 = vadd.f32 0.0, %v4366
        %v4368 = vpop.f32.mrb[0].mxu0
        %v4369 = vpop.f32.mrb[0].mxu0
        %v4370 = vadd.f32 0.0, %v4369
        %v4371 = vpop.f32.mrb[0].mxu0
        %4372 = vmatprep.mubr.bf16.mxu0 0
        %4373 = vmatmul.mubr.bf16.gmra.mrb[0].mxu0 %v4186
        %v4374 = vpop.f32.mrb[0].mxu0
        %v4375 = vadd.f32 0.0, %v4374
        %v4376 = vpop.f32.mrb[0].mxu0
        %v4377 = vpop.f32.mrb[0].mxu0
        %v4378 = vadd.f32 0.0, %v4377
        %v4379 = vpop.f32.mrb[0].mxu0
        %4380 = vmatprep.mubr.bf16.mxu0 0
        %4381 = vmatmul.mubr.bf16.gmra.mrb[0].mxu0 %v4187
        %v4382 = vpop.f32.mrb[0].mxu0
        %v4383 = vadd.f32 0.0, %v4382
        %v4384 = vpop.f32.mrb[0].mxu0
        %v4385 = vpop.f32.mrb[0].mxu0
        %v4386 = vadd.f32 0.0, %v4385
        %v4387 = vpop.f32.mrb[0].mxu0
        %4388 = vmatprep.mubr.bf16.mxu0 0
        %4389 = vmatmul.mubr.bf16.gmra.mrb[0].mxu0 %v4188
        %v4390 = vpop.f32.mrb[0].mxu0
        %v4391 = vadd.f32 0.0, %v4390
        %v4392 = vpop.f32.mrb[0].mxu0
        %v4393 = vpop.f32.mrb[0].mxu0
        %v4394 = vadd.f32 0.0, %v4393
        %v4395 = vpop.f32.mrb[0].mxu0
        %4396 = vmatprep.mubr.bf16.mxu0 0
        %4397 = vmatmul.mubr.bf16.gmra.mrb[0].mxu0 %v4189
        %v4398 = vpop.f32.mrb[0].mxu0
        %v4399 = vadd.f32 0.0, %v4398
        %v4400 = vpop.f32.mrb[0].mxu0
        %v4401 = vpop.f32.mrb[0].mxu0
        %v4402 = vadd.f32 0.0, %v4401
        %v4403 = vpop.f32.mrb[0].mxu0
        %4404 = vmatprep.mubr.bf16.mxu0 0
        %4405 = vmatmul.mubr.bf16.gmra.mrb[0].mxu0 %v4190
        %v4406 = vpop.f32.mrb[0].mxu0
        %v4407 = vadd.f32 0.0, %v4406
        %v4408 = vpop.f32.mrb[0].mxu0
        %v4409 = vpop.f32.mrb[0].mxu0
        %v4410 = vadd.f32 0.0, %v4409
        %v4411 = vpop.f32.mrb[0].mxu0
        %4412 = vmatprep.mubr.bf16.mxu0 0
        %4413 = vmatmul.mubr.bf16.gmra.mrb[0].mxu0 %v4191
        %v4414 = vpop.f32.mrb[0].mxu0
        %v4415 = vadd.f32 0.0, %v4414
        %v4416 = vpop.f32.mrb[0].mxu0
        %v4417 = vpop.f32.mrb[0].mxu0
        %v4418 = vadd.f32 0.0, %v4417
        %v4419 = vpop.f32.mrb[0].mxu0
        %4420 = vmatprep.mubr.bf16.mxu0 0
        %4421 = vmatmul.mubr.bf16.gmra.mrb[0].mxu0 %v4192
        %v4422 = vpop.f32.mrb[0].mxu0
        %v4423 = vadd.f32 0.0, %v4422
        %v4424 = vpop.f32.mrb[0].mxu0
        %v4425 = vpop.f32.mrb[0].mxu0
        %v4426 = vadd.f32 0.0, %v4425
        %v4427 = vpop.f32.mrb[0].mxu0
        %4428 = vmatprep.mubr.bf16.mxu0 0
        %4429 = vmatmul.mubr.bf16.gmra.mrb[0].mxu0 %v4193
        %v4430 = vpop.f32.mrb[0].mxu0
        %v4431 = vadd.f32 0.0, %v4430
        %v4432 = vpop.f32.mrb[0].mxu0
        %v4433 = vpop.f32.mrb[0].mxu0
        %v4434 = vadd.f32 0.0, %v4433
        %v4435 = vpop.f32.mrb[0].mxu0
        %4436 = vmatprep.mubr.bf16.mxu0 0
        %4437 = vmatmul.mubr.bf16.gmra.mrb[0].mxu0 %v4194
        %v4438 = vpop.f32.mrb[0].mxu0
        %v4439 = vadd.f32 0.0, %v4438
        %v4440 = vpop.f32.mrb[0].mxu0
        %v4441 = vpop.f32.mrb[0].mxu0
        %v4442 = vadd.f32 0.0, %v4441
        %v4443 = vpop.f32.mrb[0].mxu0
        %4444 = vmatprep.mubr.bf16.mxu0 0
        %4445 = vmatmul.mubr.bf16.gmra.mrb[0].mxu0 %v4195
        %v4446 = vpop.f32.mrb[0].mxu0
        %v4447 = vadd.f32 0.0, %v4446
        %v4448 = vpop.f32.mrb[0].mxu0
        %v4449 = vpop.f32.mrb[0].mxu0
        %v4450 = vadd.f32 0.0, %v4449
        %v4451 = vpop.f32.mrb[0].mxu0
        %4452 = vdwg.mxu0
        %v4453 = vadd.f32 %v4196, %v4327
        %v4454 = vadd.f32 %v4197, %v4330
        %v4455 = vadd.f32 %v4198, %v4335
        %v4456 = vadd.f32 %v4199, %v4338
        %v4457 = vadd.f32 %v4200, %v4343
        %v4458 = vadd.f32 %v4201, %v4346
        %v4459 = vadd.f32 %v4202, %v4351
        %v4460 = vadd.f32 %v4203, %v4354
        %v4461 = vadd.f32 %v4204, %v4359
        %v4462 = vadd.f32 %v4205, %v4362
        %v4463 = vadd.f32 %v4206, %v4367
        %v4464 = vadd.f32 %v4207, %v4370
        %v4465 = vadd.f32 %v4208, %v4375
        %v4466 = vadd.f32 %v4209, %v4378
        %v4467 = vadd.f32 %v4210, %v4383
        %v4468 = vadd.f32 %v4211, %v4386
        %v4469 = vadd.f32 %v4212, %v4391
        %v4470 = vadd.f32 %v4213, %v4394
        %v4471 = vadd.f32 %v4214, %v4399
        %v4472 = vadd.f32 %v4215, %v4402
        %v4473 = vadd.f32 %v4216, %v4407
        %v4474 = vadd.f32 %v4217, %v4410
        %v4475 = vadd.f32 %v4218, %v4415
        %v4476 = vadd.f32 %v4219, %v4418
        %v4477 = vadd.f32 %v4220, %v4423
        %v4478 = vadd.f32 %v4221, %v4426
        %v4479 = vadd.f32 %v4222, %v4431
        %v4480 = vadd.f32 %v4223, %v4434
        %v4481 = vadd.f32 %v4224, %v4439
        %v4482 = vadd.f32 %v4225, %v4442
        %v4483 = vadd.f32 %v4226, %v4447
        %v4484 = vadd.f32 %v4227, %v4450
        %4485 = vst [vmem:[#allocation3] sm:$0xff] %v4453
        %4486 = vst [vmem:[#allocation3 + $0x8] sm:$0xff] %v4454
        %4487 = vst [vmem:[#allocation3 + $0x10] sm:$0xff] %v4455
        %4488 = vst [vmem:[#allocation3 + $0x18] sm:$0xff] %v4456
        %4489 = vst [vmem:[#allocation3 + $0x20] sm:$0xff] %v4457
        %4490 = vst [vmem:[#allocation3 + $0x28] sm:$0xff] %v4458
        %4491 = vst [vmem:[#allocation3 + $0x30] sm:$0xff] %v4459
        %4492 = vst [vmem:[#allocation3 + $0x38] sm:$0xff] %v4460
        %4493 = vst [vmem:[#allocation3 + $0x40] sm:$0xff] %v4461
        %4494 = vst [vmem:[#allocation3 + $0x48] sm:$0xff] %v4462
        %4495 = vst [vmem:[#allocation3 + $0x50] sm:$0xff] %v4463
        %4496 = vst [vmem:[#allocation3 + $0x58] sm:$0xff] %v4464
        %4497 = vst [vmem:[#allocation3 + $0x60] sm:$0xff] %v4465
        %4498 = vst [vmem:[#allocation3 + $0x68] sm:$0xff] %v4466
        %4499 = vst [vmem:[#allocation3 + $0x70] sm:$0xff] %v4467
        %4500 = vst [vmem:[#allocation3 + $0x78] sm:$0xff] %v4468
        %4501 = vst [vmem:[#allocation3 + $0x80] sm:$0xff] %v4469
        %4502 = vst [vmem:[#allocation3 + $0x88] sm:$0xff] %v4470
        %4503 = vst [vmem:[#allocation3 + $0x90] sm:$0xff] %v4471
        %4504 = vst [vmem:[#allocation3 + $0x98] sm:$0xff] %v4472
        %4505 = vst [vmem:[#allocation3 + $0xa0] sm:$0xff] %v4473
        %4506 = vst [vmem:[#allocation3 + $0xa8] sm:$0xff] %v4474
        %4507 = vst [vmem:[#allocation3 + $0xb0] sm:$0xff] %v4475
        %4508 = vst [vmem:[#allocation3 + $0xb8] sm:$0xff] %v4476
        %4509 = vst [vmem:[#allocation3 + $0xc0] sm:$0xff] %v4477
        %4510 = vst [vmem:[#allocation3 + $0xc8] sm:$0xff] %v4478
        %4511 = vst [vmem:[#allocation3 + $0xd0] sm:$0xff] %v4479
        %4512 = vst [vmem:[#allocation3 + $0xd8] sm:$0xff] %v4480
        %4513 = vst [vmem:[#allocation3 + $0xe0] sm:$0xff] %v4481
        %4514 = vst [vmem:[#allocation3 + $0xe8] sm:$0xff] %v4482
        %4515 = vst [vmem:[#allocation3 + $0xf0] sm:$0xff] %v4483
        %4516 = vst [vmem:[#allocation3 + $0xf8] sm:$0xff] %v4484
        %v4517 = vld [vmem:[#allocation2 + $0x1] sm:$0xff]
        %v4518 = vld [vmem:[#allocation2 + $0x9] sm:$0xff]
        %v4519 = vld [vmem:[#allocation2 + $0x19] sm:$0xff]
        %v4520 = vld [vmem:[#allocation2 + $0x21] sm:$0xff]
        %v4521 = vld [vmem:[#allocation2 + $0x31] sm:$0xff]
        %v4522 = vld [vmem:[#allocation2 + $0x39] sm:$0xff]
        %v4523 = vld [vmem:[#allocation2 + $0x49] sm:$0xff]
        %v4524 = vld [vmem:[#allocation2 + $0x51] sm:$0xff]
        %v4525 = vld [vmem:[#allocation2 + $0x61] sm:$0xff]
        %v4526 = vld [vmem:[#allocation2 + $0x69] sm:$0xff]
        %v4527 = vld [vmem:[#allocation2 + $0x79] sm:$0xff]
        %v4528 = vld [vmem:[#allocation2 + $0x81] sm:$0xff]
        %v4529 = vld [vmem:[#allocation2 + $0x91] sm:$0xff]
        %v4530 = vld [vmem:[#allocation2 + $0x99] sm:$0xff]
        %v4531 = vld [vmem:[#allocation2 + $0xa9] sm:$0xff]
        %v4532 = vld [vmem:[#allocation2 + $0xb1] sm:$0xff]
        %v4533 = vld [vmem:[#allocation2 + $0xc1] sm:$0xff]
        %v4534 = vld [vmem:[#allocation2 + $0xc9] sm:$0xff]
        %v4535 = vld [vmem:[#allocation2 + $0xd9] sm:$0xff]
        %v4536 = vld [vmem:[#allocation2 + $0xe1] sm:$0xff]
        %v4537 = vld [vmem:[#allocation2 + $0xf1] sm:$0xff]
        %v4538 = vld [vmem:[#allocation2 + $0xf9] sm:$0xff]
        %v4539 = vld [vmem:[#allocation2 + $0x109] sm:$0xff]
        %v4540 = vld [vmem:[#allocation2 + $0x111] sm:$0xff]
        %v4541 = vld [vmem:[#allocation2 + $0x121] sm:$0xff]
        %v4542 = vld [vmem:[#allocation2 + $0x129] sm:$0xff]
        %v4543 = vld [vmem:[#allocation2 + $0x139] sm:$0xff]
        %v4544 = vld [vmem:[#allocation2 + $0x141] sm:$0xff]
        %v4545 = vld [vmem:[#allocation2 + $0x151] sm:$0xff]
        %v4546 = vld [vmem:[#allocation2 + $0x159] sm:$0xff]
        %v4547 = vld [vmem:[#allocation2 + $0x169] sm:$0xff]
        %v4548 = vld [vmem:[#allocation2 + $0x171] sm:$0xff]
        %v4549 = vpack.c.bf16 %v4518, %v4517
        %v4550 = vpack.c.bf16 %v4520, %v4519
        %v4551 = vpack.c.bf16 %v4522, %v4521
        %v4552 = vpack.c.bf16 %v4524, %v4523
        %v4553 = vpack.c.bf16 %v4526, %v4525
        %v4554 = vpack.c.bf16 %v4528, %v4527
        %v4555 = vpack.c.bf16 %v4530, %v4529
        %v4556 = vpack.c.bf16 %v4532, %v4531
        %v4557 = vpack.c.bf16 %v4534, %v4533
        %v4558 = vpack.c.bf16 %v4536, %v4535
        %v4559 = vpack.c.bf16 %v4538, %v4537
        %v4560 = vpack.c.bf16 %v4540, %v4539
        %v4561 = vpack.c.bf16 %v4542, %v4541
        %v4562 = vpack.c.bf16 %v4544, %v4543
        %v4563 = vpack.c.bf16 %v4546, %v4545
        %v4564 = vpack.c.bf16 %v4548, %v4547
        %v4565 = vld [vmem:[#allocation3] sm:$0xff]
        %v4566 = vld [vmem:[#allocation3 + $0x8] sm:$0xff]
        %v4567 = vld [vmem:[#allocation3 + $0x10] sm:$0xff]
        %v4568 = vld [vmem:[#allocation3 + $0x18] sm:$0xff]
        %v4569 = vld [vmem:[#allocation3 + $0x20] sm:$0xff]
        %v4570 = vld [vmem:[#allocation3 + $0x28] sm:$0xff]
        %v4571 = vld [vmem:[#allocation3 + $0x30] sm:$0xff]
        %v4572 = vld [vmem:[#allocation3 + $0x38] sm:$0xff]
        %v4573 = vld [vmem:[#allocation3 + $0x40] sm:$0xff]
        %v4574 = vld [vmem:[#allocation3 + $0x48] sm:$0xff]
        %v4575 = vld [vmem:[#allocation3 + $0x50] sm:$0xff]
        %v4576 = vld [vmem:[#allocation3 + $0x58] sm:$0xff]
        %v4577 = vld [vmem:[#allocation3 + $0x60] sm:$0xff]
        %v4578 = vld [vmem:[#allocation3 + $0x68] sm:$0xff]
        %v4579 = vld [vmem:[#allocation3 + $0x70] sm:$0xff]
        %v4580 = vld [vmem:[#allocation3 + $0x78] sm:$0xff]
        %v4581 = vld [vmem:[#allocation3 + $0x80] sm:$0xff]
        %v4582 = vld [vmem:[#allocation3 + $0x88] sm:$0xff]
        %v4583 = vld [vmem:[#allocation3 + $0x90] sm:$0xff]
        %v4584 = vld [vmem:[#allocation3 + $0x98] sm:$0xff]
        %v4585 = vld [vmem:[#allocation3 + $0xa0] sm:$0xff]
        %v4586 = vld [vmem:[#allocation3 + $0xa8] sm:$0xff]
        %v4587 = vld [vmem:[#allocation3 + $0xb0] sm:$0xff]
        %v4588 = vld [vmem:[#allocation3 + $0xb8] sm:$0xff]
        %v4589 = vld [vmem:[#allocation3 + $0xc0] sm:$0xff]
        %v4590 = vld [vmem:[#allocation3 + $0xc8] sm:$0xff]
        %v4591 = vld [vmem:[#allocation3 + $0xd0] sm:$0xff]
        %v4592 = vld [vmem:[#allocation3 + $0xd8] sm:$0xff]
        %v4593 = vld [vmem:[#allocation3 + $0xe0] sm:$0xff]
        %v4594 = vld [vmem:[#allocation3 + $0xe8] sm:$0xff]
        %v4595 = vld [vmem:[#allocation3 + $0xf0] sm:$0xff]
        %v4596 = vld [vmem:[#allocation3 + $0xf8] sm:$0xff]
        %s4597 = scalar_lea.vmem [#allocation10], 64
        %v4598 = vld [vmem:[%s4597] sm:$0xf]
        %v4599 = vld [vmem:[%s4597 + $0x4] sm:$0xf]
        %v4600 = vld [vmem:[%s4597 + $0x8] sm:$0xf]
        %v4601 = vld [vmem:[%s4597 + $0xc] sm:$0xf]
        %v4602 = vld [vmem:[%s4597 + $0x10] sm:$0xf]
        %v4603 = vld [vmem:[%s4597 + $0x14] sm:$0xf]
        %v4604 = vld [vmem:[%s4597 + $0x18] sm:$0xf]
        %v4605 = vld [vmem:[%s4597 + $0x1c] sm:$0xf]
        %v4606 = vld [vmem:[%s4597 + $0x20] sm:$0xf]
        %v4607 = vld [vmem:[%s4597 + $0x24] sm:$0xf]
        %v4608 = vld [vmem:[%s4597 + $0x28] sm:$0xf]
        %v4609 = vld [vmem:[%s4597 + $0x2c] sm:$0xf]
        %v4610 = vld [vmem:[%s4597 + $0x30] sm:$0xf]
        %v4611 = vld [vmem:[%s4597 + $0x34] sm:$0xf]
        %v4612 = vld [vmem:[%s4597 + $0x38] sm:$0xf]
        %v4613 = vld [vmem:[%s4597 + $0x3c] sm:$0xf]
        %v4630 = vunpack.c.l.b16 %v4598
        %v4631 = vunpack.c.l.b16 %v4599
        %v4632 = vunpack.c.l.b16 %v4600
        %v4633 = vunpack.c.l.b16 %v4601
        %v4634 = vunpack.c.l.b16 %v4602
        %v4635 = vunpack.c.l.b16 %v4603
        %v4636 = vunpack.c.l.b16 %v4604
        %v4637 = vunpack.c.l.b16 %v4605
        %v4638 = vunpack.c.l.b16 %v4606
        %v4639 = vunpack.c.l.b16 %v4607
        %v4640 = vunpack.c.l.b16 %v4608
        %v4641 = vunpack.c.l.b16 %v4609
        %v4642 = vunpack.c.l.b16 %v4610
        %v4643 = vunpack.c.l.b16 %v4611
        %v4644 = vunpack.c.l.b16 %v4612
        %v4645 = vunpack.c.l.b16 %v4613
        %v4646 = vpack.c.b16 %v4631, %v4630
        %v4647 = vpack.c.b16 %v4633, %v4632
        %v4648 = vpack.c.b16 %v4635, %v4634
        %v4649 = vpack.c.b16 %v4637, %v4636
        %v4650 = vpack.c.b16 %v4639, %v4638
        %v4651 = vpack.c.b16 %v4641, %v4640
        %v4652 = vpack.c.b16 %v4643, %v4642
        %v4653 = vpack.c.b16 %v4645, %v4644
        %4662 = vmatprep.subr.bf16.mxu0 0
        %4663 = vmatpush1.bf16.msra.mxu0 %v4646
        %4664 = vmatprep.subr.bf16.mxu0 0
        %4665 = vmatpush1.bf16.msra.mxu0 %v4647
        %4666 = vmatprep.subr.bf16.mxu0 0
        %4667 = vmatpush1.bf16.msra.mxu0 %v4648
        %4668 = vmatprep.subr.bf16.mxu0 0
        %4669 = vmatpush1.bf16.msra.mxu0 %v4649
        %4670 = vmatprep.subr.bf16.mxu0 0
        %4671 = vmatpush1.bf16.msra.mxu0 %v4650
        %4672 = vmatprep.subr.bf16.mxu0 0
        %4673 = vmatpush1.bf16.msra.mxu0 %v4651
        %4674 = vmatprep.subr.bf16.mxu0 0
        %4675 = vmatpush1.bf16.msra.mxu0 %v4652
        %4676 = vmatprep.subr.bf16.mxu0 0
        %4677 = vmatpush1.bf16.msra.mxu0 %v4653
        %4678 = vmatprep.subr.bf16.mxu0 0
        %4679 = vmatpush1.bf16.msra.mxu0 0
        %4680 = vmatprep.subr.bf16.mxu0 0
        %4681 = vmatpush1.bf16.msra.mxu0 0
        %4682 = vmatprep.subr.bf16.mxu0 0
        %4683 = vmatpush1.bf16.msra.mxu0 0
        %4684 = vmatprep.subr.bf16.mxu0 0
        %4685 = vmatpush1.bf16.msra.mxu0 0
        %4686 = vmatprep.subr.bf16.mxu0 0
        %4687 = vmatpush1.bf16.msra.mxu0 0
        %4688 = vmatprep.subr.bf16.mxu0 0
        %4689 = vmatpush1.bf16.msra.mxu0 0
        %4690 = vmatprep.subr.bf16.mxu0 0
        %4691 = vmatpush1.bf16.msra.mxu0 0
        %4692 = vmatprep.subr.bf16.mxu0 0
        %4693 = vmatpush1.bf16.msra.mxu0 0
        %4694 = vmatprep.mubr.bf16.mxu0 0
        %4695 = vmatmul.mubr.bf16.gmra.mrb[0].mxu0 %v4549
        %v4696 = vpop.f32.mrb[0].mxu0
        %v4697 = vadd.f32 0.0, %v4696
        %v4698 = vpop.f32.mrb[0].mxu0
        %v4699 = vpop.f32.mrb[0].mxu0
        %v4700 = vadd.f32 0.0, %v4699
        %v4701 = vpop.f32.mrb[0].mxu0
        %4702 = vmatprep.mubr.bf16.mxu0 0
        %4703 = vmatmul.mubr.bf16.gmra.mrb[0].mxu0 %v4550
        %v4704 = vpop.f32.mrb[0].mxu0
        %v4705 = vadd.f32 0.0, %v4704
        %v4706 = vpop.f32.mrb[0].mxu0
        %v4707 = vpop.f32.mrb[0].mxu0
        %v4708 = vadd.f32 0.0, %v4707
        %v4709 = vpop.f32.mrb[0].mxu0
        %4710 = vmatprep.mubr.bf16.mxu0 0
        %4711 = vmatmul.mubr.bf16.gmra.mrb[0].mxu0 %v4551
        %v4712 = vpop.f32.mrb[0].mxu0
        %v4713 = vadd.f32 0.0, %v4712
        %v4714 = vpop.f32.mrb[0].mxu0
        %v4715 = vpop.f32.mrb[0].mxu0
        %v4716 = vadd.f32 0.0, %v4715
        %v4717 = vpop.f32.mrb[0].mxu0
        %4718 = vmatprep.mubr.bf16.mxu0 0
        %4719 = vmatmul.mubr.bf16.gmra.mrb[0].mxu0 %v4552
        %v4720 = vpop.f32.mrb[0].mxu0
        %v4721 = vadd.f32 0.0, %v4720
        %v4722 = vpop.f32.mrb[0].mxu0
        %v4723 = vpop.f32.mrb[0].mxu0
        %v4724 = vadd.f32 0.0, %v4723
        %v4725 = vpop.f32.mrb[0].mxu0
        %4726 = vmatprep.mubr.bf16.mxu0 0
        %4727 = vmatmul.mubr.bf16.gmra.mrb[0].mxu0 %v4553
        %v4728 = vpop.f32.mrb[0].mxu0
        %v4729 = vadd.f32 0.0, %v4728
        %v4730 = vpop.f32.mrb[0].mxu0
        %v4731 = vpop.f32.mrb[0].mxu0
        %v4732 = vadd.f32 0.0, %v4731
        %v4733 = vpop.f32.mrb[0].mxu0
        %4734 = vmatprep.mubr.bf16.mxu0 0
        %4735 = vmatmul.mubr.bf16.gmra.mrb[0].mxu0 %v4554
        %v4736 = vpop.f32.mrb[0].mxu0
        %v4737 = vadd.f32 0.0, %v4736
        %v4738 = vpop.f32.mrb[0].mxu0
        %v4739 = vpop.f32.mrb[0].mxu0
        %v4740 = vadd.f32 0.0, %v4739
        %v4741 = vpop.f32.mrb[0].mxu0
        %4742 = vmatprep.mubr.bf16.mxu0 0
        %4743 = vmatmul.mubr.bf16.gmra.mrb[0].mxu0 %v4555
        %v4744 = vpop.f32.mrb[0].mxu0
        %v4745 = vadd.f32 0.0, %v4744
        %v4746 = vpop.f32.mrb[0].mxu0
        %v4747 = vpop.f32.mrb[0].mxu0
        %v4748 = vadd.f32 0.0, %v4747
        %v4749 = vpop.f32.mrb[0].mxu0
        %4750 = vmatprep.mubr.bf16.mxu0 0
        %4751 = vmatmul.mubr.bf16.gmra.mrb[0].mxu0 %v4556
        %v4752 = vpop.f32.mrb[0].mxu0
        %v4753 = vadd.f32 0.0, %v4752
        %v4754 = vpop.f32.mrb[0].mxu0
        %v4755 = vpop.f32.mrb[0].mxu0
        %v4756 = vadd.f32 0.0, %v4755
        %v4757 = vpop.f32.mrb[0].mxu0
        %4758 = vmatprep.mubr.bf16.mxu0 0
        %4759 = vmatmul.mubr.bf16.gmra.mrb[0].mxu0 %v4557
        %v4760 = vpop.f32.mrb[0].mxu0
        %v4761 = vadd.f32 0.0, %v4760
        %v4762 = vpop.f32.mrb[0].mxu0
        %v4763 = vpop.f32.mrb[0].mxu0
        %v4764 = vadd.f32 0.0, %v4763
        %v4765 = vpop.f32.mrb[0].mxu0
        %4766 = vmatprep.mubr.bf16.mxu0 0
        %4767 = vmatmul.mubr.bf16.gmra.mrb[0].mxu0 %v4558
        %v4768 = vpop.f32.mrb[0].mxu0
        %v4769 = vadd.f32 0.0, %v4768
        %v4770 = vpop.f32.mrb[0].mxu0
        %v4771 = vpop.f32.mrb[0].mxu0
        %v4772 = vadd.f32 0.0, %v4771
        %v4773 = vpop.f32.mrb[0].mxu0
        %4774 = vmatprep.mubr.bf16.mxu0 0
        %4775 = vmatmul.mubr.bf16.gmra.mrb[0].mxu0 %v4559
        %v4776 = vpop.f32.mrb[0].mxu0
        %v4777 = vadd.f32 0.0, %v4776
        %v4778 = vpop.f32.mrb[0].mxu0
        %v4779 = vpop.f32.mrb[0].mxu0
        %v4780 = vadd.f32 0.0, %v4779
        %v4781 = vpop.f32.mrb[0].mxu0
        %4782 = vmatprep.mubr.bf16.mxu0 0
        %4783 = vmatmul.mubr.bf16.gmra.mrb[0].mxu0 %v4560
        %v4784 = vpop.f32.mrb[0].mxu0
        %v4785 = vadd.f32 0.0, %v4784
        %v4786 = vpop.f32.mrb[0].mxu0
        %v4787 = vpop.f32.mrb[0].mxu0
        %v4788 = vadd.f32 0.0, %v4787
        %v4789 = vpop.f32.mrb[0].mxu0
        %4790 = vmatprep.mubr.bf16.mxu0 0
        %4791 = vmatmul.mubr.bf16.gmra.mrb[0].mxu0 %v4561
        %v4792 = vpop.f32.mrb[0].mxu0
        %v4793 = vadd.f32 0.0, %v4792
        %v4794 = vpop.f32.mrb[0].mxu0
        %v4795 = vpop.f32.mrb[0].mxu0
        %v4796 = vadd.f32 0.0, %v4795
        %v4797 = vpop.f32.mrb[0].mxu0
        %4798 = vmatprep.mubr.bf16.mxu0 0
        %4799 = vmatmul.mubr.bf16.gmra.mrb[0].mxu0 %v4562
        %v4800 = vpop.f32.mrb[0].mxu0
        %v4801 = vadd.f32 0.0, %v4800
        %v4802 = vpop.f32.mrb[0].mxu0
        %v4803 = vpop.f32.mrb[0].mxu0
        %v4804 = vadd.f32 0.0, %v4803
        %v4805 = vpop.f32.mrb[0].mxu0
        %4806 = vmatprep.mubr.bf16.mxu0 0
        %4807 = vmatmul.mubr.bf16.gmra.mrb[0].mxu0 %v4563
        %v4808 = vpop.f32.mrb[0].mxu0
        %v4809 = vadd.f32 0.0, %v4808
        %v4810 = vpop.f32.mrb[0].mxu0
        %v4811 = vpop.f32.mrb[0].mxu0
        %v4812 = vadd.f32 0.0, %v4811
        %v4813 = vpop.f32.mrb[0].mxu0
        %4814 = vmatprep.mubr.bf16.mxu0 0
        %4815 = vmatmul.mubr.bf16.gmra.mrb[0].mxu0 %v4564
        %v4816 = vpop.f32.mrb[0].mxu0
        %v4817 = vadd.f32 0.0, %v4816
        %v4818 = vpop.f32.mrb[0].mxu0
        %v4819 = vpop.f32.mrb[0].mxu0
        %v4820 = vadd.f32 0.0, %v4819
        %v4821 = vpop.f32.mrb[0].mxu0
        %4822 = vdwg.mxu0
        %v4823 = vadd.f32 %v4565, %v4697
        %v4824 = vadd.f32 %v4566, %v4700
        %v4825 = vadd.f32 %v4567, %v4705
        %v4826 = vadd.f32 %v4568, %v4708
        %v4827 = vadd.f32 %v4569, %v4713
        %v4828 = vadd.f32 %v4570, %v4716
        %v4829 = vadd.f32 %v4571, %v4721
        %v4830 = vadd.f32 %v4572, %v4724
        %v4831 = vadd.f32 %v4573, %v4729
        %v4832 = vadd.f32 %v4574, %v4732
        %v4833 = vadd.f32 %v4575, %v4737
        %v4834 = vadd.f32 %v4576, %v4740
        %v4835 = vadd.f32 %v4577, %v4745
        %v4836 = vadd.f32 %v4578, %v4748
        %v4837 = vadd.f32 %v4579, %v4753
        %v4838 = vadd.f32 %v4580, %v4756
        %v4839 = vadd.f32 %v4581, %v4761
        %v4840 = vadd.f32 %v4582, %v4764
        %v4841 = vadd.f32 %v4583, %v4769
        %v4842 = vadd.f32 %v4584, %v4772
        %v4843 = vadd.f32 %v4585, %v4777
        %v4844 = vadd.f32 %v4586, %v4780
        %v4845 = vadd.f32 %v4587, %v4785
        %v4846 = vadd.f32 %v4588, %v4788
        %v4847 = vadd.f32 %v4589, %v4793
        %v4848 = vadd.f32 %v4590, %v4796
        %v4849 = vadd.f32 %v4591, %v4801
        %v4850 = vadd.f32 %v4592, %v4804
        %v4851 = vadd.f32 %v4593, %v4809
        %v4852 = vadd.f32 %v4594, %v4812
        %v4853 = vadd.f32 %v4595, %v4817
        %v4854 = vadd.f32 %v4596, %v4820
        %4855 = vst [vmem:[#allocation3] sm:$0xff] %v4823
        %4856 = vst [vmem:[#allocation3 + $0x8] sm:$0xff] %v4824
        %4857 = vst [vmem:[#allocation3 + $0x10] sm:$0xff] %v4825
        %4858 = vst [vmem:[#allocation3 + $0x18] sm:$0xff] %v4826
        %4859 = vst [vmem:[#allocation3 + $0x20] sm:$0xff] %v4827
        %4860 = vst [vmem:[#allocation3 + $0x28] sm:$0xff] %v4828
        %4861 = vst [vmem:[#allocation3 + $0x30] sm:$0xff] %v4829
        %4862 = vst [vmem:[#allocation3 + $0x38] sm:$0xff] %v4830
        %4863 = vst [vmem:[#allocation3 + $0x40] sm:$0xff] %v4831
        %4864 = vst [vmem:[#allocation3 + $0x48] sm:$0xff] %v4832
        %4865 = vst [vmem:[#allocation3 + $0x50] sm:$0xff] %v4833
        %4866 = vst [vmem:[#allocation3 + $0x58] sm:$0xff] %v4834
        %4867 = vst [vmem:[#allocation3 + $0x60] sm:$0xff] %v4835
        %4868 = vst [vmem:[#allocation3 + $0x68] sm:$0xff] %v4836
        %4869 = vst [vmem:[#allocation3 + $0x70] sm:$0xff] %v4837
        %4870 = vst [vmem:[#allocation3 + $0x78] sm:$0xff] %v4838
        %4871 = vst [vmem:[#allocation3 + $0x80] sm:$0xff] %v4839
        %4872 = vst [vmem:[#allocation3 + $0x88] sm:$0xff] %v4840
        %4873 = vst [vmem:[#allocation3 + $0x90] sm:$0xff] %v4841
        %4874 = vst [vmem:[#allocation3 + $0x98] sm:$0xff] %v4842
        %4875 = vst [vmem:[#allocation3 + $0xa0] sm:$0xff] %v4843
        %4876 = vst [vmem:[#allocation3 + $0xa8] sm:$0xff] %v4844
        %4877 = vst [vmem:[#allocation3 + $0xb0] sm:$0xff] %v4845
        %4878 = vst [vmem:[#allocation3 + $0xb8] sm:$0xff] %v4846
        %4879 = vst [vmem:[#allocation3 + $0xc0] sm:$0xff] %v4847
        %4880 = vst [vmem:[#allocation3 + $0xc8] sm:$0xff] %v4848
        %4881 = vst [vmem:[#allocation3 + $0xd0] sm:$0xff] %v4849
        %4882 = vst [vmem:[#allocation3 + $0xd8] sm:$0xff] %v4850
        %4883 = vst [vmem:[#allocation3 + $0xe0] sm:$0xff] %v4851
        %4884 = vst [vmem:[#allocation3 + $0xe8] sm:$0xff] %v4852
        %4885 = vst [vmem:[#allocation3 + $0xf0] sm:$0xff] %v4853
        %4886 = vst [vmem:[#allocation3 + $0xf8] sm:$0xff] %v4854
        %v4887 = vld [vmem:[#allocation2 + $0x2] sm:$0xff]
        %v4888 = vld [vmem:[#allocation2 + $0xa] sm:$0xff]
        %v4889 = vld [vmem:[#allocation2 + $0x1a] sm:$0xff]
        %v4890 = vld [vmem:[#allocation2 + $0x22] sm:$0xff]
        %v4891 = vld [vmem:[#allocation2 + $0x32] sm:$0xff]
        %v4892 = vld [vmem:[#allocation2 + $0x3a] sm:$0xff]
        %v4893 = vld [vmem:[#allocation2 + $0x4a] sm:$0xff]
        %v4894 = vld [vmem:[#allocation2 + $0x52] sm:$0xff]
        %v4895 = vld [vmem:[#allocation2 + $0x62] sm:$0xff]
        %v4896 = vld [vmem:[#allocation2 + $0x6a] sm:$0xff]
        %v4897 = vld [vmem:[#allocation2 + $0x7a] sm:$0xff]
        %v4898 = vld [vmem:[#allocation2 + $0x82] sm:$0xff]
        %v4899 = vld [vmem:[#allocation2 + $0x92] sm:$0xff]
        %v4900 = vld [vmem:[#allocation2 + $0x9a] sm:$0xff]
        %v4901 = vld [vmem:[#allocation2 + $0xaa] sm:$0xff]
        %v4902 = vld [vmem:[#allocation2 + $0xb2] sm:$0xff]
        %v4903 = vld [vmem:[#allocation2 + $0xc2] sm:$0xff]
        %v4904 = vld [vmem:[#allocation2 + $0xca] sm:$0xff]
        %v4905 = vld [vmem:[#allocation2 + $0xda] sm:$0xff]
        %v4906 = vld [vmem:[#allocation2 + $0xe2] sm:$0xff]
        %v4907 = vld [vmem:[#allocation2 + $0xf2] sm:$0xff]
        %v4908 = vld [vmem:[#allocation2 + $0xfa] sm:$0xff]
        %v4909 = vld [vmem:[#allocation2 + $0x10a] sm:$0xff]
        %v4910 = vld [vmem:[#allocation2 + $0x112] sm:$0xff]
        %v4911 = vld [vmem:[#allocation2 + $0x122] sm:$0xff]
        %v4912 = vld [vmem:[#allocation2 + $0x12a] sm:$0xff]
        %v4913 = vld [vmem:[#allocation2 + $0x13a] sm:$0xff]
        %v4914 = vld [vmem:[#allocation2 + $0x142] sm:$0xff]
        %v4915 = vld [vmem:[#allocation2 + $0x152] sm:$0xff]
        %v4916 = vld [vmem:[#allocation2 + $0x15a] sm:$0xff]
        %v4917 = vld [vmem:[#allocation2 + $0x16a] sm:$0xff]
        %v4918 = vld [vmem:[#allocation2 + $0x172] sm:$0xff]
        %v4919 = vpack.c.bf16 %v4888, %v4887
        %v4920 = vpack.c.bf16 %v4890, %v4889
        %v4921 = vpack.c.bf16 %v4892, %v4891
        %v4922 = vpack.c.bf16 %v4894, %v4893
        %v4923 = vpack.c.bf16 %v4896, %v4895
        %v4924 = vpack.c.bf16 %v4898, %v4897
        %v4925 = vpack.c.bf16 %v4900, %v4899
        %v4926 = vpack.c.bf16 %v4902, %v4901
        %v4927 = vpack.c.bf16 %v4904, %v4903
        %v4928 = vpack.c.bf16 %v4906, %v4905
        %v4929 = vpack.c.bf16 %v4908, %v4907
        %v4930 = vpack.c.bf16 %v4910, %v4909
        %v4931 = vpack.c.bf16 %v4912, %v4911
        %v4932 = vpack.c.bf16 %v4914, %v4913
        %v4933 = vpack.c.bf16 %v4916, %v4915
        %v4934 = vpack.c.bf16 %v4918, %v4917
        %v4935 = vld [vmem:[#allocation3] sm:$0xff]
        %v4936 = vld [vmem:[#allocation3 + $0x8] sm:$0xff]
        %v4937 = vld [vmem:[#allocation3 + $0x10] sm:$0xff]
        %v4938 = vld [vmem:[#allocation3 + $0x18] sm:$0xff]
        %v4939 = vld [vmem:[#allocation3 + $0x20] sm:$0xff]
        %v4940 = vld [vmem:[#allocation3 + $0x28] sm:$0xff]
        %v4941 = vld [vmem:[#allocation3 + $0x30] sm:$0xff]
        %v4942 = vld [vmem:[#allocation3 + $0x38] sm:$0xff]
        %v4943 = vld [vmem:[#allocation3 + $0x40] sm:$0xff]
        %v4944 = vld [vmem:[#allocation3 + $0x48] sm:$0xff]
        %v4945 = vld [vmem:[#allocation3 + $0x50] sm:$0xff]
        %v4946 = vld [vmem:[#allocation3 + $0x58] sm:$0xff]
        %v4947 = vld [vmem:[#allocation3 + $0x60] sm:$0xff]
        %v4948 = vld [vmem:[#allocation3 + $0x68] sm:$0xff]
        %v4949 = vld [vmem:[#allocation3 + $0x70] sm:$0xff]
        %v4950 = vld [vmem:[#allocation3 + $0x78] sm:$0xff]
        %v4951 = vld [vmem:[#allocation3 + $0x80] sm:$0xff]
        %v4952 = vld [vmem:[#allocation3 + $0x88] sm:$0xff]
        %v4953 = vld [vmem:[#allocation3 + $0x90] sm:$0xff]
        %v4954 = vld [vmem:[#allocation3 + $0x98] sm:$0xff]
        %v4955 = vld [vmem:[#allocation3 + $0xa0] sm:$0xff]
        %v4956 = vld [vmem:[#allocation3 + $0xa8] sm:$0xff]
        %v4957 = vld [vmem:[#allocation3 + $0xb0] sm:$0xff]
        %v4958 = vld [vmem:[#allocation3 + $0xb8] sm:$0xff]
        %v4959 = vld [vmem:[#allocation3 + $0xc0] sm:$0xff]
        %v4960 = vld [vmem:[#allocation3 + $0xc8] sm:$0xff]
        %v4961 = vld [vmem:[#allocation3 + $0xd0] sm:$0xff]
        %v4962 = vld [vmem:[#allocation3 + $0xd8] sm:$0xff]
        %v4963 = vld [vmem:[#allocation3 + $0xe0] sm:$0xff]
        %v4964 = vld [vmem:[#allocation3 + $0xe8] sm:$0xff]
        %v4965 = vld [vmem:[#allocation3 + $0xf0] sm:$0xff]
        %v4966 = vld [vmem:[#allocation3 + $0xf8] sm:$0xff]
        %s4967 = scalar_lea.vmem [#allocation10], 128
        %v4968 = vld [vmem:[%s4967] sm:$0xf]
        %v4969 = vld [vmem:[%s4967 + $0x4] sm:$0xf]
        %v4970 = vld [vmem:[%s4967 + $0x8] sm:$0xf]
        %v4971 = vld [vmem:[%s4967 + $0xc] sm:$0xf]
        %v4972 = vld [vmem:[%s4967 + $0x10] sm:$0xf]
        %v4973 = vld [vmem:[%s4967 + $0x14] sm:$0xf]
        %v4974 = vld [vmem:[%s4967 + $0x18] sm:$0xf]
        %v4975 = vld [vmem:[%s4967 + $0x1c] sm:$0xf]
        %v4976 = vld [vmem:[%s4967 + $0x20] sm:$0xf]
        %v4977 = vld [vmem:[%s4967 + $0x24] sm:$0xf]
        %v4978 = vld [vmem:[%s4967 + $0x28] sm:$0xf]
        %v4979 = vld [vmem:[%s4967 + $0x2c] sm:$0xf]
        %v4980 = vld [vmem:[%s4967 + $0x30] sm:$0xf]
        %v4981 = vld [vmem:[%s4967 + $0x34] sm:$0xf]
        %v4982 = vld [vmem:[%s4967 + $0x38] sm:$0xf]
        %v4983 = vld [vmem:[%s4967 + $0x3c] sm:$0xf]
        %v5000 = vunpack.c.l.b16 %v4968
        %v5001 = vunpack.c.l.b16 %v4969
        %v5002 = vunpack.c.l.b16 %v4970
        %v5003 = vunpack.c.l.b16 %v4971
        %v5004 = vunpack.c.l.b16 %v4972
        %v5005 = vunpack.c.l.b16 %v4973
        %v5006 = vunpack.c.l.b16 %v4974
        %v5007 = vunpack.c.l.b16 %v4975
        %v5008 = vunpack.c.l.b16 %v4976
        %v5009 = vunpack.c.l.b16 %v4977
        %v5010 = vunpack.c.l.b16 %v4978
        %v5011 = vunpack.c.l.b16 %v4979
        %v5012 = vunpack.c.l.b16 %v4980
        %v5013 = vunpack.c.l.b16 %v4981
        %v5014 = vunpack.c.l.b16 %v4982
        %v5015 = vunpack.c.l.b16 %v4983
        %v5016 = vpack.c.b16 %v5001, %v5000
        %v5017 = vpack.c.b16 %v5003, %v5002
        %v5018 = vpack.c.b16 %v5005, %v5004
        %v5019 = vpack.c.b16 %v5007, %v5006
        %v5020 = vpack.c.b16 %v5009, %v5008
        %v5021 = vpack.c.b16 %v5011, %v5010
        %v5022 = vpack.c.b16 %v5013, %v5012
        %v5023 = vpack.c.b16 %v5015, %v5014
        %5032 = vmatprep.subr.bf16.mxu0 0
        %5033 = vmatpush1.bf16.msra.mxu0 %v5016
        %5034 = vmatprep.subr.bf16.mxu0 0
        %5035 = vmatpush1.bf16.msra.mxu0 %v5017
        %5036 = vmatprep.subr.bf16.mxu0 0
        %5037 = vmatpush1.bf16.msra.mxu0 %v5018
        %5038 = vmatprep.subr.bf16.mxu0 0
        %5039 = vmatpush1.bf16.msra.mxu0 %v5019
        %5040 = vmatprep.subr.bf16.mxu0 0
        %5041 = vmatpush1.bf16.msra.mxu0 %v5020
        %5042 = vmatprep.subr.bf16.mxu0 0
        %5043 = vmatpush1.bf16.msra.mxu0 %v5021
        %5044 = vmatprep.subr.bf16.mxu0 0
        %5045 = vmatpush1.bf16.msra.mxu0 %v5022
        %5046 = vmatprep.subr.bf16.mxu0 0
        %5047 = vmatpush1.bf16.msra.mxu0 %v5023
        %5048 = vmatprep.subr.bf16.mxu0 0
        %5049 = vmatpush1.bf16.msra.mxu0 0
        %5050 = vmatprep.subr.bf16.mxu0 0
        %5051 = vmatpush1.bf16.msra.mxu0 0
        %5052 = vmatprep.subr.bf16.mxu0 0
        %5053 = vmatpush1.bf16.msra.mxu0 0
        %5054 = vmatprep.subr.bf16.mxu0 0
        %5055 = vmatpush1.bf16.msra.mxu0 0
        %5056 = vmatprep.subr.bf16.mxu0 0
        %5057 = vmatpush1.bf16.msra.mxu0 0
        %5058 = vmatprep.subr.bf16.mxu0 0
        %5059 = vmatpush1.bf16.msra.mxu0 0
        %5060 = vmatprep.subr.bf16.mxu0 0
        %5061 = vmatpush1.bf16.msra.mxu0 0
        %5062 = vmatprep.subr.bf16.mxu0 0
        %5063 = vmatpush1.bf16.msra.mxu0 0
        %5064 = vmatprep.mubr.bf16.mxu0 0
        %5065 = vmatmul.mubr.bf16.gmra.mrb[0].mxu0 %v4919
        %v5066 = vpop.f32.mrb[0].mxu0
        %v5067 = vadd.f32 0.0, %v5066
        %v5068 = vpop.f32.mrb[0].mxu0
        %v5069 = vpop.f32.mrb[0].mxu0
        %v5070 = vadd.f32 0.0, %v5069
        %v5071 = vpop.f32.mrb[0].mxu0
        %5072 = vmatprep.mubr.bf16.mxu0 0
        %5073 = vmatmul.mubr.bf16.gmra.mrb[0].mxu0 %v4920
        %v5074 = vpop.f32.mrb[0].mxu0
        %v5075 = vadd.f32 0.0, %v5074
        %v5076 = vpop.f32.mrb[0].mxu0
        %v5077 = vpop.f32.mrb[0].mxu0
        %v5078 = vadd.f32 0.0, %v5077
        %v5079 = vpop.f32.mrb[0].mxu0
        %5080 = vmatprep.mubr.bf16.mxu0 0
        %5081 = vmatmul.mubr.bf16.gmra.mrb[0].mxu0 %v4921
        %v5082 = vpop.f32.mrb[0].mxu0
        %v5083 = vadd.f32 0.0, %v5082
        %v5084 = vpop.f32.mrb[0].mxu0
        %v5085 = vpop.f32.mrb[0].mxu0
        %v5086 = vadd.f32 0.0, %v5085
        %v5087 = vpop.f32.mrb[0].mxu0
        %5088 = vmatprep.mubr.bf16.mxu0 0
        %5089 = vmatmul.mubr.bf16.gmra.mrb[0].mxu0 %v4922
        %v5090 = vpop.f32.mrb[0].mxu0
        %v5091 = vadd.f32 0.0, %v5090
        %v5092 = vpop.f32.mrb[0].mxu0
        %v5093 = vpop.f32.mrb[0].mxu0
        %v5094 = vadd.f32 0.0, %v5093
        %v5095 = vpop.f32.mrb[0].mxu0
        %5096 = vmatprep.mubr.bf16.mxu0 0
        %5097 = vmatmul.mubr.bf16.gmra.mrb[0].mxu0 %v4923
        %v5098 = vpop.f32.mrb[0].mxu0
        %v5099 = vadd.f32 0.0, %v5098
        %v5100 = vpop.f32.mrb[0].mxu0
        %v5101 = vpop.f32.mrb[0].mxu0
        %v5102 = vadd.f32 0.0, %v5101
        %v5103 = vpop.f32.mrb[0].mxu0
        %5104 = vmatprep.mubr.bf16.mxu0 0
        %5105 = vmatmul.mubr.bf16.gmra.mrb[0].mxu0 %v4924
        %v5106 = vpop.f32.mrb[0].mxu0
        %v5107 = vadd.f32 0.0, %v5106
        %v5108 = vpop.f32.mrb[0].mxu0
        %v5109 = vpop.f32.mrb[0].mxu0
        %v5110 = vadd.f32 0.0, %v5109
        %v5111 = vpop.f32.mrb[0].mxu0
        %5112 = vmatprep.mubr.bf16.mxu0 0
        %5113 = vmatmul.mubr.bf16.gmra.mrb[0].mxu0 %v4925
        %v5114 = vpop.f32.mrb[0].mxu0
        %v5115 = vadd.f32 0.0, %v5114
        %v5116 = vpop.f32.mrb[0].mxu0
        %v5117 = vpop.f32.mrb[0].mxu0
        %v5118 = vadd.f32 0.0, %v5117
        %v5119 = vpop.f32.mrb[0].mxu0
        %5120 = vmatprep.mubr.bf16.mxu0 0
        %5121 = vmatmul.mubr.bf16.gmra.mrb[0].mxu0 %v4926
        %v5122 = vpop.f32.mrb[0].mxu0
        %v5123 = vadd.f32 0.0, %v5122
        %v5124 = vpop.f32.mrb[0].mxu0
        %v5125 = vpop.f32.mrb[0].mxu0
        %v5126 = vadd.f32 0.0, %v5125
        %v5127 = vpop.f32.mrb[0].mxu0
        %5128 = vmatprep.mubr.bf16.mxu0 0
        %5129 = vmatmul.mubr.bf16.gmra.mrb[0].mxu0 %v4927
        %v5130 = vpop.f32.mrb[0].mxu0
        %v5131 = vadd.f32 0.0, %v5130
        %v5132 = vpop.f32.mrb[0].mxu0
        %v5133 = vpop.f32.mrb[0].mxu0
        %v5134 = vadd.f32 0.0, %v5133
        %v5135 = vpop.f32.mrb[0].mxu0
        %5136 = vmatprep.mubr.bf16.mxu0 0
        %5137 = vmatmul.mubr.bf16.gmra.mrb[0].mxu0 %v4928
        %v5138 = vpop.f32.mrb[0].mxu0
        %v5139 = vadd.f32 0.0, %v5138
        %v5140 = vpop.f32.mrb[0].mxu0
        %v5141 = vpop.f32.mrb[0].mxu0
        %v5142 = vadd.f32 0.0, %v5141
        %v5143 = vpop.f32.mrb[0].mxu0
        %5144 = vmatprep.mubr.bf16.mxu0 0
        %5145 = vmatmul.mubr.bf16.gmra.mrb[0].mxu0 %v4929
        %v5146 = vpop.f32.mrb[0].mxu0
        %v5147 = vadd.f32 0.0, %v5146
        %v5148 = vpop.f32.mrb[0].mxu0
        %v5149 = vpop.f32.mrb[0].mxu0
        %v5150 = vadd.f32 0.0, %v5149
        %v5151 = vpop.f32.mrb[0].mxu0
        %5152 = vmatprep.mubr.bf16.mxu0 0
        %5153 = vmatmul.mubr.bf16.gmra.mrb[0].mxu0 %v4930
        %v5154 = vpop.f32.mrb[0].mxu0
        %v5155 = vadd.f32 0.0, %v5154
        %v5156 = vpop.f32.mrb[0].mxu0
        %v5157 = vpop.f32.mrb[0].mxu0
        %v5158 = vadd.f32 0.0, %v5157
        %v5159 = vpop.f32.mrb[0].mxu0
        %5160 = vmatprep.mubr.bf16.mxu0 0
        %5161 = vmatmul.mubr.bf16.gmra.mrb[0].mxu0 %v4931
        %v5162 = vpop.f32.mrb[0].mxu0
        %v5163 = vadd.f32 0.0, %v5162
        %v5164 = vpop.f32.mrb[0].mxu0
        %v5165 = vpop.f32.mrb[0].mxu0
        %v5166 = vadd.f32 0.0, %v5165
        %v5167 = vpop.f32.mrb[0].mxu0
        %5168 = vmatprep.mubr.bf16.mxu0 0
        %5169 = vmatmul.mubr.bf16.gmra.mrb[0].mxu0 %v4932
        %v5170 = vpop.f32.mrb[0].mxu0
        %v5171 = vadd.f32 0.0, %v5170
        %v5172 = vpop.f32.mrb[0].mxu0
        %v5173 = vpop.f32.mrb[0].mxu0
        %v5174 = vadd.f32 0.0, %v5173
        %v5175 = vpop.f32.mrb[0].mxu0
        %5176 = vmatprep.mubr.bf16.mxu0 0
        %5177 = vmatmul.mubr.bf16.gmra.mrb[0].mxu0 %v4933
        %v5178 = vpop.f32.mrb[0].mxu0
        %v5179 = vadd.f32 0.0, %v5178
        %v5180 = vpop.f32.mrb[0].mxu0
        %v5181 = vpop.f32.mrb[0].mxu0
        %v5182 = vadd.f32 0.0, %v5181
        %v5183 = vpop.f32.mrb[0].mxu0
        %5184 = vmatprep.mubr.bf16.mxu0 0
        %5185 = vmatmul.mubr.bf16.gmra.mrb[0].mxu0 %v4934
        %v5186 = vpop.f32.mrb[0].mxu0
        %v5187 = vadd.f32 0.0, %v5186
        %v5188 = vpop.f32.mrb[0].mxu0
        %v5189 = vpop.f32.mrb[0].mxu0
        %v5190 = vadd.f32 0.0, %v5189
        %v5191 = vpop.f32.mrb[0].mxu0
        %5192 = vdwg.mxu0
        %v5193 = vadd.f32 %v4935, %v5067
        %v5194 = vadd.f32 %v4936, %v5070
        %v5195 = vadd.f32 %v4937, %v5075
        %v5196 = vadd.f32 %v4938, %v5078
        %v5197 = vadd.f32 %v4939, %v5083
        %v5198 = vadd.f32 %v4940, %v5086
        %v5199 = vadd.f32 %v4941, %v5091
        %v5200 = vadd.f32 %v4942, %v5094
        %v5201 = vadd.f32 %v4943, %v5099
        %v5202 = vadd.f32 %v4944, %v5102
        %v5203 = vadd.f32 %v4945, %v5107
        %v5204 = vadd.f32 %v4946, %v5110
        %v5205 = vadd.f32 %v4947, %v5115
        %v5206 = vadd.f32 %v4948, %v5118
        %v5207 = vadd.f32 %v4949, %v5123
        %v5208 = vadd.f32 %v4950, %v5126
        %v5209 = vadd.f32 %v4951, %v5131
        %v5210 = vadd.f32 %v4952, %v5134
        %v5211 = vadd.f32 %v4953, %v5139
        %v5212 = vadd.f32 %v4954, %v5142
        %v5213 = vadd.f32 %v4955, %v5147
        %v5214 = vadd.f32 %v4956, %v5150
        %v5215 = vadd.f32 %v4957, %v5155
        %v5216 = vadd.f32 %v4958, %v5158
        %v5217 = vadd.f32 %v4959, %v5163
        %v5218 = vadd.f32 %v4960, %v5166
        %v5219 = vadd.f32 %v4961, %v5171
        %v5220 = vadd.f32 %v4962, %v5174
        %v5221 = vadd.f32 %v4963, %v5179
        %v5222 = vadd.f32 %v4964, %v5182
        %v5223 = vadd.f32 %v4965, %v5187
        %v5224 = vadd.f32 %v4966, %v5190
        %5225 = vst [vmem:[#allocation3] sm:$0xff] %v5193
        %5226 = vst [vmem:[#allocation3 + $0x8] sm:$0xff] %v5194
        %5227 = vst [vmem:[#allocation3 + $0x10] sm:$0xff] %v5195
        %5228 = vst [vmem:[#allocation3 + $0x18] sm:$0xff] %v5196
        %5229 = vst [vmem:[#allocation3 + $0x20] sm:$0xff] %v5197
        %5230 = vst [vmem:[#allocation3 + $0x28] sm:$0xff] %v5198
        %5231 = vst [vmem:[#allocation3 + $0x30] sm:$0xff] %v5199
        %5232 = vst [vmem:[#allocation3 + $0x38] sm:$0xff] %v5200
        %5233 = vst [vmem:[#allocation3 + $0x40] sm:$0xff] %v5201
        %5234 = vst [vmem:[#allocation3 + $0x48] sm:$0xff] %v5202
        %5235 = vst [vmem:[#allocation3 + $0x50] sm:$0xff] %v5203
        %5236 = vst [vmem:[#allocation3 + $0x58] sm:$0xff] %v5204
        %5237 = vst [vmem:[#allocation3 + $0x60] sm:$0xff] %v5205
        %5238 = vst [vmem:[#allocation3 + $0x68] sm:$0xff] %v5206
        %5239 = vst [vmem:[#allocation3 + $0x70] sm:$0xff] %v5207
        %5240 = vst [vmem:[#allocation3 + $0x78] sm:$0xff] %v5208
        %5241 = vst [vmem:[#allocation3 + $0x80] sm:$0xff] %v5209
        %5242 = vst [vmem:[#allocation3 + $0x88] sm:$0xff] %v5210
        %5243 = vst [vmem:[#allocation3 + $0x90] sm:$0xff] %v5211
        %5244 = vst [vmem:[#allocation3 + $0x98] sm:$0xff] %v5212
        %5245 = vst [vmem:[#allocation3 + $0xa0] sm:$0xff] %v5213
        %5246 = vst [vmem:[#allocation3 + $0xa8] sm:$0xff] %v5214
        %5247 = vst [vmem:[#allocation3 + $0xb0] sm:$0xff] %v5215
        %5248 = vst [vmem:[#allocation3 + $0xb8] sm:$0xff] %v5216
        %5249 = vst [vmem:[#allocation3 + $0xc0] sm:$0xff] %v5217
        %5250 = vst [vmem:[#allocation3 + $0xc8] sm:$0xff] %v5218
        %5251 = vst [vmem:[#allocation3 + $0xd0] sm:$0xff] %v5219
        %5252 = vst [vmem:[#allocation3 + $0xd8] sm:$0xff] %v5220
        %5253 = vst [vmem:[#allocation3 + $0xe0] sm:$0xff] %v5221
        %5254 = vst [vmem:[#allocation3 + $0xe8] sm:$0xff] %v5222
        %5255 = vst [vmem:[#allocation3 + $0xf0] sm:$0xff] %v5223
        %5256 = vst [vmem:[#allocation3 + $0xf8] sm:$0xff] %v5224
        %v5257 = vld [vmem:[%s330] sm:$0xff]
        %v5258 = vld [vmem:[%s330 + $0x8] sm:$0xff]
        %v5259 = vld [vmem:[%s330 + $0x18] sm:$0xff]
        %v5260 = vld [vmem:[%s330 + $0x20] sm:$0xff]
        %v5261 = vld [vmem:[%s330 + $0x30] sm:$0xff]
        %v5262 = vld [vmem:[%s330 + $0x38] sm:$0xff]
        %v5263 = vld [vmem:[%s330 + $0x48] sm:$0xff]
        %v5264 = vld [vmem:[%s330 + $0x50] sm:$0xff]
        %v5265 = vld [vmem:[%s330 + $0x60] sm:$0xff]
        %v5266 = vld [vmem:[%s330 + $0x68] sm:$0xff]
        %v5267 = vld [vmem:[%s330 + $0x78] sm:$0xff]
        %v5268 = vld [vmem:[%s330 + $0x80] sm:$0xff]
        %v5269 = vld [vmem:[%s330 + $0x90] sm:$0xff]
        %v5270 = vld [vmem:[%s330 + $0x98] sm:$0xff]
        %v5271 = vld [vmem:[%s330 + $0xa8] sm:$0xff]
        %v5272 = vld [vmem:[%s330 + $0xb0] sm:$0xff]
        %v5273 = vld [vmem:[%s330 + $0xc0] sm:$0xff]
        %v5274 = vld [vmem:[%s330 + $0xc8] sm:$0xff]
        %v5275 = vld [vmem:[%s330 + $0xd8] sm:$0xff]
        %v5276 = vld [vmem:[%s330 + $0xe0] sm:$0xff]
        %v5277 = vld [vmem:[%s330 + $0xf0] sm:$0xff]
        %v5278 = vld [vmem:[%s330 + $0xf8] sm:$0xff]
        %v5279 = vld [vmem:[%s330 + $0x108] sm:$0xff]
        %v5280 = vld [vmem:[%s330 + $0x110] sm:$0xff]
        %v5281 = vld [vmem:[%s330 + $0x120] sm:$0xff]
        %v5282 = vld [vmem:[%s330 + $0x128] sm:$0xff]
        %v5283 = vld [vmem:[%s330 + $0x138] sm:$0xff]
        %v5284 = vld [vmem:[%s330 + $0x140] sm:$0xff]
        %v5285 = vld [vmem:[%s330 + $0x150] sm:$0xff]
        %v5286 = vld [vmem:[%s330 + $0x158] sm:$0xff]
        %v5287 = vld [vmem:[%s330 + $0x168] sm:$0xff]
        %v5288 = vld [vmem:[%s330 + $0x170] sm:$0xff]
        %v5289 = vpack.c.bf16 %v5258, %v5257
        %v5290 = vpack.c.bf16 %v5260, %v5259
        %v5291 = vpack.c.bf16 %v5262, %v5261
        %v5292 = vpack.c.bf16 %v5264, %v5263
        %v5293 = vpack.c.bf16 %v5266, %v5265
        %v5294 = vpack.c.bf16 %v5268, %v5267
        %v5295 = vpack.c.bf16 %v5270, %v5269
        %v5296 = vpack.c.bf16 %v5272, %v5271
        %v5297 = vpack.c.bf16 %v5274, %v5273
        %v5298 = vpack.c.bf16 %v5276, %v5275
        %v5299 = vpack.c.bf16 %v5278, %v5277
        %v5300 = vpack.c.bf16 %v5280, %v5279
        %v5301 = vpack.c.bf16 %v5282, %v5281
        %v5302 = vpack.c.bf16 %v5284, %v5283
        %v5303 = vpack.c.bf16 %v5286, %v5285
        %v5304 = vpack.c.bf16 %v5288, %v5287
        %v5305 = vld [vmem:[#allocation3] sm:$0xff]
        %v5306 = vld [vmem:[#allocation3 + $0x8] sm:$0xff]
        %v5307 = vld [vmem:[#allocation3 + $0x10] sm:$0xff]
        %v5308 = vld [vmem:[#allocation3 + $0x18] sm:$0xff]
        %v5309 = vld [vmem:[#allocation3 + $0x20] sm:$0xff]
        %v5310 = vld [vmem:[#allocation3 + $0x28] sm:$0xff]
        %v5311 = vld [vmem:[#allocation3 + $0x30] sm:$0xff]
        %v5312 = vld [vmem:[#allocation3 + $0x38] sm:$0xff]
        %v5313 = vld [vmem:[#allocation3 + $0x40] sm:$0xff]
        %v5314 = vld [vmem:[#allocation3 + $0x48] sm:$0xff]
        %v5315 = vld [vmem:[#allocation3 + $0x50] sm:$0xff]
        %v5316 = vld [vmem:[#allocation3 + $0x58] sm:$0xff]
        %v5317 = vld [vmem:[#allocation3 + $0x60] sm:$0xff]
        %v5318 = vld [vmem:[#allocation3 + $0x68] sm:$0xff]
        %v5319 = vld [vmem:[#allocation3 + $0x70] sm:$0xff]
        %v5320 = vld [vmem:[#allocation3 + $0x78] sm:$0xff]
        %v5321 = vld [vmem:[#allocation3 + $0x80] sm:$0xff]
        %v5322 = vld [vmem:[#allocation3 + $0x88] sm:$0xff]
        %v5323 = vld [vmem:[#allocation3 + $0x90] sm:$0xff]
        %v5324 = vld [vmem:[#allocation3 + $0x98] sm:$0xff]
        %v5325 = vld [vmem:[#allocation3 + $0xa0] sm:$0xff]
        %v5326 = vld [vmem:[#allocation3 + $0xa8] sm:$0xff]
        %v5327 = vld [vmem:[#allocation3 + $0xb0] sm:$0xff]
        %v5328 = vld [vmem:[#allocation3 + $0xb8] sm:$0xff]
        %v5329 = vld [vmem:[#allocation3 + $0xc0] sm:$0xff]
        %v5330 = vld [vmem:[#allocation3 + $0xc8] sm:$0xff]
        %v5331 = vld [vmem:[#allocation3 + $0xd0] sm:$0xff]
        %v5332 = vld [vmem:[#allocation3 + $0xd8] sm:$0xff]
        %v5333 = vld [vmem:[#allocation3 + $0xe0] sm:$0xff]
        %v5334 = vld [vmem:[#allocation3 + $0xe8] sm:$0xff]
        %v5335 = vld [vmem:[#allocation3 + $0xf0] sm:$0xff]
        %v5336 = vld [vmem:[#allocation3 + $0xf8] sm:$0xff]
        %s5337 = scalar_lea.vmem [#allocation10], 192
        %v5338 = vld [vmem:[%s5337] sm:$0xf]
        %v5339 = vld [vmem:[%s5337 + $0x4] sm:$0xf]
        %v5340 = vld [vmem:[%s5337 + $0x8] sm:$0xf]
        %v5341 = vld [vmem:[%s5337 + $0xc] sm:$0xf]
        %v5342 = vld [vmem:[%s5337 + $0x10] sm:$0xf]
        %v5343 = vld [vmem:[%s5337 + $0x14] sm:$0xf]
        %v5344 = vld [vmem:[%s5337 + $0x18] sm:$0xf]
        %v5345 = vld [vmem:[%s5337 + $0x1c] sm:$0xf]
        %v5346 = vld [vmem:[%s5337 + $0x20] sm:$0xf]
        %v5347 = vld [vmem:[%s5337 + $0x24] sm:$0xf]
        %v5348 = vld [vmem:[%s5337 + $0x28] sm:$0xf]
        %v5349 = vld [vmem:[%s5337 + $0x2c] sm:$0xf]
        %v5350 = vld [vmem:[%s5337 + $0x30] sm:$0xf]
        %v5351 = vld [vmem:[%s5337 + $0x34] sm:$0xf]
        %v5352 = vld [vmem:[%s5337 + $0x38] sm:$0xf]
        %v5353 = vld [vmem:[%s5337 + $0x3c] sm:$0xf]
        %v5370 = vunpack.c.l.b16 %v5338
        %v5371 = vunpack.c.l.b16 %v5339
        %v5372 = vunpack.c.l.b16 %v5340
        %v5373 = vunpack.c.l.b16 %v5341
        %v5374 = vunpack.c.l.b16 %v5342
        %v5375 = vunpack.c.l.b16 %v5343
        %v5376 = vunpack.c.l.b16 %v5344
        %v5377 = vunpack.c.l.b16 %v5345
        %v5378 = vunpack.c.l.b16 %v5346
        %v5379 = vunpack.c.l.b16 %v5347
        %v5380 = vunpack.c.l.b16 %v5348
        %v5381 = vunpack.c.l.b16 %v5349
        %v5382 = vunpack.c.l.b16 %v5350
        %v5383 = vunpack.c.l.b16 %v5351
        %v5384 = vunpack.c.l.b16 %v5352
        %v5385 = vunpack.c.l.b16 %v5353
        %v5386 = vpack.c.b16 %v5371, %v5370
        %v5387 = vpack.c.b16 %v5373, %v5372
        %v5388 = vpack.c.b16 %v5375, %v5374
        %v5389 = vpack.c.b16 %v5377, %v5376
        %v5390 = vpack.c.b16 %v5379, %v5378
        %v5391 = vpack.c.b16 %v5381, %v5380
        %v5392 = vpack.c.b16 %v5383, %v5382
        %v5393 = vpack.c.b16 %v5385, %v5384
        %5402 = vmatprep.subr.bf16.mxu0 0
        %5403 = vmatpush1.bf16.msra.mxu0 %v5386
        %5404 = vmatprep.subr.bf16.mxu0 0
        %5405 = vmatpush1.bf16.msra.mxu0 %v5387
        %5406 = vmatprep.subr.bf16.mxu0 0
        %5407 = vmatpush1.bf16.msra.mxu0 %v5388
        %5408 = vmatprep.subr.bf16.mxu0 0
        %5409 = vmatpush1.bf16.msra.mxu0 %v5389
        %5410 = vmatprep.subr.bf16.mxu0 0
        %5411 = vmatpush1.bf16.msra.mxu0 %v5390
        %5412 = vmatprep.subr.bf16.mxu0 0
        %5413 = vmatpush1.bf16.msra.mxu0 %v5391
        %5414 = vmatprep.subr.bf16.mxu0 0
        %5415 = vmatpush1.bf16.msra.mxu0 %v5392
        %5416 = vmatprep.subr.bf16.mxu0 0
        %5417 = vmatpush1.bf16.msra.mxu0 %v5393
        %5418 = vmatprep.subr.bf16.mxu0 0
        %5419 = vmatpush1.bf16.msra.mxu0 0
        %5420 = vmatprep.subr.bf16.mxu0 0
        %5421 = vmatpush1.bf16.msra.mxu0 0
        %5422 = vmatprep.subr.bf16.mxu0 0
        %5423 = vmatpush1.bf16.msra.mxu0 0
        %5424 = vmatprep.subr.bf16.mxu0 0
        %5425 = vmatpush1.bf16.msra.mxu0 0
        %5426 = vmatprep.subr.bf16.mxu0 0
        %5427 = vmatpush1.bf16.msra.mxu0 0
        %5428 = vmatprep.subr.bf16.mxu0 0
        %5429 = vmatpush1.bf16.msra.mxu0 0
        %5430 = vmatprep.subr.bf16.mxu0 0
        %5431 = vmatpush1.bf16.msra.mxu0 0
        %5432 = vmatprep.subr.bf16.mxu0 0
        %5433 = vmatpush1.bf16.msra.mxu0 0
        %5434 = vmatprep.mubr.bf16.mxu0 0
        %5435 = vmatmul.mubr.bf16.gmra.mrb[0].mxu0 %v5289
        %v5436 = vpop.f32.mrb[0].mxu0
        %v5437 = vadd.f32 0.0, %v5436
        %v5438 = vpop.f32.mrb[0].mxu0
        %v5439 = vpop.f32.mrb[0].mxu0
        %v5440 = vadd.f32 0.0, %v5439
        %v5441 = vpop.f32.mrb[0].mxu0
        %5442 = vmatprep.mubr.bf16.mxu0 0
        %5443 = vmatmul.mubr.bf16.gmra.mrb[0].mxu0 %v5290
        %v5444 = vpop.f32.mrb[0].mxu0
        %v5445 = vadd.f32 0.0, %v5444
        %v5446 = vpop.f32.mrb[0].mxu0
        %v5447 = vpop.f32.mrb[0].mxu0
        %v5448 = vadd.f32 0.0, %v5447
        %v5449 = vpop.f32.mrb[0].mxu0
        %5450 = vmatprep.mubr.bf16.mxu0 0
        %5451 = vmatmul.mubr.bf16.gmra.mrb[0].mxu0 %v5291
        %v5452 = vpop.f32.mrb[0].mxu0
        %v5453 = vadd.f32 0.0, %v5452
        %v5454 = vpop.f32.mrb[0].mxu0
        %v5455 = vpop.f32.mrb[0].mxu0
        %v5456 = vadd.f32 0.0, %v5455
        %v5457 = vpop.f32.mrb[0].mxu0
        %5458 = vmatprep.mubr.bf16.mxu0 0
        %5459 = vmatmul.mubr.bf16.gmra.mrb[0].mxu0 %v5292
        %v5460 = vpop.f32.mrb[0].mxu0
        %v5461 = vadd.f32 0.0, %v5460
        %v5462 = vpop.f32.mrb[0].mxu0
        %v5463 = vpop.f32.mrb[0].mxu0
        %v5464 = vadd.f32 0.0, %v5463
        %v5465 = vpop.f32.mrb[0].mxu0
        %5466 = vmatprep.mubr.bf16.mxu0 0
        %5467 = vmatmul.mubr.bf16.gmra.mrb[0].mxu0 %v5293
        %v5468 = vpop.f32.mrb[0].mxu0
        %v5469 = vadd.f32 0.0, %v5468
        %v5470 = vpop.f32.mrb[0].mxu0
        %v5471 = vpop.f32.mrb[0].mxu0
        %v5472 = vadd.f32 0.0, %v5471
        %v5473 = vpop.f32.mrb[0].mxu0
        %5474 = vmatprep.mubr.bf16.mxu0 0
        %5475 = vmatmul.mubr.bf16.gmra.mrb[0].mxu0 %v5294
        %v5476 = vpop.f32.mrb[0].mxu0
        %v5477 = vadd.f32 0.0, %v5476
        %v5478 = vpop.f32.mrb[0].mxu0
        %v5479 = vpop.f32.mrb[0].mxu0
        %v5480 = vadd.f32 0.0, %v5479
        %v5481 = vpop.f32.mrb[0].mxu0
        %5482 = vmatprep.mubr.bf16.mxu0 0
        %5483 = vmatmul.mubr.bf16.gmra.mrb[0].mxu0 %v5295
        %v5484 = vpop.f32.mrb[0].mxu0
        %v5485 = vadd.f32 0.0, %v5484
        %v5486 = vpop.f32.mrb[0].mxu0
        %v5487 = vpop.f32.mrb[0].mxu0
        %v5488 = vadd.f32 0.0, %v5487
        %v5489 = vpop.f32.mrb[0].mxu0
        %5490 = vmatprep.mubr.bf16.mxu0 0
        %5491 = vmatmul.mubr.bf16.gmra.mrb[0].mxu0 %v5296
        %v5492 = vpop.f32.mrb[0].mxu0
        %v5493 = vadd.f32 0.0, %v5492
        %v5494 = vpop.f32.mrb[0].mxu0
        %v5495 = vpop.f32.mrb[0].mxu0
        %v5496 = vadd.f32 0.0, %v5495
        %v5497 = vpop.f32.mrb[0].mxu0
        %5498 = vmatprep.mubr.bf16.mxu0 0
        %5499 = vmatmul.mubr.bf16.gmra.mrb[0].mxu0 %v5297
        %v5500 = vpop.f32.mrb[0].mxu0
        %v5501 = vadd.f32 0.0, %v5500
        %v5502 = vpop.f32.mrb[0].mxu0
        %v5503 = vpop.f32.mrb[0].mxu0
        %v5504 = vadd.f32 0.0, %v5503
        %v5505 = vpop.f32.mrb[0].mxu0
        %5506 = vmatprep.mubr.bf16.mxu0 0
        %5507 = vmatmul.mubr.bf16.gmra.mrb[0].mxu0 %v5298
        %v5508 = vpop.f32.mrb[0].mxu0
        %v5509 = vadd.f32 0.0, %v5508
        %v5510 = vpop.f32.mrb[0].mxu0
        %v5511 = vpop.f32.mrb[0].mxu0
        %v5512 = vadd.f32 0.0, %v5511
        %v5513 = vpop.f32.mrb[0].mxu0
        %5514 = vmatprep.mubr.bf16.mxu0 0
        %5515 = vmatmul.mubr.bf16.gmra.mrb[0].mxu0 %v5299
        %v5516 = vpop.f32.mrb[0].mxu0
        %v5517 = vadd.f32 0.0, %v5516
        %v5518 = vpop.f32.mrb[0].mxu0
        %v5519 = vpop.f32.mrb[0].mxu0
        %v5520 = vadd.f32 0.0, %v5519
        %v5521 = vpop.f32.mrb[0].mxu0
        %5522 = vmatprep.mubr.bf16.mxu0 0
        %5523 = vmatmul.mubr.bf16.gmra.mrb[0].mxu0 %v5300
        %v5524 = vpop.f32.mrb[0].mxu0
        %v5525 = vadd.f32 0.0, %v5524
        %v5526 = vpop.f32.mrb[0].mxu0
        %v5527 = vpop.f32.mrb[0].mxu0
        %v5528 = vadd.f32 0.0, %v5527
        %v5529 = vpop.f32.mrb[0].mxu0
        %5530 = vmatprep.mubr.bf16.mxu0 0
        %5531 = vmatmul.mubr.bf16.gmra.mrb[0].mxu0 %v5301
        %v5532 = vpop.f32.mrb[0].mxu0
        %v5533 = vadd.f32 0.0, %v5532
        %v5534 = vpop.f32.mrb[0].mxu0
        %v5535 = vpop.f32.mrb[0].mxu0
        %v5536 = vadd.f32 0.0, %v5535
        %v5537 = vpop.f32.mrb[0].mxu0
        %5538 = vmatprep.mubr.bf16.mxu0 0
        %5539 = vmatmul.mubr.bf16.gmra.mrb[0].mxu0 %v5302
        %v5540 = vpop.f32.mrb[0].mxu0
        %v5541 = vadd.f32 0.0, %v5540
        %v5542 = vpop.f32.mrb[0].mxu0
        %v5543 = vpop.f32.mrb[0].mxu0
        %v5544 = vadd.f32 0.0, %v5543
        %v5545 = vpop.f32.mrb[0].mxu0
        %5546 = vmatprep.mubr.bf16.mxu0 0
        %5547 = vmatmul.mubr.bf16.gmra.mrb[0].mxu0 %v5303
        %v5548 = vpop.f32.mrb[0].mxu0
        %v5549 = vadd.f32 0.0, %v5548
        %v5550 = vpop.f32.mrb[0].mxu0
        %v5551 = vpop.f32.mrb[0].mxu0
        %v5552 = vadd.f32 0.0, %v5551
        %v5553 = vpop.f32.mrb[0].mxu0
        %5554 = vmatprep.mubr.bf16.mxu0 0
        %5555 = vmatmul.mubr.bf16.gmra.mrb[0].mxu0 %v5304
        %v5556 = vpop.f32.mrb[0].mxu0
        %v5557 = vadd.f32 0.0, %v5556
        %v5558 = vpop.f32.mrb[0].mxu0
        %v5559 = vpop.f32.mrb[0].mxu0
        %v5560 = vadd.f32 0.0, %v5559
        %v5561 = vpop.f32.mrb[0].mxu0
        %5562 = vdwg.mxu0
        %v5563 = vadd.f32 %v5305, %v5437
        %v5564 = vadd.f32 %v5306, %v5440
        %v5565 = vadd.f32 %v5307, %v5445
        %v5566 = vadd.f32 %v5308, %v5448
        %v5567 = vadd.f32 %v5309, %v5453
        %v5568 = vadd.f32 %v5310, %v5456
        %v5569 = vadd.f32 %v5311, %v5461
        %v5570 = vadd.f32 %v5312, %v5464
        %v5571 = vadd.f32 %v5313, %v5469
        %v5572 = vadd.f32 %v5314, %v5472
        %v5573 = vadd.f32 %v5315, %v5477
        %v5574 = vadd.f32 %v5316, %v5480
        %v5575 = vadd.f32 %v5317, %v5485
        %v5576 = vadd.f32 %v5318, %v5488
        %v5577 = vadd.f32 %v5319, %v5493
        %v5578 = vadd.f32 %v5320, %v5496
        %v5579 = vadd.f32 %v5321, %v5501
        %v5580 = vadd.f32 %v5322, %v5504
        %v5581 = vadd.f32 %v5323, %v5509
        %v5582 = vadd.f32 %v5324, %v5512
        %v5583 = vadd.f32 %v5325, %v5517
        %v5584 = vadd.f32 %v5326, %v5520
        %v5585 = vadd.f32 %v5327, %v5525
        %v5586 = vadd.f32 %v5328, %v5528
        %v5587 = vadd.f32 %v5329, %v5533
        %v5588 = vadd.f32 %v5330, %v5536
        %v5589 = vadd.f32 %v5331, %v5541
        %v5590 = vadd.f32 %v5332, %v5544
        %v5591 = vadd.f32 %v5333, %v5549
        %v5592 = vadd.f32 %v5334, %v5552
        %v5593 = vadd.f32 %v5335, %v5557
        %v5594 = vadd.f32 %v5336, %v5560
        %5595 = vst [vmem:[#allocation3] sm:$0xff] %v5563
        %5596 = vst [vmem:[#allocation3 + $0x8] sm:$0xff] %v5564
        %5597 = vst [vmem:[#allocation3 + $0x10] sm:$0xff] %v5565
        %5598 = vst [vmem:[#allocation3 + $0x18] sm:$0xff] %v5566
        %5599 = vst [vmem:[#allocation3 + $0x20] sm:$0xff] %v5567
        %5600 = vst [vmem:[#allocation3 + $0x28] sm:$0xff] %v5568
        %5601 = vst [vmem:[#allocation3 + $0x30] sm:$0xff] %v5569
        %5602 = vst [vmem:[#allocation3 + $0x38] sm:$0xff] %v5570
        %5603 = vst [vmem:[#allocation3 + $0x40] sm:$0xff] %v5571
        %5604 = vst [vmem:[#allocation3 + $0x48] sm:$0xff] %v5572
        %5605 = vst [vmem:[#allocation3 + $0x50] sm:$0xff] %v5573
        %5606 = vst [vmem:[#allocation3 + $0x58] sm:$0xff] %v5574
        %5607 = vst [vmem:[#allocation3 + $0x60] sm:$0xff] %v5575
        %5608 = vst [vmem:[#allocation3 + $0x68] sm:$0xff] %v5576
        %5609 = vst [vmem:[#allocation3 + $0x70] sm:$0xff] %v5577
        %5610 = vst [vmem:[#allocation3 + $0x78] sm:$0xff] %v5578
        %5611 = vst [vmem:[#allocation3 + $0x80] sm:$0xff] %v5579
        %5612 = vst [vmem:[#allocation3 + $0x88] sm:$0xff] %v5580
        %5613 = vst [vmem:[#allocation3 + $0x90] sm:$0xff] %v5581
        %5614 = vst [vmem:[#allocation3 + $0x98] sm:$0xff] %v5582
        %5615 = vst [vmem:[#allocation3 + $0xa0] sm:$0xff] %v5583
        %5616 = vst [vmem:[#allocation3 + $0xa8] sm:$0xff] %v5584
        %5617 = vst [vmem:[#allocation3 + $0xb0] sm:$0xff] %v5585
        %5618 = vst [vmem:[#allocation3 + $0xb8] sm:$0xff] %v5586
        %5619 = vst [vmem:[#allocation3 + $0xc0] sm:$0xff] %v5587
        %5620 = vst [vmem:[#allocation3 + $0xc8] sm:$0xff] %v5588
        %5621 = vst [vmem:[#allocation3 + $0xd0] sm:$0xff] %v5589
        %5622 = vst [vmem:[#allocation3 + $0xd8] sm:$0xff] %v5590
        %5623 = vst [vmem:[#allocation3 + $0xe0] sm:$0xff] %v5591
        %5624 = vst [vmem:[#allocation3 + $0xe8] sm:$0xff] %v5592
        %5625 = vst [vmem:[#allocation3 + $0xf0] sm:$0xff] %v5593
        %5626 = vst [vmem:[#allocation3 + $0xf8] sm:$0xff] %v5594
        %v5627 = vld [vmem:[%s330 + $0x1] sm:$0xff]
        %v5628 = vld [vmem:[%s330 + $0x9] sm:$0xff]
        %v5629 = vld [vmem:[%s330 + $0x19] sm:$0xff]
        %v5630 = vld [vmem:[%s330 + $0x21] sm:$0xff]
        %v5631 = vld [vmem:[%s330 + $0x31] sm:$0xff]
        %v5632 = vld [vmem:[%s330 + $0x39] sm:$0xff]
        %v5633 = vld [vmem:[%s330 + $0x49] sm:$0xff]
        %v5634 = vld [vmem:[%s330 + $0x51] sm:$0xff]
        %v5635 = vld [vmem:[%s330 + $0x61] sm:$0xff]
        %v5636 = vld [vmem:[%s330 + $0x69] sm:$0xff]
        %v5637 = vld [vmem:[%s330 + $0x79] sm:$0xff]
        %v5638 = vld [vmem:[%s330 + $0x81] sm:$0xff]
        %v5639 = vld [vmem:[%s330 + $0x91] sm:$0xff]
        %v5640 = vld [vmem:[%s330 + $0x99] sm:$0xff]
        %v5641 = vld [vmem:[%s330 + $0xa9] sm:$0xff]
        %v5642 = vld [vmem:[%s330 + $0xb1] sm:$0xff]
        %v5643 = vld [vmem:[%s330 + $0xc1] sm:$0xff]
        %v5644 = vld [vmem:[%s330 + $0xc9] sm:$0xff]
        %v5645 = vld [vmem:[%s330 + $0xd9] sm:$0xff]
        %v5646 = vld [vmem:[%s330 + $0xe1] sm:$0xff]
        %v5647 = vld [vmem:[%s330 + $0xf1] sm:$0xff]
        %v5648 = vld [vmem:[%s330 + $0xf9] sm:$0xff]
        %v5649 = vld [vmem:[%s330 + $0x109] sm:$0xff]
        %v5650 = vld [vmem:[%s330 + $0x111] sm:$0xff]
        %v5651 = vld [vmem:[%s330 + $0x121] sm:$0xff]
        %v5652 = vld [vmem:[%s330 + $0x129] sm:$0xff]
        %v5653 = vld [vmem:[%s330 + $0x139] sm:$0xff]
        %v5654 = vld [vmem:[%s330 + $0x141] sm:$0xff]
        %v5655 = vld [vmem:[%s330 + $0x151] sm:$0xff]
        %v5656 = vld [vmem:[%s330 + $0x159] sm:$0xff]
        %v5657 = vld [vmem:[%s330 + $0x169] sm:$0xff]
        %v5658 = vld [vmem:[%s330 + $0x171] sm:$0xff]
        %v5659 = vpack.c.bf16 %v5628, %v5627
        %v5660 = vpack.c.bf16 %v5630, %v5629
        %v5661 = vpack.c.bf16 %v5632, %v5631
        %v5662 = vpack.c.bf16 %v5634, %v5633
        %v5663 = vpack.c.bf16 %v5636, %v5635
        %v5664 = vpack.c.bf16 %v5638, %v5637
        %v5665 = vpack.c.bf16 %v5640, %v5639
        %v5666 = vpack.c.bf16 %v5642, %v5641
        %v5667 = vpack.c.bf16 %v5644, %v5643
        %v5668 = vpack.c.bf16 %v5646, %v5645
        %v5669 = vpack.c.bf16 %v5648, %v5647
        %v5670 = vpack.c.bf16 %v5650, %v5649
        %v5671 = vpack.c.bf16 %v5652, %v5651
        %v5672 = vpack.c.bf16 %v5654, %v5653
        %v5673 = vpack.c.bf16 %v5656, %v5655
        %v5674 = vpack.c.bf16 %v5658, %v5657
        %v5675 = vld [vmem:[#allocation3] sm:$0xff]
        %v5676 = vld [vmem:[#allocation3 + $0x8] sm:$0xff]
        %v5677 = vld [vmem:[#allocation3 + $0x10] sm:$0xff]
        %v5678 = vld [vmem:[#allocation3 + $0x18] sm:$0xff]
        %v5679 = vld [vmem:[#allocation3 + $0x20] sm:$0xff]
        %v5680 = vld [vmem:[#allocation3 + $0x28] sm:$0xff]
        %v5681 = vld [vmem:[#allocation3 + $0x30] sm:$0xff]
        %v5682 = vld [vmem:[#allocation3 + $0x38] sm:$0xff]
        %v5683 = vld [vmem:[#allocation3 + $0x40] sm:$0xff]
        %v5684 = vld [vmem:[#allocation3 + $0x48] sm:$0xff]
        %v5685 = vld [vmem:[#allocation3 + $0x50] sm:$0xff]
        %v5686 = vld [vmem:[#allocation3 + $0x58] sm:$0xff]
        %v5687 = vld [vmem:[#allocation3 + $0x60] sm:$0xff]
        %v5688 = vld [vmem:[#allocation3 + $0x68] sm:$0xff]
        %v5689 = vld [vmem:[#allocation3 + $0x70] sm:$0xff]
        %v5690 = vld [vmem:[#allocation3 + $0x78] sm:$0xff]
        %v5691 = vld [vmem:[#allocation3 + $0x80] sm:$0xff]
        %v5692 = vld [vmem:[#allocation3 + $0x88] sm:$0xff]
        %v5693 = vld [vmem:[#allocation3 + $0x90] sm:$0xff]
        %v5694 = vld [vmem:[#allocation3 + $0x98] sm:$0xff]
        %v5695 = vld [vmem:[#allocation3 + $0xa0] sm:$0xff]
        %v5696 = vld [vmem:[#allocation3 + $0xa8] sm:$0xff]
        %v5697 = vld [vmem:[#allocation3 + $0xb0] sm:$0xff]
        %v5698 = vld [vmem:[#allocation3 + $0xb8] sm:$0xff]
        %v5699 = vld [vmem:[#allocation3 + $0xc0] sm:$0xff]
        %v5700 = vld [vmem:[#allocation3 + $0xc8] sm:$0xff]
        %v5701 = vld [vmem:[#allocation3 + $0xd0] sm:$0xff]
        %v5702 = vld [vmem:[#allocation3 + $0xd8] sm:$0xff]
        %v5703 = vld [vmem:[#allocation3 + $0xe0] sm:$0xff]
        %v5704 = vld [vmem:[#allocation3 + $0xe8] sm:$0xff]
        %v5705 = vld [vmem:[#allocation3 + $0xf0] sm:$0xff]
        %v5706 = vld [vmem:[#allocation3 + $0xf8] sm:$0xff]
        %s5707 = scalar_lea.vmem [#allocation10], 256
        %v5708 = vld [vmem:[%s5707] sm:$0xf]
        %v5709 = vld [vmem:[%s5707 + $0x4] sm:$0xf]
        %v5710 = vld [vmem:[%s5707 + $0x8] sm:$0xf]
        %v5711 = vld [vmem:[%s5707 + $0xc] sm:$0xf]
        %v5712 = vld [vmem:[%s5707 + $0x10] sm:$0xf]
        %v5713 = vld [vmem:[%s5707 + $0x14] sm:$0xf]
        %v5714 = vld [vmem:[%s5707 + $0x18] sm:$0xf]
        %v5715 = vld [vmem:[%s5707 + $0x1c] sm:$0xf]
        %v5716 = vld [vmem:[%s5707 + $0x20] sm:$0xf]
        %v5717 = vld [vmem:[%s5707 + $0x24] sm:$0xf]
        %v5718 = vld [vmem:[%s5707 + $0x28] sm:$0xf]
        %v5719 = vld [vmem:[%s5707 + $0x2c] sm:$0xf]
        %v5720 = vld [vmem:[%s5707 + $0x30] sm:$0xf]
        %v5721 = vld [vmem:[%s5707 + $0x34] sm:$0xf]
        %v5722 = vld [vmem:[%s5707 + $0x38] sm:$0xf]
        %v5723 = vld [vmem:[%s5707 + $0x3c] sm:$0xf]
        %v5740 = vunpack.c.l.b16 %v5708
        %v5741 = vunpack.c.l.b16 %v5709
        %v5742 = vunpack.c.l.b16 %v5710
        %v5743 = vunpack.c.l.b16 %v5711
        %v5744 = vunpack.c.l.b16 %v5712
        %v5745 = vunpack.c.l.b16 %v5713
        %v5746 = vunpack.c.l.b16 %v5714
        %v5747 = vunpack.c.l.b16 %v5715
        %v5748 = vunpack.c.l.b16 %v5716
        %v5749 = vunpack.c.l.b16 %v5717
        %v5750 = vunpack.c.l.b16 %v5718
        %v5751 = vunpack.c.l.b16 %v5719
        %v5752 = vunpack.c.l.b16 %v5720
        %v5753 = vunpack.c.l.b16 %v5721
        %v5754 = vunpack.c.l.b16 %v5722
        %v5755 = vunpack.c.l.b16 %v5723
        %v5756 = vpack.c.b16 %v5741, %v5740
        %v5757 = vpack.c.b16 %v5743, %v5742
        %v5758 = vpack.c.b16 %v5745, %v5744
        %v5759 = vpack.c.b16 %v5747, %v5746
        %v5760 = vpack.c.b16 %v5749, %v5748
        %v5761 = vpack.c.b16 %v5751, %v5750
        %v5762 = vpack.c.b16 %v5753, %v5752
        %v5763 = vpack.c.b16 %v5755, %v5754
        %5772 = vmatprep.subr.bf16.mxu0 0
        %5773 = vmatpush1.bf16.msra.mxu0 %v5756
        %5774 = vmatprep.subr.bf16.mxu0 0
        %5775 = vmatpush1.bf16.msra.mxu0 %v5757
        %5776 = vmatprep.subr.bf16.mxu0 0
        %5777 = vmatpush1.bf16.msra.mxu0 %v5758
        %5778 = vmatprep.subr.bf16.mxu0 0
        %5779 = vmatpush1.bf16.msra.mxu0 %v5759
        %5780 = vmatprep.subr.bf16.mxu0 0
        %5781 = vmatpush1.bf16.msra.mxu0 %v5760
        %5782 = vmatprep.subr.bf16.mxu0 0
        %5783 = vmatpush1.bf16.msra.mxu0 %v5761
        %5784 = vmatprep.subr.bf16.mxu0 0
        %5785 = vmatpush1.bf16.msra.mxu0 %v5762
        %5786 = vmatprep.subr.bf16.mxu0 0
        %5787 = vmatpush1.bf16.msra.mxu0 %v5763
        %5788 = vmatprep.subr.bf16.mxu0 0
        %5789 = vmatpush1.bf16.msra.mxu0 0
        %5790 = vmatprep.subr.bf16.mxu0 0
        %5791 = vmatpush1.bf16.msra.mxu0 0
        %5792 = vmatprep.subr.bf16.mxu0 0
        %5793 = vmatpush1.bf16.msra.mxu0 0
        %5794 = vmatprep.subr.bf16.mxu0 0
        %5795 = vmatpush1.bf16.msra.mxu0 0
        %5796 = vmatprep.subr.bf16.mxu0 0
        %5797 = vmatpush1.bf16.msra.mxu0 0
        %5798 = vmatprep.subr.bf16.mxu0 0
        %5799 = vmatpush1.bf16.msra.mxu0 0
        %5800 = vmatprep.subr.bf16.mxu0 0
        %5801 = vmatpush1.bf16.msra.mxu0 0
        %5802 = vmatprep.subr.bf16.mxu0 0
        %5803 = vmatpush1.bf16.msra.mxu0 0
        %5804 = vmatprep.mubr.bf16.mxu0 0
        %5805 = vmatmul.mubr.bf16.gmra.mrb[0].mxu0 %v5659
        %v5806 = vpop.f32.mrb[0].mxu0
        %v5807 = vadd.f32 0.0, %v5806
        %v5808 = vpop.f32.mrb[0].mxu0
        %v5809 = vpop.f32.mrb[0].mxu0
        %v5810 = vadd.f32 0.0, %v5809
        %v5811 = vpop.f32.mrb[0].mxu0
        %5812 = vmatprep.mubr.bf16.mxu0 0
        %5813 = vmatmul.mubr.bf16.gmra.mrb[0].mxu0 %v5660
        %v5814 = vpop.f32.mrb[0].mxu0
        %v5815 = vadd.f32 0.0, %v5814
        %v5816 = vpop.f32.mrb[0].mxu0
        %v5817 = vpop.f32.mrb[0].mxu0
        %v5818 = vadd.f32 0.0, %v5817
        %v5819 = vpop.f32.mrb[0].mxu0
        %5820 = vmatprep.mubr.bf16.mxu0 0
        %5821 = vmatmul.mubr.bf16.gmra.mrb[0].mxu0 %v5661
        %v5822 = vpop.f32.mrb[0].mxu0
        %v5823 = vadd.f32 0.0, %v5822
        %v5824 = vpop.f32.mrb[0].mxu0
        %v5825 = vpop.f32.mrb[0].mxu0
        %v5826 = vadd.f32 0.0, %v5825
        %v5827 = vpop.f32.mrb[0].mxu0
        %5828 = vmatprep.mubr.bf16.mxu0 0
        %5829 = vmatmul.mubr.bf16.gmra.mrb[0].mxu0 %v5662
        %v5830 = vpop.f32.mrb[0].mxu0
        %v5831 = vadd.f32 0.0, %v5830
        %v5832 = vpop.f32.mrb[0].mxu0
        %v5833 = vpop.f32.mrb[0].mxu0
        %v5834 = vadd.f32 0.0, %v5833
        %v5835 = vpop.f32.mrb[0].mxu0
        %5836 = vmatprep.mubr.bf16.mxu0 0
        %5837 = vmatmul.mubr.bf16.gmra.mrb[0].mxu0 %v5663
        %v5838 = vpop.f32.mrb[0].mxu0
        %v5839 = vadd.f32 0.0, %v5838
        %v5840 = vpop.f32.mrb[0].mxu0
        %v5841 = vpop.f32.mrb[0].mxu0
        %v5842 = vadd.f32 0.0, %v5841
        %v5843 = vpop.f32.mrb[0].mxu0
        %5844 = vmatprep.mubr.bf16.mxu0 0
        %5845 = vmatmul.mubr.bf16.gmra.mrb[0].mxu0 %v5664
        %v5846 = vpop.f32.mrb[0].mxu0
        %v5847 = vadd.f32 0.0, %v5846
        %v5848 = vpop.f32.mrb[0].mxu0
        %v5849 = vpop.f32.mrb[0].mxu0
        %v5850 = vadd.f32 0.0, %v5849
        %v5851 = vpop.f32.mrb[0].mxu0
        %5852 = vmatprep.mubr.bf16.mxu0 0
        %5853 = vmatmul.mubr.bf16.gmra.mrb[0].mxu0 %v5665
        %v5854 = vpop.f32.mrb[0].mxu0
        %v5855 = vadd.f32 0.0, %v5854
        %v5856 = vpop.f32.mrb[0].mxu0
        %v5857 = vpop.f32.mrb[0].mxu0
        %v5858 = vadd.f32 0.0, %v5857
        %v5859 = vpop.f32.mrb[0].mxu0
        %5860 = vmatprep.mubr.bf16.mxu0 0
        %5861 = vmatmul.mubr.bf16.gmra.mrb[0].mxu0 %v5666
        %v5862 = vpop.f32.mrb[0].mxu0
        %v5863 = vadd.f32 0.0, %v5862
        %v5864 = vpop.f32.mrb[0].mxu0
        %v5865 = vpop.f32.mrb[0].mxu0
        %v5866 = vadd.f32 0.0, %v5865
        %v5867 = vpop.f32.mrb[0].mxu0
        %5868 = vmatprep.mubr.bf16.mxu0 0
        %5869 = vmatmul.mubr.bf16.gmra.mrb[0].mxu0 %v5667
        %v5870 = vpop.f32.mrb[0].mxu0
        %v5871 = vadd.f32 0.0, %v5870
        %v5872 = vpop.f32.mrb[0].mxu0
        %v5873 = vpop.f32.mrb[0].mxu0
        %v5874 = vadd.f32 0.0, %v5873
        %v5875 = vpop.f32.mrb[0].mxu0
        %5876 = vmatprep.mubr.bf16.mxu0 0
        %5877 = vmatmul.mubr.bf16.gmra.mrb[0].mxu0 %v5668
        %v5878 = vpop.f32.mrb[0].mxu0
        %v5879 = vadd.f32 0.0, %v5878
        %v5880 = vpop.f32.mrb[0].mxu0
        %v5881 = vpop.f32.mrb[0].mxu0
        %v5882 = vadd.f32 0.0, %v5881
        %v5883 = vpop.f32.mrb[0].mxu0
        %5884 = vmatprep.mubr.bf16.mxu0 0
        %5885 = vmatmul.mubr.bf16.gmra.mrb[0].mxu0 %v5669
        %v5886 = vpop.f32.mrb[0].mxu0
        %v5887 = vadd.f32 0.0, %v5886
        %v5888 = vpop.f32.mrb[0].mxu0
        %v5889 = vpop.f32.mrb[0].mxu0
        %v5890 = vadd.f32 0.0, %v5889
        %v5891 = vpop.f32.mrb[0].mxu0
        %5892 = vmatprep.mubr.bf16.mxu0 0
        %5893 = vmatmul.mubr.bf16.gmra.mrb[0].mxu0 %v5670
        %v5894 = vpop.f32.mrb[0].mxu0
        %v5895 = vadd.f32 0.0, %v5894
        %v5896 = vpop.f32.mrb[0].mxu0
        %v5897 = vpop.f32.mrb[0].mxu0
        %v5898 = vadd.f32 0.0, %v5897
        %v5899 = vpop.f32.mrb[0].mxu0
        %5900 = vmatprep.mubr.bf16.mxu0 0
        %5901 = vmatmul.mubr.bf16.gmra.mrb[0].mxu0 %v5671
        %v5902 = vpop.f32.mrb[0].mxu0
        %v5903 = vadd.f32 0.0, %v5902
        %v5904 = vpop.f32.mrb[0].mxu0
        %v5905 = vpop.f32.mrb[0].mxu0
        %v5906 = vadd.f32 0.0, %v5905
        %v5907 = vpop.f32.mrb[0].mxu0
        %5908 = vmatprep.mubr.bf16.mxu0 0
        %5909 = vmatmul.mubr.bf16.gmra.mrb[0].mxu0 %v5672
        %v5910 = vpop.f32.mrb[0].mxu0
        %v5911 = vadd.f32 0.0, %v5910
        %v5912 = vpop.f32.mrb[0].mxu0
        %v5913 = vpop.f32.mrb[0].mxu0
        %v5914 = vadd.f32 0.0, %v5913
        %v5915 = vpop.f32.mrb[0].mxu0
        %5916 = vmatprep.mubr.bf16.mxu0 0
        %5917 = vmatmul.mubr.bf16.gmra.mrb[0].mxu0 %v5673
        %v5918 = vpop.f32.mrb[0].mxu0
        %v5919 = vadd.f32 0.0, %v5918
        %v5920 = vpop.f32.mrb[0].mxu0
        %v5921 = vpop.f32.mrb[0].mxu0
        %v5922 = vadd.f32 0.0, %v5921
        %v5923 = vpop.f32.mrb[0].mxu0
        %5924 = vmatprep.mubr.bf16.mxu0 0
        %5925 = vmatmul.mubr.bf16.gmra.mrb[0].mxu0 %v5674
        %v5926 = vpop.f32.mrb[0].mxu0
        %v5927 = vadd.f32 0.0, %v5926
        %v5928 = vpop.f32.mrb[0].mxu0
        %v5929 = vpop.f32.mrb[0].mxu0
        %v5930 = vadd.f32 0.0, %v5929
        %v5931 = vpop.f32.mrb[0].mxu0
        %5932 = vdwg.mxu0
        %v5933 = vadd.f32 %v5675, %v5807
        %v5934 = vadd.f32 %v5676, %v5810
        %v5935 = vadd.f32 %v5677, %v5815
        %v5936 = vadd.f32 %v5678, %v5818
        %v5937 = vadd.f32 %v5679, %v5823
        %v5938 = vadd.f32 %v5680, %v5826
        %v5939 = vadd.f32 %v5681, %v5831
        %v5940 = vadd.f32 %v5682, %v5834
        %v5941 = vadd.f32 %v5683, %v5839
        %v5942 = vadd.f32 %v5684, %v5842
        %v5943 = vadd.f32 %v5685, %v5847
        %v5944 = vadd.f32 %v5686, %v5850
        %v5945 = vadd.f32 %v5687, %v5855
        %v5946 = vadd.f32 %v5688, %v5858
        %v5947 = vadd.f32 %v5689, %v5863
        %v5948 = vadd.f32 %v5690, %v5866
        %v5949 = vadd.f32 %v5691, %v5871
        %v5950 = vadd.f32 %v5692, %v5874
        %v5951 = vadd.f32 %v5693, %v5879
        %v5952 = vadd.f32 %v5694, %v5882
        %v5953 = vadd.f32 %v5695, %v5887
        %v5954 = vadd.f32 %v5696, %v5890
        %v5955 = vadd.f32 %v5697, %v5895
        %v5956 = vadd.f32 %v5698, %v5898
        %v5957 = vadd.f32 %v5699, %v5903
        %v5958 = vadd.f32 %v5700, %v5906
        %v5959 = vadd.f32 %v5701, %v5911
        %v5960 = vadd.f32 %v5702, %v5914
        %v5961 = vadd.f32 %v5703, %v5919
        %v5962 = vadd.f32 %v5704, %v5922
        %v5963 = vadd.f32 %v5705, %v5927
        %v5964 = vadd.f32 %v5706, %v5930
        %5965 = vst [vmem:[#allocation3] sm:$0xff] %v5933
        %5966 = vst [vmem:[#allocation3 + $0x8] sm:$0xff] %v5934
        %5967 = vst [vmem:[#allocation3 + $0x10] sm:$0xff] %v5935
        %5968 = vst [vmem:[#allocation3 + $0x18] sm:$0xff] %v5936
        %5969 = vst [vmem:[#allocation3 + $0x20] sm:$0xff] %v5937
        %5970 = vst [vmem:[#allocation3 + $0x28] sm:$0xff] %v5938
        %5971 = vst [vmem:[#allocation3 + $0x30] sm:$0xff] %v5939
        %5972 = vst [vmem:[#allocation3 + $0x38] sm:$0xff] %v5940
        %5973 = vst [vmem:[#allocation3 + $0x40] sm:$0xff] %v5941
        %5974 = vst [vmem:[#allocation3 + $0x48] sm:$0xff] %v5942
        %5975 = vst [vmem:[#allocation3 + $0x50] sm:$0xff] %v5943
        %5976 = vst [vmem:[#allocation3 + $0x58] sm:$0xff] %v5944
        %5977 = vst [vmem:[#allocation3 + $0x60] sm:$0xff] %v5945
        %5978 = vst [vmem:[#allocation3 + $0x68] sm:$0xff] %v5946
        %5979 = vst [vmem:[#allocation3 + $0x70] sm:$0xff] %v5947
        %5980 = vst [vmem:[#allocation3 + $0x78] sm:$0xff] %v5948
        %5981 = vst [vmem:[#allocation3 + $0x80] sm:$0xff] %v5949
        %5982 = vst [vmem:[#allocation3 + $0x88] sm:$0xff] %v5950
        %5983 = vst [vmem:[#allocation3 + $0x90] sm:$0xff] %v5951
        %5984 = vst [vmem:[#allocation3 + $0x98] sm:$0xff] %v5952
        %5985 = vst [vmem:[#allocation3 + $0xa0] sm:$0xff] %v5953
        %5986 = vst [vmem:[#allocation3 + $0xa8] sm:$0xff] %v5954
        %5987 = vst [vmem:[#allocation3 + $0xb0] sm:$0xff] %v5955
        %5988 = vst [vmem:[#allocation3 + $0xb8] sm:$0xff] %v5956
        %5989 = vst [vmem:[#allocation3 + $0xc0] sm:$0xff] %v5957
        %5990 = vst [vmem:[#allocation3 + $0xc8] sm:$0xff] %v5958
        %5991 = vst [vmem:[#allocation3 + $0xd0] sm:$0xff] %v5959
        %5992 = vst [vmem:[#allocation3 + $0xd8] sm:$0xff] %v5960
        %5993 = vst [vmem:[#allocation3 + $0xe0] sm:$0xff] %v5961
        %5994 = vst [vmem:[#allocation3 + $0xe8] sm:$0xff] %v5962
        %5995 = vst [vmem:[#allocation3 + $0xf0] sm:$0xff] %v5963
        %5996 = vst [vmem:[#allocation3 + $0xf8] sm:$0xff] %v5964
        %v5997 = vld [vmem:[%s330 + $0x2] sm:$0xff]
        %v5998 = vld [vmem:[%s330 + $0xa] sm:$0xff]
        %v5999 = vld [vmem:[%s330 + $0x1a] sm:$0xff]
        %v6000 = vld [vmem:[%s330 + $0x22] sm:$0xff]
        %v6001 = vld [vmem:[%s330 + $0x32] sm:$0xff]
        %v6002 = vld [vmem:[%s330 + $0x3a] sm:$0xff]
        %v6003 = vld [vmem:[%s330 + $0x4a] sm:$0xff]
        %v6004 = vld [vmem:[%s330 + $0x52] sm:$0xff]
        %v6005 = vld [vmem:[%s330 + $0x62] sm:$0xff]
        %v6006 = vld [vmem:[%s330 + $0x6a] sm:$0xff]
        %v6007 = vld [vmem:[%s330 + $0x7a] sm:$0xff]
        %v6008 = vld [vmem:[%s330 + $0x82] sm:$0xff]
        %v6009 = vld [vmem:[%s330 + $0x92] sm:$0xff]
        %v6010 = vld [vmem:[%s330 + $0x9a] sm:$0xff]
        %v6011 = vld [vmem:[%s330 + $0xaa] sm:$0xff]
        %v6012 = vld [vmem:[%s330 + $0xb2] sm:$0xff]
        %v6013 = vld [vmem:[%s330 + $0xc2] sm:$0xff]
        %v6014 = vld [vmem:[%s330 + $0xca] sm:$0xff]
        %v6015 = vld [vmem:[%s330 + $0xda] sm:$0xff]
        %v6016 = vld [vmem:[%s330 + $0xe2] sm:$0xff]
        %v6017 = vld [vmem:[%s330 + $0xf2] sm:$0xff]
        %v6018 = vld [vmem:[%s330 + $0xfa] sm:$0xff]
        %v6019 = vld [vmem:[%s330 + $0x10a] sm:$0xff]
        %v6020 = vld [vmem:[%s330 + $0x112] sm:$0xff]
        %v6021 = vld [vmem:[%s330 + $0x122] sm:$0xff]
        %v6022 = vld [vmem:[%s330 + $0x12a] sm:$0xff]
        %v6023 = vld [vmem:[%s330 + $0x13a] sm:$0xff]
        %v6024 = vld [vmem:[%s330 + $0x142] sm:$0xff]
        %v6025 = vld [vmem:[%s330 + $0x152] sm:$0xff]
        %v6026 = vld [vmem:[%s330 + $0x15a] sm:$0xff]
        %v6027 = vld [vmem:[%s330 + $0x16a] sm:$0xff]
        %v6028 = vld [vmem:[%s330 + $0x172] sm:$0xff]
        %v6029 = vpack.c.bf16 %v5998, %v5997
        %v6030 = vpack.c.bf16 %v6000, %v5999
        %v6031 = vpack.c.bf16 %v6002, %v6001
        %v6032 = vpack.c.bf16 %v6004, %v6003
        %v6033 = vpack.c.bf16 %v6006, %v6005
        %v6034 = vpack.c.bf16 %v6008, %v6007
        %v6035 = vpack.c.bf16 %v6010, %v6009
        %v6036 = vpack.c.bf16 %v6012, %v6011
        %v6037 = vpack.c.bf16 %v6014, %v6013
        %v6038 = vpack.c.bf16 %v6016, %v6015
        %v6039 = vpack.c.bf16 %v6018, %v6017
        %v6040 = vpack.c.bf16 %v6020, %v6019
        %v6041 = vpack.c.bf16 %v6022, %v6021
        %v6042 = vpack.c.bf16 %v6024, %v6023
        %v6043 = vpack.c.bf16 %v6026, %v6025
        %v6044 = vpack.c.bf16 %v6028, %v6027
        %v6045 = vld [vmem:[#allocation3] sm:$0xff]
        %v6046 = vld [vmem:[#allocation3 + $0x8] sm:$0xff]
        %v6047 = vld [vmem:[#allocation3 + $0x10] sm:$0xff]
        %v6048 = vld [vmem:[#allocation3 + $0x18] sm:$0xff]
        %v6049 = vld [vmem:[#allocation3 + $0x20] sm:$0xff]
        %v6050 = vld [vmem:[#allocation3 + $0x28] sm:$0xff]
        %v6051 = vld [vmem:[#allocation3 + $0x30] sm:$0xff]
        %v6052 = vld [vmem:[#allocation3 + $0x38] sm:$0xff]
        %v6053 = vld [vmem:[#allocation3 + $0x40] sm:$0xff]
        %v6054 = vld [vmem:[#allocation3 + $0x48] sm:$0xff]
        %v6055 = vld [vmem:[#allocation3 + $0x50] sm:$0xff]
        %v6056 = vld [vmem:[#allocation3 + $0x58] sm:$0xff]
        %v6057 = vld [vmem:[#allocation3 + $0x60] sm:$0xff]
        %v6058 = vld [vmem:[#allocation3 + $0x68] sm:$0xff]
        %v6059 = vld [vmem:[#allocation3 + $0x70] sm:$0xff]
        %v6060 = vld [vmem:[#allocation3 + $0x78] sm:$0xff]
        %v6061 = vld [vmem:[#allocation3 + $0x80] sm:$0xff]
        %v6062 = vld [vmem:[#allocation3 + $0x88] sm:$0xff]
        %v6063 = vld [vmem:[#allocation3 + $0x90] sm:$0xff]
        %v6064 = vld [vmem:[#allocation3 + $0x98] sm:$0xff]
        %v6065 = vld [vmem:[#allocation3 + $0xa0] sm:$0xff]
        %v6066 = vld [vmem:[#allocation3 + $0xa8] sm:$0xff]
        %v6067 = vld [vmem:[#allocation3 + $0xb0] sm:$0xff]
        %v6068 = vld [vmem:[#allocation3 + $0xb8] sm:$0xff]
        %v6069 = vld [vmem:[#allocation3 + $0xc0] sm:$0xff]
        %v6070 = vld [vmem:[#allocation3 + $0xc8] sm:$0xff]
        %v6071 = vld [vmem:[#allocation3 + $0xd0] sm:$0xff]
        %v6072 = vld [vmem:[#allocation3 + $0xd8] sm:$0xff]
        %v6073 = vld [vmem:[#allocation3 + $0xe0] sm:$0xff]
        %v6074 = vld [vmem:[#allocation3 + $0xe8] sm:$0xff]
        %v6075 = vld [vmem:[#allocation3 + $0xf0] sm:$0xff]
        %v6076 = vld [vmem:[#allocation3 + $0xf8] sm:$0xff]
        %s6077 = scalar_lea.vmem [#allocation10], 320
        %v6078 = vld [vmem:[%s6077] sm:$0xf]
        %v6079 = vld [vmem:[%s6077 + $0x4] sm:$0xf]
        %v6080 = vld [vmem:[%s6077 + $0x8] sm:$0xf]
        %v6081 = vld [vmem:[%s6077 + $0xc] sm:$0xf]
        %v6082 = vld [vmem:[%s6077 + $0x10] sm:$0xf]
        %v6083 = vld [vmem:[%s6077 + $0x14] sm:$0xf]
        %v6084 = vld [vmem:[%s6077 + $0x18] sm:$0xf]
        %v6085 = vld [vmem:[%s6077 + $0x1c] sm:$0xf]
        %v6086 = vld [vmem:[%s6077 + $0x20] sm:$0xf]
        %v6087 = vld [vmem:[%s6077 + $0x24] sm:$0xf]
        %v6088 = vld [vmem:[%s6077 + $0x28] sm:$0xf]
        %v6089 = vld [vmem:[%s6077 + $0x2c] sm:$0xf]
        %v6090 = vld [vmem:[%s6077 + $0x30] sm:$0xf]
        %v6091 = vld [vmem:[%s6077 + $0x34] sm:$0xf]
        %v6092 = vld [vmem:[%s6077 + $0x38] sm:$0xf]
        %v6093 = vld [vmem:[%s6077 + $0x3c] sm:$0xf]
        %v6110 = vunpack.c.l.b16 %v6078
        %v6111 = vunpack.c.l.b16 %v6079
        %v6112 = vunpack.c.l.b16 %v6080
        %v6113 = vunpack.c.l.b16 %v6081
        %v6114 = vunpack.c.l.b16 %v6082
        %v6115 = vunpack.c.l.b16 %v6083
        %v6116 = vunpack.c.l.b16 %v6084
        %v6117 = vunpack.c.l.b16 %v6085
        %v6118 = vunpack.c.l.b16 %v6086
        %v6119 = vunpack.c.l.b16 %v6087
        %v6120 = vunpack.c.l.b16 %v6088
        %v6121 = vunpack.c.l.b16 %v6089
        %v6122 = vunpack.c.l.b16 %v6090
        %v6123 = vunpack.c.l.b16 %v6091
        %v6124 = vunpack.c.l.b16 %v6092
        %v6125 = vunpack.c.l.b16 %v6093
        %v6126 = vpack.c.b16 %v6111, %v6110
        %v6127 = vpack.c.b16 %v6113, %v6112
        %v6128 = vpack.c.b16 %v6115, %v6114
        %v6129 = vpack.c.b16 %v6117, %v6116
        %v6130 = vpack.c.b16 %v6119, %v6118
        %v6131 = vpack.c.b16 %v6121, %v6120
        %v6132 = vpack.c.b16 %v6123, %v6122
        %v6133 = vpack.c.b16 %v6125, %v6124
        %6142 = vmatprep.subr.bf16.mxu0 0
        %6143 = vmatpush1.bf16.msra.mxu0 %v6126
        %6144 = vmatprep.subr.bf16.mxu0 0
        %6145 = vmatpush1.bf16.msra.mxu0 %v6127
        %6146 = vmatprep.subr.bf16.mxu0 0
        %6147 = vmatpush1.bf16.msra.mxu0 %v6128
        %6148 = vmatprep.subr.bf16.mxu0 0
        %6149 = vmatpush1.bf16.msra.mxu0 %v6129
        %6150 = vmatprep.subr.bf16.mxu0 0
        %6151 = vmatpush1.bf16.msra.mxu0 %v6130
        %6152 = vmatprep.subr.bf16.mxu0 0
        %6153 = vmatpush1.bf16.msra.mxu0 %v6131
        %6154 = vmatprep.subr.bf16.mxu0 0
        %6155 = vmatpush1.bf16.msra.mxu0 %v6132
        %6156 = vmatprep.subr.bf16.mxu0 0
        %6157 = vmatpush1.bf16.msra.mxu0 %v6133
        %6158 = vmatprep.subr.bf16.mxu0 0
        %6159 = vmatpush1.bf16.msra.mxu0 0
        %6160 = vmatprep.subr.bf16.mxu0 0
        %6161 = vmatpush1.bf16.msra.mxu0 0
        %6162 = vmatprep.subr.bf16.mxu0 0
        %6163 = vmatpush1.bf16.msra.mxu0 0
        %6164 = vmatprep.subr.bf16.mxu0 0
        %6165 = vmatpush1.bf16.msra.mxu0 0
        %6166 = vmatprep.subr.bf16.mxu0 0
        %6167 = vmatpush1.bf16.msra.mxu0 0
        %6168 = vmatprep.subr.bf16.mxu0 0
        %6169 = vmatpush1.bf16.msra.mxu0 0
        %6170 = vmatprep.subr.bf16.mxu0 0
        %6171 = vmatpush1.bf16.msra.mxu0 0
        %6172 = vmatprep.subr.bf16.mxu0 0
        %6173 = vmatpush1.bf16.msra.mxu0 0
        %6174 = vmatprep.mubr.bf16.mxu0 0
        %6175 = vmatmul.mubr.bf16.gmra.mrb[0].mxu0 %v6029
        %v6176 = vpop.f32.mrb[0].mxu0
        %v6177 = vadd.f32 0.0, %v6176
        %v6178 = vpop.f32.mrb[0].mxu0
        %v6179 = vpop.f32.mrb[0].mxu0
        %v6180 = vadd.f32 0.0, %v6179
        %v6181 = vpop.f32.mrb[0].mxu0
        %6182 = vmatprep.mubr.bf16.mxu0 0
        %6183 = vmatmul.mubr.bf16.gmra.mrb[0].mxu0 %v6030
        %v6184 = vpop.f32.mrb[0].mxu0
        %v6185 = vadd.f32 0.0, %v6184
        %v6186 = vpop.f32.mrb[0].mxu0
        %v6187 = vpop.f32.mrb[0].mxu0
        %v6188 = vadd.f32 0.0, %v6187
        %v6189 = vpop.f32.mrb[0].mxu0
        %6190 = vmatprep.mubr.bf16.mxu0 0
        %6191 = vmatmul.mubr.bf16.gmra.mrb[0].mxu0 %v6031
        %v6192 = vpop.f32.mrb[0].mxu0
        %v6193 = vadd.f32 0.0, %v6192
        %v6194 = vpop.f32.mrb[0].mxu0
        %v6195 = vpop.f32.mrb[0].mxu0
        %v6196 = vadd.f32 0.0, %v6195
        %v6197 = vpop.f32.mrb[0].mxu0
        %6198 = vmatprep.mubr.bf16.mxu0 0
        %6199 = vmatmul.mubr.bf16.gmra.mrb[0].mxu0 %v6032
        %v6200 = vpop.f32.mrb[0].mxu0
        %v6201 = vadd.f32 0.0, %v6200
        %v6202 = vpop.f32.mrb[0].mxu0
        %v6203 = vpop.f32.mrb[0].mxu0
        %v6204 = vadd.f32 0.0, %v6203
        %v6205 = vpop.f32.mrb[0].mxu0
        %6206 = vmatprep.mubr.bf16.mxu0 0
        %6207 = vmatmul.mubr.bf16.gmra.mrb[0].mxu0 %v6033
        %v6208 = vpop.f32.mrb[0].mxu0
        %v6209 = vadd.f32 0.0, %v6208
        %v6210 = vpop.f32.mrb[0].mxu0
        %v6211 = vpop.f32.mrb[0].mxu0
        %v6212 = vadd.f32 0.0, %v6211
        %v6213 = vpop.f32.mrb[0].mxu0
        %6214 = vmatprep.mubr.bf16.mxu0 0
        %6215 = vmatmul.mubr.bf16.gmra.mrb[0].mxu0 %v6034
        %v6216 = vpop.f32.mrb[0].mxu0
        %v6217 = vadd.f32 0.0, %v6216
        %v6218 = vpop.f32.mrb[0].mxu0
        %v6219 = vpop.f32.mrb[0].mxu0
        %v6220 = vadd.f32 0.0, %v6219
        %v6221 = vpop.f32.mrb[0].mxu0
        %6222 = vmatprep.mubr.bf16.mxu0 0
        %6223 = vmatmul.mubr.bf16.gmra.mrb[0].mxu0 %v6035
        %v6224 = vpop.f32.mrb[0].mxu0
        %v6225 = vadd.f32 0.0, %v6224
        %v6226 = vpop.f32.mrb[0].mxu0
        %v6227 = vpop.f32.mrb[0].mxu0
        %v6228 = vadd.f32 0.0, %v6227
        %v6229 = vpop.f32.mrb[0].mxu0
        %6230 = vmatprep.mubr.bf16.mxu0 0
        %6231 = vmatmul.mubr.bf16.gmra.mrb[0].mxu0 %v6036
        %v6232 = vpop.f32.mrb[0].mxu0
        %v6233 = vadd.f32 0.0, %v6232
        %v6234 = vpop.f32.mrb[0].mxu0
        %v6235 = vpop.f32.mrb[0].mxu0
        %v6236 = vadd.f32 0.0, %v6235
        %v6237 = vpop.f32.mrb[0].mxu0
        %6238 = vmatprep.mubr.bf16.mxu0 0
        %6239 = vmatmul.mubr.bf16.gmra.mrb[0].mxu0 %v6037
        %v6240 = vpop.f32.mrb[0].mxu0
        %v6241 = vadd.f32 0.0, %v6240
        %v6242 = vpop.f32.mrb[0].mxu0
        %v6243 = vpop.f32.mrb[0].mxu0
        %v6244 = vadd.f32 0.0, %v6243
        %v6245 = vpop.f32.mrb[0].mxu0
        %6246 = vmatprep.mubr.bf16.mxu0 0
        %6247 = vmatmul.mubr.bf16.gmra.mrb[0].mxu0 %v6038
        %v6248 = vpop.f32.mrb[0].mxu0
        %v6249 = vadd.f32 0.0, %v6248
        %v6250 = vpop.f32.mrb[0].mxu0
        %v6251 = vpop.f32.mrb[0].mxu0
        %v6252 = vadd.f32 0.0, %v6251
        %v6253 = vpop.f32.mrb[0].mxu0
        %6254 = vmatprep.mubr.bf16.mxu0 0
        %6255 = vmatmul.mubr.bf16.gmra.mrb[0].mxu0 %v6039
        %v6256 = vpop.f32.mrb[0].mxu0
        %v6257 = vadd.f32 0.0, %v6256
        %v6258 = vpop.f32.mrb[0].mxu0
        %v6259 = vpop.f32.mrb[0].mxu0
        %v6260 = vadd.f32 0.0, %v6259
        %v6261 = vpop.f32.mrb[0].mxu0
        %6262 = vmatprep.mubr.bf16.mxu0 0
        %6263 = vmatmul.mubr.bf16.gmra.mrb[0].mxu0 %v6040
        %v6264 = vpop.f32.mrb[0].mxu0
        %v6265 = vadd.f32 0.0, %v6264
        %v6266 = vpop.f32.mrb[0].mxu0
        %v6267 = vpop.f32.mrb[0].mxu0
        %v6268 = vadd.f32 0.0, %v6267
        %v6269 = vpop.f32.mrb[0].mxu0
        %6270 = vmatprep.mubr.bf16.mxu0 0
        %6271 = vmatmul.mubr.bf16.gmra.mrb[0].mxu0 %v6041
        %v6272 = vpop.f32.mrb[0].mxu0
        %v6273 = vadd.f32 0.0, %v6272
        %v6274 = vpop.f32.mrb[0].mxu0
        %v6275 = vpop.f32.mrb[0].mxu0
        %v6276 = vadd.f32 0.0, %v6275
        %v6277 = vpop.f32.mrb[0].mxu0
        %6278 = vmatprep.mubr.bf16.mxu0 0
        %6279 = vmatmul.mubr.bf16.gmra.mrb[0].mxu0 %v6042
        %v6280 = vpop.f32.mrb[0].mxu0
        %v6281 = vadd.f32 0.0, %v6280
        %v6282 = vpop.f32.mrb[0].mxu0
        %v6283 = vpop.f32.mrb[0].mxu0
        %v6284 = vadd.f32 0.0, %v6283
        %v6285 = vpop.f32.mrb[0].mxu0
        %6286 = vmatprep.mubr.bf16.mxu0 0
        %6287 = vmatmul.mubr.bf16.gmra.mrb[0].mxu0 %v6043
        %v6288 = vpop.f32.mrb[0].mxu0
        %v6289 = vadd.f32 0.0, %v6288
        %v6290 = vpop.f32.mrb[0].mxu0
        %v6291 = vpop.f32.mrb[0].mxu0
        %v6292 = vadd.f32 0.0, %v6291
        %v6293 = vpop.f32.mrb[0].mxu0
        %6294 = vmatprep.mubr.bf16.mxu0 0
        %6295 = vmatmul.mubr.bf16.gmra.mrb[0].mxu0 %v6044
        %v6296 = vpop.f32.mrb[0].mxu0
        %v6297 = vadd.f32 0.0, %v6296
        %v6298 = vpop.f32.mrb[0].mxu0
        %v6299 = vpop.f32.mrb[0].mxu0
        %v6300 = vadd.f32 0.0, %v6299
        %v6301 = vpop.f32.mrb[0].mxu0
        %6302 = vdwg.mxu0
        %v6303 = vadd.f32 %v6045, %v6177
        %v6304 = vadd.f32 %v6046, %v6180
        %v6305 = vadd.f32 %v6047, %v6185
        %v6306 = vadd.f32 %v6048, %v6188
        %v6307 = vadd.f32 %v6049, %v6193
        %v6308 = vadd.f32 %v6050, %v6196
        %v6309 = vadd.f32 %v6051, %v6201
        %v6310 = vadd.f32 %v6052, %v6204
        %v6311 = vadd.f32 %v6053, %v6209
        %v6312 = vadd.f32 %v6054, %v6212
        %v6313 = vadd.f32 %v6055, %v6217
        %v6314 = vadd.f32 %v6056, %v6220
        %v6315 = vadd.f32 %v6057, %v6225
        %v6316 = vadd.f32 %v6058, %v6228
        %v6317 = vadd.f32 %v6059, %v6233
        %v6318 = vadd.f32 %v6060, %v6236
        %v6319 = vadd.f32 %v6061, %v6241
        %v6320 = vadd.f32 %v6062, %v6244
        %v6321 = vadd.f32 %v6063, %v6249
        %v6322 = vadd.f32 %v6064, %v6252
        %v6323 = vadd.f32 %v6065, %v6257
        %v6324 = vadd.f32 %v6066, %v6260
        %v6325 = vadd.f32 %v6067, %v6265
        %v6326 = vadd.f32 %v6068, %v6268
        %v6327 = vadd.f32 %v6069, %v6273
        %v6328 = vadd.f32 %v6070, %v6276
        %v6329 = vadd.f32 %v6071, %v6281
        %v6330 = vadd.f32 %v6072, %v6284
        %v6331 = vadd.f32 %v6073, %v6289
        %v6332 = vadd.f32 %v6074, %v6292
        %v6333 = vadd.f32 %v6075, %v6297
        %v6334 = vadd.f32 %v6076, %v6300
        %6335 = vst [vmem:[#allocation3] sm:$0xff] %v6303
        %6336 = vst [vmem:[#allocation3 + $0x8] sm:$0xff] %v6304
        %6337 = vst [vmem:[#allocation3 + $0x10] sm:$0xff] %v6305
        %6338 = vst [vmem:[#allocation3 + $0x18] sm:$0xff] %v6306
        %6339 = vst [vmem:[#allocation3 + $0x20] sm:$0xff] %v6307
        %6340 = vst [vmem:[#allocation3 + $0x28] sm:$0xff] %v6308
        %6341 = vst [vmem:[#allocation3 + $0x30] sm:$0xff] %v6309
        %6342 = vst [vmem:[#allocation3 + $0x38] sm:$0xff] %v6310
        %6343 = vst [vmem:[#allocation3 + $0x40] sm:$0xff] %v6311
        %6344 = vst [vmem:[#allocation3 + $0x48] sm:$0xff] %v6312
        %6345 = vst [vmem:[#allocation3 + $0x50] sm:$0xff] %v6313
        %6346 = vst [vmem:[#allocation3 + $0x58] sm:$0xff] %v6314
        %6347 = vst [vmem:[#allocation3 + $0x60] sm:$0xff] %v6315
        %6348 = vst [vmem:[#allocation3 + $0x68] sm:$0xff] %v6316
        %6349 = vst [vmem:[#allocation3 + $0x70] sm:$0xff] %v6317
        %6350 = vst [vmem:[#allocation3 + $0x78] sm:$0xff] %v6318
        %6351 = vst [vmem:[#allocation3 + $0x80] sm:$0xff] %v6319
        %6352 = vst [vmem:[#allocation3 + $0x88] sm:$0xff] %v6320
        %6353 = vst [vmem:[#allocation3 + $0x90] sm:$0xff] %v6321
        %6354 = vst [vmem:[#allocation3 + $0x98] sm:$0xff] %v6322
        %6355 = vst [vmem:[#allocation3 + $0xa0] sm:$0xff] %v6323
        %6356 = vst [vmem:[#allocation3 + $0xa8] sm:$0xff] %v6324
        %6357 = vst [vmem:[#allocation3 + $0xb0] sm:$0xff] %v6325
        %6358 = vst [vmem:[#allocation3 + $0xb8] sm:$0xff] %v6326
        %6359 = vst [vmem:[#allocation3 + $0xc0] sm:$0xff] %v6327
        %6360 = vst [vmem:[#allocation3 + $0xc8] sm:$0xff] %v6328
        %6361 = vst [vmem:[#allocation3 + $0xd0] sm:$0xff] %v6329
        %6362 = vst [vmem:[#allocation3 + $0xd8] sm:$0xff] %v6330
        %6363 = vst [vmem:[#allocation3 + $0xe0] sm:$0xff] %v6331
        %6364 = vst [vmem:[#allocation3 + $0xe8] sm:$0xff] %v6332
        %6365 = vst [vmem:[#allocation3 + $0xf0] sm:$0xff] %v6333
        %6366 = vst [vmem:[#allocation3 + $0xf8] sm:$0xff] %v6334
        %v6367 = vld [vmem:[%s2655] sm:$0xff]
        %v6368 = vld [vmem:[%s2655 + $0x8] sm:$0xff]
        %v6369 = vld [vmem:[%s2655 + $0x18] sm:$0xff]
        %v6370 = vld [vmem:[%s2655 + $0x20] sm:$0xff]
        %v6371 = vld [vmem:[%s2655 + $0x30] sm:$0xff]
        %v6372 = vld [vmem:[%s2655 + $0x38] sm:$0xff]
        %v6373 = vld [vmem:[%s2655 + $0x48] sm:$0xff]
        %v6374 = vld [vmem:[%s2655 + $0x50] sm:$0xff]
        %v6375 = vld [vmem:[%s2655 + $0x60] sm:$0xff]
        %v6376 = vld [vmem:[%s2655 + $0x68] sm:$0xff]
        %v6377 = vld [vmem:[%s2655 + $0x78] sm:$0xff]
        %v6378 = vld [vmem:[%s2655 + $0x80] sm:$0xff]
        %v6379 = vld [vmem:[%s2655 + $0x90] sm:$0xff]
        %v6380 = vld [vmem:[%s2655 + $0x98] sm:$0xff]
        %v6381 = vld [vmem:[%s2655 + $0xa8] sm:$0xff]
        %v6382 = vld [vmem:[%s2655 + $0xb0] sm:$0xff]
        %v6383 = vld [vmem:[%s2655 + $0xc0] sm:$0xff]
        %v6384 = vld [vmem:[%s2655 + $0xc8] sm:$0xff]
        %v6385 = vld [vmem:[%s2655 + $0xd8] sm:$0xff]
        %v6386 = vld [vmem:[%s2655 + $0xe0] sm:$0xff]
        %v6387 = vld [vmem:[%s2655 + $0xf0] sm:$0xff]
        %v6388 = vld [vmem:[%s2655 + $0xf8] sm:$0xff]
        %v6389 = vld [vmem:[%s2655 + $0x108] sm:$0xff]
        %v6390 = vld [vmem:[%s2655 + $0x110] sm:$0xff]
        %v6391 = vld [vmem:[%s2655 + $0x120] sm:$0xff]
        %v6392 = vld [vmem:[%s2655 + $0x128] sm:$0xff]
        %v6393 = vld [vmem:[%s2655 + $0x138] sm:$0xff]
        %v6394 = vld [vmem:[%s2655 + $0x140] sm:$0xff]
        %v6395 = vld [vmem:[%s2655 + $0x150] sm:$0xff]
        %v6396 = vld [vmem:[%s2655 + $0x158] sm:$0xff]
        %v6397 = vld [vmem:[%s2655 + $0x168] sm:$0xff]
        %v6398 = vld [vmem:[%s2655 + $0x170] sm:$0xff]
        %v6399 = vpack.c.bf16 %v6368, %v6367
        %v6400 = vpack.c.bf16 %v6370, %v6369
        %v6401 = vpack.c.bf16 %v6372, %v6371
        %v6402 = vpack.c.bf16 %v6374, %v6373
        %v6403 = vpack.c.bf16 %v6376, %v6375
        %v6404 = vpack.c.bf16 %v6378, %v6377
        %v6405 = vpack.c.bf16 %v6380, %v6379
        %v6406 = vpack.c.bf16 %v6382, %v6381
        %v6407 = vpack.c.bf16 %v6384, %v6383
        %v6408 = vpack.c.bf16 %v6386, %v6385
        %v6409 = vpack.c.bf16 %v6388, %v6387
        %v6410 = vpack.c.bf16 %v6390, %v6389
        %v6411 = vpack.c.bf16 %v6392, %v6391
        %v6412 = vpack.c.bf16 %v6394, %v6393
        %v6413 = vpack.c.bf16 %v6396, %v6395
        %v6414 = vpack.c.bf16 %v6398, %v6397
        %v6415 = vld [vmem:[#allocation3] sm:$0xff]
        %v6416 = vld [vmem:[#allocation3 + $0x8] sm:$0xff]
        %v6417 = vld [vmem:[#allocation3 + $0x10] sm:$0xff]
        %v6418 = vld [vmem:[#allocation3 + $0x18] sm:$0xff]
        %v6419 = vld [vmem:[#allocation3 + $0x20] sm:$0xff]
        %v6420 = vld [vmem:[#allocation3 + $0x28] sm:$0xff]
        %v6421 = vld [vmem:[#allocation3 + $0x30] sm:$0xff]
        %v6422 = vld [vmem:[#allocation3 + $0x38] sm:$0xff]
        %v6423 = vld [vmem:[#allocation3 + $0x40] sm:$0xff]
        %v6424 = vld [vmem:[#allocation3 + $0x48] sm:$0xff]
        %v6425 = vld [vmem:[#allocation3 + $0x50] sm:$0xff]
        %v6426 = vld [vmem:[#allocation3 + $0x58] sm:$0xff]
        %v6427 = vld [vmem:[#allocation3 + $0x60] sm:$0xff]
        %v6428 = vld [vmem:[#allocation3 + $0x68] sm:$0xff]
        %v6429 = vld [vmem:[#allocation3 + $0x70] sm:$0xff]
        %v6430 = vld [vmem:[#allocation3 + $0x78] sm:$0xff]
        %v6431 = vld [vmem:[#allocation3 + $0x80] sm:$0xff]
        %v6432 = vld [vmem:[#allocation3 + $0x88] sm:$0xff]
        %v6433 = vld [vmem:[#allocation3 + $0x90] sm:$0xff]
        %v6434 = vld [vmem:[#allocation3 + $0x98] sm:$0xff]
        %v6435 = vld [vmem:[#allocation3 + $0xa0] sm:$0xff]
        %v6436 = vld [vmem:[#allocation3 + $0xa8] sm:$0xff]
        %v6437 = vld [vmem:[#allocation3 + $0xb0] sm:$0xff]
        %v6438 = vld [vmem:[#allocation3 + $0xb8] sm:$0xff]
        %v6439 = vld [vmem:[#allocation3 + $0xc0] sm:$0xff]
        %v6440 = vld [vmem:[#allocation3 + $0xc8] sm:$0xff]
        %v6441 = vld [vmem:[#allocation3 + $0xd0] sm:$0xff]
        %v6442 = vld [vmem:[#allocation3 + $0xd8] sm:$0xff]
        %v6443 = vld [vmem:[#allocation3 + $0xe0] sm:$0xff]
        %v6444 = vld [vmem:[#allocation3 + $0xe8] sm:$0xff]
        %v6445 = vld [vmem:[#allocation3 + $0xf0] sm:$0xff]
        %v6446 = vld [vmem:[#allocation3 + $0xf8] sm:$0xff]
        %s6447 = scalar_lea.vmem [#allocation10], 384
        %v6448 = vld [vmem:[%s6447] sm:$0xf]
        %v6449 = vld [vmem:[%s6447 + $0x4] sm:$0xf]
        %v6450 = vld [vmem:[%s6447 + $0x8] sm:$0xf]
        %v6451 = vld [vmem:[%s6447 + $0xc] sm:$0xf]
        %v6452 = vld [vmem:[%s6447 + $0x10] sm:$0xf]
        %v6453 = vld [vmem:[%s6447 + $0x14] sm:$0xf]
        %v6454 = vld [vmem:[%s6447 + $0x18] sm:$0xf]
        %v6455 = vld [vmem:[%s6447 + $0x1c] sm:$0xf]
        %v6456 = vld [vmem:[%s6447 + $0x20] sm:$0xf]
        %v6457 = vld [vmem:[%s6447 + $0x24] sm:$0xf]
        %v6458 = vld [vmem:[%s6447 + $0x28] sm:$0xf]
        %v6459 = vld [vmem:[%s6447 + $0x2c] sm:$0xf]
        %v6460 = vld [vmem:[%s6447 + $0x30] sm:$0xf]
        %v6461 = vld [vmem:[%s6447 + $0x34] sm:$0xf]
        %v6462 = vld [vmem:[%s6447 + $0x38] sm:$0xf]
        %v6463 = vld [vmem:[%s6447 + $0x3c] sm:$0xf]
        %v6480 = vunpack.c.l.b16 %v6448
        %v6481 = vunpack.c.l.b16 %v6449
        %v6482 = vunpack.c.l.b16 %v6450
        %v6483 = vunpack.c.l.b16 %v6451
        %v6484 = vunpack.c.l.b16 %v6452
        %v6485 = vunpack.c.l.b16 %v6453
        %v6486 = vunpack.c.l.b16 %v6454
        %v6487 = vunpack.c.l.b16 %v6455
        %v6488 = vunpack.c.l.b16 %v6456
        %v6489 = vunpack.c.l.b16 %v6457
        %v6490 = vunpack.c.l.b16 %v6458
        %v6491 = vunpack.c.l.b16 %v6459
        %v6492 = vunpack.c.l.b16 %v6460
        %v6493 = vunpack.c.l.b16 %v6461
        %v6494 = vunpack.c.l.b16 %v6462
        %v6495 = vunpack.c.l.b16 %v6463
        %v6496 = vpack.c.b16 %v6481, %v6480
        %v6497 = vpack.c.b16 %v6483, %v6482
        %v6498 = vpack.c.b16 %v6485, %v6484
        %v6499 = vpack.c.b16 %v6487, %v6486
        %v6500 = vpack.c.b16 %v6489, %v6488
        %v6501 = vpack.c.b16 %v6491, %v6490
        %v6502 = vpack.c.b16 %v6493, %v6492
        %v6503 = vpack.c.b16 %v6495, %v6494
        %6512 = vmatprep.subr.bf16.mxu0 0
        %6513 = vmatpush1.bf16.msra.mxu0 %v6496
        %6514 = vmatprep.subr.bf16.mxu0 0
        %6515 = vmatpush1.bf16.msra.mxu0 %v6497
        %6516 = vmatprep.subr.bf16.mxu0 0
        %6517 = vmatpush1.bf16.msra.mxu0 %v6498
        %6518 = vmatprep.subr.bf16.mxu0 0
        %6519 = vmatpush1.bf16.msra.mxu0 %v6499
        %6520 = vmatprep.subr.bf16.mxu0 0
        %6521 = vmatpush1.bf16.msra.mxu0 %v6500
        %6522 = vmatprep.subr.bf16.mxu0 0
        %6523 = vmatpush1.bf16.msra.mxu0 %v6501
        %6524 = vmatprep.subr.bf16.mxu0 0
        %6525 = vmatpush1.bf16.msra.mxu0 %v6502
        %6526 = vmatprep.subr.bf16.mxu0 0
        %6527 = vmatpush1.bf16.msra.mxu0 %v6503
        %6528 = vmatprep.subr.bf16.mxu0 0
        %6529 = vmatpush1.bf16.msra.mxu0 0
        %6530 = vmatprep.subr.bf16.mxu0 0
        %6531 = vmatpush1.bf16.msra.mxu0 0
        %6532 = vmatprep.subr.bf16.mxu0 0
        %6533 = vmatpush1.bf16.msra.mxu0 0
        %6534 = vmatprep.subr.bf16.mxu0 0
        %6535 = vmatpush1.bf16.msra.mxu0 0
        %6536 = vmatprep.subr.bf16.mxu0 0
        %6537 = vmatpush1.bf16.msra.mxu0 0
        %6538 = vmatprep.subr.bf16.mxu0 0
        %6539 = vmatpush1.bf16.msra.mxu0 0
        %6540 = vmatprep.subr.bf16.mxu0 0
        %6541 = vmatpush1.bf16.msra.mxu0 0
        %6542 = vmatprep.subr.bf16.mxu0 0
        %6543 = vmatpush1.bf16.msra.mxu0 0
        %6544 = vmatprep.mubr.bf16.mxu0 0
        %6545 = vmatmul.mubr.bf16.gmra.mrb[0].mxu0 %v6399
        %v6546 = vpop.f32.mrb[0].mxu0
        %v6547 = vadd.f32 0.0, %v6546
        %v6548 = vpop.f32.mrb[0].mxu0
        %v6549 = vpop.f32.mrb[0].mxu0
        %v6550 = vadd.f32 0.0, %v6549
        %v6551 = vpop.f32.mrb[0].mxu0
        %6552 = vmatprep.mubr.bf16.mxu0 0
        %6553 = vmatmul.mubr.bf16.gmra.mrb[0].mxu0 %v6400
        %v6554 = vpop.f32.mrb[0].mxu0
        %v6555 = vadd.f32 0.0, %v6554
        %v6556 = vpop.f32.mrb[0].mxu0
        %v6557 = vpop.f32.mrb[0].mxu0
        %v6558 = vadd.f32 0.0, %v6557
        %v6559 = vpop.f32.mrb[0].mxu0
        %6560 = vmatprep.mubr.bf16.mxu0 0
        %6561 = vmatmul.mubr.bf16.gmra.mrb[0].mxu0 %v6401
        %v6562 = vpop.f32.mrb[0].mxu0
        %v6563 = vadd.f32 0.0, %v6562
        %v6564 = vpop.f32.mrb[0].mxu0
        %v6565 = vpop.f32.mrb[0].mxu0
        %v6566 = vadd.f32 0.0, %v6565
        %v6567 = vpop.f32.mrb[0].mxu0
        %6568 = vmatprep.mubr.bf16.mxu0 0
        %6569 = vmatmul.mubr.bf16.gmra.mrb[0].mxu0 %v6402
        %v6570 = vpop.f32.mrb[0].mxu0
        %v6571 = vadd.f32 0.0, %v6570
        %v6572 = vpop.f32.mrb[0].mxu0
        %v6573 = vpop.f32.mrb[0].mxu0
        %v6574 = vadd.f32 0.0, %v6573
        %v6575 = vpop.f32.mrb[0].mxu0
        %6576 = vmatprep.mubr.bf16.mxu0 0
        %6577 = vmatmul.mubr.bf16.gmra.mrb[0].mxu0 %v6403
        %v6578 = vpop.f32.mrb[0].mxu0
        %v6579 = vadd.f32 0.0, %v6578
        %v6580 = vpop.f32.mrb[0].mxu0
        %v6581 = vpop.f32.mrb[0].mxu0
        %v6582 = vadd.f32 0.0, %v6581
        %v6583 = vpop.f32.mrb[0].mxu0
        %6584 = vmatprep.mubr.bf16.mxu0 0
        %6585 = vmatmul.mubr.bf16.gmra.mrb[0].mxu0 %v6404
        %v6586 = vpop.f32.mrb[0].mxu0
        %v6587 = vadd.f32 0.0, %v6586
        %v6588 = vpop.f32.mrb[0].mxu0
        %v6589 = vpop.f32.mrb[0].mxu0
        %v6590 = vadd.f32 0.0, %v6589
        %v6591 = vpop.f32.mrb[0].mxu0
        %6592 = vmatprep.mubr.bf16.mxu0 0
        %6593 = vmatmul.mubr.bf16.gmra.mrb[0].mxu0 %v6405
        %v6594 = vpop.f32.mrb[0].mxu0
        %v6595 = vadd.f32 0.0, %v6594
        %v6596 = vpop.f32.mrb[0].mxu0
        %v6597 = vpop.f32.mrb[0].mxu0
        %v6598 = vadd.f32 0.0, %v6597
        %v6599 = vpop.f32.mrb[0].mxu0
        %6600 = vmatprep.mubr.bf16.mxu0 0
        %6601 = vmatmul.mubr.bf16.gmra.mrb[0].mxu0 %v6406
        %v6602 = vpop.f32.mrb[0].mxu0
        %v6603 = vadd.f32 0.0, %v6602
        %v6604 = vpop.f32.mrb[0].mxu0
        %v6605 = vpop.f32.mrb[0].mxu0
        %v6606 = vadd.f32 0.0, %v6605
        %v6607 = vpop.f32.mrb[0].mxu0
        %6608 = vmatprep.mubr.bf16.mxu0 0
        %6609 = vmatmul.mubr.bf16.gmra.mrb[0].mxu0 %v6407
        %v6610 = vpop.f32.mrb[0].mxu0
        %v6611 = vadd.f32 0.0, %v6610
        %v6612 = vpop.f32.mrb[0].mxu0
        %v6613 = vpop.f32.mrb[0].mxu0
        %v6614 = vadd.f32 0.0, %v6613
        %v6615 = vpop.f32.mrb[0].mxu0
        %6616 = vmatprep.mubr.bf16.mxu0 0
        %6617 = vmatmul.mubr.bf16.gmra.mrb[0].mxu0 %v6408
        %v6618 = vpop.f32.mrb[0].mxu0
        %v6619 = vadd.f32 0.0, %v6618
        %v6620 = vpop.f32.mrb[0].mxu0
        %v6621 = vpop.f32.mrb[0].mxu0
        %v6622 = vadd.f32 0.0, %v6621
        %v6623 = vpop.f32.mrb[0].mxu0
        %6624 = vmatprep.mubr.bf16.mxu0 0
        %6625 = vmatmul.mubr.bf16.gmra.mrb[0].mxu0 %v6409
        %v6626 = vpop.f32.mrb[0].mxu0
        %v6627 = vadd.f32 0.0, %v6626
        %v6628 = vpop.f32.mrb[0].mxu0
        %v6629 = vpop.f32.mrb[0].mxu0
        %v6630 = vadd.f32 0.0, %v6629
        %v6631 = vpop.f32.mrb[0].mxu0
        %6632 = vmatprep.mubr.bf16.mxu0 0
        %6633 = vmatmul.mubr.bf16.gmra.mrb[0].mxu0 %v6410
        %v6634 = vpop.f32.mrb[0].mxu0
        %v6635 = vadd.f32 0.0, %v6634
        %v6636 = vpop.f32.mrb[0].mxu0
        %v6637 = vpop.f32.mrb[0].mxu0
        %v6638 = vadd.f32 0.0, %v6637
        %v6639 = vpop.f32.mrb[0].mxu0
        %6640 = vmatprep.mubr.bf16.mxu0 0
        %6641 = vmatmul.mubr.bf16.gmra.mrb[0].mxu0 %v6411
        %v6642 = vpop.f32.mrb[0].mxu0
        %v6643 = vadd.f32 0.0, %v6642
        %v6644 = vpop.f32.mrb[0].mxu0
        %v6645 = vpop.f32.mrb[0].mxu0
        %v6646 = vadd.f32 0.0, %v6645
        %v6647 = vpop.f32.mrb[0].mxu0
        %6648 = vmatprep.mubr.bf16.mxu0 0
        %6649 = vmatmul.mubr.bf16.gmra.mrb[0].mxu0 %v6412
        %v6650 = vpop.f32.mrb[0].mxu0
        %v6651 = vadd.f32 0.0, %v6650
        %v6652 = vpop.f32.mrb[0].mxu0
        %v6653 = vpop.f32.mrb[0].mxu0
        %v6654 = vadd.f32 0.0, %v6653
        %v6655 = vpop.f32.mrb[0].mxu0
        %6656 = vmatprep.mubr.bf16.mxu0 0
        %6657 = vmatmul.mubr.bf16.gmra.mrb[0].mxu0 %v6413
        %v6658 = vpop.f32.mrb[0].mxu0
        %v6659 = vadd.f32 0.0, %v6658
        %v6660 = vpop.f32.mrb[0].mxu0
        %v6661 = vpop.f32.mrb[0].mxu0
        %v6662 = vadd.f32 0.0, %v6661
        %v6663 = vpop.f32.mrb[0].mxu0
        %6664 = vmatprep.mubr.bf16.mxu0 0
        %6665 = vmatmul.mubr.bf16.gmra.mrb[0].mxu0 %v6414
        %v6666 = vpop.f32.mrb[0].mxu0
        %v6667 = vadd.f32 0.0, %v6666
        %v6668 = vpop.f32.mrb[0].mxu0
        %v6669 = vpop.f32.mrb[0].mxu0
        %v6670 = vadd.f32 0.0, %v6669
        %v6671 = vpop.f32.mrb[0].mxu0
        %6672 = vdwg.mxu0
        %v6673 = vadd.f32 %v6415, %v6547
        %v6674 = vadd.f32 %v6416, %v6550
        %v6675 = vadd.f32 %v6417, %v6555
        %v6676 = vadd.f32 %v6418, %v6558
        %v6677 = vadd.f32 %v6419, %v6563
        %v6678 = vadd.f32 %v6420, %v6566
        %v6679 = vadd.f32 %v6421, %v6571
        %v6680 = vadd.f32 %v6422, %v6574
        %v6681 = vadd.f32 %v6423, %v6579
        %v6682 = vadd.f32 %v6424, %v6582
        %v6683 = vadd.f32 %v6425, %v6587
        %v6684 = vadd.f32 %v6426, %v6590
        %v6685 = vadd.f32 %v6427, %v6595
        %v6686 = vadd.f32 %v6428, %v6598
        %v6687 = vadd.f32 %v6429, %v6603
        %v6688 = vadd.f32 %v6430, %v6606
        %v6689 = vadd.f32 %v6431, %v6611
        %v6690 = vadd.f32 %v6432, %v6614
        %v6691 = vadd.f32 %v6433, %v6619
        %v6692 = vadd.f32 %v6434, %v6622
        %v6693 = vadd.f32 %v6435, %v6627
        %v6694 = vadd.f32 %v6436, %v6630
        %v6695 = vadd.f32 %v6437, %v6635
        %v6696 = vadd.f32 %v6438, %v6638
        %v6697 = vadd.f32 %v6439, %v6643
        %v6698 = vadd.f32 %v6440, %v6646
        %v6699 = vadd.f32 %v6441, %v6651
        %v6700 = vadd.f32 %v6442, %v6654
        %v6701 = vadd.f32 %v6443, %v6659
        %v6702 = vadd.f32 %v6444, %v6662
        %v6703 = vadd.f32 %v6445, %v6667
        %v6704 = vadd.f32 %v6446, %v6670
        %6705 = vst [vmem:[#allocation3] sm:$0xff] %v6673
        %6706 = vst [vmem:[#allocation3 + $0x8] sm:$0xff] %v6674
        %6707 = vst [vmem:[#allocation3 + $0x10] sm:$0xff] %v6675
        %6708 = vst [vmem:[#allocation3 + $0x18] sm:$0xff] %v6676
        %6709 = vst [vmem:[#allocation3 + $0x20] sm:$0xff] %v6677
        %6710 = vst [vmem:[#allocation3 + $0x28] sm:$0xff] %v6678
        %6711 = vst [vmem:[#allocation3 + $0x30] sm:$0xff] %v6679
        %6712 = vst [vmem:[#allocation3 + $0x38] sm:$0xff] %v6680
        %6713 = vst [vmem:[#allocation3 + $0x40] sm:$0xff] %v6681
        %6714 = vst [vmem:[#allocation3 + $0x48] sm:$0xff] %v6682
        %6715 = vst [vmem:[#allocation3 + $0x50] sm:$0xff] %v6683
        %6716 = vst [vmem:[#allocation3 + $0x58] sm:$0xff] %v6684
        %6717 = vst [vmem:[#allocation3 + $0x60] sm:$0xff] %v6685
        %6718 = vst [vmem:[#allocation3 + $0x68] sm:$0xff] %v6686
        %6719 = vst [vmem:[#allocation3 + $0x70] sm:$0xff] %v6687
        %6720 = vst [vmem:[#allocation3 + $0x78] sm:$0xff] %v6688
        %6721 = vst [vmem:[#allocation3 + $0x80] sm:$0xff] %v6689
        %6722 = vst [vmem:[#allocation3 + $0x88] sm:$0xff] %v6690
        %6723 = vst [vmem:[#allocation3 + $0x90] sm:$0xff] %v6691
        %6724 = vst [vmem:[#allocation3 + $0x98] sm:$0xff] %v6692
        %6725 = vst [vmem:[#allocation3 + $0xa0] sm:$0xff] %v6693
        %6726 = vst [vmem:[#allocation3 + $0xa8] sm:$0xff] %v6694
        %6727 = vst [vmem:[#allocation3 + $0xb0] sm:$0xff] %v6695
        %6728 = vst [vmem:[#allocation3 + $0xb8] sm:$0xff] %v6696
        %6729 = vst [vmem:[#allocation3 + $0xc0] sm:$0xff] %v6697
        %6730 = vst [vmem:[#allocation3 + $0xc8] sm:$0xff] %v6698
        %6731 = vst [vmem:[#allocation3 + $0xd0] sm:$0xff] %v6699
        %6732 = vst [vmem:[#allocation3 + $0xd8] sm:$0xff] %v6700
        %6733 = vst [vmem:[#allocation3 + $0xe0] sm:$0xff] %v6701
        %6734 = vst [vmem:[#allocation3 + $0xe8] sm:$0xff] %v6702
        %6735 = vst [vmem:[#allocation3 + $0xf0] sm:$0xff] %v6703
        %6736 = vst [vmem:[#allocation3 + $0xf8] sm:$0xff] %v6704
        %v6737 = vld [vmem:[%s2655 + $0x1] sm:$0xff]
        %v6738 = vld [vmem:[%s2655 + $0x9] sm:$0xff]
        %v6739 = vld [vmem:[%s2655 + $0x19] sm:$0xff]
        %v6740 = vld [vmem:[%s2655 + $0x21] sm:$0xff]
        %v6741 = vld [vmem:[%s2655 + $0x31] sm:$0xff]
        %v6742 = vld [vmem:[%s2655 + $0x39] sm:$0xff]
        %v6743 = vld [vmem:[%s2655 + $0x49] sm:$0xff]
        %v6744 = vld [vmem:[%s2655 + $0x51] sm:$0xff]
        %v6745 = vld [vmem:[%s2655 + $0x61] sm:$0xff]
        %v6746 = vld [vmem:[%s2655 + $0x69] sm:$0xff]
        %v6747 = vld [vmem:[%s2655 + $0x79] sm:$0xff]
        %v6748 = vld [vmem:[%s2655 + $0x81] sm:$0xff]
        %v6749 = vld [vmem:[%s2655 + $0x91] sm:$0xff]
        %v6750 = vld [vmem:[%s2655 + $0x99] sm:$0xff]
        %v6751 = vld [vmem:[%s2655 + $0xa9] sm:$0xff]
        %v6752 = vld [vmem:[%s2655 + $0xb1] sm:$0xff]
        %v6753 = vld [vmem:[%s2655 + $0xc1] sm:$0xff]
        %v6754 = vld [vmem:[%s2655 + $0xc9] sm:$0xff]
        %v6755 = vld [vmem:[%s2655 + $0xd9] sm:$0xff]
        %v6756 = vld [vmem:[%s2655 + $0xe1] sm:$0xff]
        %v6757 = vld [vmem:[%s2655 + $0xf1] sm:$0xff]
        %v6758 = vld [vmem:[%s2655 + $0xf9] sm:$0xff]
        %v6759 = vld [vmem:[%s2655 + $0x109] sm:$0xff]
        %v6760 = vld [vmem:[%s2655 + $0x111] sm:$0xff]
        %v6761 = vld [vmem:[%s2655 + $0x121] sm:$0xff]
        %v6762 = vld [vmem:[%s2655 + $0x129] sm:$0xff]
        %v6763 = vld [vmem:[%s2655 + $0x139] sm:$0xff]
        %v6764 = vld [vmem:[%s2655 + $0x141] sm:$0xff]
        %v6765 = vld [vmem:[%s2655 + $0x151] sm:$0xff]
        %v6766 = vld [vmem:[%s2655 + $0x159] sm:$0xff]
        %v6767 = vld [vmem:[%s2655 + $0x169] sm:$0xff]
        %v6768 = vld [vmem:[%s2655 + $0x171] sm:$0xff]
        %v6769 = vpack.c.bf16 %v6738, %v6737
        %v6770 = vpack.c.bf16 %v6740, %v6739
        %v6771 = vpack.c.bf16 %v6742, %v6741
        %v6772 = vpack.c.bf16 %v6744, %v6743
        %v6773 = vpack.c.bf16 %v6746, %v6745
        %v6774 = vpack.c.bf16 %v6748, %v6747
        %v6775 = vpack.c.bf16 %v6750, %v6749
        %v6776 = vpack.c.bf16 %v6752, %v6751
        %v6777 = vpack.c.bf16 %v6754, %v6753
        %v6778 = vpack.c.bf16 %v6756, %v6755
        %v6779 = vpack.c.bf16 %v6758, %v6757
        %v6780 = vpack.c.bf16 %v6760, %v6759
        %v6781 = vpack.c.bf16 %v6762, %v6761
        %v6782 = vpack.c.bf16 %v6764, %v6763
        %v6783 = vpack.c.bf16 %v6766, %v6765
        %v6784 = vpack.c.bf16 %v6768, %v6767
        %v6785 = vld [vmem:[#allocation3] sm:$0xff]
        %v6786 = vld [vmem:[#allocation3 + $0x8] sm:$0xff]
        %v6787 = vld [vmem:[#allocation3 + $0x10] sm:$0xff]
        %v6788 = vld [vmem:[#allocation3 + $0x18] sm:$0xff]
        %v6789 = vld [vmem:[#allocation3 + $0x20] sm:$0xff]
        %v6790 = vld [vmem:[#allocation3 + $0x28] sm:$0xff]
        %v6791 = vld [vmem:[#allocation3 + $0x30] sm:$0xff]
        %v6792 = vld [vmem:[#allocation3 + $0x38] sm:$0xff]
        %v6793 = vld [vmem:[#allocation3 + $0x40] sm:$0xff]
        %v6794 = vld [vmem:[#allocation3 + $0x48] sm:$0xff]
        %v6795 = vld [vmem:[#allocation3 + $0x50] sm:$0xff]
        %v6796 = vld [vmem:[#allocation3 + $0x58] sm:$0xff]
        %v6797 = vld [vmem:[#allocation3 + $0x60] sm:$0xff]
        %v6798 = vld [vmem:[#allocation3 + $0x68] sm:$0xff]
        %v6799 = vld [vmem:[#allocation3 + $0x70] sm:$0xff]
        %v6800 = vld [vmem:[#allocation3 + $0x78] sm:$0xff]
        %v6801 = vld [vmem:[#allocation3 + $0x80] sm:$0xff]
        %v6802 = vld [vmem:[#allocation3 + $0x88] sm:$0xff]
        %v6803 = vld [vmem:[#allocation3 + $0x90] sm:$0xff]
        %v6804 = vld [vmem:[#allocation3 + $0x98] sm:$0xff]
        %v6805 = vld [vmem:[#allocation3 + $0xa0] sm:$0xff]
        %v6806 = vld [vmem:[#allocation3 + $0xa8] sm:$0xff]
        %v6807 = vld [vmem:[#allocation3 + $0xb0] sm:$0xff]
        %v6808 = vld [vmem:[#allocation3 + $0xb8] sm:$0xff]
        %v6809 = vld [vmem:[#allocation3 + $0xc0] sm:$0xff]
        %v6810 = vld [vmem:[#allocation3 + $0xc8] sm:$0xff]
        %v6811 = vld [vmem:[#allocation3 + $0xd0] sm:$0xff]
        %v6812 = vld [vmem:[#allocation3 + $0xd8] sm:$0xff]
        %v6813 = vld [vmem:[#allocation3 + $0xe0] sm:$0xff]
        %v6814 = vld [vmem:[#allocation3 + $0xe8] sm:$0xff]
        %v6815 = vld [vmem:[#allocation3 + $0xf0] sm:$0xff]
        %v6816 = vld [vmem:[#allocation3 + $0xf8] sm:$0xff]
        %s6817 = scalar_lea.vmem [#allocation10], 448
        %v6818 = vld [vmem:[%s6817] sm:$0xf]
        %v6819 = vld [vmem:[%s6817 + $0x4] sm:$0xf]
        %v6820 = vld [vmem:[%s6817 + $0x8] sm:$0xf]
        %v6821 = vld [vmem:[%s6817 + $0xc] sm:$0xf]
        %v6822 = vld [vmem:[%s6817 + $0x10] sm:$0xf]
        %v6823 = vld [vmem:[%s6817 + $0x14] sm:$0xf]
        %v6824 = vld [vmem:[%s6817 + $0x18] sm:$0xf]
        %v6825 = vld [vmem:[%s6817 + $0x1c] sm:$0xf]
        %v6826 = vld [vmem:[%s6817 + $0x20] sm:$0xf]
        %v6827 = vld [vmem:[%s6817 + $0x24] sm:$0xf]
        %v6828 = vld [vmem:[%s6817 + $0x28] sm:$0xf]
        %v6829 = vld [vmem:[%s6817 + $0x2c] sm:$0xf]
        %v6830 = vld [vmem:[%s6817 + $0x30] sm:$0xf]
        %v6831 = vld [vmem:[%s6817 + $0x34] sm:$0xf]
        %v6832 = vld [vmem:[%s6817 + $0x38] sm:$0xf]
        %v6833 = vld [vmem:[%s6817 + $0x3c] sm:$0xf]
        %v6850 = vunpack.c.l.b16 %v6818
        %v6851 = vunpack.c.l.b16 %v6819
        %v6852 = vunpack.c.l.b16 %v6820
        %v6853 = vunpack.c.l.b16 %v6821
        %v6854 = vunpack.c.l.b16 %v6822
        %v6855 = vunpack.c.l.b16 %v6823
        %v6856 = vunpack.c.l.b16 %v6824
        %v6857 = vunpack.c.l.b16 %v6825
        %v6858 = vunpack.c.l.b16 %v6826
        %v6859 = vunpack.c.l.b16 %v6827
        %v6860 = vunpack.c.l.b16 %v6828
        %v6861 = vunpack.c.l.b16 %v6829
        %v6862 = vunpack.c.l.b16 %v6830
        %v6863 = vunpack.c.l.b16 %v6831
        %v6864 = vunpack.c.l.b16 %v6832
        %v6865 = vunpack.c.l.b16 %v6833
        %v6866 = vpack.c.b16 %v6851, %v6850
        %v6867 = vpack.c.b16 %v6853, %v6852
        %v6868 = vpack.c.b16 %v6855, %v6854
        %v6869 = vpack.c.b16 %v6857, %v6856
        %v6870 = vpack.c.b16 %v6859, %v6858
        %v6871 = vpack.c.b16 %v6861, %v6860
        %v6872 = vpack.c.b16 %v6863, %v6862
        %v6873 = vpack.c.b16 %v6865, %v6864
        %6882 = vmatprep.subr.bf16.mxu0 0
        %6883 = vmatpush1.bf16.msra.mxu0 %v6866
        %6884 = vmatprep.subr.bf16.mxu0 0
        %6885 = vmatpush1.bf16.msra.mxu0 %v6867
        %6886 = vmatprep.subr.bf16.mxu0 0
        %6887 = vmatpush1.bf16.msra.mxu0 %v6868
        %6888 = vmatprep.subr.bf16.mxu0 0
        %6889 = vmatpush1.bf16.msra.mxu0 %v6869
        %6890 = vmatprep.subr.bf16.mxu0 0
        %6891 = vmatpush1.bf16.msra.mxu0 %v6870
        %6892 = vmatprep.subr.bf16.mxu0 0
        %6893 = vmatpush1.bf16.msra.mxu0 %v6871
        %6894 = vmatprep.subr.bf16.mxu0 0
        %6895 = vmatpush1.bf16.msra.mxu0 %v6872
        %6896 = vmatprep.subr.bf16.mxu0 0
        %6897 = vmatpush1.bf16.msra.mxu0 %v6873
        %6898 = vmatprep.subr.bf16.mxu0 0
        %6899 = vmatpush1.bf16.msra.mxu0 0
        %6900 = vmatprep.subr.bf16.mxu0 0
        %6901 = vmatpush1.bf16.msra.mxu0 0
        %6902 = vmatprep.subr.bf16.mxu0 0
        %6903 = vmatpush1.bf16.msra.mxu0 0
        %6904 = vmatprep.subr.bf16.mxu0 0
        %6905 = vmatpush1.bf16.msra.mxu0 0
        %6906 = vmatprep.subr.bf16.mxu0 0
        %6907 = vmatpush1.bf16.msra.mxu0 0
        %6908 = vmatprep.subr.bf16.mxu0 0
        %6909 = vmatpush1.bf16.msra.mxu0 0
        %6910 = vmatprep.subr.bf16.mxu0 0
        %6911 = vmatpush1.bf16.msra.mxu0 0
        %6912 = vmatprep.subr.bf16.mxu0 0
        %6913 = vmatpush1.bf16.msra.mxu0 0
        %6914 = vmatprep.mubr.bf16.mxu0 0
        %6915 = vmatmul.mubr.bf16.gmra.mrb[0].mxu0 %v6769
        %v6916 = vpop.f32.mrb[0].mxu0
        %v6917 = vadd.f32 0.0, %v6916
        %v6918 = vpop.f32.mrb[0].mxu0
        %v6919 = vpop.f32.mrb[0].mxu0
        %v6920 = vadd.f32 0.0, %v6919
        %v6921 = vpop.f32.mrb[0].mxu0
        %6922 = vmatprep.mubr.bf16.mxu0 0
        %6923 = vmatmul.mubr.bf16.gmra.mrb[0].mxu0 %v6770
        %v6924 = vpop.f32.mrb[0].mxu0
        %v6925 = vadd.f32 0.0, %v6924
        %v6926 = vpop.f32.mrb[0].mxu0
        %v6927 = vpop.f32.mrb[0].mxu0
        %v6928 = vadd.f32 0.0, %v6927
        %v6929 = vpop.f32.mrb[0].mxu0
        %6930 = vmatprep.mubr.bf16.mxu0 0
        %6931 = vmatmul.mubr.bf16.gmra.mrb[0].mxu0 %v6771
        %v6932 = vpop.f32.mrb[0].mxu0
        %v6933 = vadd.f32 0.0, %v6932
        %v6934 = vpop.f32.mrb[0].mxu0
        %v6935 = vpop.f32.mrb[0].mxu0
        %v6936 = vadd.f32 0.0, %v6935
        %v6937 = vpop.f32.mrb[0].mxu0
        %6938 = vmatprep.mubr.bf16.mxu0 0
        %6939 = vmatmul.mubr.bf16.gmra.mrb[0].mxu0 %v6772
        %v6940 = vpop.f32.mrb[0].mxu0
        %v6941 = vadd.f32 0.0, %v6940
        %v6942 = vpop.f32.mrb[0].mxu0
        %v6943 = vpop.f32.mrb[0].mxu0
        %v6944 = vadd.f32 0.0, %v6943
        %v6945 = vpop.f32.mrb[0].mxu0
        %6946 = vmatprep.mubr.bf16.mxu0 0
        %6947 = vmatmul.mubr.bf16.gmra.mrb[0].mxu0 %v6773
        %v6948 = vpop.f32.mrb[0].mxu0
        %v6949 = vadd.f32 0.0, %v6948
        %v6950 = vpop.f32.mrb[0].mxu0
        %v6951 = vpop.f32.mrb[0].mxu0
        %v6952 = vadd.f32 0.0, %v6951
        %v6953 = vpop.f32.mrb[0].mxu0
        %6954 = vmatprep.mubr.bf16.mxu0 0
        %6955 = vmatmul.mubr.bf16.gmra.mrb[0].mxu0 %v6774
        %v6956 = vpop.f32.mrb[0].mxu0
        %v6957 = vadd.f32 0.0, %v6956
        %v6958 = vpop.f32.mrb[0].mxu0
        %v6959 = vpop.f32.mrb[0].mxu0
        %v6960 = vadd.f32 0.0, %v6959
        %v6961 = vpop.f32.mrb[0].mxu0
        %6962 = vmatprep.mubr.bf16.mxu0 0
        %6963 = vmatmul.mubr.bf16.gmra.mrb[0].mxu0 %v6775
        %v6964 = vpop.f32.mrb[0].mxu0
        %v6965 = vadd.f32 0.0, %v6964
        %v6966 = vpop.f32.mrb[0].mxu0
        %v6967 = vpop.f32.mrb[0].mxu0
        %v6968 = vadd.f32 0.0, %v6967
        %v6969 = vpop.f32.mrb[0].mxu0
        %6970 = vmatprep.mubr.bf16.mxu0 0
        %6971 = vmatmul.mubr.bf16.gmra.mrb[0].mxu0 %v6776
        %v6972 = vpop.f32.mrb[0].mxu0
        %v6973 = vadd.f32 0.0, %v6972
        %v6974 = vpop.f32.mrb[0].mxu0
        %v6975 = vpop.f32.mrb[0].mxu0
        %v6976 = vadd.f32 0.0, %v6975
        %v6977 = vpop.f32.mrb[0].mxu0
        %6978 = vmatprep.mubr.bf16.mxu0 0
        %6979 = vmatmul.mubr.bf16.gmra.mrb[0].mxu0 %v6777
        %v6980 = vpop.f32.mrb[0].mxu0
        %v6981 = vadd.f32 0.0, %v6980
        %v6982 = vpop.f32.mrb[0].mxu0
        %v6983 = vpop.f32.mrb[0].mxu0
        %v6984 = vadd.f32 0.0, %v6983
        %v6985 = vpop.f32.mrb[0].mxu0
        %6986 = vmatprep.mubr.bf16.mxu0 0
        %6987 = vmatmul.mubr.bf16.gmra.mrb[0].mxu0 %v6778
        %v6988 = vpop.f32.mrb[0].mxu0
        %v6989 = vadd.f32 0.0, %v6988
        %v6990 = vpop.f32.mrb[0].mxu0
        %v6991 = vpop.f32.mrb[0].mxu0
        %v6992 = vadd.f32 0.0, %v6991
        %v6993 = vpop.f32.mrb[0].mxu0
        %6994 = vmatprep.mubr.bf16.mxu0 0
        %6995 = vmatmul.mubr.bf16.gmra.mrb[0].mxu0 %v6779
        %v6996 = vpop.f32.mrb[0].mxu0
        %v6997 = vadd.f32 0.0, %v6996
        %v6998 = vpop.f32.mrb[0].mxu0
        %v6999 = vpop.f32.mrb[0].mxu0
        %v7000 = vadd.f32 0.0, %v6999
        %v7001 = vpop.f32.mrb[0].mxu0
        %7002 = vmatprep.mubr.bf16.mxu0 0
        %7003 = vmatmul.mubr.bf16.gmra.mrb[0].mxu0 %v6780
        %v7004 = vpop.f32.mrb[0].mxu0
        %v7005 = vadd.f32 0.0, %v7004
        %v7006 = vpop.f32.mrb[0].mxu0
        %v7007 = vpop.f32.mrb[0].mxu0
        %v7008 = vadd.f32 0.0, %v7007
        %v7009 = vpop.f32.mrb[0].mxu0
        %7010 = vmatprep.mubr.bf16.mxu0 0
        %7011 = vmatmul.mubr.bf16.gmra.mrb[0].mxu0 %v6781
        %v7012 = vpop.f32.mrb[0].mxu0
        %v7013 = vadd.f32 0.0, %v7012
        %v7014 = vpop.f32.mrb[0].mxu0
        %v7015 = vpop.f32.mrb[0].mxu0
        %v7016 = vadd.f32 0.0, %v7015
        %v7017 = vpop.f32.mrb[0].mxu0
        %7018 = vmatprep.mubr.bf16.mxu0 0
        %7019 = vmatmul.mubr.bf16.gmra.mrb[0].mxu0 %v6782
        %v7020 = vpop.f32.mrb[0].mxu0
        %v7021 = vadd.f32 0.0, %v7020
        %v7022 = vpop.f32.mrb[0].mxu0
        %v7023 = vpop.f32.mrb[0].mxu0
        %v7024 = vadd.f32 0.0, %v7023
        %v7025 = vpop.f32.mrb[0].mxu0
        %7026 = vmatprep.mubr.bf16.mxu0 0
        %7027 = vmatmul.mubr.bf16.gmra.mrb[0].mxu0 %v6783
        %v7028 = vpop.f32.mrb[0].mxu0
        %v7029 = vadd.f32 0.0, %v7028
        %v7030 = vpop.f32.mrb[0].mxu0
        %v7031 = vpop.f32.mrb[0].mxu0
        %v7032 = vadd.f32 0.0, %v7031
        %v7033 = vpop.f32.mrb[0].mxu0
        %7034 = vmatprep.mubr.bf16.mxu0 0
        %7035 = vmatmul.mubr.bf16.gmra.mrb[0].mxu0 %v6784
        %v7036 = vpop.f32.mrb[0].mxu0
        %v7037 = vadd.f32 0.0, %v7036
        %v7038 = vpop.f32.mrb[0].mxu0
        %v7039 = vpop.f32.mrb[0].mxu0
        %v7040 = vadd.f32 0.0, %v7039
        %v7041 = vpop.f32.mrb[0].mxu0
        %7042 = vdwg.mxu0
        %v7043 = vadd.f32 %v6785, %v6917
        %v7044 = vadd.f32 %v6786, %v6920
        %v7045 = vadd.f32 %v6787, %v6925
        %v7046 = vadd.f32 %v6788, %v6928
        %v7047 = vadd.f32 %v6789, %v6933
        %v7048 = vadd.f32 %v6790, %v6936
        %v7049 = vadd.f32 %v6791, %v6941
        %v7050 = vadd.f32 %v6792, %v6944
        %v7051 = vadd.f32 %v6793, %v6949
        %v7052 = vadd.f32 %v6794, %v6952
        %v7053 = vadd.f32 %v6795, %v6957
        %v7054 = vadd.f32 %v6796, %v6960
        %v7055 = vadd.f32 %v6797, %v6965
        %v7056 = vadd.f32 %v6798, %v6968
        %v7057 = vadd.f32 %v6799, %v6973
        %v7058 = vadd.f32 %v6800, %v6976
        %v7059 = vadd.f32 %v6801, %v6981
        %v7060 = vadd.f32 %v6802, %v6984
        %v7061 = vadd.f32 %v6803, %v6989
        %v7062 = vadd.f32 %v6804, %v6992
        %v7063 = vadd.f32 %v6805, %v6997
        %v7064 = vadd.f32 %v6806, %v7000
        %v7065 = vadd.f32 %v6807, %v7005
        %v7066 = vadd.f32 %v6808, %v7008
        %v7067 = vadd.f32 %v6809, %v7013
        %v7068 = vadd.f32 %v6810, %v7016
        %v7069 = vadd.f32 %v6811, %v7021
        %v7070 = vadd.f32 %v6812, %v7024
        %v7071 = vadd.f32 %v6813, %v7029
        %v7072 = vadd.f32 %v6814, %v7032
        %v7073 = vadd.f32 %v6815, %v7037
        %v7074 = vadd.f32 %v6816, %v7040
        %7075 = vst [vmem:[#allocation3] sm:$0xff] %v7043
        %7076 = vst [vmem:[#allocation3 + $0x8] sm:$0xff] %v7044
        %7077 = vst [vmem:[#allocation3 + $0x10] sm:$0xff] %v7045
        %7078 = vst [vmem:[#allocation3 + $0x18] sm:$0xff] %v7046
        %7079 = vst [vmem:[#allocation3 + $0x20] sm:$0xff] %v7047
        %7080 = vst [vmem:[#allocation3 + $0x28] sm:$0xff] %v7048
        %7081 = vst [vmem:[#allocation3 + $0x30] sm:$0xff] %v7049
        %7082 = vst [vmem:[#allocation3 + $0x38] sm:$0xff] %v7050
        %7083 = vst [vmem:[#allocation3 + $0x40] sm:$0xff] %v7051
        %7084 = vst [vmem:[#allocation3 + $0x48] sm:$0xff] %v7052
        %7085 = vst [vmem:[#allocation3 + $0x50] sm:$0xff] %v7053
        %7086 = vst [vmem:[#allocation3 + $0x58] sm:$0xff] %v7054
        %7087 = vst [vmem:[#allocation3 + $0x60] sm:$0xff] %v7055
        %7088 = vst [vmem:[#allocation3 + $0x68] sm:$0xff] %v7056
        %7089 = vst [vmem:[#allocation3 + $0x70] sm:$0xff] %v7057
        %7090 = vst [vmem:[#allocation3 + $0x78] sm:$0xff] %v7058
        %7091 = vst [vmem:[#allocation3 + $0x80] sm:$0xff] %v7059
        %7092 = vst [vmem:[#allocation3 + $0x88] sm:$0xff] %v7060
        %7093 = vst [vmem:[#allocation3 + $0x90] sm:$0xff] %v7061
        %7094 = vst [vmem:[#allocation3 + $0x98] sm:$0xff] %v7062
        %7095 = vst [vmem:[#allocation3 + $0xa0] sm:$0xff] %v7063
        %7096 = vst [vmem:[#allocation3 + $0xa8] sm:$0xff] %v7064
        %7097 = vst [vmem:[#allocation3 + $0xb0] sm:$0xff] %v7065
        %7098 = vst [vmem:[#allocation3 + $0xb8] sm:$0xff] %v7066
        %7099 = vst [vmem:[#allocation3 + $0xc0] sm:$0xff] %v7067
        %7100 = vst [vmem:[#allocation3 + $0xc8] sm:$0xff] %v7068
        %7101 = vst [vmem:[#allocation3 + $0xd0] sm:$0xff] %v7069
        %7102 = vst [vmem:[#allocation3 + $0xd8] sm:$0xff] %v7070
        %7103 = vst [vmem:[#allocation3 + $0xe0] sm:$0xff] %v7071
        %7104 = vst [vmem:[#allocation3 + $0xe8] sm:$0xff] %v7072
        %7105 = vst [vmem:[#allocation3 + $0xf0] sm:$0xff] %v7073
        %7106 = vst [vmem:[#allocation3 + $0xf8] sm:$0xff] %v7074
        %v7107 = vld [vmem:[%s2655 + $0x2] sm:$0xff]
        %v7108 = vld [vmem:[%s2655 + $0xa] sm:$0xff]
        %v7109 = vld [vmem:[%s2655 + $0x1a] sm:$0xff]
        %v7110 = vld [vmem:[%s2655 + $0x22] sm:$0xff]
        %v7111 = vld [vmem:[%s2655 + $0x32] sm:$0xff]
        %v7112 = vld [vmem:[%s2655 + $0x3a] sm:$0xff]
        %v7113 = vld [vmem:[%s2655 + $0x4a] sm:$0xff]
        %v7114 = vld [vmem:[%s2655 + $0x52] sm:$0xff]
        %v7115 = vld [vmem:[%s2655 + $0x62] sm:$0xff]
        %v7116 = vld [vmem:[%s2655 + $0x6a] sm:$0xff]
        %v7117 = vld [vmem:[%s2655 + $0x7a] sm:$0xff]
        %v7118 = vld [vmem:[%s2655 + $0x82] sm:$0xff]
        %v7119 = vld [vmem:[%s2655 + $0x92] sm:$0xff]
        %v7120 = vld [vmem:[%s2655 + $0x9a] sm:$0xff]
        %v7121 = vld [vmem:[%s2655 + $0xaa] sm:$0xff]
        %v7122 = vld [vmem:[%s2655 + $0xb2] sm:$0xff]
        %v7123 = vld [vmem:[%s2655 + $0xc2] sm:$0xff]
        %v7124 = vld [vmem:[%s2655 + $0xca] sm:$0xff]
        %v7125 = vld [vmem:[%s2655 + $0xda] sm:$0xff]
        %v7126 = vld [vmem:[%s2655 + $0xe2] sm:$0xff]
        %v7127 = vld [vmem:[%s2655 + $0xf2] sm:$0xff]
        %v7128 = vld [vmem:[%s2655 + $0xfa] sm:$0xff]
        %v7129 = vld [vmem:[%s2655 + $0x10a] sm:$0xff]
        %v7130 = vld [vmem:[%s2655 + $0x112] sm:$0xff]
        %v7131 = vld [vmem:[%s2655 + $0x122] sm:$0xff]
        %v7132 = vld [vmem:[%s2655 + $0x12a] sm:$0xff]
        %v7133 = vld [vmem:[%s2655 + $0x13a] sm:$0xff]
        %v7134 = vld [vmem:[%s2655 + $0x142] sm:$0xff]
        %v7135 = vld [vmem:[%s2655 + $0x152] sm:$0xff]
        %v7136 = vld [vmem:[%s2655 + $0x15a] sm:$0xff]
        %v7137 = vld [vmem:[%s2655 + $0x16a] sm:$0xff]
        %v7138 = vld [vmem:[%s2655 + $0x172] sm:$0xff]
        %v7139 = vpack.c.bf16 %v7108, %v7107
        %v7140 = vpack.c.bf16 %v7110, %v7109
        %v7141 = vpack.c.bf16 %v7112, %v7111
        %v7142 = vpack.c.bf16 %v7114, %v7113
        %v7143 = vpack.c.bf16 %v7116, %v7115
        %v7144 = vpack.c.bf16 %v7118, %v7117
        %v7145 = vpack.c.bf16 %v7120, %v7119
        %v7146 = vpack.c.bf16 %v7122, %v7121
        %v7147 = vpack.c.bf16 %v7124, %v7123
        %v7148 = vpack.c.bf16 %v7126, %v7125
        %v7149 = vpack.c.bf16 %v7128, %v7127
        %v7150 = vpack.c.bf16 %v7130, %v7129
        %v7151 = vpack.c.bf16 %v7132, %v7131
        %v7152 = vpack.c.bf16 %v7134, %v7133
        %v7153 = vpack.c.bf16 %v7136, %v7135
        %v7154 = vpack.c.bf16 %v7138, %v7137
        %v7155 = vld [vmem:[#allocation3] sm:$0xff]
        %v7156 = vld [vmem:[#allocation3 + $0x8] sm:$0xff]
        %v7157 = vld [vmem:[#allocation3 + $0x10] sm:$0xff]
        %v7158 = vld [vmem:[#allocation3 + $0x18] sm:$0xff]
        %v7159 = vld [vmem:[#allocation3 + $0x20] sm:$0xff]
        %v7160 = vld [vmem:[#allocation3 + $0x28] sm:$0xff]
        %v7161 = vld [vmem:[#allocation3 + $0x30] sm:$0xff]
        %v7162 = vld [vmem:[#allocation3 + $0x38] sm:$0xff]
        %v7163 = vld [vmem:[#allocation3 + $0x40] sm:$0xff]
        %v7164 = vld [vmem:[#allocation3 + $0x48] sm:$0xff]
        %v7165 = vld [vmem:[#allocation3 + $0x50] sm:$0xff]
        %v7166 = vld [vmem:[#allocation3 + $0x58] sm:$0xff]
        %v7167 = vld [vmem:[#allocation3 + $0x60] sm:$0xff]
        %v7168 = vld [vmem:[#allocation3 + $0x68] sm:$0xff]
        %v7169 = vld [vmem:[#allocation3 + $0x70] sm:$0xff]
        %v7170 = vld [vmem:[#allocation3 + $0x78] sm:$0xff]
        %v7171 = vld [vmem:[#allocation3 + $0x80] sm:$0xff]
        %v7172 = vld [vmem:[#allocation3 + $0x88] sm:$0xff]
        %v7173 = vld [vmem:[#allocation3 + $0x90] sm:$0xff]
        %v7174 = vld [vmem:[#allocation3 + $0x98] sm:$0xff]
        %v7175 = vld [vmem:[#allocation3 + $0xa0] sm:$0xff]
        %v7176 = vld [vmem:[#allocation3 + $0xa8] sm:$0xff]
        %v7177 = vld [vmem:[#allocation3 + $0xb0] sm:$0xff]
        %v7178 = vld [vmem:[#allocation3 + $0xb8] sm:$0xff]
        %v7179 = vld [vmem:[#allocation3 + $0xc0] sm:$0xff]
        %v7180 = vld [vmem:[#allocation3 + $0xc8] sm:$0xff]
        %v7181 = vld [vmem:[#allocation3 + $0xd0] sm:$0xff]
        %v7182 = vld [vmem:[#allocation3 + $0xd8] sm:$0xff]
        %v7183 = vld [vmem:[#allocation3 + $0xe0] sm:$0xff]
        %v7184 = vld [vmem:[#allocation3 + $0xe8] sm:$0xff]
        %v7185 = vld [vmem:[#allocation3 + $0xf0] sm:$0xff]
        %v7186 = vld [vmem:[#allocation3 + $0xf8] sm:$0xff]
        %s7187 = scalar_lea.vmem [#allocation10], 512
        %v7188 = vld [vmem:[%s7187] sm:$0xf]
        %v7189 = vld [vmem:[%s7187 + $0x4] sm:$0xf]
        %v7190 = vld [vmem:[%s7187 + $0x8] sm:$0xf]
        %v7191 = vld [vmem:[%s7187 + $0xc] sm:$0xf]
        %v7192 = vld [vmem:[%s7187 + $0x10] sm:$0xf]
        %v7193 = vld [vmem:[%s7187 + $0x14] sm:$0xf]
        %v7194 = vld [vmem:[%s7187 + $0x18] sm:$0xf]
        %v7195 = vld [vmem:[%s7187 + $0x1c] sm:$0xf]
        %v7196 = vld [vmem:[%s7187 + $0x20] sm:$0xf]
        %v7197 = vld [vmem:[%s7187 + $0x24] sm:$0xf]
        %v7198 = vld [vmem:[%s7187 + $0x28] sm:$0xf]
        %v7199 = vld [vmem:[%s7187 + $0x2c] sm:$0xf]
        %v7200 = vld [vmem:[%s7187 + $0x30] sm:$0xf]
        %v7201 = vld [vmem:[%s7187 + $0x34] sm:$0xf]
        %v7202 = vld [vmem:[%s7187 + $0x38] sm:$0xf]
        %v7203 = vld [vmem:[%s7187 + $0x3c] sm:$0xf]
        %v7220 = vunpack.c.l.b16 %v7188
        %v7221 = vunpack.c.l.b16 %v7189
        %v7222 = vunpack.c.l.b16 %v7190
        %v7223 = vunpack.c.l.b16 %v7191
        %v7224 = vunpack.c.l.b16 %v7192
        %v7225 = vunpack.c.l.b16 %v7193
        %v7226 = vunpack.c.l.b16 %v7194
        %v7227 = vunpack.c.l.b16 %v7195
        %v7228 = vunpack.c.l.b16 %v7196
        %v7229 = vunpack.c.l.b16 %v7197
        %v7230 = vunpack.c.l.b16 %v7198
        %v7231 = vunpack.c.l.b16 %v7199
        %v7232 = vunpack.c.l.b16 %v7200
        %v7233 = vunpack.c.l.b16 %v7201
        %v7234 = vunpack.c.l.b16 %v7202
        %v7235 = vunpack.c.l.b16 %v7203
        %v7236 = vpack.c.b16 %v7221, %v7220
        %v7237 = vpack.c.b16 %v7223, %v7222
        %v7238 = vpack.c.b16 %v7225, %v7224
        %v7239 = vpack.c.b16 %v7227, %v7226
        %v7240 = vpack.c.b16 %v7229, %v7228
        %v7241 = vpack.c.b16 %v7231, %v7230
        %v7242 = vpack.c.b16 %v7233, %v7232
        %v7243 = vpack.c.b16 %v7235, %v7234
        %7252 = vmatprep.subr.bf16.mxu0 0
        %7253 = vmatpush1.bf16.msra.mxu0 %v7236
        %7254 = vmatprep.subr.bf16.mxu0 0
        %7255 = vmatpush1.bf16.msra.mxu0 %v7237
        %7256 = vmatprep.subr.bf16.mxu0 0
        %7257 = vmatpush1.bf16.msra.mxu0 %v7238
        %7258 = vmatprep.subr.bf16.mxu0 0
        %7259 = vmatpush1.bf16.msra.mxu0 %v7239
        %7260 = vmatprep.subr.bf16.mxu0 0
        %7261 = vmatpush1.bf16.msra.mxu0 %v7240
        %7262 = vmatprep.subr.bf16.mxu0 0
        %7263 = vmatpush1.bf16.msra.mxu0 %v7241
        %7264 = vmatprep.subr.bf16.mxu0 0
        %7265 = vmatpush1.bf16.msra.mxu0 %v7242
        %7266 = vmatprep.subr.bf16.mxu0 0
        %7267 = vmatpush1.bf16.msra.mxu0 %v7243
        %7268 = vmatprep.subr.bf16.mxu0 0
        %7269 = vmatpush1.bf16.msra.mxu0 0
        %7270 = vmatprep.subr.bf16.mxu0 0
        %7271 = vmatpush1.bf16.msra.mxu0 0
        %7272 = vmatprep.subr.bf16.mxu0 0
        %7273 = vmatpush1.bf16.msra.mxu0 0
        %7274 = vmatprep.subr.bf16.mxu0 0
        %7275 = vmatpush1.bf16.msra.mxu0 0
        %7276 = vmatprep.subr.bf16.mxu0 0
        %7277 = vmatpush1.bf16.msra.mxu0 0
        %7278 = vmatprep.subr.bf16.mxu0 0
        %7279 = vmatpush1.bf16.msra.mxu0 0
        %7280 = vmatprep.subr.bf16.mxu0 0
        %7281 = vmatpush1.bf16.msra.mxu0 0
        %7282 = vmatprep.subr.bf16.mxu0 0
        %7283 = vmatpush1.bf16.msra.mxu0 0
        %7284 = vmatprep.mubr.bf16.mxu0 0
        %7285 = vmatmul.mubr.bf16.gmra.mrb[0].mxu0 %v7139
        %v7286 = vpop.f32.mrb[0].mxu0
        %v7287 = vadd.f32 0.0, %v7286
        %v7288 = vpop.f32.mrb[0].mxu0
        %v7289 = vpop.f32.mrb[0].mxu0
        %v7290 = vadd.f32 0.0, %v7289
        %v7291 = vpop.f32.mrb[0].mxu0
        %7292 = vmatprep.mubr.bf16.mxu0 0
        %7293 = vmatmul.mubr.bf16.gmra.mrb[0].mxu0 %v7140
        %v7294 = vpop.f32.mrb[0].mxu0
        %v7295 = vadd.f32 0.0, %v7294
        %v7296 = vpop.f32.mrb[0].mxu0
        %v7297 = vpop.f32.mrb[0].mxu0
        %v7298 = vadd.f32 0.0, %v7297
        %v7299 = vpop.f32.mrb[0].mxu0
        %7300 = vmatprep.mubr.bf16.mxu0 0
        %7301 = vmatmul.mubr.bf16.gmra.mrb[0].mxu0 %v7141
        %v7302 = vpop.f32.mrb[0].mxu0
        %v7303 = vadd.f32 0.0, %v7302
        %v7304 = vpop.f32.mrb[0].mxu0
        %v7305 = vpop.f32.mrb[0].mxu0
        %v7306 = vadd.f32 0.0, %v7305
        %v7307 = vpop.f32.mrb[0].mxu0
        %7308 = vmatprep.mubr.bf16.mxu0 0
        %7309 = vmatmul.mubr.bf16.gmra.mrb[0].mxu0 %v7142
        %v7310 = vpop.f32.mrb[0].mxu0
        %v7311 = vadd.f32 0.0, %v7310
        %v7312 = vpop.f32.mrb[0].mxu0
        %v7313 = vpop.f32.mrb[0].mxu0
        %v7314 = vadd.f32 0.0, %v7313
        %v7315 = vpop.f32.mrb[0].mxu0
        %7316 = vmatprep.mubr.bf16.mxu0 0
        %7317 = vmatmul.mubr.bf16.gmra.mrb[0].mxu0 %v7143
        %v7318 = vpop.f32.mrb[0].mxu0
        %v7319 = vadd.f32 0.0, %v7318
        %v7320 = vpop.f32.mrb[0].mxu0
        %v7321 = vpop.f32.mrb[0].mxu0
        %v7322 = vadd.f32 0.0, %v7321
        %v7323 = vpop.f32.mrb[0].mxu0
        %7324 = vmatprep.mubr.bf16.mxu0 0
        %7325 = vmatmul.mubr.bf16.gmra.mrb[0].mxu0 %v7144
        %v7326 = vpop.f32.mrb[0].mxu0
        %v7327 = vadd.f32 0.0, %v7326
        %v7328 = vpop.f32.mrb[0].mxu0
        %v7329 = vpop.f32.mrb[0].mxu0
        %v7330 = vadd.f32 0.0, %v7329
        %v7331 = vpop.f32.mrb[0].mxu0
        %7332 = vmatprep.mubr.bf16.mxu0 0
        %7333 = vmatmul.mubr.bf16.gmra.mrb[0].mxu0 %v7145
        %v7334 = vpop.f32.mrb[0].mxu0
        %v7335 = vadd.f32 0.0, %v7334
        %v7336 = vpop.f32.mrb[0].mxu0
        %v7337 = vpop.f32.mrb[0].mxu0
        %v7338 = vadd.f32 0.0, %v7337
        %v7339 = vpop.f32.mrb[0].mxu0
        %7340 = vmatprep.mubr.bf16.mxu0 0
        %7341 = vmatmul.mubr.bf16.gmra.mrb[0].mxu0 %v7146
        %v7342 = vpop.f32.mrb[0].mxu0
        %v7343 = vadd.f32 0.0, %v7342
        %v7344 = vpop.f32.mrb[0].mxu0
        %v7345 = vpop.f32.mrb[0].mxu0
        %v7346 = vadd.f32 0.0, %v7345
        %v7347 = vpop.f32.mrb[0].mxu0
        %7348 = vmatprep.mubr.bf16.mxu0 0
        %7349 = vmatmul.mubr.bf16.gmra.mrb[0].mxu0 %v7147
        %v7350 = vpop.f32.mrb[0].mxu0
        %v7351 = vadd.f32 0.0, %v7350
        %v7352 = vpop.f32.mrb[0].mxu0
        %v7353 = vpop.f32.mrb[0].mxu0
        %v7354 = vadd.f32 0.0, %v7353
        %v7355 = vpop.f32.mrb[0].mxu0
        %7356 = vmatprep.mubr.bf16.mxu0 0
        %7357 = vmatmul.mubr.bf16.gmra.mrb[0].mxu0 %v7148
        %v7358 = vpop.f32.mrb[0].mxu0
        %v7359 = vadd.f32 0.0, %v7358
        %v7360 = vpop.f32.mrb[0].mxu0
        %v7361 = vpop.f32.mrb[0].mxu0
        %v7362 = vadd.f32 0.0, %v7361
        %v7363 = vpop.f32.mrb[0].mxu0
        %7364 = vmatprep.mubr.bf16.mxu0 0
        %7365 = vmatmul.mubr.bf16.gmra.mrb[0].mxu0 %v7149
        %v7366 = vpop.f32.mrb[0].mxu0
        %v7367 = vadd.f32 0.0, %v7366
        %v7368 = vpop.f32.mrb[0].mxu0
        %v7369 = vpop.f32.mrb[0].mxu0
        %v7370 = vadd.f32 0.0, %v7369
        %v7371 = vpop.f32.mrb[0].mxu0
        %7372 = vmatprep.mubr.bf16.mxu0 0
        %7373 = vmatmul.mubr.bf16.gmra.mrb[0].mxu0 %v7150
        %v7374 = vpop.f32.mrb[0].mxu0
        %v7375 = vadd.f32 0.0, %v7374
        %v7376 = vpop.f32.mrb[0].mxu0
        %v7377 = vpop.f32.mrb[0].mxu0
        %v7378 = vadd.f32 0.0, %v7377
        %v7379 = vpop.f32.mrb[0].mxu0
        %7380 = vmatprep.mubr.bf16.mxu0 0
        %7381 = vmatmul.mubr.bf16.gmra.mrb[0].mxu0 %v7151
        %v7382 = vpop.f32.mrb[0].mxu0
        %v7383 = vadd.f32 0.0, %v7382
        %v7384 = vpop.f32.mrb[0].mxu0
        %v7385 = vpop.f32.mrb[0].mxu0
        %v7386 = vadd.f32 0.0, %v7385
        %v7387 = vpop.f32.mrb[0].mxu0
        %7388 = vmatprep.mubr.bf16.mxu0 0
        %7389 = vmatmul.mubr.bf16.gmra.mrb[0].mxu0 %v7152
        %v7390 = vpop.f32.mrb[0].mxu0
        %v7391 = vadd.f32 0.0, %v7390
        %v7392 = vpop.f32.mrb[0].mxu0
        %v7393 = vpop.f32.mrb[0].mxu0
        %v7394 = vadd.f32 0.0, %v7393
        %v7395 = vpop.f32.mrb[0].mxu0
        %7396 = vmatprep.mubr.bf16.mxu0 0
        %7397 = vmatmul.mubr.bf16.gmra.mrb[0].mxu0 %v7153
        %v7398 = vpop.f32.mrb[0].mxu0
        %v7399 = vadd.f32 0.0, %v7398
        %v7400 = vpop.f32.mrb[0].mxu0
        %v7401 = vpop.f32.mrb[0].mxu0
        %v7402 = vadd.f32 0.0, %v7401
        %v7403 = vpop.f32.mrb[0].mxu0
        %7404 = vmatprep.mubr.bf16.mxu0 0
        %7405 = vmatmul.mubr.bf16.gmra.mrb[0].mxu0 %v7154
        %v7406 = vpop.f32.mrb[0].mxu0
        %v7407 = vadd.f32 0.0, %v7406
        %v7408 = vpop.f32.mrb[0].mxu0
        %v7409 = vpop.f32.mrb[0].mxu0
        %v7410 = vadd.f32 0.0, %v7409
        %v7411 = vpop.f32.mrb[0].mxu0
        %7412 = vdwg.mxu0
        %v7413 = vadd.f32 %v7155, %v7287
        %v7414 = vadd.f32 %v7156, %v7290
        %v7415 = vadd.f32 %v7157, %v7295
        %v7416 = vadd.f32 %v7158, %v7298
        %v7417 = vadd.f32 %v7159, %v7303
        %v7418 = vadd.f32 %v7160, %v7306
        %v7419 = vadd.f32 %v7161, %v7311
        %v7420 = vadd.f32 %v7162, %v7314
        %v7421 = vadd.f32 %v7163, %v7319
        %v7422 = vadd.f32 %v7164, %v7322
        %v7423 = vadd.f32 %v7165, %v7327
        %v7424 = vadd.f32 %v7166, %v7330
        %v7425 = vadd.f32 %v7167, %v7335
        %v7426 = vadd.f32 %v7168, %v7338
        %v7427 = vadd.f32 %v7169, %v7343
        %v7428 = vadd.f32 %v7170, %v7346
        %v7429 = vadd.f32 %v7171, %v7351
        %v7430 = vadd.f32 %v7172, %v7354
        %v7431 = vadd.f32 %v7173, %v7359
        %v7432 = vadd.f32 %v7174, %v7362
        %v7433 = vadd.f32 %v7175, %v7367
        %v7434 = vadd.f32 %v7176, %v7370
        %v7435 = vadd.f32 %v7177, %v7375
        %v7436 = vadd.f32 %v7178, %v7378
        %v7437 = vadd.f32 %v7179, %v7383
        %v7438 = vadd.f32 %v7180, %v7386
        %v7439 = vadd.f32 %v7181, %v7391
        %v7440 = vadd.f32 %v7182, %v7394
        %v7441 = vadd.f32 %v7183, %v7399
        %v7442 = vadd.f32 %v7184, %v7402
        %v7443 = vadd.f32 %v7185, %v7407
        %v7444 = vadd.f32 %v7186, %v7410
        %7445 = vst [vmem:[#allocation3] sm:$0xff] %v7413
        %7446 = vst [vmem:[#allocation3 + $0x8] sm:$0xff] %v7414
        %7447 = vst [vmem:[#allocation3 + $0x10] sm:$0xff] %v7415
        %7448 = vst [vmem:[#allocation3 + $0x18] sm:$0xff] %v7416
        %7449 = vst [vmem:[#allocation3 + $0x20] sm:$0xff] %v7417
        %7450 = vst [vmem:[#allocation3 + $0x28] sm:$0xff] %v7418
        %7451 = vst [vmem:[#allocation3 + $0x30] sm:$0xff] %v7419
        %7452 = vst [vmem:[#allocation3 + $0x38] sm:$0xff] %v7420
        %7453 = vst [vmem:[#allocation3 + $0x40] sm:$0xff] %v7421
        %7454 = vst [vmem:[#allocation3 + $0x48] sm:$0xff] %v7422
        %7455 = vst [vmem:[#allocation3 + $0x50] sm:$0xff] %v7423
        %7456 = vst [vmem:[#allocation3 + $0x58] sm:$0xff] %v7424
        %7457 = vst [vmem:[#allocation3 + $0x60] sm:$0xff] %v7425
        %7458 = vst [vmem:[#allocation3 + $0x68] sm:$0xff] %v7426
        %7459 = vst [vmem:[#allocation3 + $0x70] sm:$0xff] %v7427
        %7460 = vst [vmem:[#allocation3 + $0x78] sm:$0xff] %v7428
        %7461 = vst [vmem:[#allocation3 + $0x80] sm:$0xff] %v7429
        %7462 = vst [vmem:[#allocation3 + $0x88] sm:$0xff] %v7430
        %7463 = vst [vmem:[#allocation3 + $0x90] sm:$0xff] %v7431
        %7464 = vst [vmem:[#allocation3 + $0x98] sm:$0xff] %v7432
        %7465 = vst [vmem:[#allocation3 + $0xa0] sm:$0xff] %v7433
        %7466 = vst [vmem:[#allocation3 + $0xa8] sm:$0xff] %v7434
        %7467 = vst [vmem:[#allocation3 + $0xb0] sm:$0xff] %v7435
        %7468 = vst [vmem:[#allocation3 + $0xb8] sm:$0xff] %v7436
        %7469 = vst [vmem:[#allocation3 + $0xc0] sm:$0xff] %v7437
        %7470 = vst [vmem:[#allocation3 + $0xc8] sm:$0xff] %v7438
        %7471 = vst [vmem:[#allocation3 + $0xd0] sm:$0xff] %v7439
        %7472 = vst [vmem:[#allocation3 + $0xd8] sm:$0xff] %v7440
        %7473 = vst [vmem:[#allocation3 + $0xe0] sm:$0xff] %v7441
        %7474 = vst [vmem:[#allocation3 + $0xe8] sm:$0xff] %v7442
        %7475 = vst [vmem:[#allocation3 + $0xf0] sm:$0xff] %v7443
        %7476 = vst [vmem:[#allocation3 + $0xf8] sm:$0xff] %v7444
        %v7477 = vld [vmem:[#allocation3] sm:$0xff]
        %v7478 = vld [vmem:[#allocation3 + $0x8] sm:$0xff]
        %v7479 = vld [vmem:[#allocation3 + $0x10] sm:$0xff]
        %v7480 = vld [vmem:[#allocation3 + $0x18] sm:$0xff]
        %v7481 = vld [vmem:[#allocation3 + $0x20] sm:$0xff]
        %v7482 = vld [vmem:[#allocation3 + $0x28] sm:$0xff]
        %v7483 = vld [vmem:[#allocation3 + $0x30] sm:$0xff]
        %v7484 = vld [vmem:[#allocation3 + $0x38] sm:$0xff]
        %v7485 = vld [vmem:[#allocation3 + $0x40] sm:$0xff]
        %v7486 = vld [vmem:[#allocation3 + $0x48] sm:$0xff]
        %v7487 = vld [vmem:[#allocation3 + $0x50] sm:$0xff]
        %v7488 = vld [vmem:[#allocation3 + $0x58] sm:$0xff]
        %v7489 = vld [vmem:[#allocation3 + $0x60] sm:$0xff]
        %v7490 = vld [vmem:[#allocation3 + $0x68] sm:$0xff]
        %v7491 = vld [vmem:[#allocation3 + $0x70] sm:$0xff]
        %v7492 = vld [vmem:[#allocation3 + $0x78] sm:$0xff]
        %v7493 = vld [vmem:[#allocation3 + $0x80] sm:$0xff]
        %v7494 = vld [vmem:[#allocation3 + $0x88] sm:$0xff]
        %v7495 = vld [vmem:[#allocation3 + $0x90] sm:$0xff]
        %v7496 = vld [vmem:[#allocation3 + $0x98] sm:$0xff]
        %v7497 = vld [vmem:[#allocation3 + $0xa0] sm:$0xff]
        %v7498 = vld [vmem:[#allocation3 + $0xa8] sm:$0xff]
        %v7499 = vld [vmem:[#allocation3 + $0xb0] sm:$0xff]
        %v7500 = vld [vmem:[#allocation3 + $0xb8] sm:$0xff]
        %v7501 = vld [vmem:[#allocation3 + $0xc0] sm:$0xff]
        %v7502 = vld [vmem:[#allocation3 + $0xc8] sm:$0xff]
        %v7503 = vld [vmem:[#allocation3 + $0xd0] sm:$0xff]
        %v7504 = vld [vmem:[#allocation3 + $0xd8] sm:$0xff]
        %v7505 = vld [vmem:[#allocation3 + $0xe0] sm:$0xff]
        %v7506 = vld [vmem:[#allocation3 + $0xe8] sm:$0xff]
        %v7507 = vld [vmem:[#allocation3 + $0xf0] sm:$0xff]
        %v7508 = vld [vmem:[#allocation3 + $0xf8] sm:$0xff]
        %v7509 = vld [vmem:[#allocation12] sm:$0x1]
        %v7511 = vlaneseq
        %v7512 = vshrl.u32 %v7511, 7
        %v7513 = vsub.s32 0, %v7512
        %v7514 = vrot.slane %v7509, %v7513
        %v7516 = vadd.f32 %v7477, %v7514
        %v7517 = vadd.f32 %v7478, %v7514
        %v7518 = vadd.f32 %v7479, %v7514
        %v7519 = vadd.f32 %v7480, %v7514
        %v7520 = vadd.f32 %v7481, %v7514
        %v7521 = vadd.f32 %v7482, %v7514
        %v7522 = vadd.f32 %v7483, %v7514
        %v7523 = vadd.f32 %v7484, %v7514
        %v7524 = vadd.f32 %v7485, %v7514
        %v7525 = vadd.f32 %v7486, %v7514
        %v7526 = vadd.f32 %v7487, %v7514
        %v7527 = vadd.f32 %v7488, %v7514
        %v7528 = vadd.f32 %v7489, %v7514
        %v7529 = vadd.f32 %v7490, %v7514
        %v7530 = vadd.f32 %v7491, %v7514
        %v7531 = vadd.f32 %v7492, %v7514
        %v7532 = vadd.f32 %v7493, %v7514
        %v7533 = vadd.f32 %v7494, %v7514
        %v7534 = vadd.f32 %v7495, %v7514
        %v7535 = vadd.f32 %v7496, %v7514
        %v7536 = vadd.f32 %v7497, %v7514
        %v7537 = vadd.f32 %v7498, %v7514
        %v7538 = vadd.f32 %v7499, %v7514
        %v7539 = vadd.f32 %v7500, %v7514
        %v7540 = vadd.f32 %v7501, %v7514
        %v7541 = vadd.f32 %v7502, %v7514
        %v7542 = vadd.f32 %v7503, %v7514
        %v7543 = vadd.f32 %v7504, %v7514
        %v7544 = vadd.f32 %v7505, %v7514
        %v7545 = vadd.f32 %v7506, %v7514
        %v7546 = vadd.f32 %v7507, %v7514
        %v7547 = vadd.f32 %v7508, %v7514
        %v7548 = vadd.f32 %v7516, %v7517
        %v7549 = vadd.f32 %v7548, %v7518
        %v7550 = vadd.f32 %v7549, %v7519
        %v7551 = vadd.f32 %v7550, %v7520
        %v7552 = vadd.f32 %v7551, %v7521
        %v7553 = vadd.f32 %v7552, %v7522
        %v7554 = vadd.f32 %v7553, %v7523
        %v7555 = vadd.f32 %v7554, %v7524
        %v7556 = vadd.f32 %v7555, %v7525
        %v7557 = vadd.f32 %v7556, %v7526
        %v7558 = vadd.f32 %v7557, %v7527
        %v7559 = vadd.f32 %v7558, %v7528
        %v7560 = vadd.f32 %v7559, %v7529
        %v7561 = vadd.f32 %v7560, %v7530
        %v7562 = vadd.f32 %v7561, %v7531
        %v7563 = vadd.f32 %v7562, %v7532
        %v7564 = vadd.f32 %v7563, %v7533
        %v7565 = vadd.f32 %v7564, %v7534
        %v7566 = vadd.f32 %v7565, %v7535
        %v7567 = vadd.f32 %v7566, %v7536
        %v7568 = vadd.f32 %v7567, %v7537
        %v7569 = vadd.f32 %v7568, %v7538
        %v7570 = vadd.f32 %v7569, %v7539
        %v7571 = vadd.f32 %v7570, %v7540
        %v7572 = vadd.f32 %v7571, %v7541
        %v7573 = vadd.f32 %v7572, %v7542
        %v7574 = vadd.f32 %v7573, %v7543
        %v7575 = vadd.f32 %v7574, %v7544
        %v7576 = vadd.f32 %v7575, %v7545
        %v7577 = vadd.f32 %v7576, %v7546
        %v7578 = vadd.f32 %v7577, %v7547
        %v7579 = vrot.slane %v7578, 4
        %v7580 = vadd.f32 %v7578, %v7579
        %v7581 = vrot.slane %v7580, 2
        %v7582 = vadd.f32 %v7580, %v7581
        %v7583 = vrot.slane %v7582, 1
        %v7584 = vadd.f32 %v7582, %v7583
        %v7585 = vmul.f32 %v7584, %v3874
        %v7586 = vsub.f32 %v7516, %v7585
        %v7587 = vsub.f32 %v7517, %v7585
        %v7588 = vsub.f32 %v7518, %v7585
        %v7589 = vsub.f32 %v7519, %v7585
        %v7590 = vsub.f32 %v7520, %v7585
        %v7591 = vsub.f32 %v7521, %v7585
        %v7592 = vsub.f32 %v7522, %v7585
        %v7593 = vsub.f32 %v7523, %v7585
        %v7594 = vsub.f32 %v7524, %v7585
        %v7595 = vsub.f32 %v7525, %v7585
        %v7596 = vsub.f32 %v7526, %v7585
        %v7597 = vsub.f32 %v7527, %v7585
        %v7598 = vsub.f32 %v7528, %v7585
        %v7599 = vsub.f32 %v7529, %v7585
        %v7600 = vsub.f32 %v7530, %v7585
        %v7601 = vsub.f32 %v7531, %v7585
        %v7602 = vsub.f32 %v7532, %v7585
        %v7603 = vsub.f32 %v7533, %v7585
        %v7604 = vsub.f32 %v7534, %v7585
        %v7605 = vsub.f32 %v7535, %v7585
        %v7606 = vsub.f32 %v7536, %v7585
        %v7607 = vsub.f32 %v7537, %v7585
        %v7608 = vsub.f32 %v7538, %v7585
        %v7609 = vsub.f32 %v7539, %v7585
        %v7610 = vsub.f32 %v7540, %v7585
        %v7611 = vsub.f32 %v7541, %v7585
        %v7612 = vsub.f32 %v7542, %v7585
        %v7613 = vsub.f32 %v7543, %v7585
        %v7614 = vsub.f32 %v7544, %v7585
        %v7615 = vsub.f32 %v7545, %v7585
        %v7616 = vsub.f32 %v7546, %v7585
        %v7617 = vsub.f32 %v7547, %v7585
        %v7618 = vmul.f32 %v7586, %v7586
        %v7619 = vmul.f32 %v7587, %v7587
        %v7620 = vmul.f32 %v7588, %v7588
        %v7621 = vmul.f32 %v7589, %v7589
        %v7622 = vmul.f32 %v7590, %v7590
        %v7623 = vmul.f32 %v7591, %v7591
        %v7624 = vmul.f32 %v7592, %v7592
        %v7625 = vmul.f32 %v7593, %v7593
        %v7626 = vmul.f32 %v7594, %v7594
        %v7627 = vmul.f32 %v7595, %v7595
        %v7628 = vmul.f32 %v7596, %v7596
        %v7629 = vmul.f32 %v7597, %v7597
        %v7630 = vmul.f32 %v7598, %v7598
        %v7631 = vmul.f32 %v7599, %v7599
        %v7632 = vmul.f32 %v7600, %v7600
        %v7633 = vmul.f32 %v7601, %v7601
        %v7634 = vmul.f32 %v7602, %v7602
        %v7635 = vmul.f32 %v7603, %v7603
        %v7636 = vmul.f32 %v7604, %v7604
        %v7637 = vmul.f32 %v7605, %v7605
        %v7638 = vmul.f32 %v7606, %v7606
        %v7639 = vmul.f32 %v7607, %v7607
        %v7640 = vmul.f32 %v7608, %v7608
        %v7641 = vmul.f32 %v7609, %v7609
        %v7642 = vmul.f32 %v7610, %v7610
        %v7643 = vmul.f32 %v7611, %v7611
        %v7644 = vmul.f32 %v7612, %v7612
        %v7645 = vmul.f32 %v7613, %v7613
        %v7646 = vmul.f32 %v7614, %v7614
        %v7647 = vmul.f32 %v7615, %v7615
        %v7648 = vmul.f32 %v7616, %v7616
        %v7649 = vmul.f32 %v7617, %v7617
        %v7650 = vadd.f32 %v7618, %v7619
        %v7651 = vadd.f32 %v7650, %v7620
        %v7652 = vadd.f32 %v7651, %v7621
        %v7653 = vadd.f32 %v7652, %v7622
        %v7654 = vadd.f32 %v7653, %v7623
        %v7655 = vadd.f32 %v7654, %v7624
        %v7656 = vadd.f32 %v7655, %v7625
        %v7657 = vadd.f32 %v7656, %v7626
        %v7658 = vadd.f32 %v7657, %v7627
        %v7659 = vadd.f32 %v7658, %v7628
        %v7660 = vadd.f32 %v7659, %v7629
        %v7661 = vadd.f32 %v7660, %v7630
        %v7662 = vadd.f32 %v7661, %v7631
        %v7663 = vadd.f32 %v7662, %v7632
        %v7664 = vadd.f32 %v7663, %v7633
        %v7665 = vadd.f32 %v7664, %v7634
        %v7666 = vadd.f32 %v7665, %v7635
        %v7667 = vadd.f32 %v7666, %v7636
        %v7668 = vadd.f32 %v7667, %v7637
        %v7669 = vadd.f32 %v7668, %v7638
        %v7670 = vadd.f32 %v7669, %v7639
        %v7671 = vadd.f32 %v7670, %v7640
        %v7672 = vadd.f32 %v7671, %v7641
        %v7673 = vadd.f32 %v7672, %v7642
        %v7674 = vadd.f32 %v7673, %v7643
        %v7675 = vadd.f32 %v7674, %v7644
        %v7676 = vadd.f32 %v7675, %v7645
        %v7677 = vadd.f32 %v7676, %v7646
        %v7678 = vadd.f32 %v7677, %v7647
        %v7679 = vadd.f32 %v7678, %v7648
        %v7680 = vadd.f32 %v7679, %v7649
        %v7681 = vrot.slane %v7680, 4
        %v7682 = vadd.f32 %v7680, %v7681
        %v7683 = vrot.slane %v7682, 2
        %v7684 = vadd.f32 %v7682, %v7683
        %v7685 = vrot.slane %v7684, 1
        %v7686 = vadd.f32 %v7684, %v7685
        %v7687 = vmul.f32 %v7686, %v3874
        %v7688 = vadd.f32 %v7687, 1e-05
        %v7689 = vrsqrt.pop %v7688
        %v7690 = vmul.f32 %v7586, %v7689
        %v7691 = vmul.f32 %v7587, %v7689
        %v7692 = vmul.f32 %v7588, %v7689
        %v7693 = vmul.f32 %v7589, %v7689
        %v7694 = vmul.f32 %v7590, %v7689
        %v7695 = vmul.f32 %v7591, %v7689
        %v7696 = vmul.f32 %v7592, %v7689
        %v7697 = vmul.f32 %v7593, %v7689
        %v7698 = vmul.f32 %v7594, %v7689
        %v7699 = vmul.f32 %v7595, %v7689
        %v7700 = vmul.f32 %v7596, %v7689
        %v7701 = vmul.f32 %v7597, %v7689
        %v7702 = vmul.f32 %v7598, %v7689
        %v7703 = vmul.f32 %v7599, %v7689
        %v7704 = vmul.f32 %v7600, %v7689
        %v7705 = vmul.f32 %v7601, %v7689
        %v7706 = vmul.f32 %v7602, %v7689
        %v7707 = vmul.f32 %v7603, %v7689
        %v7708 = vmul.f32 %v7604, %v7689
        %v7709 = vmul.f32 %v7605, %v7689
        %v7710 = vmul.f32 %v7606, %v7689
        %v7711 = vmul.f32 %v7607, %v7689
        %v7712 = vmul.f32 %v7608, %v7689
        %v7713 = vmul.f32 %v7609, %v7689
        %v7714 = vmul.f32 %v7610, %v7689
        %v7715 = vmul.f32 %v7611, %v7689
        %v7716 = vmul.f32 %v7612, %v7689
        %v7717 = vmul.f32 %v7613, %v7689
        %v7718 = vmul.f32 %v7614, %v7689
        %v7719 = vmul.f32 %v7615, %v7689
        %v7720 = vmul.f32 %v7616, %v7689
        %v7721 = vmul.f32 %v7617, %v7689
        %v7722 = vld [vmem:[%s254] sm:$0xff]
        %v7723 = vld [vmem:[%s254 + $0x8] sm:$0xff]
        %v7724 = vld [vmem:[%s254 + $0x10] sm:$0xff]
        %v7725 = vld [vmem:[%s254 + $0x18] sm:$0xff]
        %v7726 = vld [vmem:[%s254 + $0x20] sm:$0xff]
        %v7727 = vld [vmem:[%s254 + $0x28] sm:$0xff]
        %v7728 = vld [vmem:[%s254 + $0x30] sm:$0xff]
        %v7729 = vld [vmem:[%s254 + $0x38] sm:$0xff]
        %v7730 = vld [vmem:[%s254 + $0x40] sm:$0xff]
        %v7731 = vld [vmem:[%s254 + $0x48] sm:$0xff]
        %v7732 = vld [vmem:[%s254 + $0x50] sm:$0xff]
        %v7733 = vld [vmem:[%s254 + $0x58] sm:$0xff]
        %v7734 = vld [vmem:[%s254 + $0x60] sm:$0xff]
        %v7735 = vld [vmem:[%s254 + $0x68] sm:$0xff]
        %v7736 = vld [vmem:[%s254 + $0x70] sm:$0xff]
        %v7737 = vld [vmem:[%s254 + $0x78] sm:$0xff]
        %v7738 = vld [vmem:[%s254 + $0x80] sm:$0xff]
        %v7739 = vld [vmem:[%s254 + $0x88] sm:$0xff]
        %v7740 = vld [vmem:[%s254 + $0x90] sm:$0xff]
        %v7741 = vld [vmem:[%s254 + $0x98] sm:$0xff]
        %v7742 = vld [vmem:[%s254 + $0xa0] sm:$0xff]
        %v7743 = vld [vmem:[%s254 + $0xa8] sm:$0xff]
        %v7744 = vld [vmem:[%s254 + $0xb0] sm:$0xff]
        %v7745 = vld [vmem:[%s254 + $0xb8] sm:$0xff]
        %v7746 = vld [vmem:[%s254 + $0xc0] sm:$0xff]
        %v7747 = vld [vmem:[%s254 + $0xc8] sm:$0xff]
        %v7748 = vld [vmem:[%s254 + $0xd0] sm:$0xff]
        %v7749 = vld [vmem:[%s254 + $0xd8] sm:$0xff]
        %v7750 = vld [vmem:[%s254 + $0xe0] sm:$0xff]
        %v7751 = vld [vmem:[%s254 + $0xe8] sm:$0xff]
        %v7752 = vld [vmem:[%s254 + $0xf0] sm:$0xff]
        %v7753 = vld [vmem:[%s254 + $0xf8] sm:$0xff]
        %v7754 = vadd.f32 %v7722, %v7690
        %v7755 = vadd.f32 %v7723, %v7691
        %v7756 = vadd.f32 %v7724, %v7692
        %v7757 = vadd.f32 %v7725, %v7693
        %v7758 = vadd.f32 %v7726, %v7694
        %v7759 = vadd.f32 %v7727, %v7695
        %v7760 = vadd.f32 %v7728, %v7696
        %v7761 = vadd.f32 %v7729, %v7697
        %v7762 = vadd.f32 %v7730, %v7698
        %v7763 = vadd.f32 %v7731, %v7699
        %v7764 = vadd.f32 %v7732, %v7700
        %v7765 = vadd.f32 %v7733, %v7701
        %v7766 = vadd.f32 %v7734, %v7702
        %v7767 = vadd.f32 %v7735, %v7703
        %v7768 = vadd.f32 %v7736, %v7704
        %v7769 = vadd.f32 %v7737, %v7705
        %v7770 = vadd.f32 %v7738, %v7706
        %v7771 = vadd.f32 %v7739, %v7707
        %v7772 = vadd.f32 %v7740, %v7708
        %v7773 = vadd.f32 %v7741, %v7709
        %v7774 = vadd.f32 %v7742, %v7710
        %v7775 = vadd.f32 %v7743, %v7711
        %v7776 = vadd.f32 %v7744, %v7712
        %v7777 = vadd.f32 %v7745, %v7713
        %v7778 = vadd.f32 %v7746, %v7714
        %v7779 = vadd.f32 %v7747, %v7715
        %v7780 = vadd.f32 %v7748, %v7716
        %v7781 = vadd.f32 %v7749, %v7717
        %v7782 = vadd.f32 %v7750, %v7718
        %v7783 = vadd.f32 %v7751, %v7719
        %v7784 = vadd.f32 %v7752, %v7720
        %v7785 = vadd.f32 %v7753, %v7721
        %7786 = vst [vmem:[%s296] sm:$0xff] %v7754
        %7787 = vst [vmem:[%s296 + $0x8] sm:$0xff] %v7755
        %7788 = vst [vmem:[%s296 + $0x10] sm:$0xff] %v7756
        %7789 = vst [vmem:[%s296 + $0x18] sm:$0xff] %v7757
        %7790 = vst [vmem:[%s296 + $0x20] sm:$0xff] %v7758
        %7791 = vst [vmem:[%s296 + $0x28] sm:$0xff] %v7759
        %7792 = vst [vmem:[%s296 + $0x30] sm:$0xff] %v7760
        %7793 = vst [vmem:[%s296 + $0x38] sm:$0xff] %v7761
        %7794 = vst [vmem:[%s296 + $0x40] sm:$0xff] %v7762
        %7795 = vst [vmem:[%s296 + $0x48] sm:$0xff] %v7763
        %7796 = vst [vmem:[%s296 + $0x50] sm:$0xff] %v7764
        %7797 = vst [vmem:[%s296 + $0x58] sm:$0xff] %v7765
        %7798 = vst [vmem:[%s296 + $0x60] sm:$0xff] %v7766
        %7799 = vst [vmem:[%s296 + $0x68] sm:$0xff] %v7767
        %7800 = vst [vmem:[%s296 + $0x70] sm:$0xff] %v7768
        %7801 = vst [vmem:[%s296 + $0x78] sm:$0xff] %v7769
        %7802 = vst [vmem:[%s296 + $0x80] sm:$0xff] %v7770
        %7803 = vst [vmem:[%s296 + $0x88] sm:$0xff] %v7771
        %7804 = vst [vmem:[%s296 + $0x90] sm:$0xff] %v7772
        %7805 = vst [vmem:[%s296 + $0x98] sm:$0xff] %v7773
        %7806 = vst [vmem:[%s296 + $0xa0] sm:$0xff] %v7774
        %7807 = vst [vmem:[%s296 + $0xa8] sm:$0xff] %v7775
        %7808 = vst [vmem:[%s296 + $0xb0] sm:$0xff] %v7776
        %7809 = vst [vmem:[%s296 + $0xb8] sm:$0xff] %v7777
        %7810 = vst [vmem:[%s296 + $0xc0] sm:$0xff] %v7778
        %7811 = vst [vmem:[%s296 + $0xc8] sm:$0xff] %v7779
        %7812 = vst [vmem:[%s296 + $0xd0] sm:$0xff] %v7780
        %7813 = vst [vmem:[%s296 + $0xd8] sm:$0xff] %v7781
        %7814 = vst [vmem:[%s296 + $0xe0] sm:$0xff] %v7782
        %7815 = vst [vmem:[%s296 + $0xe8] sm:$0xff] %v7783
        %7816 = vst [vmem:[%s296 + $0xf0] sm:$0xff] %v7784
        %7817 = vst [vmem:[%s296 + $0xf8] sm:$0xff] %v7785
        %s7818 = sand.u32 %s142, 1
        %s7819 = scalar_lea.sflag [#allocation6], %s7818
        %s7820 = sand.u32 %s142, 1
        %s7821 = smul.addr %s7820, 256
        %s7822 = scalar_lea.vmem [#allocation13], %s7821
        // Predicated region
        $region61: #{residual_block_forward.1} parent=39 // pred_check
          %p7823 = pneg %p152
        $region62: #{residual_block_forward.1} parent=39 // pred_check_branch
          %7825 = sbr.rel (%p7823) target = $region64
        $region63: #{residual_block_forward.1} parent=39 // pred_region
          %s7827 = ssub.s32 4096, 4096
          %7828 = vsyncadd %s7819, %s7827
          %s7829 = smul.addr %s24, 32
          %s7830 = smul.addr %s7829, 128
          %s7831 = scalar_lea.hbm %s5, %s7830
          %s7832 = sshll.u32 %s7822, 4
          %s7833 = int_to_ptr.vmem [resolvable:$true] %s7832
          %7838 = dma.vmem_to_hbm [thread:$0]  %s7833, 4096, %s7831, %s7819, 128, 128, 8
        $region64: #{residual_block_forward.1} parent=39 // pred_fallthru
          _
      $region40: #{residual_block_forward.1} parent=5 // pred_fallthru
        _
      %p7839 = scmp.le.s32.totalorder 2, %s19
      // Predicated region
      $region65: #{residual_block_forward.1} parent=5 // pred_check
        %p7840 = pneg %p7839
      $region66: #{residual_block_forward.1} parent=5 // pred_check_branch
        %7842 = sbr.rel (%p7840) target = $region68
      $region67: #{residual_block_forward.1} parent=5 // pred_region
        %s7843 = ssub.s32 %s19, 2
        // Predicated region
        $region69: #{residual_block_forward.1} parent=67 // pred_check
          %p7844 = pneg %p158
        $region70: #{residual_block_forward.1} parent=67 // pred_check_branch
          %7846 = sbr.rel (%p7844) target = $region72
        $region71: #{residual_block_forward.1} parent=67 // pred_region
          %s7847 = sand.u32 %s143, 1
          %s7848 = scalar_lea.sflag [#allocation6], %s7847
          %s7849 = sand.u32 %s143, 1
          %s7850 = smul.addr %s7849, 256
          %s7851 = scalar_lea.vmem [#allocation13], %s7850
          %7852 = dma.done %s7848, 4096
        $region72: #{residual_block_forward.1} parent=67 // pred_fallthru
          _
      $region68: #{residual_block_forward.1} parent=5 // pred_fallthru
        _
    $region6: #{residual_block_forward.1} parent=1 // loop_footer
      %s23 = sadd.s32 1, %s19
    $region7: #{residual_block_forward.1} parent=1 // loop_footer_branch
      %18 = sbr.rel target = $region3
    $region8: #{residual_block_forward.1} parent=1 // loop_exit
      _
    %7853 = vsyncpa [#allocation5], 1
    %s7854 = scalar_lea.sflag [#allocation5], 1
    %7855 = vsyncpa %s7854, 1
    %7856 = vsyncpa [#allocation8], 1
    %7857 = vsyncpa [#allocation11], 1
    %7858 = vsyncpa [#allocation6], 1
    %s7859 = scalar_lea.sflag [#allocation6], 1
    %7860 = vsyncpa %s7859, 1

</llo_original>
